<compile_context>
chip_gen: v7x
topology: tpu7x:2x2x1
jax: 0.10.0
libtpu: 0.0.40
codegen_flags: <defaults>
</compile_context>

<pallas_src>
import jax
import jax.numpy as jnp
from jax import lax
from jax.experimental import pallas as pl
from jax.experimental.pallas import tpu as pltpu

CONV_KERNELS = (3, 5, 7, 9)
CONV_GROUPS = (1, 4, 8, 16)
SE_REDUCTION = 4
NUM_BRANCHES = 4
KMAX = max(CONV_KERNELS)          # 9
PAD = KMAX // 2                   # 4


# ----------------------------- fused Pallas kernel ---------------------------

def psa_fused_call(xq, pk, H, W):
    """xq: (P, Hp, Wp, 2*c4) padded, 4x-replicated, pair-packed input."""
    P, Hp, Wp, Cin2 = xq.shape
    Cout2 = pk["pww"].shape[1]                 # 2 * 4 * split (= 128 here)
    h8 = pk["w1"].shape[1]                     # 8 * SE hidden
    HW = H * W
    SH = 8 if H % 8 == 0 else H                # row-strip height
    NS = H // SH

    def kernel(x_ref, dww_ref, pww_ref, pwb_ref, w1_ref, b1_ref,
               w2_ref, b2_ref, sm_ref, o_ref, xs_ref):
        # x_ref : (Hp, Wp, Cin2)   o_ref : (HW, Cout2)
        # xs_ref: (SH + 2*PAD, W, Cin2) staged kx-shift scratch

        def strip_body(s, pooled):
            row0 = pl.multiple_of(s * SH, SH)
            acc = jnp.zeros((SH, W, Cin2), jnp.float32)
            for kx in range(KMAX):
                # ONE W-shifted (sublane-relayout) copy per kx; ky slices below
                # start at sublane 0 and walk the free major axis only.
                xs_ref[...] = x_ref[pl.ds(row0, SH + 2 * PAD), pl.ds(kx, W), :]
                for ky in range(KMAX):
                    w_t = dww_ref[ky * KMAX + kx]              # (Cin2,)
                    acc = acc + xs_ref[ky:ky + SH, :, :] * w_t
            # fused grouped pointwise (block-diag, columns already in the
            # module's final [x4|x3|x2|x1] order per image); depthwise bias is
            # folded into pwb.
            y = jnp.dot(acc.reshape(SH * W, Cin2), pww_ref[...],
                        preferred_element_type=jnp.float32) + pwb_ref[0]
            r0 = pl.multiple_of(s * (SH * W), SH * W)
            o_ref[pl.ds(r0, SH * W), :] = y.astype(o_ref.dtype)
            return pooled + jnp.sum(y, axis=0, keepdims=True)

        pooled = lax.fori_loop(0, NS, strip_body,
                               jnp.zeros((1, Cout2), jnp.float32))

        # ---- SE (block-diag over 8 (image,branch) groups) + branch softmax ----
        pooled = pooled * (1.0 / float(HW))                     # (1, Cout2)
        h = jnp.maximum(
            jnp.dot(pooled, w1_ref[...], preferred_element_type=jnp.float32)
            + b1_ref[0], 0.0)
        g = jax.nn.sigmoid(
            jnp.dot(h, w2_ref[...], preferred_element_type=jnp.float32)
            + b2_ref[0])
        e = jnp.exp(g)                       # g in (0,1): no max-shift needed
        denom = jnp.dot(e, sm_ref[...], preferred_element_type=jnp.float32)
        att = e * pl.reciprocal(denom)                          # (1, Cout2)
        o_ref[...] = (o_ref[...] * att).astype(o_ref.dtype)

    return pl.pallas_call(
        kernel,
        out_shape=jax.ShapeDtypeStruct((P, HW, Cout2), jnp.float32),
        grid_spec=pltpu.PrefetchScalarGridSpec(
            num_scalar_prefetch=0,
            grid=(P,),
            in_specs=[
                pl.BlockSpec((None, Hp, Wp, Cin2), lambda p: (p, 0, 0, 0)),
                pl.BlockSpec((KMAX * KMAX, Cin2), lambda p: (0, 0)),
                pl.BlockSpec((Cin2, Cout2), lambda p: (0, 0)),
                pl.BlockSpec((1, Cout2), lambda p: (0, 0)),
                pl.BlockSpec((Cout2, h8), lambda p: (0, 0)),
                pl.BlockSpec((1, h8), lambda p: (0, 0)),
                pl.BlockSpec((h8, Cout2), lambda p: (0, 0)),
                pl.BlockSpec((1, Cout2), lambda p: (0, 0)),
                pl.BlockSpec((Cout2, Cout2), lambda p: (0, 0)),
            ],
            out_specs=pl.BlockSpec((None, HW, Cout2), lambda p: (p, 0, 0)),
            scratch_shapes=[pltpu.VMEM((SH + 2 * PAD, W, Cin2), jnp.float32)],
        ),
        compiler_params=pltpu.CompilerParams(
            dimension_semantics=("parallel",)),   # independent per batch pair
    )(xq, pk["dww"], pk["pww"], pk["pwb"], pk["w1"], pk["b1"],
      pk["w2"], pk["b2"], pk["summat"])


# ----------------------------- wrappers ---------------------------------------

def psa_forward_nhwc(x_nhwc, params):
    B, H, W, cin = x_nhwc.shape
    split = params["branches"][0]["pw_b"].shape[0]
    s4 = NUM_BRANCHES * split
    c4 = NUM_BRANCHES * cin

    # pad batch to an even count so pairs pack the 128-lane axis exactly
    Bp = B + (B % 2)
    if Bp != B:
        x_nhwc = jnp.concatenate(
            [x_nhwc, jnp.zeros((Bp - B, H, W, cin), x_nhwc.dtype)], axis=0)

    # pad ONCE, replicate 4x along channels (one copy per branch), pack pairs
    # -> the BlockSpec DMA delivers fully packed 128-lane tiles to the kernel.
    xp = jnp.pad(x_nhwc, ((0, 0), (PAD, PAD), (PAD, PAD), (0, 0)))
    xq = jnp.tile(xp, (1, 1, 1, NUM_BRANCHES))                 # (Bp,Hp,Wp,c4)
    Hp, Wp = H + 2 * PAD, W + 2 * PAD
    xq = xq.reshape(Bp // 2, 2, Hp, Wp, c4).transpose(0, 2, 3, 1, 4)
    xq = xq.reshape(Bp // 2, Hp, Wp, 2 * c4)

    pk = pack_psa_params(params, cin)
    out = psa_fused_call(xq, pk, H, W)                         # (Bp//2,HW,2*s4)
    out = out.reshape(Bp // 2, H, W, 2, s4).transpose(0, 3, 1, 2, 4)
    out = out.reshape(Bp, H, W, s4)
    return out[:B]


def psa_module_forward(x_nchw, params):
    """Matches PSAModule.forward: NCHW in, NCHW out (channels = [x4,x3,x2,x1])."""
    x_nhwc = jnp.transpose(x_nchw, (0, 2, 3, 1))
    out_nhwc = psa_forward_nhwc(x_nhwc, params)
    return jnp.transpose(out_nhwc, (0, 3, 1, 2))


# ----------------------------- parameter packing -------------------------------

def grouped_pointwise_dense(w, groups, cin):
    """PyTorch grouped 1x1 conv weight (Cout, Cin//g) -> dense (Cin, Cout)."""
    cout, cin_g = w.shape
    out_g = cout // groups
    dense = jnp.zeros((cin, cout), jnp.float32)
    for gi in range(groups):
        blk = w[gi * out_g:(gi + 1) * out_g, :]
        dense = dense.at[gi * cin_g:(gi + 1) * cin_g,
                         gi * out_g:(gi + 1) * out_g].set(blk.T)
    return dense


def pack_psa_params(params, cin):
    """Pack the 4 branches + SE into pair-packed fused arrays."""
    nb = NUM_BRANCHES
    split = params["branches"][0]["pw_b"].shape[0]
    c4 = nb * cin
    s4 = nb * split

    dww1 = jnp.zeros((KMAX, KMAX, c4), jnp.float32)
    dwb1 = jnp.zeros((c4,), jnp.float32)
    pww1 = jnp.zeros((c4, s4), jnp.float32)
    pwb1 = jnp.zeros((s4,), jnp.float32)
    for j, (br, K) in enumerate(zip(params["branches"], CONV_KERNELS)):
        off = (KMAX - K) // 2                         # center KxK inside 9x9
        dww1 = dww1.at[off:off + K, off:off + K,
                       j * cin:(j + 1) * cin].set(br["dw_w"])
        dwb1 = dwb1.at[j * cin:(j + 1) * cin].set(br["dw_b"])
        col = (nb - 1 - j) * split                    # reversed -> [x4|x3|x2|x1]
        pww1 = pww1.at[j * cin:(j + 1) * cin, col:col + split].set(br["pw_w"])
        pwb1 = pwb1.at[col:col + split].set(br["pw_b"])
    pwb1 = pwb1 + dwb1 @ pww1                         # fold depthwise bias

    # pair-pack: two images share the 128-lane axis (identical weights)
    dww = jnp.tile(dww1.reshape(KMAX * KMAX, c4), (1, 2))
    pww = jnp.zeros((2 * c4, 2 * s4), jnp.float32)
    pww = pww.at[:c4, :s4].set(pww1).at[c4:, s4:].set(pww1)
    pwb = jnp.tile(pwb1, (2,)).reshape(1, -1)

    se = params["se"]
    ng = 2 * nb                                       # (image, branch) groups
    w1 = jnp.kron(jnp.eye(ng, dtype=jnp.float32), se["w1"])   # (2*s4, ng*hid)
    w2 = jnp.kron(jnp.eye(ng, dtype=jnp.float32), se["w2"])   # (ng*hid, 2*s4)
    b1 = jnp.tile(se["b1"], (ng,)).reshape(1, -1)
    b2 = jnp.tile(se["b2"], (ng,)).reshape(1, -1)
    # branch-sum matrix: per image, per within-split channel, sum over branches
    summat = jnp.kron(jnp.eye(2, dtype=jnp.float32),
                      jnp.kron(jnp.ones((nb, nb), jnp.float32),
                               jnp.eye(split, dtype=jnp.float32)))
    return dict(dww=dww, pww=pww, pwb=pwb, w1=w1, b1=b1, w2=w2, b2=b2,
                summat=summat)


def init_params(inplans, planes, key):
    split = planes // 4
    hidden = max(split // SE_REDUCTION, 1)
    keys = jax.random.split(key, 4 * 4 + 4)

    branches = []
    for i, (K, g) in enumerate(zip(CONV_KERNELS, CONV_GROUPS)):
        k0, k1, k2, k3 = keys[4 * i: 4 * i + 4]
        dw_w = 0.2 * jax.random.normal(k0, (K, K, inplans), jnp.float32)
        dw_b = 0.1 * jax.random.normal(k1, (inplans,), jnp.float32)
        pw_raw = 0.2 * jax.random.normal(k2, (split, inplans // g), jnp.float32)
        pw_b = 0.1 * jax.random.normal(k3, (split,), jnp.float32)
        branches.append(dict(dw_w=dw_w, dw_b=dw_b,
                             pw_w=grouped_pointwise_dense(pw_raw, g, inplans),
                             pw_b=pw_b))

    ks = keys[16:]
    se = dict(
        w1=0.2 * jax.random.normal(ks[0], (split, hidden), jnp.float32),
        b1=0.1 * jax.random.normal(ks[1], (hidden,), jnp.float32),
        w2=0.2 * jax.random.normal(ks[2], (hidden, split), jnp.float32),
        b2=0.1 * jax.random.normal(ks[3], (split,), jnp.float32),
    )
    return dict(branches=branches, se=se)


# ----------------------------- pure-JAX reference ------------------------------

def ref_forward_nhwc(x, params):
    B, H, W, Cin = x.shape
    ys = []
    for br, K in zip(params["branches"], CONV_KERNELS):
        p = K // 2
        xp = jnp.pad(x, ((0, 0), (p, p), (p, p), (0, 0)))
        acc = jnp.zeros((B, H, W, Cin), jnp.float32)
        for ky in range(K):
            for kx in range(K):
                acc = acc + xp[:, ky:ky + H, kx:kx + W, :] * br["dw_w"][ky, kx]
        acc = acc + br["dw_b"]
        ys.append(jnp.einsum("bhwc,cd->bhwd", acc, br["pw_w"]) + br["pw_b"])
    feats = jnp.stack(ys, axis=0)                      # (4, B, H, W, C) = x1..x4
    pooled = feats.mean(axis=(2, 3))                   # (4, B, C)
    se = params["se"]
    h = jax.nn.relu(pooled @ se["w1"] + se["b1"])
    s = h @ se["w2"] + se["b2"]
    att = jax.nn.softmax(jax.nn.sigmoid(s), axis=0)    # softmax over branches
    wfeats = feats * att[:, :, None, None, :]
    return jnp.concatenate([wfeats[3], wfeats[2], wfeats[1], wfeats[0]], axis=-1)


# ----------------------------- main --------------------------------------------

if __name__ == "__main__":
    B, INPLANS, PLANES, H, W = 2, 16, 64, 16, 16

    root = jax.random.PRNGKey(0)
    kx_key, kp_key = jax.random.split(root)
    x_nchw = jax.random.normal(kx_key, (B, INPLANS, H, W), jnp.float32)
    params = init_params(INPLANS, PLANES, kp_key)

    out_nchw = psa_module_forward(x_nchw, params)
    jax.block_until_ready(out_nchw)
    assert out_nchw.shape == (B, PLANES, H, W), out_nchw.shape

    # verify against the pure-JAX reference of the module semantics
    x_nhwc = jnp.transpose(x_nchw, (0, 2, 3, 1))
    ref = ref_forward_nhwc(x_nhwc, params)
    got = jnp.transpose(out_nchw, (0, 2, 3, 1))
    if not jnp.allclose(got, ref, rtol=2e-3, atol=2e-3):
        raise AssertionError(
            f"mismatch vs reference, max abs diff = "
            f"{float(jnp.max(jnp.abs(got - ref)))}")

    print("KERNEL_OK")
</pallas_src>

<mosaic_0001>
module attributes {stable_mosaic.version = 11 : i64} {
  func.func @kernel(%arg0: i32, %arg1: memref<1x24x24x128xf32, #tpu.memory_space<vmem>>, %arg2: memref<81x128xf32, #tpu.memory_space<vmem>>, %arg3: memref<128x128xf32, #tpu.memory_space<vmem>>, %arg4: memref<1x128xf32, #tpu.memory_space<vmem>>, %arg5: memref<128x32xf32, #tpu.memory_space<vmem>>, %arg6: memref<1x32xf32, #tpu.memory_space<vmem>>, %arg7: memref<32x128xf32, #tpu.memory_space<vmem>>, %arg8: memref<1x128xf32, #tpu.memory_space<vmem>>, %arg9: memref<128x128xf32, #tpu.memory_space<vmem>>, %arg10: memref<1x256x128xf32, #tpu.memory_space<vmem>>, %arg11: memref<16x16x128xf32, #tpu.memory_space<vmem>>) attributes {dimension_semantics = [#tpu.dimension_semantics<parallel>], iteration_bounds = array<i64: 1>, scalar_prefetch = 0 : i64, scratch_operands = 1 : i64, tpu.core_type = #tpu.core_type<tc>, window_params = [{transform_indices = @transform_0, window_bounds = array<i64: 1, 24, 24, 128>}, {pipeline_mode = #tpu.pipeline_mode<synchronous>, transform_indices = @transform_1, window_bounds = array<i64: 81, 128>}, {pipeline_mode = #tpu.pipeline_mode<synchronous>, transform_indices = @transform_2, window_bounds = array<i64: 128, 128>}, {pipeline_mode = #tpu.pipeline_mode<synchronous>, transform_indices = @transform_3, window_bounds = array<i64: 1, 128>}, {pipeline_mode = #tpu.pipeline_mode<synchronous>, transform_indices = @transform_4, window_bounds = array<i64: 128, 32>}, {pipeline_mode = #tpu.pipeline_mode<synchronous>, transform_indices = @transform_5, window_bounds = array<i64: 1, 32>}, {pipeline_mode = #tpu.pipeline_mode<synchronous>, transform_indices = @transform_6, window_bounds = array<i64: 32, 128>}, {pipeline_mode = #tpu.pipeline_mode<synchronous>, transform_indices = @transform_7, window_bounds = array<i64: 1, 128>}, {pipeline_mode = #tpu.pipeline_mode<synchronous>, transform_indices = @transform_8, window_bounds = array<i64: 128, 128>}, {transform_indices = @transform_9, window_bounds = array<i64: 1, 256, 128>}]} {
    %cst = arith.constant 0.000000e+00 : f32
    %0 = vector.broadcast %cst : f32 to vector<1x128xf32>
    %c0_i32 = arith.constant 0 : i32
    %c2_i32 = arith.constant 2 : i32
    %1 = arith.addi %c0_i32, %c2_i32 : i32
    %c1_i32 = arith.constant 1 : i32
    %2 = scf.for %arg12 = %c0_i32 to %1 step %c1_i32 iter_args(%arg13 = %0) -> (vector<1x128xf32>)  : i32 {
      %c8_i32 = arith.constant 8 : i32
      %36 = arith.muli %arg12, %c8_i32 : i32
      %37 = tpu.assume_multiple %36, 8 : i32
      %cst_22 = arith.constant 0.000000e+00 : f32
      %38 = vector.broadcast %cst_22 : f32 to vector<8x16x128xf32>
      %c0_23 = arith.constant 0 : index
      %39 = arith.index_cast %37 : i32 to index
      %c0_24 = arith.constant 0 : index
      %c0_25 = arith.constant 0 : index
      %40 = vector.load %arg1[%c0_23, %39, %c0_24, %c0_25] : memref<1x24x24x128xf32, #tpu.memory_space<vmem>>, vector<1x16x16x128xf32>
      %41 = vector.shape_cast %40 : vector<1x16x16x128xf32> to vector<16x16x128xf32>
      %c0_26 = arith.constant 0 : index
      %c0_27 = arith.constant 0 : index
      %c0_28 = arith.constant 0 : index
      %42 = vector.load %arg11[%c0_26, %c0_27, %c0_28] : memref<16x16x128xf32, #tpu.memory_space<vmem>>, vector<16x16x128xf32>
      tpu.vector_store %arg11[%c0_26, %c0_27, %c0_28], %41 {strides = array<i32>} : memref<16x16x128xf32, #tpu.memory_space<vmem>>, vector<16x16x128xf32>,
      %c0_29 = arith.constant 0 : index
      %c0_30 = arith.constant 0 : index
      %43 = vector.load %arg2[%c0_29, %c0_30] : memref<81x128xf32, #tpu.memory_space<vmem>>, vector<1x128xf32>
      %44 = vector.shape_cast %43 : vector<1x128xf32> to vector<128xf32>
      %c0_31 = arith.constant 0 : index
      %c0_32 = arith.constant 0 : index
      %c0_33 = arith.constant 0 : index
      %45 = vector.load %arg11[%c0_31, %c0_32, %c0_33] : memref<16x16x128xf32, #tpu.memory_space<vmem>>, vector<8x16x128xf32>
      %46 = vector.shape_cast %44 : vector<128xf32> to vector<1x1x128xf32>
      %47 = vector.broadcast %46 : vector<1x1x128xf32> to vector<8x16x128xf32>
      %48 = arith.mulf %45, %47 : vector<8x16x128xf32>
      %49 = arith.addf %38, %48 : vector<8x16x128xf32>
      %c9 = arith.constant 9 : index
      %c0_34 = arith.constant 0 : index
      %50 = vector.load %arg2[%c9, %c0_34] : memref<81x128xf32, #tpu.memory_space<vmem>>, vector<1x128xf32>
      %51 = vector.shape_cast %50 : vector<1x128xf32> to vector<128xf32>
      %c1 = arith.constant 1 : index
      %c0_35 = arith.constant 0 : index
      %c0_36 = arith.constant 0 : index
      %52 = vector.load %arg11[%c1, %c0_35, %c0_36] : memref<16x16x128xf32, #tpu.memory_space<vmem>>, vector<8x16x128xf32>
      %53 = vector.shape_cast %51 : vector<128xf32> to vector<1x1x128xf32>
      %54 = vector.broadcast %53 : vector<1x1x128xf32> to vector<8x16x128xf32>
      %55 = arith.mulf %52, %54 : vector<8x16x128xf32>
      %56 = arith.addf %49, %55 : vector<8x16x128xf32>
      %c18 = arith.constant 18 : index
      %c0_37 = arith.constant 0 : index
      %57 = vector.load %arg2[%c18, %c0_37] : memref<81x128xf32, #tpu.memory_space<vmem>>, vector<1x128xf32>
      %58 = vector.shape_cast %57 : vector<1x128xf32> to vector<128xf32>
      %c2 = arith.constant 2 : index
      %c0_38 = arith.constant 0 : index
      %c0_39 = arith.constant 0 : index
      %59 = vector.load %arg11[%c2, %c0_38, %c0_39] : memref<16x16x128xf32, #tpu.memory_space<vmem>>, vector<8x16x128xf32>
      %60 = vector.shape_cast %58 : vector<128xf32> to vector<1x1x128xf32>
      %61 = vector.broadcast %60 : vector<1x1x128xf32> to vector<8x16x128xf32>
      %62 = arith.mulf %59, %61 : vector<8x16x128xf32>
      %63 = arith.addf %56, %62 : vector<8x16x128xf32>
      %c27 = arith.constant 27 : index
      %c0_40 = arith.constant 0 : index
      %64 = vector.load %arg2[%c27, %c0_40] : memref<81x128xf32, #tpu.memory_space<vmem>>, vector<1x128xf32>
      %65 = vector.shape_cast %64 : vector<1x128xf32> to vector<128xf32>
      %c3 = arith.constant 3 : index
      %c0_41 = arith.constant 0 : index
      %c0_42 = arith.constant 0 : index
      %66 = vector.load %arg11[%c3, %c0_41, %c0_42] : memref<16x16x128xf32, #tpu.memory_space<vmem>>, vector<8x16x128xf32>
      %67 = vector.shape_cast %65 : vector<128xf32> to vector<1x1x128xf32>
      %68 = vector.broadcast %67 : vector<1x1x128xf32> to vector<8x16x128xf32>
      %69 = arith.mulf %66, %68 : vector<8x16x128xf32>
      %70 = arith.addf %63, %69 : vector<8x16x128xf32>
      %c36 = arith.constant 36 : index
      %c0_43 = arith.constant 0 : index
      %71 = vector.load %arg2[%c36, %c0_43] : memref<81x128xf32, #tpu.memory_space<vmem>>, vector<1x128xf32>
      %72 = vector.shape_cast %71 : vector<1x128xf32> to vector<128xf32>
      %c4 = arith.constant 4 : index
      %c0_44 = arith.constant 0 : index
      %c0_45 = arith.constant 0 : index
      %73 = vector.load %arg11[%c4, %c0_44, %c0_45] : memref<16x16x128xf32, #tpu.memory_space<vmem>>, vector<8x16x128xf32>
      %74 = vector.shape_cast %72 : vector<128xf32> to vector<1x1x128xf32>
      %75 = vector.broadcast %74 : vector<1x1x128xf32> to vector<8x16x128xf32>
      %76 = arith.mulf %73, %75 : vector<8x16x128xf32>
      %77 = arith.addf %70, %76 : vector<8x16x128xf32>
      %c45 = arith.constant 45 : index
      %c0_46 = arith.constant 0 : index
      %78 = vector.load %arg2[%c45, %c0_46] : memref<81x128xf32, #tpu.memory_space<vmem>>, vector<1x128xf32>
      %79 = vector.shape_cast %78 : vector<1x128xf32> to vector<128xf32>
      %c5 = arith.constant 5 : index
      %c0_47 = arith.constant 0 : index
      %c0_48 = arith.constant 0 : index
      %80 = vector.load %arg11[%c5, %c0_47, %c0_48] : memref<16x16x128xf32, #tpu.memory_space<vmem>>, vector<8x16x128xf32>
      %81 = vector.shape_cast %79 : vector<128xf32> to vector<1x1x128xf32>
      %82 = vector.broadcast %81 : vector<1x1x128xf32> to vector<8x16x128xf32>
      %83 = arith.mulf %80, %82 : vector<8x16x128xf32>
      %84 = arith.addf %77, %83 : vector<8x16x128xf32>
      %c54 = arith.constant 54 : index
      %c0_49 = arith.constant 0 : index
      %85 = vector.load %arg2[%c54, %c0_49] : memref<81x128xf32, #tpu.memory_space<vmem>>, vector<1x128xf32>
      %86 = vector.shape_cast %85 : vector<1x128xf32> to vector<128xf32>
      %c6 = arith.constant 6 : index
      %c0_50 = arith.constant 0 : index
      %c0_51 = arith.constant 0 : index
      %87 = vector.load %arg11[%c6, %c0_50, %c0_51] : memref<16x16x128xf32, #tpu.memory_space<vmem>>, vector<8x16x128xf32>
      %88 = vector.shape_cast %86 : vector<128xf32> to vector<1x1x128xf32>
      %89 = vector.broadcast %88 : vector<1x1x128xf32> to vector<8x16x128xf32>
      %90 = arith.mulf %87, %89 : vector<8x16x128xf32>
      %91 = arith.addf %84, %90 : vector<8x16x128xf32>
      %c63 = arith.constant 63 : index
      %c0_52 = arith.constant 0 : index
      %92 = vector.load %arg2[%c63, %c0_52] : memref<81x128xf32, #tpu.memory_space<vmem>>, vector<1x128xf32>
      %93 = vector.shape_cast %92 : vector<1x128xf32> to vector<128xf32>
      %c7 = arith.constant 7 : index
      %c0_53 = arith.constant 0 : index
      %c0_54 = arith.constant 0 : index
      %94 = vector.load %arg11[%c7, %c0_53, %c0_54] : memref<16x16x128xf32, #tpu.memory_space<vmem>>, vector<8x16x128xf32>
      %95 = vector.shape_cast %93 : vector<128xf32> to vector<1x1x128xf32>
      %96 = vector.broadcast %95 : vector<1x1x128xf32> to vector<8x16x128xf32>
      %97 = arith.mulf %94, %96 : vector<8x16x128xf32>
      %98 = arith.addf %91, %97 : vector<8x16x128xf32>
      %c72 = arith.constant 72 : index
      %c0_55 = arith.constant 0 : index
      %99 = vector.load %arg2[%c72, %c0_55] : memref<81x128xf32, #tpu.memory_space<vmem>>, vector<1x128xf32>
      %100 = vector.shape_cast %99 : vector<1x128xf32> to vector<128xf32>
      %c8 = arith.constant 8 : index
      %c0_56 = arith.constant 0 : index
      %c0_57 = arith.constant 0 : index
      %101 = vector.load %arg11[%c8, %c0_56, %c0_57] : memref<16x16x128xf32, #tpu.memory_space<vmem>>, vector<8x16x128xf32>
      %102 = vector.shape_cast %100 : vector<128xf32> to vector<1x1x128xf32>
      %103 = vector.broadcast %102 : vector<1x1x128xf32> to vector<8x16x128xf32>
      %104 = arith.mulf %101, %103 : vector<8x16x128xf32>
      %105 = arith.addf %98, %104 : vector<8x16x128xf32>
      %c0_58 = arith.constant 0 : index
      %106 = arith.index_cast %37 : i32 to index
      %c1_59 = arith.constant 1 : index
      %c0_60 = arith.constant 0 : index
      %107 = vector.load %arg1[%c0_58, %106, %c1_59, %c0_60] : memref<1x24x24x128xf32, #tpu.memory_space<vmem>>, vector<1x16x16x128xf32>
      %108 = vector.shape_cast %107 : vector<1x16x16x128xf32> to vector<16x16x128xf32>
      %c0_61 = arith.constant 0 : index
      %c0_62 = arith.constant 0 : index
      %c0_63 = arith.constant 0 : index
      %109 = vector.load %arg11[%c0_61, %c0_62, %c0_63] : memref<16x16x128xf32, #tpu.memory_space<vmem>>, vector<16x16x128xf32>
      tpu.vector_store %arg11[%c0_61, %c0_62, %c0_63], %108 {strides = array<i32>} : memref<16x16x128xf32, #tpu.memory_space<vmem>>, vector<16x16x128xf32>,
      %c1_64 = arith.constant 1 : index
      %c0_65 = arith.constant 0 : index
      %110 = vector.load %arg2[%c1_64, %c0_65] : memref<81x128xf32, #tpu.memory_space<vmem>>, vector<1x128xf32>
      %111 = vector.shape_cast %110 : vector<1x128xf32> to vector<128xf32>
      %c0_66 = arith.constant 0 : index
      %c0_67 = arith.constant 0 : index
      %c0_68 = arith.constant 0 : index
      %112 = vector.load %arg11[%c0_66, %c0_67, %c0_68] : memref<16x16x128xf32, #tpu.memory_space<vmem>>, vector<8x16x128xf32>
      %113 = vector.shape_cast %111 : vector<128xf32> to vector<1x1x128xf32>
      %114 = vector.broadcast %113 : vector<1x1x128xf32> to vector<8x16x128xf32>
      %115 = arith.mulf %112, %114 : vector<8x16x128xf32>
      %116 = arith.addf %105, %115 : vector<8x16x128xf32>
      %c10 = arith.constant 10 : index
      %c0_69 = arith.constant 0 : index
      %117 = vector.load %arg2[%c10, %c0_69] : memref<81x128xf32, #tpu.memory_space<vmem>>, vector<1x128xf32>
      %118 = vector.shape_cast %117 : vector<1x128xf32> to vector<128xf32>
      %c1_70 = arith.constant 1 : index
      %c0_71 = arith.constant 0 : index
      %c0_72 = arith.constant 0 : index
      %119 = vector.load %arg11[%c1_70, %c0_71, %c0_72] : memref<16x16x128xf32, #tpu.memory_space<vmem>>, vector<8x16x128xf32>
      %120 = vector.shape_cast %118 : vector<128xf32> to vector<1x1x128xf32>
      %121 = vector.broadcast %120 : vector<1x1x128xf32> to vector<8x16x128xf32>
      %122 = arith.mulf %119, %121 : vector<8x16x128xf32>
      %123 = arith.addf %116, %122 : vector<8x16x128xf32>
      %c19 = arith.constant 19 : index
      %c0_73 = arith.constant 0 : index
      %124 = vector.load %arg2[%c19, %c0_73] : memref<81x128xf32, #tpu.memory_space<vmem>>, vector<1x128xf32>
      %125 = vector.shape_cast %124 : vector<1x128xf32> to vector<128xf32>
      %c2_74 = arith.constant 2 : index
      %c0_75 = arith.constant 0 : index
      %c0_76 = arith.constant 0 : index
      %126 = vector.load %arg11[%c2_74, %c0_75, %c0_76] : memref<16x16x128xf32, #tpu.memory_space<vmem>>, vector<8x16x128xf32>
      %127 = vector.shape_cast %125 : vector<128xf32> to vector<1x1x128xf32>
      %128 = vector.broadcast %127 : vector<1x1x128xf32> to vector<8x16x128xf32>
      %129 = arith.mulf %126, %128 : vector<8x16x128xf32>
      %130 = arith.addf %123, %129 : vector<8x16x128xf32>
      %c28 = arith.constant 28 : index
      %c0_77 = arith.constant 0 : index
      %131 = vector.load %arg2[%c28, %c0_77] : memref<81x128xf32, #tpu.memory_space<vmem>>, vector<1x128xf32>
      %132 = vector.shape_cast %131 : vector<1x128xf32> to vector<128xf32>
      %c3_78 = arith.constant 3 : index
      %c0_79 = arith.constant 0 : index
      %c0_80 = arith.constant 0 : index
      %133 = vector.load %arg11[%c3_78, %c0_79, %c0_80] : memref<16x16x128xf32, #tpu.memory_space<vmem>>, vector<8x16x128xf32>
      %134 = vector.shape_cast %132 : vector<128xf32> to vector<1x1x128xf32>
      %135 = vector.broadcast %134 : vector<1x1x128xf32> to vector<8x16x128xf32>
      %136 = arith.mulf %133, %135 : vector<8x16x128xf32>
      %137 = arith.addf %130, %136 : vector<8x16x128xf32>
      %c37 = arith.constant 37 : index
      %c0_81 = arith.constant 0 : index
      %138 = vector.load %arg2[%c37, %c0_81] : memref<81x128xf32, #tpu.memory_space<vmem>>, vector<1x128xf32>
      %139 = vector.shape_cast %138 : vector<1x128xf32> to vector<128xf32>
      %c4_82 = arith.constant 4 : index
      %c0_83 = arith.constant 0 : index
      %c0_84 = arith.constant 0 : index
      %140 = vector.load %arg11[%c4_82, %c0_83, %c0_84] : memref<16x16x128xf32, #tpu.memory_space<vmem>>, vector<8x16x128xf32>
      %141 = vector.shape_cast %139 : vector<128xf32> to vector<1x1x128xf32>
      %142 = vector.broadcast %141 : vector<1x1x128xf32> to vector<8x16x128xf32>
      %143 = arith.mulf %140, %142 : vector<8x16x128xf32>
      %144 = arith.addf %137, %143 : vector<8x16x128xf32>
      %c46 = arith.constant 46 : index
      %c0_85 = arith.constant 0 : index
      %145 = vector.load %arg2[%c46, %c0_85] : memref<81x128xf32, #tpu.memory_space<vmem>>, vector<1x128xf32>
      %146 = vector.shape_cast %145 : vector<1x128xf32> to vector<128xf32>
      %c5_86 = arith.constant 5 : index
      %c0_87 = arith.constant 0 : index
      %c0_88 = arith.constant 0 : index
      %147 = vector.load %arg11[%c5_86, %c0_87, %c0_88] : memref<16x16x128xf32, #tpu.memory_space<vmem>>, vector<8x16x128xf32>
      %148 = vector.shape_cast %146 : vector<128xf32> to vector<1x1x128xf32>
      %149 = vector.broadcast %148 : vector<1x1x128xf32> to vector<8x16x128xf32>
      %150 = arith.mulf %147, %149 : vector<8x16x128xf32>
      %151 = arith.addf %144, %150 : vector<8x16x128xf32>
      %c55 = arith.constant 55 : index
      %c0_89 = arith.constant 0 : index
      %152 = vector.load %arg2[%c55, %c0_89] : memref<81x128xf32, #tpu.memory_space<vmem>>, vector<1x128xf32>
      %153 = vector.shape_cast %152 : vector<1x128xf32> to vector<128xf32>
      %c6_90 = arith.constant 6 : index
      %c0_91 = arith.constant 0 : index
      %c0_92 = arith.constant 0 : index
      %154 = vector.load %arg11[%c6_90, %c0_91, %c0_92] : memref<16x16x128xf32, #tpu.memory_space<vmem>>, vector<8x16x128xf32>
      %155 = vector.shape_cast %153 : vector<128xf32> to vector<1x1x128xf32>
      %156 = vector.broadcast %155 : vector<1x1x128xf32> to vector<8x16x128xf32>
      %157 = arith.mulf %154, %156 : vector<8x16x128xf32>
      %158 = arith.addf %151, %157 : vector<8x16x128xf32>
      %c64 = arith.constant 64 : index
      %c0_93 = arith.constant 0 : index
      %159 = vector.load %arg2[%c64, %c0_93] : memref<81x128xf32, #tpu.memory_space<vmem>>, vector<1x128xf32>
      %160 = vector.shape_cast %159 : vector<1x128xf32> to vector<128xf32>
      %c7_94 = arith.constant 7 : index
      %c0_95 = arith.constant 0 : index
      %c0_96 = arith.constant 0 : index
      %161 = vector.load %arg11[%c7_94, %c0_95, %c0_96] : memref<16x16x128xf32, #tpu.memory_space<vmem>>, vector<8x16x128xf32>
      %162 = vector.shape_cast %160 : vector<128xf32> to vector<1x1x128xf32>
      %163 = vector.broadcast %162 : vector<1x1x128xf32> to vector<8x16x128xf32>
      %164 = arith.mulf %161, %163 : vector<8x16x128xf32>
      %165 = arith.addf %158, %164 : vector<8x16x128xf32>
      %c73 = arith.constant 73 : index
      %c0_97 = arith.constant 0 : index
      %166 = vector.load %arg2[%c73, %c0_97] : memref<81x128xf32, #tpu.memory_space<vmem>>, vector<1x128xf32>
      %167 = vector.shape_cast %166 : vector<1x128xf32> to vector<128xf32>
      %c8_98 = arith.constant 8 : index
      %c0_99 = arith.constant 0 : index
      %c0_100 = arith.constant 0 : index
      %168 = vector.load %arg11[%c8_98, %c0_99, %c0_100] : memref<16x16x128xf32, #tpu.memory_space<vmem>>, vector<8x16x128xf32>
      %169 = vector.shape_cast %167 : vector<128xf32> to vector<1x1x128xf32>
      %170 = vector.broadcast %169 : vector<1x1x128xf32> to vector<8x16x128xf32>
      %171 = arith.mulf %168, %170 : vector<8x16x128xf32>
      %172 = arith.addf %165, %171 : vector<8x16x128xf32>
      %c0_101 = arith.constant 0 : index
      %173 = arith.index_cast %37 : i32 to index
      %c2_102 = arith.constant 2 : index
      %c0_103 = arith.constant 0 : index
      %174 = vector.load %arg1[%c0_101, %173, %c2_102, %c0_103] : memref<1x24x24x128xf32, #tpu.memory_space<vmem>>, vector<1x16x16x128xf32>
      %175 = vector.shape_cast %174 : vector<1x16x16x128xf32> to vector<16x16x128xf32>
      %c0_104 = arith.constant 0 : index
      %c0_105 = arith.constant 0 : index
      %c0_106 = arith.constant 0 : index
      %176 = vector.load %arg11[%c0_104, %c0_105, %c0_106] : memref<16x16x128xf32, #tpu.memory_space<vmem>>, vector<16x16x128xf32>
      tpu.vector_store %arg11[%c0_104, %c0_105, %c0_106], %175 {strides = array<i32>} : memref<16x16x128xf32, #tpu.memory_space<vmem>>, vector<16x16x128xf32>,
      %c2_107 = arith.constant 2 : index
      %c0_108 = arith.constant 0 : index
      %177 = vector.load %arg2[%c2_107, %c0_108] : memref<81x128xf32, #tpu.memory_space<vmem>>, vector<1x128xf32>
      %178 = vector.shape_cast %177 : vector<1x128xf32> to vector<128xf32>
      %c0_109 = arith.constant 0 : index
      %c0_110 = arith.constant 0 : index
      %c0_111 = arith.constant 0 : index
      %179 = vector.load %arg11[%c0_109, %c0_110, %c0_111] : memref<16x16x128xf32, #tpu.memory_space<vmem>>, vector<8x16x128xf32>
      %180 = vector.shape_cast %178 : vector<128xf32> to vector<1x1x128xf32>
      %181 = vector.broadcast %180 : vector<1x1x128xf32> to vector<8x16x128xf32>
      %182 = arith.mulf %179, %181 : vector<8x16x128xf32>
      %183 = arith.addf %172, %182 : vector<8x16x128xf32>
      %c11 = arith.constant 11 : index
      %c0_112 = arith.constant 0 : index
      %184 = vector.load %arg2[%c11, %c0_112] : memref<81x128xf32, #tpu.memory_space<vmem>>, vector<1x128xf32>
      %185 = vector.shape_cast %184 : vector<1x128xf32> to vector<128xf32>
      %c1_113 = arith.constant 1 : index
      %c0_114 = arith.constant 0 : index
      %c0_115 = arith.constant 0 : index
      %186 = vector.load %arg11[%c1_113, %c0_114, %c0_115] : memref<16x16x128xf32, #tpu.memory_space<vmem>>, vector<8x16x128xf32>
      %187 = vector.shape_cast %185 : vector<128xf32> to vector<1x1x128xf32>
      %188 = vector.broadcast %187 : vector<1x1x128xf32> to vector<8x16x128xf32>
      %189 = arith.mulf %186, %188 : vector<8x16x128xf32>
      %190 = arith.addf %183, %189 : vector<8x16x128xf32>
      %c20 = arith.constant 20 : index
      %c0_116 = arith.constant 0 : index
      %191 = vector.load %arg2[%c20, %c0_116] : memref<81x128xf32, #tpu.memory_space<vmem>>, vector<1x128xf32>
      %192 = vector.shape_cast %191 : vector<1x128xf32> to vector<128xf32>
      %c2_117 = arith.constant 2 : index
      %c0_118 = arith.constant 0 : index
      %c0_119 = arith.constant 0 : index
      %193 = vector.load %arg11[%c2_117, %c0_118, %c0_119] : memref<16x16x128xf32, #tpu.memory_space<vmem>>, vector<8x16x128xf32>
      %194 = vector.shape_cast %192 : vector<128xf32> to vector<1x1x128xf32>
      %195 = vector.broadcast %194 : vector<1x1x128xf32> to vector<8x16x128xf32>
      %196 = arith.mulf %193, %195 : vector<8x16x128xf32>
      %197 = arith.addf %190, %196 : vector<8x16x128xf32>
      %c29 = arith.constant 29 : index
      %c0_120 = arith.constant 0 : index
      %198 = vector.load %arg2[%c29, %c0_120] : memref<81x128xf32, #tpu.memory_space<vmem>>, vector<1x128xf32>
      %199 = vector.shape_cast %198 : vector<1x128xf32> to vector<128xf32>
      %c3_121 = arith.constant 3 : index
      %c0_122 = arith.constant 0 : index
      %c0_123 = arith.constant 0 : index
      %200 = vector.load %arg11[%c3_121, %c0_122, %c0_123] : memref<16x16x128xf32, #tpu.memory_space<vmem>>, vector<8x16x128xf32>
      %201 = vector.shape_cast %199 : vector<128xf32> to vector<1x1x128xf32>
      %202 = vector.broadcast %201 : vector<1x1x128xf32> to vector<8x16x128xf32>
      %203 = arith.mulf %200, %202 : vector<8x16x128xf32>
      %204 = arith.addf %197, %203 : vector<8x16x128xf32>
      %c38 = arith.constant 38 : index
      %c0_124 = arith.constant 0 : index
      %205 = vector.load %arg2[%c38, %c0_124] : memref<81x128xf32, #tpu.memory_space<vmem>>, vector<1x128xf32>
      %206 = vector.shape_cast %205 : vector<1x128xf32> to vector<128xf32>
      %c4_125 = arith.constant 4 : index
      %c0_126 = arith.constant 0 : index
      %c0_127 = arith.constant 0 : index
      %207 = vector.load %arg11[%c4_125, %c0_126, %c0_127] : memref<16x16x128xf32, #tpu.memory_space<vmem>>, vector<8x16x128xf32>
      %208 = vector.shape_cast %206 : vector<128xf32> to vector<1x1x128xf32>
      %209 = vector.broadcast %208 : vector<1x1x128xf32> to vector<8x16x128xf32>
      %210 = arith.mulf %207, %209 : vector<8x16x128xf32>
      %211 = arith.addf %204, %210 : vector<8x16x128xf32>
      %c47 = arith.constant 47 : index
      %c0_128 = arith.constant 0 : index
      %212 = vector.load %arg2[%c47, %c0_128] : memref<81x128xf32, #tpu.memory_space<vmem>>, vector<1x128xf32>
      %213 = vector.shape_cast %212 : vector<1x128xf32> to vector<128xf32>
      %c5_129 = arith.constant 5 : index
      %c0_130 = arith.constant 0 : index
      %c0_131 = arith.constant 0 : index
      %214 = vector.load %arg11[%c5_129, %c0_130, %c0_131] : memref<16x16x128xf32, #tpu.memory_space<vmem>>, vector<8x16x128xf32>
      %215 = vector.shape_cast %213 : vector<128xf32> to vector<1x1x128xf32>
      %216 = vector.broadcast %215 : vector<1x1x128xf32> to vector<8x16x128xf32>
      %217 = arith.mulf %214, %216 : vector<8x16x128xf32>
      %218 = arith.addf %211, %217 : vector<8x16x128xf32>
      %c56 = arith.constant 56 : index
      %c0_132 = arith.constant 0 : index
      %219 = vector.load %arg2[%c56, %c0_132] : memref<81x128xf32, #tpu.memory_space<vmem>>, vector<1x128xf32>
      %220 = vector.shape_cast %219 : vector<1x128xf32> to vector<128xf32>
      %c6_133 = arith.constant 6 : index
      %c0_134 = arith.constant 0 : index
      %c0_135 = arith.constant 0 : index
      %221 = vector.load %arg11[%c6_133, %c0_134, %c0_135] : memref<16x16x128xf32, #tpu.memory_space<vmem>>, vector<8x16x128xf32>
      %222 = vector.shape_cast %220 : vector<128xf32> to vector<1x1x128xf32>
      %223 = vector.broadcast %222 : vector<1x1x128xf32> to vector<8x16x128xf32>
      %224 = arith.mulf %221, %223 : vector<8x16x128xf32>
      %225 = arith.addf %218, %224 : vector<8x16x128xf32>
      %c65 = arith.constant 65 : index
      %c0_136 = arith.constant 0 : index
      %226 = vector.load %arg2[%c65, %c0_136] : memref<81x128xf32, #tpu.memory_space<vmem>>, vector<1x128xf32>
      %227 = vector.shape_cast %226 : vector<1x128xf32> to vector<128xf32>
      %c7_137 = arith.constant 7 : index
      %c0_138 = arith.constant 0 : index
      %c0_139 = arith.constant 0 : index
      %228 = vector.load %arg11[%c7_137, %c0_138, %c0_139] : memref<16x16x128xf32, #tpu.memory_space<vmem>>, vector<8x16x128xf32>
      %229 = vector.shape_cast %227 : vector<128xf32> to vector<1x1x128xf32>
      %230 = vector.broadcast %229 : vector<1x1x128xf32> to vector<8x16x128xf32>
      %231 = arith.mulf %228, %230 : vector<8x16x128xf32>
      %232 = arith.addf %225, %231 : vector<8x16x128xf32>
      %c74 = arith.constant 74 : index
      %c0_140 = arith.constant 0 : index
      %233 = vector.load %arg2[%c74, %c0_140] : memref<81x128xf32, #tpu.memory_space<vmem>>, vector<1x128xf32>
      %234 = vector.shape_cast %233 : vector<1x128xf32> to vector<128xf32>
      %c8_141 = arith.constant 8 : index
      %c0_142 = arith.constant 0 : index
      %c0_143 = arith.constant 0 : index
      %235 = vector.load %arg11[%c8_141, %c0_142, %c0_143] : memref<16x16x128xf32, #tpu.memory_space<vmem>>, vector<8x16x128xf32>
      %236 = vector.shape_cast %234 : vector<128xf32> to vector<1x1x128xf32>
      %237 = vector.broadcast %236 : vector<1x1x128xf32> to vector<8x16x128xf32>
      %238 = arith.mulf %235, %237 : vector<8x16x128xf32>
      %239 = arith.addf %232, %238 : vector<8x16x128xf32>
      %c0_144 = arith.constant 0 : index
      %240 = arith.index_cast %37 : i32 to index
      %c3_145 = arith.constant 3 : index
      %c0_146 = arith.constant 0 : index
      %241 = vector.load %arg1[%c0_144, %240, %c3_145, %c0_146] : memref<1x24x24x128xf32, #tpu.memory_space<vmem>>, vector<1x16x16x128xf32>
      %242 = vector.shape_cast %241 : vector<1x16x16x128xf32> to vector<16x16x128xf32>
      %c0_147 = arith.constant 0 : index
      %c0_148 = arith.constant 0 : index
      %c0_149 = arith.constant 0 : index
      %243 = vector.load %arg11[%c0_147, %c0_148, %c0_149] : memref<16x16x128xf32, #tpu.memory_space<vmem>>, vector<16x16x128xf32>
      tpu.vector_store %arg11[%c0_147, %c0_148, %c0_149], %242 {strides = array<i32>} : memref<16x16x128xf32, #tpu.memory_space<vmem>>, vector<16x16x128xf32>,
      %c3_150 = arith.constant 3 : index
      %c0_151 = arith.constant 0 : index
      %244 = vector.load %arg2[%c3_150, %c0_151] : memref<81x128xf32, #tpu.memory_space<vmem>>, vector<1x128xf32>
      %245 = vector.shape_cast %244 : vector<1x128xf32> to vector<128xf32>
      %c0_152 = arith.constant 0 : index
      %c0_153 = arith.constant 0 : index
      %c0_154 = arith.constant 0 : index
      %246 = vector.load %arg11[%c0_152, %c0_153, %c0_154] : memref<16x16x128xf32, #tpu.memory_space<vmem>>, vector<8x16x128xf32>
      %247 = vector.shape_cast %245 : vector<128xf32> to vector<1x1x128xf32>
      %248 = vector.broadcast %247 : vector<1x1x128xf32> to vector<8x16x128xf32>
      %249 = arith.mulf %246, %248 : vector<8x16x128xf32>
      %250 = arith.addf %239, %249 : vector<8x16x128xf32>
      %c12 = arith.constant 12 : index
      %c0_155 = arith.constant 0 : index
      %251 = vector.load %arg2[%c12, %c0_155] : memref<81x128xf32, #tpu.memory_space<vmem>>, vector<1x128xf32>
      %252 = vector.shape_cast %251 : vector<1x128xf32> to vector<128xf32>
      %c1_156 = arith.constant 1 : index
      %c0_157 = arith.constant 0 : index
      %c0_158 = arith.constant 0 : index
      %253 = vector.load %arg11[%c1_156, %c0_157, %c0_158] : memref<16x16x128xf32, #tpu.memory_space<vmem>>, vector<8x16x128xf32>
      %254 = vector.shape_cast %252 : vector<128xf32> to vector<1x1x128xf32>
      %255 = vector.broadcast %254 : vector<1x1x128xf32> to vector<8x16x128xf32>
      %256 = arith.mulf %253, %255 : vector<8x16x128xf32>
      %257 = arith.addf %250, %256 : vector<8x16x128xf32>
      %c21 = arith.constant 21 : index
      %c0_159 = arith.constant 0 : index
      %258 = vector.load %arg2[%c21, %c0_159] : memref<81x128xf32, #tpu.memory_space<vmem>>, vector<1x128xf32>
      %259 = vector.shape_cast %258 : vector<1x128xf32> to vector<128xf32>
      %c2_160 = arith.constant 2 : index
      %c0_161 = arith.constant 0 : index
      %c0_162 = arith.constant 0 : index
      %260 = vector.load %arg11[%c2_160, %c0_161, %c0_162] : memref<16x16x128xf32, #tpu.memory_space<vmem>>, vector<8x16x128xf32>
      %261 = vector.shape_cast %259 : vector<128xf32> to vector<1x1x128xf32>
      %262 = vector.broadcast %261 : vector<1x1x128xf32> to vector<8x16x128xf32>
      %263 = arith.mulf %260, %262 : vector<8x16x128xf32>
      %264 = arith.addf %257, %263 : vector<8x16x128xf32>
      %c30 = arith.constant 30 : index
      %c0_163 = arith.constant 0 : index
      %265 = vector.load %arg2[%c30, %c0_163] : memref<81x128xf32, #tpu.memory_space<vmem>>, vector<1x128xf32>
      %266 = vector.shape_cast %265 : vector<1x128xf32> to vector<128xf32>
      %c3_164 = arith.constant 3 : index
      %c0_165 = arith.constant 0 : index
      %c0_166 = arith.constant 0 : index
      %267 = vector.load %arg11[%c3_164, %c0_165, %c0_166] : memref<16x16x128xf32, #tpu.memory_space<vmem>>, vector<8x16x128xf32>
      %268 = vector.shape_cast %266 : vector<128xf32> to vector<1x1x128xf32>
      %269 = vector.broadcast %268 : vector<1x1x128xf32> to vector<8x16x128xf32>
      %270 = arith.mulf %267, %269 : vector<8x16x128xf32>
      %271 = arith.addf %264, %270 : vector<8x16x128xf32>
      %c39 = arith.constant 39 : index
      %c0_167 = arith.constant 0 : index
      %272 = vector.load %arg2[%c39, %c0_167] : memref<81x128xf32, #tpu.memory_space<vmem>>, vector<1x128xf32>
      %273 = vector.shape_cast %272 : vector<1x128xf32> to vector<128xf32>
      %c4_168 = arith.constant 4 : index
      %c0_169 = arith.constant 0 : index
      %c0_170 = arith.constant 0 : index
      %274 = vector.load %arg11[%c4_168, %c0_169, %c0_170] : memref<16x16x128xf32, #tpu.memory_space<vmem>>, vector<8x16x128xf32>
      %275 = vector.shape_cast %273 : vector<128xf32> to vector<1x1x128xf32>
      %276 = vector.broadcast %275 : vector<1x1x128xf32> to vector<8x16x128xf32>
      %277 = arith.mulf %274, %276 : vector<8x16x128xf32>
      %278 = arith.addf %271, %277 : vector<8x16x128xf32>
      %c48 = arith.constant 48 : index
      %c0_171 = arith.constant 0 : index
      %279 = vector.load %arg2[%c48, %c0_171] : memref<81x128xf32, #tpu.memory_space<vmem>>, vector<1x128xf32>
      %280 = vector.shape_cast %279 : vector<1x128xf32> to vector<128xf32>
      %c5_172 = arith.constant 5 : index
      %c0_173 = arith.constant 0 : index
      %c0_174 = arith.constant 0 : index
      %281 = vector.load %arg11[%c5_172, %c0_173, %c0_174] : memref<16x16x128xf32, #tpu.memory_space<vmem>>, vector<8x16x128xf32>
      %282 = vector.shape_cast %280 : vector<128xf32> to vector<1x1x128xf32>
      %283 = vector.broadcast %282 : vector<1x1x128xf32> to vector<8x16x128xf32>
      %284 = arith.mulf %281, %283 : vector<8x16x128xf32>
      %285 = arith.addf %278, %284 : vector<8x16x128xf32>
      %c57 = arith.constant 57 : index
      %c0_175 = arith.constant 0 : index
      %286 = vector.load %arg2[%c57, %c0_175] : memref<81x128xf32, #tpu.memory_space<vmem>>, vector<1x128xf32>
      %287 = vector.shape_cast %286 : vector<1x128xf32> to vector<128xf32>
      %c6_176 = arith.constant 6 : index
      %c0_177 = arith.constant 0 : index
      %c0_178 = arith.constant 0 : index
      %288 = vector.load %arg11[%c6_176, %c0_177, %c0_178] : memref<16x16x128xf32, #tpu.memory_space<vmem>>, vector<8x16x128xf32>
      %289 = vector.shape_cast %287 : vector<128xf32> to vector<1x1x128xf32>
      %290 = vector.broadcast %289 : vector<1x1x128xf32> to vector<8x16x128xf32>
      %291 = arith.mulf %288, %290 : vector<8x16x128xf32>
      %292 = arith.addf %285, %291 : vector<8x16x128xf32>
      %c66 = arith.constant 66 : index
      %c0_179 = arith.constant 0 : index
      %293 = vector.load %arg2[%c66, %c0_179] : memref<81x128xf32, #tpu.memory_space<vmem>>, vector<1x128xf32>
      %294 = vector.shape_cast %293 : vector<1x128xf32> to vector<128xf32>
      %c7_180 = arith.constant 7 : index
      %c0_181 = arith.constant 0 : index
      %c0_182 = arith.constant 0 : index
      %295 = vector.load %arg11[%c7_180, %c0_181, %c0_182] : memref<16x16x128xf32, #tpu.memory_space<vmem>>, vector<8x16x128xf32>
      %296 = vector.shape_cast %294 : vector<128xf32> to vector<1x1x128xf32>
      %297 = vector.broadcast %296 : vector<1x1x128xf32> to vector<8x16x128xf32>
      %298 = arith.mulf %295, %297 : vector<8x16x128xf32>
      %299 = arith.addf %292, %298 : vector<8x16x128xf32>
      %c75 = arith.constant 75 : index
      %c0_183 = arith.constant 0 : index
      %300 = vector.load %arg2[%c75, %c0_183] : memref<81x128xf32, #tpu.memory_space<vmem>>, vector<1x128xf32>
      %301 = vector.shape_cast %300 : vector<1x128xf32> to vector<128xf32>
      %c8_184 = arith.constant 8 : index
      %c0_185 = arith.constant 0 : index
      %c0_186 = arith.constant 0 : index
      %302 = vector.load %arg11[%c8_184, %c0_185, %c0_186] : memref<16x16x128xf32, #tpu.memory_space<vmem>>, vector<8x16x128xf32>
      %303 = vector.shape_cast %301 : vector<128xf32> to vector<1x1x128xf32>
      %304 = vector.broadcast %303 : vector<1x1x128xf32> to vector<8x16x128xf32>
      %305 = arith.mulf %302, %304 : vector<8x16x128xf32>
      %306 = arith.addf %299, %305 : vector<8x16x128xf32>
      %c0_187 = arith.constant 0 : index
      %307 = arith.index_cast %37 : i32 to index
      %c4_188 = arith.constant 4 : index
      %c0_189 = arith.constant 0 : index
      %308 = vector.load %arg1[%c0_187, %307, %c4_188, %c0_189] : memref<1x24x24x128xf32, #tpu.memory_space<vmem>>, vector<1x16x16x128xf32>
      %309 = vector.shape_cast %308 : vector<1x16x16x128xf32> to vector<16x16x128xf32>
      %c0_190 = arith.constant 0 : index
      %c0_191 = arith.constant 0 : index
      %c0_192 = arith.constant 0 : index
      %310 = vector.load %arg11[%c0_190, %c0_191, %c0_192] : memref<16x16x128xf32, #tpu.memory_space<vmem>>, vector<16x16x128xf32>
      tpu.vector_store %arg11[%c0_190, %c0_191, %c0_192], %309 {strides = array<i32>} : memref<16x16x128xf32, #tpu.memory_space<vmem>>, vector<16x16x128xf32>,
      %c4_193 = arith.constant 4 : index
      %c0_194 = arith.constant 0 : index
      %311 = vector.load %arg2[%c4_193, %c0_194] : memref<81x128xf32, #tpu.memory_space<vmem>>, vector<1x128xf32>
      %312 = vector.shape_cast %311 : vector<1x128xf32> to vector<128xf32>
      %c0_195 = arith.constant 0 : index
      %c0_196 = arith.constant 0 : index
      %c0_197 = arith.constant 0 : index
      %313 = vector.load %arg11[%c0_195, %c0_196, %c0_197] : memref<16x16x128xf32, #tpu.memory_space<vmem>>, vector<8x16x128xf32>
      %314 = vector.shape_cast %312 : vector<128xf32> to vector<1x1x128xf32>
      %315 = vector.broadcast %314 : vector<1x1x128xf32> to vector<8x16x128xf32>
      %316 = arith.mulf %313, %315 : vector<8x16x128xf32>
      %317 = arith.addf %306, %316 : vector<8x16x128xf32>
      %c13 = arith.constant 13 : index
      %c0_198 = arith.constant 0 : index
      %318 = vector.load %arg2[%c13, %c0_198] : memref<81x128xf32, #tpu.memory_space<vmem>>, vector<1x128xf32>
      %319 = vector.shape_cast %318 : vector<1x128xf32> to vector<128xf32>
      %c1_199 = arith.constant 1 : index
      %c0_200 = arith.constant 0 : index
      %c0_201 = arith.constant 0 : index
      %320 = vector.load %arg11[%c1_199, %c0_200, %c0_201] : memref<16x16x128xf32, #tpu.memory_space<vmem>>, vector<8x16x128xf32>
      %321 = vector.shape_cast %319 : vector<128xf32> to vector<1x1x128xf32>
      %322 = vector.broadcast %321 : vector<1x1x128xf32> to vector<8x16x128xf32>
      %323 = arith.mulf %320, %322 : vector<8x16x128xf32>
      %324 = arith.addf %317, %323 : vector<8x16x128xf32>
      %c22 = arith.constant 22 : index
      %c0_202 = arith.constant 0 : index
      %325 = vector.load %arg2[%c22, %c0_202] : memref<81x128xf32, #tpu.memory_space<vmem>>, vector<1x128xf32>
      %326 = vector.shape_cast %325 : vector<1x128xf32> to vector<128xf32>
      %c2_203 = arith.constant 2 : index
      %c0_204 = arith.constant 0 : index
      %c0_205 = arith.constant 0 : index
      %327 = vector.load %arg11[%c2_203, %c0_204, %c0_205] : memref<16x16x128xf32, #tpu.memory_space<vmem>>, vector<8x16x128xf32>
      %328 = vector.shape_cast %326 : vector<128xf32> to vector<1x1x128xf32>
      %329 = vector.broadcast %328 : vector<1x1x128xf32> to vector<8x16x128xf32>
      %330 = arith.mulf %327, %329 : vector<8x16x128xf32>
      %331 = arith.addf %324, %330 : vector<8x16x128xf32>
      %c31 = arith.constant 31 : index
      %c0_206 = arith.constant 0 : index
      %332 = vector.load %arg2[%c31, %c0_206] : memref<81x128xf32, #tpu.memory_space<vmem>>, vector<1x128xf32>
      %333 = vector.shape_cast %332 : vector<1x128xf32> to vector<128xf32>
      %c3_207 = arith.constant 3 : index
      %c0_208 = arith.constant 0 : index
      %c0_209 = arith.constant 0 : index
      %334 = vector.load %arg11[%c3_207, %c0_208, %c0_209] : memref<16x16x128xf32, #tpu.memory_space<vmem>>, vector<8x16x128xf32>
      %335 = vector.shape_cast %333 : vector<128xf32> to vector<1x1x128xf32>
      %336 = vector.broadcast %335 : vector<1x1x128xf32> to vector<8x16x128xf32>
      %337 = arith.mulf %334, %336 : vector<8x16x128xf32>
      %338 = arith.addf %331, %337 : vector<8x16x128xf32>
      %c40 = arith.constant 40 : index
      %c0_210 = arith.constant 0 : index
      %339 = vector.load %arg2[%c40, %c0_210] : memref<81x128xf32, #tpu.memory_space<vmem>>, vector<1x128xf32>
      %340 = vector.shape_cast %339 : vector<1x128xf32> to vector<128xf32>
      %c4_211 = arith.constant 4 : index
      %c0_212 = arith.constant 0 : index
      %c0_213 = arith.constant 0 : index
      %341 = vector.load %arg11[%c4_211, %c0_212, %c0_213] : memref<16x16x128xf32, #tpu.memory_space<vmem>>, vector<8x16x128xf32>
      %342 = vector.shape_cast %340 : vector<128xf32> to vector<1x1x128xf32>
      %343 = vector.broadcast %342 : vector<1x1x128xf32> to vector<8x16x128xf32>
      %344 = arith.mulf %341, %343 : vector<8x16x128xf32>
      %345 = arith.addf %338, %344 : vector<8x16x128xf32>
      %c49 = arith.constant 49 : index
      %c0_214 = arith.constant 0 : index
      %346 = vector.load %arg2[%c49, %c0_214] : memref<81x128xf32, #tpu.memory_space<vmem>>, vector<1x128xf32>
      %347 = vector.shape_cast %346 : vector<1x128xf32> to vector<128xf32>
      %c5_215 = arith.constant 5 : index
      %c0_216 = arith.constant 0 : index
      %c0_217 = arith.constant 0 : index
      %348 = vector.load %arg11[%c5_215, %c0_216, %c0_217] : memref<16x16x128xf32, #tpu.memory_space<vmem>>, vector<8x16x128xf32>
      %349 = vector.shape_cast %347 : vector<128xf32> to vector<1x1x128xf32>
      %350 = vector.broadcast %349 : vector<1x1x128xf32> to vector<8x16x128xf32>
      %351 = arith.mulf %348, %350 : vector<8x16x128xf32>
      %352 = arith.addf %345, %351 : vector<8x16x128xf32>
      %c58 = arith.constant 58 : index
      %c0_218 = arith.constant 0 : index
      %353 = vector.load %arg2[%c58, %c0_218] : memref<81x128xf32, #tpu.memory_space<vmem>>, vector<1x128xf32>
      %354 = vector.shape_cast %353 : vector<1x128xf32> to vector<128xf32>
      %c6_219 = arith.constant 6 : index
      %c0_220 = arith.constant 0 : index
      %c0_221 = arith.constant 0 : index
      %355 = vector.load %arg11[%c6_219, %c0_220, %c0_221] : memref<16x16x128xf32, #tpu.memory_space<vmem>>, vector<8x16x128xf32>
      %356 = vector.shape_cast %354 : vector<128xf32> to vector<1x1x128xf32>
      %357 = vector.broadcast %356 : vector<1x1x128xf32> to vector<8x16x128xf32>
      %358 = arith.mulf %355, %357 : vector<8x16x128xf32>
      %359 = arith.addf %352, %358 : vector<8x16x128xf32>
      %c67 = arith.constant 67 : index
      %c0_222 = arith.constant 0 : index
      %360 = vector.load %arg2[%c67, %c0_222] : memref<81x128xf32, #tpu.memory_space<vmem>>, vector<1x128xf32>
      %361 = vector.shape_cast %360 : vector<1x128xf32> to vector<128xf32>
      %c7_223 = arith.constant 7 : index
      %c0_224 = arith.constant 0 : index
      %c0_225 = arith.constant 0 : index
      %362 = vector.load %arg11[%c7_223, %c0_224, %c0_225] : memref<16x16x128xf32, #tpu.memory_space<vmem>>, vector<8x16x128xf32>
      %363 = vector.shape_cast %361 : vector<128xf32> to vector<1x1x128xf32>
      %364 = vector.broadcast %363 : vector<1x1x128xf32> to vector<8x16x128xf32>
      %365 = arith.mulf %362, %364 : vector<8x16x128xf32>
      %366 = arith.addf %359, %365 : vector<8x16x128xf32>
      %c76 = arith.constant 76 : index
      %c0_226 = arith.constant 0 : index
      %367 = vector.load %arg2[%c76, %c0_226] : memref<81x128xf32, #tpu.memory_space<vmem>>, vector<1x128xf32>
      %368 = vector.shape_cast %367 : vector<1x128xf32> to vector<128xf32>
      %c8_227 = arith.constant 8 : index
      %c0_228 = arith.constant 0 : index
      %c0_229 = arith.constant 0 : index
      %369 = vector.load %arg11[%c8_227, %c0_228, %c0_229] : memref<16x16x128xf32, #tpu.memory_space<vmem>>, vector<8x16x128xf32>
      %370 = vector.shape_cast %368 : vector<128xf32> to vector<1x1x128xf32>
      %371 = vector.broadcast %370 : vector<1x1x128xf32> to vector<8x16x128xf32>
      %372 = arith.mulf %369, %371 : vector<8x16x128xf32>
      %373 = arith.addf %366, %372 : vector<8x16x128xf32>
      %c0_230 = arith.constant 0 : index
      %374 = arith.index_cast %37 : i32 to index
      %c5_231 = arith.constant 5 : index
      %c0_232 = arith.constant 0 : index
      %375 = vector.load %arg1[%c0_230, %374, %c5_231, %c0_232] : memref<1x24x24x128xf32, #tpu.memory_space<vmem>>, vector<1x16x16x128xf32>
      %376 = vector.shape_cast %375 : vector<1x16x16x128xf32> to vector<16x16x128xf32>
      %c0_233 = arith.constant 0 : index
      %c0_234 = arith.constant 0 : index
      %c0_235 = arith.constant 0 : index
      %377 = vector.load %arg11[%c0_233, %c0_234, %c0_235] : memref<16x16x128xf32, #tpu.memory_space<vmem>>, vector<16x16x128xf32>
      tpu.vector_store %arg11[%c0_233, %c0_234, %c0_235], %376 {strides = array<i32>} : memref<16x16x128xf32, #tpu.memory_space<vmem>>, vector<16x16x128xf32>,
      %c5_236 = arith.constant 5 : index
      %c0_237 = arith.constant 0 : index
      %378 = vector.load %arg2[%c5_236, %c0_237] : memref<81x128xf32, #tpu.memory_space<vmem>>, vector<1x128xf32>
      %379 = vector.shape_cast %378 : vector<1x128xf32> to vector<128xf32>
      %c0_238 = arith.constant 0 : index
      %c0_239 = arith.constant 0 : index
      %c0_240 = arith.constant 0 : index
      %380 = vector.load %arg11[%c0_238, %c0_239, %c0_240] : memref<16x16x128xf32, #tpu.memory_space<vmem>>, vector<8x16x128xf32>
      %381 = vector.shape_cast %379 : vector<128xf32> to vector<1x1x128xf32>
      %382 = vector.broadcast %381 : vector<1x1x128xf32> to vector<8x16x128xf32>
      %383 = arith.mulf %380, %382 : vector<8x16x128xf32>
      %384 = arith.addf %373, %383 : vector<8x16x128xf32>
      %c14 = arith.constant 14 : index
      %c0_241 = arith.constant 0 : index
      %385 = vector.load %arg2[%c14, %c0_241] : memref<81x128xf32, #tpu.memory_space<vmem>>, vector<1x128xf32>
      %386 = vector.shape_cast %385 : vector<1x128xf32> to vector<128xf32>
      %c1_242 = arith.constant 1 : index
      %c0_243 = arith.constant 0 : index
      %c0_244 = arith.constant 0 : index
      %387 = vector.load %arg11[%c1_242, %c0_243, %c0_244] : memref<16x16x128xf32, #tpu.memory_space<vmem>>, vector<8x16x128xf32>
      %388 = vector.shape_cast %386 : vector<128xf32> to vector<1x1x128xf32>
      %389 = vector.broadcast %388 : vector<1x1x128xf32> to vector<8x16x128xf32>
      %390 = arith.mulf %387, %389 : vector<8x16x128xf32>
      %391 = arith.addf %384, %390 : vector<8x16x128xf32>
      %c23 = arith.constant 23 : index
      %c0_245 = arith.constant 0 : index
      %392 = vector.load %arg2[%c23, %c0_245] : memref<81x128xf32, #tpu.memory_space<vmem>>, vector<1x128xf32>
      %393 = vector.shape_cast %392 : vector<1x128xf32> to vector<128xf32>
      %c2_246 = arith.constant 2 : index
      %c0_247 = arith.constant 0 : index
      %c0_248 = arith.constant 0 : index
      %394 = vector.load %arg11[%c2_246, %c0_247, %c0_248] : memref<16x16x128xf32, #tpu.memory_space<vmem>>, vector<8x16x128xf32>
      %395 = vector.shape_cast %393 : vector<128xf32> to vector<1x1x128xf32>
      %396 = vector.broadcast %395 : vector<1x1x128xf32> to vector<8x16x128xf32>
      %397 = arith.mulf %394, %396 : vector<8x16x128xf32>
      %398 = arith.addf %391, %397 : vector<8x16x128xf32>
      %c32 = arith.constant 32 : index
      %c0_249 = arith.constant 0 : index
      %399 = vector.load %arg2[%c32, %c0_249] : memref<81x128xf32, #tpu.memory_space<vmem>>, vector<1x128xf32>
      %400 = vector.shape_cast %399 : vector<1x128xf32> to vector<128xf32>
      %c3_250 = arith.constant 3 : index
      %c0_251 = arith.constant 0 : index
      %c0_252 = arith.constant 0 : index
      %401 = vector.load %arg11[%c3_250, %c0_251, %c0_252] : memref<16x16x128xf32, #tpu.memory_space<vmem>>, vector<8x16x128xf32>
      %402 = vector.shape_cast %400 : vector<128xf32> to vector<1x1x128xf32>
      %403 = vector.broadcast %402 : vector<1x1x128xf32> to vector<8x16x128xf32>
      %404 = arith.mulf %401, %403 : vector<8x16x128xf32>
      %405 = arith.addf %398, %404 : vector<8x16x128xf32>
      %c41 = arith.constant 41 : index
      %c0_253 = arith.constant 0 : index
      %406 = vector.load %arg2[%c41, %c0_253] : memref<81x128xf32, #tpu.memory_space<vmem>>, vector<1x128xf32>
      %407 = vector.shape_cast %406 : vector<1x128xf32> to vector<128xf32>
      %c4_254 = arith.constant 4 : index
      %c0_255 = arith.constant 0 : index
      %c0_256 = arith.constant 0 : index
      %408 = vector.load %arg11[%c4_254, %c0_255, %c0_256] : memref<16x16x128xf32, #tpu.memory_space<vmem>>, vector<8x16x128xf32>
      %409 = vector.shape_cast %407 : vector<128xf32> to vector<1x1x128xf32>
      %410 = vector.broadcast %409 : vector<1x1x128xf32> to vector<8x16x128xf32>
      %411 = arith.mulf %408, %410 : vector<8x16x128xf32>
      %412 = arith.addf %405, %411 : vector<8x16x128xf32>
      %c50 = arith.constant 50 : index
      %c0_257 = arith.constant 0 : index
      %413 = vector.load %arg2[%c50, %c0_257] : memref<81x128xf32, #tpu.memory_space<vmem>>, vector<1x128xf32>
      %414 = vector.shape_cast %413 : vector<1x128xf32> to vector<128xf32>
      %c5_258 = arith.constant 5 : index
      %c0_259 = arith.constant 0 : index
      %c0_260 = arith.constant 0 : index
      %415 = vector.load %arg11[%c5_258, %c0_259, %c0_260] : memref<16x16x128xf32, #tpu.memory_space<vmem>>, vector<8x16x128xf32>
      %416 = vector.shape_cast %414 : vector<128xf32> to vector<1x1x128xf32>
      %417 = vector.broadcast %416 : vector<1x1x128xf32> to vector<8x16x128xf32>
      %418 = arith.mulf %415, %417 : vector<8x16x128xf32>
      %419 = arith.addf %412, %418 : vector<8x16x128xf32>
      %c59 = arith.constant 59 : index
      %c0_261 = arith.constant 0 : index
      %420 = vector.load %arg2[%c59, %c0_261] : memref<81x128xf32, #tpu.memory_space<vmem>>, vector<1x128xf32>
      %421 = vector.shape_cast %420 : vector<1x128xf32> to vector<128xf32>
      %c6_262 = arith.constant 6 : index
      %c0_263 = arith.constant 0 : index
      %c0_264 = arith.constant 0 : index
      %422 = vector.load %arg11[%c6_262, %c0_263, %c0_264] : memref<16x16x128xf32, #tpu.memory_space<vmem>>, vector<8x16x128xf32>
      %423 = vector.shape_cast %421 : vector<128xf32> to vector<1x1x128xf32>
      %424 = vector.broadcast %423 : vector<1x1x128xf32> to vector<8x16x128xf32>
      %425 = arith.mulf %422, %424 : vector<8x16x128xf32>
      %426 = arith.addf %419, %425 : vector<8x16x128xf32>
      %c68 = arith.constant 68 : index
      %c0_265 = arith.constant 0 : index
      %427 = vector.load %arg2[%c68, %c0_265] : memref<81x128xf32, #tpu.memory_space<vmem>>, vector<1x128xf32>
      %428 = vector.shape_cast %427 : vector<1x128xf32> to vector<128xf32>
      %c7_266 = arith.constant 7 : index
      %c0_267 = arith.constant 0 : index
      %c0_268 = arith.constant 0 : index
      %429 = vector.load %arg11[%c7_266, %c0_267, %c0_268] : memref<16x16x128xf32, #tpu.memory_space<vmem>>, vector<8x16x128xf32>
      %430 = vector.shape_cast %428 : vector<128xf32> to vector<1x1x128xf32>
      %431 = vector.broadcast %430 : vector<1x1x128xf32> to vector<8x16x128xf32>
      %432 = arith.mulf %429, %431 : vector<8x16x128xf32>
      %433 = arith.addf %426, %432 : vector<8x16x128xf32>
      %c77 = arith.constant 77 : index
      %c0_269 = arith.constant 0 : index
      %434 = vector.load %arg2[%c77, %c0_269] : memref<81x128xf32, #tpu.memory_space<vmem>>, vector<1x128xf32>
      %435 = vector.shape_cast %434 : vector<1x128xf32> to vector<128xf32>
      %c8_270 = arith.constant 8 : index
      %c0_271 = arith.constant 0 : index
      %c0_272 = arith.constant 0 : index
      %436 = vector.load %arg11[%c8_270, %c0_271, %c0_272] : memref<16x16x128xf32, #tpu.memory_space<vmem>>, vector<8x16x128xf32>
      %437 = vector.shape_cast %435 : vector<128xf32> to vector<1x1x128xf32>
      %438 = vector.broadcast %437 : vector<1x1x128xf32> to vector<8x16x128xf32>
      %439 = arith.mulf %436, %438 : vector<8x16x128xf32>
      %440 = arith.addf %433, %439 : vector<8x16x128xf32>
      %c0_273 = arith.constant 0 : index
      %441 = arith.index_cast %37 : i32 to index
      %c6_274 = arith.constant 6 : index
      %c0_275 = arith.constant 0 : index
      %442 = vector.load %arg1[%c0_273, %441, %c6_274, %c0_275] : memref<1x24x24x128xf32, #tpu.memory_space<vmem>>, vector<1x16x16x128xf32>
      %443 = vector.shape_cast %442 : vector<1x16x16x128xf32> to vector<16x16x128xf32>
      %c0_276 = arith.constant 0 : index
      %c0_277 = arith.constant 0 : index
      %c0_278 = arith.constant 0 : index
      %444 = vector.load %arg11[%c0_276, %c0_277, %c0_278] : memref<16x16x128xf32, #tpu.memory_space<vmem>>, vector<16x16x128xf32>
      tpu.vector_store %arg11[%c0_276, %c0_277, %c0_278], %443 {strides = array<i32>} : memref<16x16x128xf32, #tpu.memory_space<vmem>>, vector<16x16x128xf32>,
      %c6_279 = arith.constant 6 : index
      %c0_280 = arith.constant 0 : index
      %445 = vector.load %arg2[%c6_279, %c0_280] : memref<81x128xf32, #tpu.memory_space<vmem>>, vector<1x128xf32>
      %446 = vector.shape_cast %445 : vector<1x128xf32> to vector<128xf32>
      %c0_281 = arith.constant 0 : index
      %c0_282 = arith.constant 0 : index
      %c0_283 = arith.constant 0 : index
      %447 = vector.load %arg11[%c0_281, %c0_282, %c0_283] : memref<16x16x128xf32, #tpu.memory_space<vmem>>, vector<8x16x128xf32>
      %448 = vector.shape_cast %446 : vector<128xf32> to vector<1x1x128xf32>
      %449 = vector.broadcast %448 : vector<1x1x128xf32> to vector<8x16x128xf32>
      %450 = arith.mulf %447, %449 : vector<8x16x128xf32>
      %451 = arith.addf %440, %450 : vector<8x16x128xf32>
      %c15 = arith.constant 15 : index
      %c0_284 = arith.constant 0 : index
      %452 = vector.load %arg2[%c15, %c0_284] : memref<81x128xf32, #tpu.memory_space<vmem>>, vector<1x128xf32>
      %453 = vector.shape_cast %452 : vector<1x128xf32> to vector<128xf32>
      %c1_285 = arith.constant 1 : index
      %c0_286 = arith.constant 0 : index
      %c0_287 = arith.constant 0 : index
      %454 = vector.load %arg11[%c1_285, %c0_286, %c0_287] : memref<16x16x128xf32, #tpu.memory_space<vmem>>, vector<8x16x128xf32>
      %455 = vector.shape_cast %453 : vector<128xf32> to vector<1x1x128xf32>
      %456 = vector.broadcast %455 : vector<1x1x128xf32> to vector<8x16x128xf32>
      %457 = arith.mulf %454, %456 : vector<8x16x128xf32>
      %458 = arith.addf %451, %457 : vector<8x16x128xf32>
      %c24 = arith.constant 24 : index
      %c0_288 = arith.constant 0 : index
      %459 = vector.load %arg2[%c24, %c0_288] : memref<81x128xf32, #tpu.memory_space<vmem>>, vector<1x128xf32>
      %460 = vector.shape_cast %459 : vector<1x128xf32> to vector<128xf32>
      %c2_289 = arith.constant 2 : index
      %c0_290 = arith.constant 0 : index
      %c0_291 = arith.constant 0 : index
      %461 = vector.load %arg11[%c2_289, %c0_290, %c0_291] : memref<16x16x128xf32, #tpu.memory_space<vmem>>, vector<8x16x128xf32>
      %462 = vector.shape_cast %460 : vector<128xf32> to vector<1x1x128xf32>
      %463 = vector.broadcast %462 : vector<1x1x128xf32> to vector<8x16x128xf32>
      %464 = arith.mulf %461, %463 : vector<8x16x128xf32>
      %465 = arith.addf %458, %464 : vector<8x16x128xf32>
      %c33 = arith.constant 33 : index
      %c0_292 = arith.constant 0 : index
      %466 = vector.load %arg2[%c33, %c0_292] : memref<81x128xf32, #tpu.memory_space<vmem>>, vector<1x128xf32>
      %467 = vector.shape_cast %466 : vector<1x128xf32> to vector<128xf32>
      %c3_293 = arith.constant 3 : index
      %c0_294 = arith.constant 0 : index
      %c0_295 = arith.constant 0 : index
      %468 = vector.load %arg11[%c3_293, %c0_294, %c0_295] : memref<16x16x128xf32, #tpu.memory_space<vmem>>, vector<8x16x128xf32>
      %469 = vector.shape_cast %467 : vector<128xf32> to vector<1x1x128xf32>
      %470 = vector.broadcast %469 : vector<1x1x128xf32> to vector<8x16x128xf32>
      %471 = arith.mulf %468, %470 : vector<8x16x128xf32>
      %472 = arith.addf %465, %471 : vector<8x16x128xf32>
      %c42 = arith.constant 42 : index
      %c0_296 = arith.constant 0 : index
      %473 = vector.load %arg2[%c42, %c0_296] : memref<81x128xf32, #tpu.memory_space<vmem>>, vector<1x128xf32>
      %474 = vector.shape_cast %473 : vector<1x128xf32> to vector<128xf32>
      %c4_297 = arith.constant 4 : index
      %c0_298 = arith.constant 0 : index
      %c0_299 = arith.constant 0 : index
      %475 = vector.load %arg11[%c4_297, %c0_298, %c0_299] : memref<16x16x128xf32, #tpu.memory_space<vmem>>, vector<8x16x128xf32>
      %476 = vector.shape_cast %474 : vector<128xf32> to vector<1x1x128xf32>
      %477 = vector.broadcast %476 : vector<1x1x128xf32> to vector<8x16x128xf32>
      %478 = arith.mulf %475, %477 : vector<8x16x128xf32>
      %479 = arith.addf %472, %478 : vector<8x16x128xf32>
      %c51 = arith.constant 51 : index
      %c0_300 = arith.constant 0 : index
      %480 = vector.load %arg2[%c51, %c0_300] : memref<81x128xf32, #tpu.memory_space<vmem>>, vector<1x128xf32>
      %481 = vector.shape_cast %480 : vector<1x128xf32> to vector<128xf32>
      %c5_301 = arith.constant 5 : index
      %c0_302 = arith.constant 0 : index
      %c0_303 = arith.constant 0 : index
      %482 = vector.load %arg11[%c5_301, %c0_302, %c0_303] : memref<16x16x128xf32, #tpu.memory_space<vmem>>, vector<8x16x128xf32>
      %483 = vector.shape_cast %481 : vector<128xf32> to vector<1x1x128xf32>
      %484 = vector.broadcast %483 : vector<1x1x128xf32> to vector<8x16x128xf32>
      %485 = arith.mulf %482, %484 : vector<8x16x128xf32>
      %486 = arith.addf %479, %485 : vector<8x16x128xf32>
      %c60 = arith.constant 60 : index
      %c0_304 = arith.constant 0 : index
      %487 = vector.load %arg2[%c60, %c0_304] : memref<81x128xf32, #tpu.memory_space<vmem>>, vector<1x128xf32>
      %488 = vector.shape_cast %487 : vector<1x128xf32> to vector<128xf32>
      %c6_305 = arith.constant 6 : index
      %c0_306 = arith.constant 0 : index
      %c0_307 = arith.constant 0 : index
      %489 = vector.load %arg11[%c6_305, %c0_306, %c0_307] : memref<16x16x128xf32, #tpu.memory_space<vmem>>, vector<8x16x128xf32>
      %490 = vector.shape_cast %488 : vector<128xf32> to vector<1x1x128xf32>
      %491 = vector.broadcast %490 : vector<1x1x128xf32> to vector<8x16x128xf32>
      %492 = arith.mulf %489, %491 : vector<8x16x128xf32>
      %493 = arith.addf %486, %492 : vector<8x16x128xf32>
      %c69 = arith.constant 69 : index
      %c0_308 = arith.constant 0 : index
      %494 = vector.load %arg2[%c69, %c0_308] : memref<81x128xf32, #tpu.memory_space<vmem>>, vector<1x128xf32>
      %495 = vector.shape_cast %494 : vector<1x128xf32> to vector<128xf32>
      %c7_309 = arith.constant 7 : index
      %c0_310 = arith.constant 0 : index
      %c0_311 = arith.constant 0 : index
      %496 = vector.load %arg11[%c7_309, %c0_310, %c0_311] : memref<16x16x128xf32, #tpu.memory_space<vmem>>, vector<8x16x128xf32>
      %497 = vector.shape_cast %495 : vector<128xf32> to vector<1x1x128xf32>
      %498 = vector.broadcast %497 : vector<1x1x128xf32> to vector<8x16x128xf32>
      %499 = arith.mulf %496, %498 : vector<8x16x128xf32>
      %500 = arith.addf %493, %499 : vector<8x16x128xf32>
      %c78 = arith.constant 78 : index
      %c0_312 = arith.constant 0 : index
      %501 = vector.load %arg2[%c78, %c0_312] : memref<81x128xf32, #tpu.memory_space<vmem>>, vector<1x128xf32>
      %502 = vector.shape_cast %501 : vector<1x128xf32> to vector<128xf32>
      %c8_313 = arith.constant 8 : index
      %c0_314 = arith.constant 0 : index
      %c0_315 = arith.constant 0 : index
      %503 = vector.load %arg11[%c8_313, %c0_314, %c0_315] : memref<16x16x128xf32, #tpu.memory_space<vmem>>, vector<8x16x128xf32>
      %504 = vector.shape_cast %502 : vector<128xf32> to vector<1x1x128xf32>
      %505 = vector.broadcast %504 : vector<1x1x128xf32> to vector<8x16x128xf32>
      %506 = arith.mulf %503, %505 : vector<8x16x128xf32>
      %507 = arith.addf %500, %506 : vector<8x16x128xf32>
      %c0_316 = arith.constant 0 : index
      %508 = arith.index_cast %37 : i32 to index
      %c7_317 = arith.constant 7 : index
      %c0_318 = arith.constant 0 : index
      %509 = vector.load %arg1[%c0_316, %508, %c7_317, %c0_318] : memref<1x24x24x128xf32, #tpu.memory_space<vmem>>, vector<1x16x16x128xf32>
      %510 = vector.shape_cast %509 : vector<1x16x16x128xf32> to vector<16x16x128xf32>
      %c0_319 = arith.constant 0 : index
      %c0_320 = arith.constant 0 : index
      %c0_321 = arith.constant 0 : index
      %511 = vector.load %arg11[%c0_319, %c0_320, %c0_321] : memref<16x16x128xf32, #tpu.memory_space<vmem>>, vector<16x16x128xf32>
      tpu.vector_store %arg11[%c0_319, %c0_320, %c0_321], %510 {strides = array<i32>} : memref<16x16x128xf32, #tpu.memory_space<vmem>>, vector<16x16x128xf32>,
      %c7_322 = arith.constant 7 : index
      %c0_323 = arith.constant 0 : index
      %512 = vector.load %arg2[%c7_322, %c0_323] : memref<81x128xf32, #tpu.memory_space<vmem>>, vector<1x128xf32>
      %513 = vector.shape_cast %512 : vector<1x128xf32> to vector<128xf32>
      %c0_324 = arith.constant 0 : index
      %c0_325 = arith.constant 0 : index
      %c0_326 = arith.constant 0 : index
      %514 = vector.load %arg11[%c0_324, %c0_325, %c0_326] : memref<16x16x128xf32, #tpu.memory_space<vmem>>, vector<8x16x128xf32>
      %515 = vector.shape_cast %513 : vector<128xf32> to vector<1x1x128xf32>
      %516 = vector.broadcast %515 : vector<1x1x128xf32> to vector<8x16x128xf32>
      %517 = arith.mulf %514, %516 : vector<8x16x128xf32>
      %518 = arith.addf %507, %517 : vector<8x16x128xf32>
      %c16 = arith.constant 16 : index
      %c0_327 = arith.constant 0 : index
      %519 = vector.load %arg2[%c16, %c0_327] : memref<81x128xf32, #tpu.memory_space<vmem>>, vector<1x128xf32>
      %520 = vector.shape_cast %519 : vector<1x128xf32> to vector<128xf32>
      %c1_328 = arith.constant 1 : index
      %c0_329 = arith.constant 0 : index
      %c0_330 = arith.constant 0 : index
      %521 = vector.load %arg11[%c1_328, %c0_329, %c0_330] : memref<16x16x128xf32, #tpu.memory_space<vmem>>, vector<8x16x128xf32>
      %522 = vector.shape_cast %520 : vector<128xf32> to vector<1x1x128xf32>
      %523 = vector.broadcast %522 : vector<1x1x128xf32> to vector<8x16x128xf32>
      %524 = arith.mulf %521, %523 : vector<8x16x128xf32>
      %525 = arith.addf %518, %524 : vector<8x16x128xf32>
      %c25 = arith.constant 25 : index
      %c0_331 = arith.constant 0 : index
      %526 = vector.load %arg2[%c25, %c0_331] : memref<81x128xf32, #tpu.memory_space<vmem>>, vector<1x128xf32>
      %527 = vector.shape_cast %526 : vector<1x128xf32> to vector<128xf32>
      %c2_332 = arith.constant 2 : index
      %c0_333 = arith.constant 0 : index
      %c0_334 = arith.constant 0 : index
      %528 = vector.load %arg11[%c2_332, %c0_333, %c0_334] : memref<16x16x128xf32, #tpu.memory_space<vmem>>, vector<8x16x128xf32>
      %529 = vector.shape_cast %527 : vector<128xf32> to vector<1x1x128xf32>
      %530 = vector.broadcast %529 : vector<1x1x128xf32> to vector<8x16x128xf32>
      %531 = arith.mulf %528, %530 : vector<8x16x128xf32>
      %532 = arith.addf %525, %531 : vector<8x16x128xf32>
      %c34 = arith.constant 34 : index
      %c0_335 = arith.constant 0 : index
      %533 = vector.load %arg2[%c34, %c0_335] : memref<81x128xf32, #tpu.memory_space<vmem>>, vector<1x128xf32>
      %534 = vector.shape_cast %533 : vector<1x128xf32> to vector<128xf32>
      %c3_336 = arith.constant 3 : index
      %c0_337 = arith.constant 0 : index
      %c0_338 = arith.constant 0 : index
      %535 = vector.load %arg11[%c3_336, %c0_337, %c0_338] : memref<16x16x128xf32, #tpu.memory_space<vmem>>, vector<8x16x128xf32>
      %536 = vector.shape_cast %534 : vector<128xf32> to vector<1x1x128xf32>
      %537 = vector.broadcast %536 : vector<1x1x128xf32> to vector<8x16x128xf32>
      %538 = arith.mulf %535, %537 : vector<8x16x128xf32>
      %539 = arith.addf %532, %538 : vector<8x16x128xf32>
      %c43 = arith.constant 43 : index
      %c0_339 = arith.constant 0 : index
      %540 = vector.load %arg2[%c43, %c0_339] : memref<81x128xf32, #tpu.memory_space<vmem>>, vector<1x128xf32>
      %541 = vector.shape_cast %540 : vector<1x128xf32> to vector<128xf32>
      %c4_340 = arith.constant 4 : index
      %c0_341 = arith.constant 0 : index
      %c0_342 = arith.constant 0 : index
      %542 = vector.load %arg11[%c4_340, %c0_341, %c0_342] : memref<16x16x128xf32, #tpu.memory_space<vmem>>, vector<8x16x128xf32>
      %543 = vector.shape_cast %541 : vector<128xf32> to vector<1x1x128xf32>
      %544 = vector.broadcast %543 : vector<1x1x128xf32> to vector<8x16x128xf32>
      %545 = arith.mulf %542, %544 : vector<8x16x128xf32>
      %546 = arith.addf %539, %545 : vector<8x16x128xf32>
      %c52 = arith.constant 52 : index
      %c0_343 = arith.constant 0 : index
      %547 = vector.load %arg2[%c52, %c0_343] : memref<81x128xf32, #tpu.memory_space<vmem>>, vector<1x128xf32>
      %548 = vector.shape_cast %547 : vector<1x128xf32> to vector<128xf32>
      %c5_344 = arith.constant 5 : index
      %c0_345 = arith.constant 0 : index
      %c0_346 = arith.constant 0 : index
      %549 = vector.load %arg11[%c5_344, %c0_345, %c0_346] : memref<16x16x128xf32, #tpu.memory_space<vmem>>, vector<8x16x128xf32>
      %550 = vector.shape_cast %548 : vector<128xf32> to vector<1x1x128xf32>
      %551 = vector.broadcast %550 : vector<1x1x128xf32> to vector<8x16x128xf32>
      %552 = arith.mulf %549, %551 : vector<8x16x128xf32>
      %553 = arith.addf %546, %552 : vector<8x16x128xf32>
      %c61 = arith.constant 61 : index
      %c0_347 = arith.constant 0 : index
      %554 = vector.load %arg2[%c61, %c0_347] : memref<81x128xf32, #tpu.memory_space<vmem>>, vector<1x128xf32>
      %555 = vector.shape_cast %554 : vector<1x128xf32> to vector<128xf32>
      %c6_348 = arith.constant 6 : index
      %c0_349 = arith.constant 0 : index
      %c0_350 = arith.constant 0 : index
      %556 = vector.load %arg11[%c6_348, %c0_349, %c0_350] : memref<16x16x128xf32, #tpu.memory_space<vmem>>, vector<8x16x128xf32>
      %557 = vector.shape_cast %555 : vector<128xf32> to vector<1x1x128xf32>
      %558 = vector.broadcast %557 : vector<1x1x128xf32> to vector<8x16x128xf32>
      %559 = arith.mulf %556, %558 : vector<8x16x128xf32>
      %560 = arith.addf %553, %559 : vector<8x16x128xf32>
      %c70 = arith.constant 70 : index
      %c0_351 = arith.constant 0 : index
      %561 = vector.load %arg2[%c70, %c0_351] : memref<81x128xf32, #tpu.memory_space<vmem>>, vector<1x128xf32>
      %562 = vector.shape_cast %561 : vector<1x128xf32> to vector<128xf32>
      %c7_352 = arith.constant 7 : index
      %c0_353 = arith.constant 0 : index
      %c0_354 = arith.constant 0 : index
      %563 = vector.load %arg11[%c7_352, %c0_353, %c0_354] : memref<16x16x128xf32, #tpu.memory_space<vmem>>, vector<8x16x128xf32>
      %564 = vector.shape_cast %562 : vector<128xf32> to vector<1x1x128xf32>
      %565 = vector.broadcast %564 : vector<1x1x128xf32> to vector<8x16x128xf32>
      %566 = arith.mulf %563, %565 : vector<8x16x128xf32>
      %567 = arith.addf %560, %566 : vector<8x16x128xf32>
      %c79 = arith.constant 79 : index
      %c0_355 = arith.constant 0 : index
      %568 = vector.load %arg2[%c79, %c0_355] : memref<81x128xf32, #tpu.memory_space<vmem>>, vector<1x128xf32>
      %569 = vector.shape_cast %568 : vector<1x128xf32> to vector<128xf32>
      %c8_356 = arith.constant 8 : index
      %c0_357 = arith.constant 0 : index
      %c0_358 = arith.constant 0 : index
      %570 = vector.load %arg11[%c8_356, %c0_357, %c0_358] : memref<16x16x128xf32, #tpu.memory_space<vmem>>, vector<8x16x128xf32>
      %571 = vector.shape_cast %569 : vector<128xf32> to vector<1x1x128xf32>
      %572 = vector.broadcast %571 : vector<1x1x128xf32> to vector<8x16x128xf32>
      %573 = arith.mulf %570, %572 : vector<8x16x128xf32>
      %574 = arith.addf %567, %573 : vector<8x16x128xf32>
      %c0_359 = arith.constant 0 : index
      %575 = arith.index_cast %37 : i32 to index
      %c8_360 = arith.constant 8 : index
      %c0_361 = arith.constant 0 : index
      %576 = vector.load %arg1[%c0_359, %575, %c8_360, %c0_361] : memref<1x24x24x128xf32, #tpu.memory_space<vmem>>, vector<1x16x16x128xf32>
      %577 = vector.shape_cast %576 : vector<1x16x16x128xf32> to vector<16x16x128xf32>
      %c0_362 = arith.constant 0 : index
      %c0_363 = arith.constant 0 : index
      %c0_364 = arith.constant 0 : index
      %578 = vector.load %arg11[%c0_362, %c0_363, %c0_364] : memref<16x16x128xf32, #tpu.memory_space<vmem>>, vector<16x16x128xf32>
      tpu.vector_store %arg11[%c0_362, %c0_363, %c0_364], %577 {strides = array<i32>} : memref<16x16x128xf32, #tpu.memory_space<vmem>>, vector<16x16x128xf32>,
      %c8_365 = arith.constant 8 : index
      %c0_366 = arith.constant 0 : index
      %579 = vector.load %arg2[%c8_365, %c0_366] : memref<81x128xf32, #tpu.memory_space<vmem>>, vector<1x128xf32>
      %580 = vector.shape_cast %579 : vector<1x128xf32> to vector<128xf32>
      %c0_367 = arith.constant 0 : index
      %c0_368 = arith.constant 0 : index
      %c0_369 = arith.constant 0 : index
      %581 = vector.load %arg11[%c0_367, %c0_368, %c0_369] : memref<16x16x128xf32, #tpu.memory_space<vmem>>, vector<8x16x128xf32>
      %582 = vector.shape_cast %580 : vector<128xf32> to vector<1x1x128xf32>
      %583 = vector.broadcast %582 : vector<1x1x128xf32> to vector<8x16x128xf32>
      %584 = arith.mulf %581, %583 : vector<8x16x128xf32>
      %585 = arith.addf %574, %584 : vector<8x16x128xf32>
      %c17 = arith.constant 17 : index
      %c0_370 = arith.constant 0 : index
      %586 = vector.load %arg2[%c17, %c0_370] : memref<81x128xf32, #tpu.memory_space<vmem>>, vector<1x128xf32>
      %587 = vector.shape_cast %586 : vector<1x128xf32> to vector<128xf32>
      %c1_371 = arith.constant 1 : index
      %c0_372 = arith.constant 0 : index
      %c0_373 = arith.constant 0 : index
      %588 = vector.load %arg11[%c1_371, %c0_372, %c0_373] : memref<16x16x128xf32, #tpu.memory_space<vmem>>, vector<8x16x128xf32>
      %589 = vector.shape_cast %587 : vector<128xf32> to vector<1x1x128xf32>
      %590 = vector.broadcast %589 : vector<1x1x128xf32> to vector<8x16x128xf32>
      %591 = arith.mulf %588, %590 : vector<8x16x128xf32>
      %592 = arith.addf %585, %591 : vector<8x16x128xf32>
      %c26 = arith.constant 26 : index
      %c0_374 = arith.constant 0 : index
      %593 = vector.load %arg2[%c26, %c0_374] : memref<81x128xf32, #tpu.memory_space<vmem>>, vector<1x128xf32>
      %594 = vector.shape_cast %593 : vector<1x128xf32> to vector<128xf32>
      %c2_375 = arith.constant 2 : index
      %c0_376 = arith.constant 0 : index
      %c0_377 = arith.constant 0 : index
      %595 = vector.load %arg11[%c2_375, %c0_376, %c0_377] : memref<16x16x128xf32, #tpu.memory_space<vmem>>, vector<8x16x128xf32>
      %596 = vector.shape_cast %594 : vector<128xf32> to vector<1x1x128xf32>
      %597 = vector.broadcast %596 : vector<1x1x128xf32> to vector<8x16x128xf32>
      %598 = arith.mulf %595, %597 : vector<8x16x128xf32>
      %599 = arith.addf %592, %598 : vector<8x16x128xf32>
      %c35 = arith.constant 35 : index
      %c0_378 = arith.constant 0 : index
      %600 = vector.load %arg2[%c35, %c0_378] : memref<81x128xf32, #tpu.memory_space<vmem>>, vector<1x128xf32>
      %601 = vector.shape_cast %600 : vector<1x128xf32> to vector<128xf32>
      %c3_379 = arith.constant 3 : index
      %c0_380 = arith.constant 0 : index
      %c0_381 = arith.constant 0 : index
      %602 = vector.load %arg11[%c3_379, %c0_380, %c0_381] : memref<16x16x128xf32, #tpu.memory_space<vmem>>, vector<8x16x128xf32>
      %603 = vector.shape_cast %601 : vector<128xf32> to vector<1x1x128xf32>
      %604 = vector.broadcast %603 : vector<1x1x128xf32> to vector<8x16x128xf32>
      %605 = arith.mulf %602, %604 : vector<8x16x128xf32>
      %606 = arith.addf %599, %605 : vector<8x16x128xf32>
      %c44 = arith.constant 44 : index
      %c0_382 = arith.constant 0 : index
      %607 = vector.load %arg2[%c44, %c0_382] : memref<81x128xf32, #tpu.memory_space<vmem>>, vector<1x128xf32>
      %608 = vector.shape_cast %607 : vector<1x128xf32> to vector<128xf32>
      %c4_383 = arith.constant 4 : index
      %c0_384 = arith.constant 0 : index
      %c0_385 = arith.constant 0 : index
      %609 = vector.load %arg11[%c4_383, %c0_384, %c0_385] : memref<16x16x128xf32, #tpu.memory_space<vmem>>, vector<8x16x128xf32>
      %610 = vector.shape_cast %608 : vector<128xf32> to vector<1x1x128xf32>
      %611 = vector.broadcast %610 : vector<1x1x128xf32> to vector<8x16x128xf32>
      %612 = arith.mulf %609, %611 : vector<8x16x128xf32>
      %613 = arith.addf %606, %612 : vector<8x16x128xf32>
      %c53 = arith.constant 53 : index
      %c0_386 = arith.constant 0 : index
      %614 = vector.load %arg2[%c53, %c0_386] : memref<81x128xf32, #tpu.memory_space<vmem>>, vector<1x128xf32>
      %615 = vector.shape_cast %614 : vector<1x128xf32> to vector<128xf32>
      %c5_387 = arith.constant 5 : index
      %c0_388 = arith.constant 0 : index
      %c0_389 = arith.constant 0 : index
      %616 = vector.load %arg11[%c5_387, %c0_388, %c0_389] : memref<16x16x128xf32, #tpu.memory_space<vmem>>, vector<8x16x128xf32>
      %617 = vector.shape_cast %615 : vector<128xf32> to vector<1x1x128xf32>
      %618 = vector.broadcast %617 : vector<1x1x128xf32> to vector<8x16x128xf32>
      %619 = arith.mulf %616, %618 : vector<8x16x128xf32>
      %620 = arith.addf %613, %619 : vector<8x16x128xf32>
      %c62 = arith.constant 62 : index
      %c0_390 = arith.constant 0 : index
      %621 = vector.load %arg2[%c62, %c0_390] : memref<81x128xf32, #tpu.memory_space<vmem>>, vector<1x128xf32>
      %622 = vector.shape_cast %621 : vector<1x128xf32> to vector<128xf32>
      %c6_391 = arith.constant 6 : index
      %c0_392 = arith.constant 0 : index
      %c0_393 = arith.constant 0 : index
      %623 = vector.load %arg11[%c6_391, %c0_392, %c0_393] : memref<16x16x128xf32, #tpu.memory_space<vmem>>, vector<8x16x128xf32>
      %624 = vector.shape_cast %622 : vector<128xf32> to vector<1x1x128xf32>
      %625 = vector.broadcast %624 : vector<1x1x128xf32> to vector<8x16x128xf32>
      %626 = arith.mulf %623, %625 : vector<8x16x128xf32>
      %627 = arith.addf %620, %626 : vector<8x16x128xf32>
      %c71 = arith.constant 71 : index
      %c0_394 = arith.constant 0 : index
      %628 = vector.load %arg2[%c71, %c0_394] : memref<81x128xf32, #tpu.memory_space<vmem>>, vector<1x128xf32>
      %629 = vector.shape_cast %628 : vector<1x128xf32> to vector<128xf32>
      %c7_395 = arith.constant 7 : index
      %c0_396 = arith.constant 0 : index
      %c0_397 = arith.constant 0 : index
      %630 = vector.load %arg11[%c7_395, %c0_396, %c0_397] : memref<16x16x128xf32, #tpu.memory_space<vmem>>, vector<8x16x128xf32>
      %631 = vector.shape_cast %629 : vector<128xf32> to vector<1x1x128xf32>
      %632 = vector.broadcast %631 : vector<1x1x128xf32> to vector<8x16x128xf32>
      %633 = arith.mulf %630, %632 : vector<8x16x128xf32>
      %634 = arith.addf %627, %633 : vector<8x16x128xf32>
      %c80 = arith.constant 80 : index
      %c0_398 = arith.constant 0 : index
      %635 = vector.load %arg2[%c80, %c0_398] : memref<81x128xf32, #tpu.memory_space<vmem>>, vector<1x128xf32>
      %636 = vector.shape_cast %635 : vector<1x128xf32> to vector<128xf32>
      %c8_399 = arith.constant 8 : index
      %c0_400 = arith.constant 0 : index
      %c0_401 = arith.constant 0 : index
      %637 = vector.load %arg11[%c8_399, %c0_400, %c0_401] : memref<16x16x128xf32, #tpu.memory_space<vmem>>, vector<8x16x128xf32>
      %638 = vector.shape_cast %636 : vector<128xf32> to vector<1x1x128xf32>
      %639 = vector.broadcast %638 : vector<1x1x128xf32> to vector<8x16x128xf32>
      %640 = arith.mulf %637, %639 : vector<8x16x128xf32>
      %641 = arith.addf %634, %640 : vector<8x16x128xf32>
      %642 = vector.shape_cast %641 : vector<8x16x128xf32> to vector<128x128xf32>
      %c0_402 = arith.constant 0 : index
      %c0_403 = arith.constant 0 : index
      %643 = vector.load %arg3[%c0_402, %c0_403] : memref<128x128xf32, #tpu.memory_space<vmem>>, vector<128x128xf32>
      %cst_404 = arith.constant dense<0.000000e+00> : vector<128x128xf32>
      %644 = tpu.matmul %642, %643, %cst_404 {dimension_numbers = #tpu.dot_dimension_numbers<[1], [0], [0], [1], [0, 0, 1, 1], [], []>} : vector<128x128xf32>, vector<128x128xf32>, vector<128x128xf32> -> vector<128x128xf32>
      %c0_405 = arith.constant 0 : index
      %c0_406 = arith.constant 0 : index
      %645 = vector.load %arg4[%c0_405, %c0_406] : memref<1x128xf32, #tpu.memory_space<vmem>>, vector<1x128xf32>
      %646 = vector.shape_cast %645 : vector<1x128xf32> to vector<128xf32>
      %647 = vector.shape_cast %646 : vector<128xf32> to vector<1x128xf32>
      %648 = vector.broadcast %647 : vector<1x128xf32> to vector<128x128xf32>
      %649 = arith.addf %644, %648 : vector<128x128xf32>
      %c128_i32 = arith.constant 128 : i32
      %650 = arith.muli %arg12, %c128_i32 : i32
      %651 = tpu.assume_multiple %650, 128 : i32
      %c0_407 = arith.constant 0 : index
      %652 = arith.index_cast %651 : i32 to index
      %c0_408 = arith.constant 0 : index
      %653 = vector.load %arg10[%c0_407, %652, %c0_408] : memref<1x256x128xf32, #tpu.memory_space<vmem>>, vector<1x128x128xf32>
      %654 = vector.shape_cast %653 : vector<1x128x128xf32> to vector<128x128xf32>
      %655 = vector.shape_cast %649 : vector<128x128xf32> to vector<1x128x128xf32>
      tpu.vector_store %arg10[%c0_407, %652, %c0_408], %655 {strides = array<i32>} : memref<1x256x128xf32, #tpu.memory_space<vmem>>, vector<1x128x128xf32>,
      %cst_409 = arith.constant dense<0.000000e+00> : vector<128xf32>
      %656 = vector.multi_reduction <add>, %649, %cst_409 [0] : vector<128x128xf32> to vector<128xf32>
      %657 = vector.shape_cast %656 : vector<128xf32> to vector<1x128xf32>
      %658 = arith.addf %arg13, %657 : vector<1x128xf32>
      scf.yield %658 : vector<1x128xf32>
    }
    %c2_i32_0 = arith.constant 2 : i32
    %cst_1 = arith.constant 3.906250e-03 : f32
    %3 = vector.broadcast %cst_1 : f32 to vector<1x128xf32>
    %4 = arith.mulf %2, %3 : vector<1x128xf32>
    %c0 = arith.constant 0 : index
    %c0_2 = arith.constant 0 : index
    %5 = vector.load %arg5[%c0, %c0_2] : memref<128x32xf32, #tpu.memory_space<vmem>>, vector<128x32xf32>
    %cst_3 = arith.constant dense<0.000000e+00> : vector<1x32xf32>
    %6 = tpu.matmul %4, %5, %cst_3 {dimension_numbers = #tpu.dot_dimension_numbers<[1], [0], [0], [1], [0, 0, 1, 1], [], []>} : vector<1x128xf32>, vector<128x32xf32>, vector<1x32xf32> -> vector<1x32xf32>
    %c0_4 = arith.constant 0 : index
    %c0_5 = arith.constant 0 : index
    %7 = vector.load %arg6[%c0_4, %c0_5] : memref<1x32xf32, #tpu.memory_space<vmem>>, vector<1x32xf32>
    %8 = vector.shape_cast %7 : vector<1x32xf32> to vector<32xf32>
    %9 = vector.shape_cast %8 : vector<32xf32> to vector<1x32xf32>
    %10 = arith.addf %6, %9 : vector<1x32xf32>
    %cst_6 = arith.constant 0.000000e+00 : f32
    %11 = vector.broadcast %cst_6 : f32 to vector<1x32xf32>
    %12 = arith.maximumf %10, %11 : vector<1x32xf32>
    %c0_7 = arith.constant 0 : index
    %c0_8 = arith.constant 0 : index
    %13 = vector.load %arg7[%c0_7, %c0_8] : memref<32x128xf32, #tpu.memory_space<vmem>>, vector<32x128xf32>
    %cst_9 = arith.constant dense<0.000000e+00> : vector<1x128xf32>
    %14 = tpu.matmul %12, %13, %cst_9 {dimension_numbers = #tpu.dot_dimension_numbers<[1], [0], [0], [1], [0, 0, 1, 1], [], []>} : vector<1x32xf32>, vector<32x128xf32>, vector<1x128xf32> -> vector<1x128xf32>
    %c0_10 = arith.constant 0 : index
    %c0_11 = arith.constant 0 : index
    %15 = vector.load %arg8[%c0_10, %c0_11] : memref<1x128xf32, #tpu.memory_space<vmem>>, vector<1x128xf32>
    %16 = vector.shape_cast %15 : vector<1x128xf32> to vector<128xf32>
    %17 = vector.shape_cast %16 : vector<128xf32> to vector<1x128xf32>
    %18 = arith.addf %14, %17 : vector<1x128xf32>
    %19 = arith.negf %18 : vector<1x128xf32>
    %20 = math.exp %19 : vector<1x128xf32>
    %cst_12 = arith.constant 1.000000e+00 : f32
    %21 = vector.broadcast %cst_12 : f32 to vector<1x128xf32>
    %22 = arith.addf %21, %20 : vector<1x128xf32>
    %23 = arith.divf %21, %22 : vector<1x128xf32>
    %24 = math.exp %23 : vector<1x128xf32>
    %c0_13 = arith.constant 0 : index
    %c0_14 = arith.constant 0 : index
    %25 = vector.load %arg9[%c0_13, %c0_14] : memref<128x128xf32, #tpu.memory_space<vmem>>, vector<128x128xf32>
    %cst_15 = arith.constant dense<0.000000e+00> : vector<1x128xf32>
    %26 = tpu.matmul %24, %25, %cst_15 {dimension_numbers = #tpu.dot_dimension_numbers<[1], [0], [0], [1], [0, 0, 1, 1], [], []>} : vector<1x128xf32>, vector<128x128xf32>, vector<1x128xf32> -> vector<1x128xf32>
    %27 = tpu.reciprocal %26 : vector<1x128xf32> -> vector<1x128xf32>
    %28 = arith.mulf %24, %27 : vector<1x128xf32>
    %c0_16 = arith.constant 0 : index
    %c0_17 = arith.constant 0 : index
    %c0_18 = arith.constant 0 : index
    %29 = vector.load %arg10[%c0_16, %c0_17, %c0_18] : memref<1x256x128xf32, #tpu.memory_space<vmem>>, vector<1x256x128xf32>
    %30 = vector.shape_cast %29 : vector<1x256x128xf32> to vector<256x128xf32>
    %31 = vector.broadcast %28 : vector<1x128xf32> to vector<256x128xf32>
    %32 = arith.mulf %30, %31 : vector<256x128xf32>
    %c0_19 = arith.constant 0 : index
    %c0_20 = arith.constant 0 : index
    %c0_21 = arith.constant 0 : index
    %33 = vector.load %arg10[%c0_19, %c0_20, %c0_21] : memref<1x256x128xf32, #tpu.memory_space<vmem>>, vector<1x256x128xf32>
    %34 = vector.shape_cast %33 : vector<1x256x128xf32> to vector<256x128xf32>
    %35 = vector.shape_cast %32 : vector<256x128xf32> to vector<1x256x128xf32>
    tpu.vector_store %arg10[%c0_19, %c0_20, %c0_21], %35 {strides = array<i32>} : memref<1x256x128xf32, #tpu.memory_space<vmem>>, vector<1x256x128xf32>,
    return
  }
  func.func @transform_0(%arg0: i32) -> (i32, i32, i32, i32) {
    %c0_i32 = arith.constant 0 : i32
    %c0_i32_0 = arith.constant 0 : i32
    %c0_i32_1 = arith.constant 0 : i32
    %c0_i32_2 = arith.constant 0 : i32
    return %arg0, %c0_i32, %c0_i32_0, %c0_i32_1 : i32, i32, i32, i32
  }
  func.func @transform_1(%arg0: i32) -> (i32, i32) {
    %c0_i32 = arith.constant 0 : i32
    %c0_i32_0 = arith.constant 0 : i32
    %c0_i32_1 = arith.constant 0 : i32
    return %c0_i32, %c0_i32_0 : i32, i32
  }
  func.func @transform_2(%arg0: i32) -> (i32, i32) {
    %c0_i32 = arith.constant 0 : i32
    %c0_i32_0 = arith.constant 0 : i32
    %c0_i32_1 = arith.constant 0 : i32
    return %c0_i32, %c0_i32_0 : i32, i32
  }
  func.func @transform_3(%arg0: i32) -> (i32, i32) {
    %c0_i32 = arith.constant 0 : i32
    %c0_i32_0 = arith.constant 0 : i32
    %c0_i32_1 = arith.constant 0 : i32
    return %c0_i32, %c0_i32_0 : i32, i32
  }
  func.func @transform_4(%arg0: i32) -> (i32, i32) {
    %c0_i32 = arith.constant 0 : i32
    %c0_i32_0 = arith.constant 0 : i32
    %c0_i32_1 = arith.constant 0 : i32
    return %c0_i32, %c0_i32_0 : i32, i32
  }
  func.func @transform_5(%arg0: i32) -> (i32, i32) {
    %c0_i32 = arith.constant 0 : i32
    %c0_i32_0 = arith.constant 0 : i32
    %c0_i32_1 = arith.constant 0 : i32
    return %c0_i32, %c0_i32_0 : i32, i32
  }
  func.func @transform_6(%arg0: i32) -> (i32, i32) {
    %c0_i32 = arith.constant 0 : i32
    %c0_i32_0 = arith.constant 0 : i32
    %c0_i32_1 = arith.constant 0 : i32
    return %c0_i32, %c0_i32_0 : i32, i32
  }
  func.func @transform_7(%arg0: i32) -> (i32, i32) {
    %c0_i32 = arith.constant 0 : i32
    %c0_i32_0 = arith.constant 0 : i32
    %c0_i32_1 = arith.constant 0 : i32
    return %c0_i32, %c0_i32_0 : i32, i32
  }
  func.func @transform_8(%arg0: i32) -> (i32, i32) {
    %c0_i32 = arith.constant 0 : i32
    %c0_i32_0 = arith.constant 0 : i32
    %c0_i32_1 = arith.constant 0 : i32
    return %c0_i32, %c0_i32_0 : i32, i32
  }
  func.func @transform_9(%arg0: i32) -> (i32, i32, i32) {
    %c0_i32 = arith.constant 0 : i32
    %c0_i32_0 = arith.constant 0 : i32
    %c0_i32_1 = arith.constant 0 : i32
    return %arg0, %c0_i32, %c0_i32_0 : i32, i32, i32
  }
}

</mosaic_0001>

<llo_original>
// kernel: tpu_custom_call.1
$region0: #{tpu_custom_call.1}
  #allocation0 [shape = 'u32[]', space=smem, size = 0x4, offset = 0x4, fixed_abs, tag = 'smem constant byte address 0x4 - core index']
  #allocation1 [shape = 'u32[144,128]{1,0:T(1,128)}', space=vmem, size = 0x12000, scoped, tag = 'internal scratch']
  #allocation2 [shape = 'f32[16,16,128]{2,1,0:T(8,128)}', space=vmem, size = 0x20000, scoped, tag = 'scratch operand']
  %s0 = inlined_call_operand.hbm [shape: f32[1,24,24,128], index: 0, kind: input, shape index: {}]
  %s1 = inlined_call_operand.hbm [shape: f32[81,128], index: 1, kind: input, shape index: {}]
  %s2 = inlined_call_operand.vmem [shape: f32[128,128], index: 2, kind: input, shape index: {}]
  %s3 = inlined_call_operand.vmem [shape: f32[1,128], index: 3, kind: input, shape index: {}]
  %s4 = inlined_call_operand.vmem [shape: f32[128,32], index: 4, kind: input, shape index: {}]
  %s5 = inlined_call_operand.vmem [shape: f32[1,32], index: 5, kind: input, shape index: {}]
  %s6 = inlined_call_operand.vmem [shape: f32[32,128], index: 6, kind: input, shape index: {}]
  %s7 = inlined_call_operand.vmem [shape: f32[1,128], index: 7, kind: input, shape index: {}]
  %s8 = inlined_call_operand.hbm [shape: f32[128,128], index: 8, kind: input, shape index: {}]
  %s9 = inlined_call_operand.hbm [shape: f32[1,256,128], index: 9, kind: output, shape index: {}]
  %s10 = sld [smem:[#allocation0]]
  $region65: #{tpu_custom_call.1} parent=0
    _
  %s12 = ssub.s32 1, %s10
  %s13 = scalar_select 0, %s12, %s10
  $region1: #{tpu_custom_call.1} parent=0
    #allocation3 [shape = 'u8[294912]{0}', space=vmem, size = 0x48000, scoped, tag = 'input window, operand 0, single buffered']
    #allocation4 [shape = 's32[1]{0}', space=sflag, size = 0x4, scoped, tag = 'scoped memory for tpu_custom_call.1']
    #allocation5 [shape = 's32[1]{0}', space=sflag, size = 0x4, scoped, tag = 'scoped memory for tpu_custom_call.1']
    #allocation6 [shape = 'u8[45056]{0}', space=vmem, size = 0xb000, scoped, tag = 'input window, operand 1, single buffered']
    #allocation7 [shape = 's32[1]{0}', space=sflag, size = 0x4, scoped, tag = 'scoped memory for tpu_custom_call.1']
    #allocation8 [shape = 'u8[65536]{0}', space=vmem, size = 0x10000, scoped, tag = 'input window, operand 8, single buffered']
    #allocation9 [shape = 'u8[131072]{0}', space=vmem, size = 0x20000, scoped, tag = 'output window, operand 0, single buffered']
    %14 = vsyncpa [#allocation4], 0
    %15 = vsyncpa [#allocation7], 0
    %16 = vsyncpa [#allocation5], 0
    // Predicated region
    $region2: #{tpu_custom_call.1} parent=1 // pred_check
      _
    $region3: #{tpu_custom_call.1} parent=1 // pred_check_branch
      %18 = sbr.rel (0) target = $region5
    $region4: #{tpu_custom_call.1} parent=1 // pred_region
      %s20 = ssub.s32 9216, 9216
      %21 = vsyncadd [#allocation4], %s20
      %s22 = sshll.u32 [#allocation3], 4
      %s23 = int_to_ptr.vmem [resolvable:$true] %s22
      %28 = dma.hbm_to_vmem [thread:$0]  %s0, 9216, %s23, [#allocation4], 128, 128, 8
    $region5: #{tpu_custom_call.1} parent=1 // pred_fallthru
      _
    // Predicated region
    $region6: #{tpu_custom_call.1} parent=1 // pred_check
      _
    $region7: #{tpu_custom_call.1} parent=1 // pred_check_branch
      %30 = sbr.rel (0) target = $region9
    $region8: #{tpu_custom_call.1} parent=1 // pred_region
      %s32 = ssub.s32 1408, 1408
      %33 = vsyncadd [#allocation7], %s32
      %s34 = sshll.u32 [#allocation6], 4
      %s35 = int_to_ptr.vmem [resolvable:$true] %s34
      %40 = dma.hbm_to_vmem [thread:$0]  %s1, 1408, %s35, [#allocation7], 128, 128, 8
    $region9: #{tpu_custom_call.1} parent=1 // pred_fallthru
      _
    // Predicated region
    $region10: #{tpu_custom_call.1} parent=1 // pred_check
      _
    $region11: #{tpu_custom_call.1} parent=1 // pred_check_branch
      %42 = sbr.rel (0) target = $region13
    $region12: #{tpu_custom_call.1} parent=1 // pred_region
      _
    $region13: #{tpu_custom_call.1} parent=1 // pred_fallthru
      _
    // Predicated region
    $region14: #{tpu_custom_call.1} parent=1 // pred_check
      _
    $region15: #{tpu_custom_call.1} parent=1 // pred_check_branch
      %44 = sbr.rel (0) target = $region17
    $region16: #{tpu_custom_call.1} parent=1 // pred_region
      _
    $region17: #{tpu_custom_call.1} parent=1 // pred_fallthru
      _
    // Predicated region
    $region18: #{tpu_custom_call.1} parent=1 // pred_check
      _
    $region19: #{tpu_custom_call.1} parent=1 // pred_check_branch
      %46 = sbr.rel (0) target = $region21
    $region20: #{tpu_custom_call.1} parent=1 // pred_region
      _
    $region21: #{tpu_custom_call.1} parent=1 // pred_fallthru
      _
    // Predicated region
    $region22: #{tpu_custom_call.1} parent=1 // pred_check
      _
    $region23: #{tpu_custom_call.1} parent=1 // pred_check_branch
      %48 = sbr.rel (0) target = $region25
    $region24: #{tpu_custom_call.1} parent=1 // pred_region
      _
    $region25: #{tpu_custom_call.1} parent=1 // pred_fallthru
      _
    // Predicated region
    $region26: #{tpu_custom_call.1} parent=1 // pred_check
      _
    $region27: #{tpu_custom_call.1} parent=1 // pred_check_branch
      %50 = sbr.rel (0) target = $region29
    $region28: #{tpu_custom_call.1} parent=1 // pred_region
      _
    $region29: #{tpu_custom_call.1} parent=1 // pred_fallthru
      _
    // Predicated region
    $region30: #{tpu_custom_call.1} parent=1 // pred_check
      _
    $region31: #{tpu_custom_call.1} parent=1 // pred_check_branch
      %52 = sbr.rel (0) target = $region33
    $region32: #{tpu_custom_call.1} parent=1 // pred_region
      _
    $region33: #{tpu_custom_call.1} parent=1 // pred_fallthru
      _
    // Predicated region
    $region34: #{tpu_custom_call.1} parent=1 // pred_check
      _
    $region35: #{tpu_custom_call.1} parent=1 // pred_check_branch
      %54 = sbr.rel (0) target = $region37
    $region36: #{tpu_custom_call.1} parent=1 // pred_region
      %s56 = ssub.s32 2048, 2048
      %57 = vsyncadd [#allocation7], %s56
      %s58 = sshll.u32 [#allocation8], 4
      %s59 = int_to_ptr.vmem [resolvable:$true] %s58
      %64 = dma.hbm_to_vmem [thread:$0]  %s8, 2048, %s59, [#allocation7], 128, 128, 8
    $region37: #{tpu_custom_call.1} parent=1 // pred_fallthru
      _
    // Predicated region
    $region38: #{tpu_custom_call.1} parent=1 // pred_check
      _
    $region39: #{tpu_custom_call.1} parent=1 // pred_check_branch
      %66 = sbr.rel (0) target = $region41
    $region40: #{tpu_custom_call.1} parent=1 // pred_region
      %67 = dma.done [#allocation4], 9216
    $region41: #{tpu_custom_call.1} parent=1 // pred_fallthru
      _
    // Predicated region
    $region42: #{tpu_custom_call.1} parent=1 // pred_check
      _
    $region43: #{tpu_custom_call.1} parent=1 // pred_check_branch
      %69 = sbr.rel (0) target = $region45
    $region44: #{tpu_custom_call.1} parent=1 // pred_region
      %70 = dma.done [#allocation7], 1408
    $region45: #{tpu_custom_call.1} parent=1 // pred_fallthru
      _
    // Predicated region
    $region46: #{tpu_custom_call.1} parent=1 // pred_check
      _
    $region47: #{tpu_custom_call.1} parent=1 // pred_check_branch
      %72 = sbr.rel (0) target = $region49
    $region48: #{tpu_custom_call.1} parent=1 // pred_region
      %73 = dma.done [#allocation7], 2048
    $region49: #{tpu_custom_call.1} parent=1 // pred_fallthru
      _
    loop: start=0, step=1, limit=2
    $region50: #{tpu_custom_call.1} parent=1 // loop_pre_header
      _
    $region51: #{tpu_custom_call.1} parent=1 // loop_header
      %s75 = sphi 0, %s79
      %p76 = scmp.ge.s32.totalorder %s75, 2
      %v80 = vphi 0.0, %v5168
    $region52: #{tpu_custom_call.1} parent=1 // loop_header_branch
      %78 = sbr.rel (%p76) target = $region56
    $region53: #{tpu_custom_call.1} parent=1 // loop_body
      %s81 = smul.u32 %s75, 8
      %s82 = smul.u32 %s81, 24
      %s83 = scalar_lea.vmem [#allocation3], %s82
      %v84 = vld [vmem:[%s83] sm:$0xff]
      %v85 = vld [vmem:[%s83 + $0x8] sm:$0xff]
      %v86 = vld [vmem:[%s83 + $0x18] sm:$0xff]
      %v87 = vld [vmem:[%s83 + $0x20] sm:$0xff]
      %v88 = vld [vmem:[%s83 + $0x30] sm:$0xff]
      %v89 = vld [vmem:[%s83 + $0x38] sm:$0xff]
      %v90 = vld [vmem:[%s83 + $0x48] sm:$0xff]
      %v91 = vld [vmem:[%s83 + $0x50] sm:$0xff]
      %v92 = vld [vmem:[%s83 + $0x60] sm:$0xff]
      %v93 = vld [vmem:[%s83 + $0x68] sm:$0xff]
      %v94 = vld [vmem:[%s83 + $0x78] sm:$0xff]
      %v95 = vld [vmem:[%s83 + $0x80] sm:$0xff]
      %v96 = vld [vmem:[%s83 + $0x90] sm:$0xff]
      %v97 = vld [vmem:[%s83 + $0x98] sm:$0xff]
      %v98 = vld [vmem:[%s83 + $0xa8] sm:$0xff]
      %v99 = vld [vmem:[%s83 + $0xb0] sm:$0xff]
      %v100 = vld [vmem:[%s83 + $0xc0] sm:$0xff]
      %v101 = vld [vmem:[%s83 + $0xc8] sm:$0xff]
      %v102 = vld [vmem:[%s83 + $0xd8] sm:$0xff]
      %v103 = vld [vmem:[%s83 + $0xe0] sm:$0xff]
      %v104 = vld [vmem:[%s83 + $0xf0] sm:$0xff]
      %v105 = vld [vmem:[%s83 + $0xf8] sm:$0xff]
      %v106 = vld [vmem:[%s83 + $0x108] sm:$0xff]
      %v107 = vld [vmem:[%s83 + $0x110] sm:$0xff]
      %v108 = vld [vmem:[%s83 + $0x120] sm:$0xff]
      %v109 = vld [vmem:[%s83 + $0x128] sm:$0xff]
      %v110 = vld [vmem:[%s83 + $0x138] sm:$0xff]
      %v111 = vld [vmem:[%s83 + $0x140] sm:$0xff]
      %v112 = vld [vmem:[%s83 + $0x150] sm:$0xff]
      %v113 = vld [vmem:[%s83 + $0x158] sm:$0xff]
      %v114 = vld [vmem:[%s83 + $0x168] sm:$0xff]
      %v115 = vld [vmem:[%s83 + $0x170] sm:$0xff]
      %116 = vst [vmem:[#allocation2] sm:$0xff] %v84
      %117 = vst [vmem:[#allocation2 + $0x8] sm:$0xff] %v85
      %118 = vst [vmem:[#allocation2 + $0x10] sm:$0xff] %v86
      %119 = vst [vmem:[#allocation2 + $0x18] sm:$0xff] %v87
      %120 = vst [vmem:[#allocation2 + $0x20] sm:$0xff] %v88
      %121 = vst [vmem:[#allocation2 + $0x28] sm:$0xff] %v89
      %122 = vst [vmem:[#allocation2 + $0x30] sm:$0xff] %v90
      %123 = vst [vmem:[#allocation2 + $0x38] sm:$0xff] %v91
      %124 = vst [vmem:[#allocation2 + $0x40] sm:$0xff] %v92
      %125 = vst [vmem:[#allocation2 + $0x48] sm:$0xff] %v93
      %126 = vst [vmem:[#allocation2 + $0x50] sm:$0xff] %v94
      %127 = vst [vmem:[#allocation2 + $0x58] sm:$0xff] %v95
      %128 = vst [vmem:[#allocation2 + $0x60] sm:$0xff] %v96
      %129 = vst [vmem:[#allocation2 + $0x68] sm:$0xff] %v97
      %130 = vst [vmem:[#allocation2 + $0x70] sm:$0xff] %v98
      %131 = vst [vmem:[#allocation2 + $0x78] sm:$0xff] %v99
      %132 = vst [vmem:[#allocation2 + $0x80] sm:$0xff] %v100
      %133 = vst [vmem:[#allocation2 + $0x88] sm:$0xff] %v101
      %134 = vst [vmem:[#allocation2 + $0x90] sm:$0xff] %v102
      %135 = vst [vmem:[#allocation2 + $0x98] sm:$0xff] %v103
      %136 = vst [vmem:[#allocation2 + $0xa0] sm:$0xff] %v104
      %137 = vst [vmem:[#allocation2 + $0xa8] sm:$0xff] %v105
      %138 = vst [vmem:[#allocation2 + $0xb0] sm:$0xff] %v106
      %139 = vst [vmem:[#allocation2 + $0xb8] sm:$0xff] %v107
      %140 = vst [vmem:[#allocation2 + $0xc0] sm:$0xff] %v108
      %141 = vst [vmem:[#allocation2 + $0xc8] sm:$0xff] %v109
      %142 = vst [vmem:[#allocation2 + $0xd0] sm:$0xff] %v110
      %143 = vst [vmem:[#allocation2 + $0xd8] sm:$0xff] %v111
      %144 = vst [vmem:[#allocation2 + $0xe0] sm:$0xff] %v112
      %145 = vst [vmem:[#allocation2 + $0xe8] sm:$0xff] %v113
      %146 = vst [vmem:[#allocation2 + $0xf0] sm:$0xff] %v114
      %147 = vst [vmem:[#allocation2 + $0xf8] sm:$0xff] %v115
      %v148 = vld [vmem:[#allocation6] sm:$0x1]
      %v149 = vld [vmem:[#allocation2] sm:$0xff]
      %v150 = vld [vmem:[#allocation2 + $0x8] sm:$0xff]
      %v151 = vld [vmem:[#allocation2 + $0x10] sm:$0xff]
      %v152 = vld [vmem:[#allocation2 + $0x18] sm:$0xff]
      %v153 = vld [vmem:[#allocation2 + $0x20] sm:$0xff]
      %v154 = vld [vmem:[#allocation2 + $0x28] sm:$0xff]
      %v155 = vld [vmem:[#allocation2 + $0x30] sm:$0xff]
      %v156 = vld [vmem:[#allocation2 + $0x38] sm:$0xff]
      %v157 = vld [vmem:[#allocation2 + $0x40] sm:$0xff]
      %v158 = vld [vmem:[#allocation2 + $0x48] sm:$0xff]
      %v159 = vld [vmem:[#allocation2 + $0x50] sm:$0xff]
      %v160 = vld [vmem:[#allocation2 + $0x58] sm:$0xff]
      %v161 = vld [vmem:[#allocation2 + $0x60] sm:$0xff]
      %v162 = vld [vmem:[#allocation2 + $0x68] sm:$0xff]
      %v163 = vld [vmem:[#allocation2 + $0x70] sm:$0xff]
      %v164 = vld [vmem:[#allocation2 + $0x78] sm:$0xff]
      %v165 = vlaneseq
      %v166 = vshrl.u32 %v165, 7
      %v167 = vsub.s32 0, %v166
      %v168 = vrot.slane %v148, %v167
      %v169 = vmul.f32 %v149, %v168
      %v170 = vmul.f32 %v150, %v168
      %v171 = vmul.f32 %v151, %v168
      %v172 = vmul.f32 %v152, %v168
      %v173 = vmul.f32 %v153, %v168
      %v174 = vmul.f32 %v154, %v168
      %v175 = vmul.f32 %v155, %v168
      %v176 = vmul.f32 %v156, %v168
      %v177 = vmul.f32 %v157, %v168
      %v178 = vmul.f32 %v158, %v168
      %v179 = vmul.f32 %v159, %v168
      %v180 = vmul.f32 %v160, %v168
      %v181 = vmul.f32 %v161, %v168
      %v182 = vmul.f32 %v162, %v168
      %v183 = vmul.f32 %v163, %v168
      %v184 = vmul.f32 %v164, %v168
      %v185 = vadd.f32 %v169, 0.0
      %v186 = vadd.f32 %v170, 0.0
      %v187 = vadd.f32 %v171, 0.0
      %v188 = vadd.f32 %v172, 0.0
      %v189 = vadd.f32 %v173, 0.0
      %v190 = vadd.f32 %v174, 0.0
      %v191 = vadd.f32 %v175, 0.0
      %v192 = vadd.f32 %v176, 0.0
      %v193 = vadd.f32 %v177, 0.0
      %v194 = vadd.f32 %v178, 0.0
      %v195 = vadd.f32 %v179, 0.0
      %v196 = vadd.f32 %v180, 0.0
      %v197 = vadd.f32 %v181, 0.0
      %v198 = vadd.f32 %v182, 0.0
      %v199 = vadd.f32 %v183, 0.0
      %v200 = vadd.f32 %v184, 0.0
      %v201 = vld [vmem:[#allocation6 + $0x9] sm:$0x1]
      %s202 = scalar_lea.vmem [#allocation2], 16
      %v203 = vld [vmem:[%s202] sm:$0xff]
      %v204 = vld [vmem:[%s202 + $0x8] sm:$0xff]
      %v205 = vld [vmem:[%s202 + $0x10] sm:$0xff]
      %v206 = vld [vmem:[%s202 + $0x18] sm:$0xff]
      %v207 = vld [vmem:[%s202 + $0x20] sm:$0xff]
      %v208 = vld [vmem:[%s202 + $0x28] sm:$0xff]
      %v209 = vld [vmem:[%s202 + $0x30] sm:$0xff]
      %v210 = vld [vmem:[%s202 + $0x38] sm:$0xff]
      %v211 = vld [vmem:[%s202 + $0x40] sm:$0xff]
      %v212 = vld [vmem:[%s202 + $0x48] sm:$0xff]
      %v213 = vld [vmem:[%s202 + $0x50] sm:$0xff]
      %v214 = vld [vmem:[%s202 + $0x58] sm:$0xff]
      %v215 = vld [vmem:[%s202 + $0x60] sm:$0xff]
      %v216 = vld [vmem:[%s202 + $0x68] sm:$0xff]
      %v217 = vld [vmem:[%s202 + $0x70] sm:$0xff]
      %v218 = vld [vmem:[%s202 + $0x78] sm:$0xff]
      %v219 = vlaneseq
      %v220 = vshrl.u32 %v219, 7
      %v221 = vsub.s32 0, %v220
      %v222 = vrot.slane %v201, %v221
      %v223 = vmul.f32 %v203, %v222
      %v224 = vmul.f32 %v204, %v222
      %v225 = vmul.f32 %v205, %v222
      %v226 = vmul.f32 %v206, %v222
      %v227 = vmul.f32 %v207, %v222
      %v228 = vmul.f32 %v208, %v222
      %v229 = vmul.f32 %v209, %v222
      %v230 = vmul.f32 %v210, %v222
      %v231 = vmul.f32 %v211, %v222
      %v232 = vmul.f32 %v212, %v222
      %v233 = vmul.f32 %v213, %v222
      %v234 = vmul.f32 %v214, %v222
      %v235 = vmul.f32 %v215, %v222
      %v236 = vmul.f32 %v216, %v222
      %v237 = vmul.f32 %v217, %v222
      %v238 = vmul.f32 %v218, %v222
      %v239 = vadd.f32 %v185, %v223
      %v240 = vadd.f32 %v186, %v224
      %v241 = vadd.f32 %v187, %v225
      %v242 = vadd.f32 %v188, %v226
      %v243 = vadd.f32 %v189, %v227
      %v244 = vadd.f32 %v190, %v228
      %v245 = vadd.f32 %v191, %v229
      %v246 = vadd.f32 %v192, %v230
      %v247 = vadd.f32 %v193, %v231
      %v248 = vadd.f32 %v194, %v232
      %v249 = vadd.f32 %v195, %v233
      %v250 = vadd.f32 %v196, %v234
      %v251 = vadd.f32 %v197, %v235
      %v252 = vadd.f32 %v198, %v236
      %v253 = vadd.f32 %v199, %v237
      %v254 = vadd.f32 %v200, %v238
      %v255 = vld [vmem:[#allocation6 + $0x12] sm:$0x1]
      %s256 = scalar_lea.vmem [#allocation2], 32
      %v257 = vld [vmem:[%s256] sm:$0xff]
      %v258 = vld [vmem:[%s256 + $0x8] sm:$0xff]
      %v259 = vld [vmem:[%s256 + $0x10] sm:$0xff]
      %v260 = vld [vmem:[%s256 + $0x18] sm:$0xff]
      %v261 = vld [vmem:[%s256 + $0x20] sm:$0xff]
      %v262 = vld [vmem:[%s256 + $0x28] sm:$0xff]
      %v263 = vld [vmem:[%s256 + $0x30] sm:$0xff]
      %v264 = vld [vmem:[%s256 + $0x38] sm:$0xff]
      %v265 = vld [vmem:[%s256 + $0x40] sm:$0xff]
      %v266 = vld [vmem:[%s256 + $0x48] sm:$0xff]
      %v267 = vld [vmem:[%s256 + $0x50] sm:$0xff]
      %v268 = vld [vmem:[%s256 + $0x58] sm:$0xff]
      %v269 = vld [vmem:[%s256 + $0x60] sm:$0xff]
      %v270 = vld [vmem:[%s256 + $0x68] sm:$0xff]
      %v271 = vld [vmem:[%s256 + $0x70] sm:$0xff]
      %v272 = vld [vmem:[%s256 + $0x78] sm:$0xff]
      %v273 = vlaneseq
      %v274 = vshrl.u32 %v273, 7
      %v275 = vsub.s32 0, %v274
      %v276 = vrot.slane %v255, %v275
      %v277 = vmul.f32 %v257, %v276
      %v278 = vmul.f32 %v258, %v276
      %v279 = vmul.f32 %v259, %v276
      %v280 = vmul.f32 %v260, %v276
      %v281 = vmul.f32 %v261, %v276
      %v282 = vmul.f32 %v262, %v276
      %v283 = vmul.f32 %v263, %v276
      %v284 = vmul.f32 %v264, %v276
      %v285 = vmul.f32 %v265, %v276
      %v286 = vmul.f32 %v266, %v276
      %v287 = vmul.f32 %v267, %v276
      %v288 = vmul.f32 %v268, %v276
      %v289 = vmul.f32 %v269, %v276
      %v290 = vmul.f32 %v270, %v276
      %v291 = vmul.f32 %v271, %v276
      %v292 = vmul.f32 %v272, %v276
      %v293 = vadd.f32 %v239, %v277
      %v294 = vadd.f32 %v240, %v278
      %v295 = vadd.f32 %v241, %v279
      %v296 = vadd.f32 %v242, %v280
      %v297 = vadd.f32 %v243, %v281
      %v298 = vadd.f32 %v244, %v282
      %v299 = vadd.f32 %v245, %v283
      %v300 = vadd.f32 %v246, %v284
      %v301 = vadd.f32 %v247, %v285
      %v302 = vadd.f32 %v248, %v286
      %v303 = vadd.f32 %v249, %v287
      %v304 = vadd.f32 %v250, %v288
      %v305 = vadd.f32 %v251, %v289
      %v306 = vadd.f32 %v252, %v290
      %v307 = vadd.f32 %v253, %v291
      %v308 = vadd.f32 %v254, %v292
      %v309 = vld [vmem:[#allocation6 + $0x1b] sm:$0x1]
      %s310 = scalar_lea.vmem [#allocation2], 48
      %v311 = vld [vmem:[%s310] sm:$0xff]
      %v312 = vld [vmem:[%s310 + $0x8] sm:$0xff]
      %v313 = vld [vmem:[%s310 + $0x10] sm:$0xff]
      %v314 = vld [vmem:[%s310 + $0x18] sm:$0xff]
      %v315 = vld [vmem:[%s310 + $0x20] sm:$0xff]
      %v316 = vld [vmem:[%s310 + $0x28] sm:$0xff]
      %v317 = vld [vmem:[%s310 + $0x30] sm:$0xff]
      %v318 = vld [vmem:[%s310 + $0x38] sm:$0xff]
      %v319 = vld [vmem:[%s310 + $0x40] sm:$0xff]
      %v320 = vld [vmem:[%s310 + $0x48] sm:$0xff]
      %v321 = vld [vmem:[%s310 + $0x50] sm:$0xff]
      %v322 = vld [vmem:[%s310 + $0x58] sm:$0xff]
      %v323 = vld [vmem:[%s310 + $0x60] sm:$0xff]
      %v324 = vld [vmem:[%s310 + $0x68] sm:$0xff]
      %v325 = vld [vmem:[%s310 + $0x70] sm:$0xff]
      %v326 = vld [vmem:[%s310 + $0x78] sm:$0xff]
      %v327 = vlaneseq
      %v328 = vshrl.u32 %v327, 7
      %v329 = vsub.s32 0, %v328
      %v330 = vrot.slane %v309, %v329
      %v331 = vmul.f32 %v311, %v330
      %v332 = vmul.f32 %v312, %v330
      %v333 = vmul.f32 %v313, %v330
      %v334 = vmul.f32 %v314, %v330
      %v335 = vmul.f32 %v315, %v330
      %v336 = vmul.f32 %v316, %v330
      %v337 = vmul.f32 %v317, %v330
      %v338 = vmul.f32 %v318, %v330
      %v339 = vmul.f32 %v319, %v330
      %v340 = vmul.f32 %v320, %v330
      %v341 = vmul.f32 %v321, %v330
      %v342 = vmul.f32 %v322, %v330
      %v343 = vmul.f32 %v323, %v330
      %v344 = vmul.f32 %v324, %v330
      %v345 = vmul.f32 %v325, %v330
      %v346 = vmul.f32 %v326, %v330
      %v347 = vadd.f32 %v293, %v331
      %v348 = vadd.f32 %v294, %v332
      %v349 = vadd.f32 %v295, %v333
      %v350 = vadd.f32 %v296, %v334
      %v351 = vadd.f32 %v297, %v335
      %v352 = vadd.f32 %v298, %v336
      %v353 = vadd.f32 %v299, %v337
      %v354 = vadd.f32 %v300, %v338
      %v355 = vadd.f32 %v301, %v339
      %v356 = vadd.f32 %v302, %v340
      %v357 = vadd.f32 %v303, %v341
      %v358 = vadd.f32 %v304, %v342
      %v359 = vadd.f32 %v305, %v343
      %v360 = vadd.f32 %v306, %v344
      %v361 = vadd.f32 %v307, %v345
      %v362 = vadd.f32 %v308, %v346
      %v363 = vld [vmem:[#allocation6 + $0x24] sm:$0x1]
      %s364 = scalar_lea.vmem [#allocation2], 64
      %v365 = vld [vmem:[%s364] sm:$0xff]
      %v366 = vld [vmem:[%s364 + $0x8] sm:$0xff]
      %v367 = vld [vmem:[%s364 + $0x10] sm:$0xff]
      %v368 = vld [vmem:[%s364 + $0x18] sm:$0xff]
      %v369 = vld [vmem:[%s364 + $0x20] sm:$0xff]
      %v370 = vld [vmem:[%s364 + $0x28] sm:$0xff]
      %v371 = vld [vmem:[%s364 + $0x30] sm:$0xff]
      %v372 = vld [vmem:[%s364 + $0x38] sm:$0xff]
      %v373 = vld [vmem:[%s364 + $0x40] sm:$0xff]
      %v374 = vld [vmem:[%s364 + $0x48] sm:$0xff]
      %v375 = vld [vmem:[%s364 + $0x50] sm:$0xff]
      %v376 = vld [vmem:[%s364 + $0x58] sm:$0xff]
      %v377 = vld [vmem:[%s364 + $0x60] sm:$0xff]
      %v378 = vld [vmem:[%s364 + $0x68] sm:$0xff]
      %v379 = vld [vmem:[%s364 + $0x70] sm:$0xff]
      %v380 = vld [vmem:[%s364 + $0x78] sm:$0xff]
      %v381 = vlaneseq
      %v382 = vshrl.u32 %v381, 7
      %v383 = vsub.s32 0, %v382
      %v384 = vrot.slane %v363, %v383
      %v385 = vmul.f32 %v365, %v384
      %v386 = vmul.f32 %v366, %v384
      %v387 = vmul.f32 %v367, %v384
      %v388 = vmul.f32 %v368, %v384
      %v389 = vmul.f32 %v369, %v384
      %v390 = vmul.f32 %v370, %v384
      %v391 = vmul.f32 %v371, %v384
      %v392 = vmul.f32 %v372, %v384
      %v393 = vmul.f32 %v373, %v384
      %v394 = vmul.f32 %v374, %v384
      %v395 = vmul.f32 %v375, %v384
      %v396 = vmul.f32 %v376, %v384
      %v397 = vmul.f32 %v377, %v384
      %v398 = vmul.f32 %v378, %v384
      %v399 = vmul.f32 %v379, %v384
      %v400 = vmul.f32 %v380, %v384
      %v401 = vadd.f32 %v347, %v385
      %v402 = vadd.f32 %v348, %v386
      %v403 = vadd.f32 %v349, %v387
      %v404 = vadd.f32 %v350, %v388
      %v405 = vadd.f32 %v351, %v389
      %v406 = vadd.f32 %v352, %v390
      %v407 = vadd.f32 %v353, %v391
      %v408 = vadd.f32 %v354, %v392
      %v409 = vadd.f32 %v355, %v393
      %v410 = vadd.f32 %v356, %v394
      %v411 = vadd.f32 %v357, %v395
      %v412 = vadd.f32 %v358, %v396
      %v413 = vadd.f32 %v359, %v397
      %v414 = vadd.f32 %v360, %v398
      %v415 = vadd.f32 %v361, %v399
      %v416 = vadd.f32 %v362, %v400
      %v417 = vld [vmem:[#allocation6 + $0x2d] sm:$0x1]
      %s418 = scalar_lea.vmem [#allocation2], 80
      %v419 = vld [vmem:[%s418] sm:$0xff]
      %v420 = vld [vmem:[%s418 + $0x8] sm:$0xff]
      %v421 = vld [vmem:[%s418 + $0x10] sm:$0xff]
      %v422 = vld [vmem:[%s418 + $0x18] sm:$0xff]
      %v423 = vld [vmem:[%s418 + $0x20] sm:$0xff]
      %v424 = vld [vmem:[%s418 + $0x28] sm:$0xff]
      %v425 = vld [vmem:[%s418 + $0x30] sm:$0xff]
      %v426 = vld [vmem:[%s418 + $0x38] sm:$0xff]
      %v427 = vld [vmem:[%s418 + $0x40] sm:$0xff]
      %v428 = vld [vmem:[%s418 + $0x48] sm:$0xff]
      %v429 = vld [vmem:[%s418 + $0x50] sm:$0xff]
      %v430 = vld [vmem:[%s418 + $0x58] sm:$0xff]
      %v431 = vld [vmem:[%s418 + $0x60] sm:$0xff]
      %v432 = vld [vmem:[%s418 + $0x68] sm:$0xff]
      %v433 = vld [vmem:[%s418 + $0x70] sm:$0xff]
      %v434 = vld [vmem:[%s418 + $0x78] sm:$0xff]
      %v435 = vlaneseq
      %v436 = vshrl.u32 %v435, 7
      %v437 = vsub.s32 0, %v436
      %v438 = vrot.slane %v417, %v437
      %v439 = vmul.f32 %v419, %v438
      %v440 = vmul.f32 %v420, %v438
      %v441 = vmul.f32 %v421, %v438
      %v442 = vmul.f32 %v422, %v438
      %v443 = vmul.f32 %v423, %v438
      %v444 = vmul.f32 %v424, %v438
      %v445 = vmul.f32 %v425, %v438
      %v446 = vmul.f32 %v426, %v438
      %v447 = vmul.f32 %v427, %v438
      %v448 = vmul.f32 %v428, %v438
      %v449 = vmul.f32 %v429, %v438
      %v450 = vmul.f32 %v430, %v438
      %v451 = vmul.f32 %v431, %v438
      %v452 = vmul.f32 %v432, %v438
      %v453 = vmul.f32 %v433, %v438
      %v454 = vmul.f32 %v434, %v438
      %v455 = vadd.f32 %v401, %v439
      %v456 = vadd.f32 %v402, %v440
      %v457 = vadd.f32 %v403, %v441
      %v458 = vadd.f32 %v404, %v442
      %v459 = vadd.f32 %v405, %v443
      %v460 = vadd.f32 %v406, %v444
      %v461 = vadd.f32 %v407, %v445
      %v462 = vadd.f32 %v408, %v446
      %v463 = vadd.f32 %v409, %v447
      %v464 = vadd.f32 %v410, %v448
      %v465 = vadd.f32 %v411, %v449
      %v466 = vadd.f32 %v412, %v450
      %v467 = vadd.f32 %v413, %v451
      %v468 = vadd.f32 %v414, %v452
      %v469 = vadd.f32 %v415, %v453
      %v470 = vadd.f32 %v416, %v454
      %v471 = vld [vmem:[#allocation6 + $0x36] sm:$0x1]
      %s472 = scalar_lea.vmem [#allocation2], 96
      %v473 = vld [vmem:[%s472] sm:$0xff]
      %v474 = vld [vmem:[%s472 + $0x8] sm:$0xff]
      %v475 = vld [vmem:[%s472 + $0x10] sm:$0xff]
      %v476 = vld [vmem:[%s472 + $0x18] sm:$0xff]
      %v477 = vld [vmem:[%s472 + $0x20] sm:$0xff]
      %v478 = vld [vmem:[%s472 + $0x28] sm:$0xff]
      %v479 = vld [vmem:[%s472 + $0x30] sm:$0xff]
      %v480 = vld [vmem:[%s472 + $0x38] sm:$0xff]
      %v481 = vld [vmem:[%s472 + $0x40] sm:$0xff]
      %v482 = vld [vmem:[%s472 + $0x48] sm:$0xff]
      %v483 = vld [vmem:[%s472 + $0x50] sm:$0xff]
      %v484 = vld [vmem:[%s472 + $0x58] sm:$0xff]
      %v485 = vld [vmem:[%s472 + $0x60] sm:$0xff]
      %v486 = vld [vmem:[%s472 + $0x68] sm:$0xff]
      %v487 = vld [vmem:[%s472 + $0x70] sm:$0xff]
      %v488 = vld [vmem:[%s472 + $0x78] sm:$0xff]
      %v489 = vlaneseq
      %v490 = vshrl.u32 %v489, 7
      %v491 = vsub.s32 0, %v490
      %v492 = vrot.slane %v471, %v491
      %v493 = vmul.f32 %v473, %v492
      %v494 = vmul.f32 %v474, %v492
      %v495 = vmul.f32 %v475, %v492
      %v496 = vmul.f32 %v476, %v492
      %v497 = vmul.f32 %v477, %v492
      %v498 = vmul.f32 %v478, %v492
      %v499 = vmul.f32 %v479, %v492
      %v500 = vmul.f32 %v480, %v492
      %v501 = vmul.f32 %v481, %v492
      %v502 = vmul.f32 %v482, %v492
      %v503 = vmul.f32 %v483, %v492
      %v504 = vmul.f32 %v484, %v492
      %v505 = vmul.f32 %v485, %v492
      %v506 = vmul.f32 %v486, %v492
      %v507 = vmul.f32 %v487, %v492
      %v508 = vmul.f32 %v488, %v492
      %v509 = vadd.f32 %v455, %v493
      %v510 = vadd.f32 %v456, %v494
      %v511 = vadd.f32 %v457, %v495
      %v512 = vadd.f32 %v458, %v496
      %v513 = vadd.f32 %v459, %v497
      %v514 = vadd.f32 %v460, %v498
      %v515 = vadd.f32 %v461, %v499
      %v516 = vadd.f32 %v462, %v500
      %v517 = vadd.f32 %v463, %v501
      %v518 = vadd.f32 %v464, %v502
      %v519 = vadd.f32 %v465, %v503
      %v520 = vadd.f32 %v466, %v504
      %v521 = vadd.f32 %v467, %v505
      %v522 = vadd.f32 %v468, %v506
      %v523 = vadd.f32 %v469, %v507
      %v524 = vadd.f32 %v470, %v508
      %v525 = vld [vmem:[#allocation6 + $0x3f] sm:$0x1]
      %s526 = scalar_lea.vmem [#allocation2], 112
      %v527 = vld [vmem:[%s526] sm:$0xff]
      %v528 = vld [vmem:[%s526 + $0x8] sm:$0xff]
      %v529 = vld [vmem:[%s526 + $0x10] sm:$0xff]
      %v530 = vld [vmem:[%s526 + $0x18] sm:$0xff]
      %v531 = vld [vmem:[%s526 + $0x20] sm:$0xff]
      %v532 = vld [vmem:[%s526 + $0x28] sm:$0xff]
      %v533 = vld [vmem:[%s526 + $0x30] sm:$0xff]
      %v534 = vld [vmem:[%s526 + $0x38] sm:$0xff]
      %v535 = vld [vmem:[%s526 + $0x40] sm:$0xff]
      %v536 = vld [vmem:[%s526 + $0x48] sm:$0xff]
      %v537 = vld [vmem:[%s526 + $0x50] sm:$0xff]
      %v538 = vld [vmem:[%s526 + $0x58] sm:$0xff]
      %v539 = vld [vmem:[%s526 + $0x60] sm:$0xff]
      %v540 = vld [vmem:[%s526 + $0x68] sm:$0xff]
      %v541 = vld [vmem:[%s526 + $0x70] sm:$0xff]
      %v542 = vld [vmem:[%s526 + $0x78] sm:$0xff]
      %v543 = vlaneseq
      %v544 = vshrl.u32 %v543, 7
      %v545 = vsub.s32 0, %v544
      %v546 = vrot.slane %v525, %v545
      %v547 = vmul.f32 %v527, %v546
      %v548 = vmul.f32 %v528, %v546
      %v549 = vmul.f32 %v529, %v546
      %v550 = vmul.f32 %v530, %v546
      %v551 = vmul.f32 %v531, %v546
      %v552 = vmul.f32 %v532, %v546
      %v553 = vmul.f32 %v533, %v546
      %v554 = vmul.f32 %v534, %v546
      %v555 = vmul.f32 %v535, %v546
      %v556 = vmul.f32 %v536, %v546
      %v557 = vmul.f32 %v537, %v546
      %v558 = vmul.f32 %v538, %v546
      %v559 = vmul.f32 %v539, %v546
      %v560 = vmul.f32 %v540, %v546
      %v561 = vmul.f32 %v541, %v546
      %v562 = vmul.f32 %v542, %v546
      %v563 = vadd.f32 %v509, %v547
      %v564 = vadd.f32 %v510, %v548
      %v565 = vadd.f32 %v511, %v549
      %v566 = vadd.f32 %v512, %v550
      %v567 = vadd.f32 %v513, %v551
      %v568 = vadd.f32 %v514, %v552
      %v569 = vadd.f32 %v515, %v553
      %v570 = vadd.f32 %v516, %v554
      %v571 = vadd.f32 %v517, %v555
      %v572 = vadd.f32 %v518, %v556
      %v573 = vadd.f32 %v519, %v557
      %v574 = vadd.f32 %v520, %v558
      %v575 = vadd.f32 %v521, %v559
      %v576 = vadd.f32 %v522, %v560
      %v577 = vadd.f32 %v523, %v561
      %v578 = vadd.f32 %v524, %v562
      %v579 = vld [vmem:[#allocation6 + $0x48] sm:$0x1]
      %s580 = scalar_lea.vmem [#allocation2], 128
      %v581 = vld [vmem:[%s580] sm:$0xff]
      %v582 = vld [vmem:[%s580 + $0x8] sm:$0xff]
      %v583 = vld [vmem:[%s580 + $0x10] sm:$0xff]
      %v584 = vld [vmem:[%s580 + $0x18] sm:$0xff]
      %v585 = vld [vmem:[%s580 + $0x20] sm:$0xff]
      %v586 = vld [vmem:[%s580 + $0x28] sm:$0xff]
      %v587 = vld [vmem:[%s580 + $0x30] sm:$0xff]
      %v588 = vld [vmem:[%s580 + $0x38] sm:$0xff]
      %v589 = vld [vmem:[%s580 + $0x40] sm:$0xff]
      %v590 = vld [vmem:[%s580 + $0x48] sm:$0xff]
      %v591 = vld [vmem:[%s580 + $0x50] sm:$0xff]
      %v592 = vld [vmem:[%s580 + $0x58] sm:$0xff]
      %v593 = vld [vmem:[%s580 + $0x60] sm:$0xff]
      %v594 = vld [vmem:[%s580 + $0x68] sm:$0xff]
      %v595 = vld [vmem:[%s580 + $0x70] sm:$0xff]
      %v596 = vld [vmem:[%s580 + $0x78] sm:$0xff]
      %v597 = vlaneseq
      %v598 = vshrl.u32 %v597, 7
      %v599 = vsub.s32 0, %v598
      %v600 = vrot.slane %v579, %v599
      %v601 = vmul.f32 %v581, %v600
      %v602 = vmul.f32 %v582, %v600
      %v603 = vmul.f32 %v583, %v600
      %v604 = vmul.f32 %v584, %v600
      %v605 = vmul.f32 %v585, %v600
      %v606 = vmul.f32 %v586, %v600
      %v607 = vmul.f32 %v587, %v600
      %v608 = vmul.f32 %v588, %v600
      %v609 = vmul.f32 %v589, %v600
      %v610 = vmul.f32 %v590, %v600
      %v611 = vmul.f32 %v591, %v600
      %v612 = vmul.f32 %v592, %v600
      %v613 = vmul.f32 %v593, %v600
      %v614 = vmul.f32 %v594, %v600
      %v615 = vmul.f32 %v595, %v600
      %v616 = vmul.f32 %v596, %v600
      %v617 = vadd.f32 %v563, %v601
      %v618 = vadd.f32 %v564, %v602
      %v619 = vadd.f32 %v565, %v603
      %v620 = vadd.f32 %v566, %v604
      %v621 = vadd.f32 %v567, %v605
      %v622 = vadd.f32 %v568, %v606
      %v623 = vadd.f32 %v569, %v607
      %v624 = vadd.f32 %v570, %v608
      %v625 = vadd.f32 %v571, %v609
      %v626 = vadd.f32 %v572, %v610
      %v627 = vadd.f32 %v573, %v611
      %v628 = vadd.f32 %v574, %v612
      %v629 = vadd.f32 %v575, %v613
      %v630 = vadd.f32 %v576, %v614
      %v631 = vadd.f32 %v577, %v615
      %v632 = vadd.f32 %v578, %v616
      %v633 = vld [vmem:[%s83 + $0x1] sm:$0xff]
      %v634 = vld [vmem:[%s83 + $0x9] sm:$0xff]
      %v635 = vld [vmem:[%s83 + $0x19] sm:$0xff]
      %v636 = vld [vmem:[%s83 + $0x21] sm:$0xff]
      %v637 = vld [vmem:[%s83 + $0x31] sm:$0xff]
      %v638 = vld [vmem:[%s83 + $0x39] sm:$0xff]
      %v639 = vld [vmem:[%s83 + $0x49] sm:$0xff]
      %v640 = vld [vmem:[%s83 + $0x51] sm:$0xff]
      %v641 = vld [vmem:[%s83 + $0x61] sm:$0xff]
      %v642 = vld [vmem:[%s83 + $0x69] sm:$0xff]
      %v643 = vld [vmem:[%s83 + $0x79] sm:$0xff]
      %v644 = vld [vmem:[%s83 + $0x81] sm:$0xff]
      %v645 = vld [vmem:[%s83 + $0x91] sm:$0xff]
      %v646 = vld [vmem:[%s83 + $0x99] sm:$0xff]
      %v647 = vld [vmem:[%s83 + $0xa9] sm:$0xff]
      %v648 = vld [vmem:[%s83 + $0xb1] sm:$0xff]
      %v649 = vld [vmem:[%s83 + $0xc1] sm:$0xff]
      %v650 = vld [vmem:[%s83 + $0xc9] sm:$0xff]
      %v651 = vld [vmem:[%s83 + $0xd9] sm:$0xff]
      %v652 = vld [vmem:[%s83 + $0xe1] sm:$0xff]
      %v653 = vld [vmem:[%s83 + $0xf1] sm:$0xff]
      %v654 = vld [vmem:[%s83 + $0xf9] sm:$0xff]
      %v655 = vld [vmem:[%s83 + $0x109] sm:$0xff]
      %v656 = vld [vmem:[%s83 + $0x111] sm:$0xff]
      %v657 = vld [vmem:[%s83 + $0x121] sm:$0xff]
      %v658 = vld [vmem:[%s83 + $0x129] sm:$0xff]
      %v659 = vld [vmem:[%s83 + $0x139] sm:$0xff]
      %v660 = vld [vmem:[%s83 + $0x141] sm:$0xff]
      %v661 = vld [vmem:[%s83 + $0x151] sm:$0xff]
      %v662 = vld [vmem:[%s83 + $0x159] sm:$0xff]
      %v663 = vld [vmem:[%s83 + $0x169] sm:$0xff]
      %v664 = vld [vmem:[%s83 + $0x171] sm:$0xff]
      %665 = vst [vmem:[#allocation2] sm:$0xff] %v633
      %666 = vst [vmem:[#allocation2 + $0x8] sm:$0xff] %v634
      %667 = vst [vmem:[#allocation2 + $0x10] sm:$0xff] %v635
      %668 = vst [vmem:[#allocation2 + $0x18] sm:$0xff] %v636
      %669 = vst [vmem:[#allocation2 + $0x20] sm:$0xff] %v637
      %670 = vst [vmem:[#allocation2 + $0x28] sm:$0xff] %v638
      %671 = vst [vmem:[#allocation2 + $0x30] sm:$0xff] %v639
      %672 = vst [vmem:[#allocation2 + $0x38] sm:$0xff] %v640
      %673 = vst [vmem:[#allocation2 + $0x40] sm:$0xff] %v641
      %674 = vst [vmem:[#allocation2 + $0x48] sm:$0xff] %v642
      %675 = vst [vmem:[#allocation2 + $0x50] sm:$0xff] %v643
      %676 = vst [vmem:[#allocation2 + $0x58] sm:$0xff] %v644
      %677 = vst [vmem:[#allocation2 + $0x60] sm:$0xff] %v645
      %678 = vst [vmem:[#allocation2 + $0x68] sm:$0xff] %v646
      %679 = vst [vmem:[#allocation2 + $0x70] sm:$0xff] %v647
      %680 = vst [vmem:[#allocation2 + $0x78] sm:$0xff] %v648
      %681 = vst [vmem:[#allocation2 + $0x80] sm:$0xff] %v649
      %682 = vst [vmem:[#allocation2 + $0x88] sm:$0xff] %v650
      %683 = vst [vmem:[#allocation2 + $0x90] sm:$0xff] %v651
      %684 = vst [vmem:[#allocation2 + $0x98] sm:$0xff] %v652
      %685 = vst [vmem:[#allocation2 + $0xa0] sm:$0xff] %v653
      %686 = vst [vmem:[#allocation2 + $0xa8] sm:$0xff] %v654
      %687 = vst [vmem:[#allocation2 + $0xb0] sm:$0xff] %v655
      %688 = vst [vmem:[#allocation2 + $0xb8] sm:$0xff] %v656
      %689 = vst [vmem:[#allocation2 + $0xc0] sm:$0xff] %v657
      %690 = vst [vmem:[#allocation2 + $0xc8] sm:$0xff] %v658
      %691 = vst [vmem:[#allocation2 + $0xd0] sm:$0xff] %v659
      %692 = vst [vmem:[#allocation2 + $0xd8] sm:$0xff] %v660
      %693 = vst [vmem:[#allocation2 + $0xe0] sm:$0xff] %v661
      %694 = vst [vmem:[#allocation2 + $0xe8] sm:$0xff] %v662
      %695 = vst [vmem:[#allocation2 + $0xf0] sm:$0xff] %v663
      %696 = vst [vmem:[#allocation2 + $0xf8] sm:$0xff] %v664
      %v697 = vld [vmem:[#allocation6 + $0x1] sm:$0x1]
      %v698 = vld [vmem:[#allocation2] sm:$0xff]
      %v699 = vld [vmem:[#allocation2 + $0x8] sm:$0xff]
      %v700 = vld [vmem:[#allocation2 + $0x10] sm:$0xff]
      %v701 = vld [vmem:[#allocation2 + $0x18] sm:$0xff]
      %v702 = vld [vmem:[#allocation2 + $0x20] sm:$0xff]
      %v703 = vld [vmem:[#allocation2 + $0x28] sm:$0xff]
      %v704 = vld [vmem:[#allocation2 + $0x30] sm:$0xff]
      %v705 = vld [vmem:[#allocation2 + $0x38] sm:$0xff]
      %v706 = vld [vmem:[#allocation2 + $0x40] sm:$0xff]
      %v707 = vld [vmem:[#allocation2 + $0x48] sm:$0xff]
      %v708 = vld [vmem:[#allocation2 + $0x50] sm:$0xff]
      %v709 = vld [vmem:[#allocation2 + $0x58] sm:$0xff]
      %v710 = vld [vmem:[#allocation2 + $0x60] sm:$0xff]
      %v711 = vld [vmem:[#allocation2 + $0x68] sm:$0xff]
      %v712 = vld [vmem:[#allocation2 + $0x70] sm:$0xff]
      %v713 = vld [vmem:[#allocation2 + $0x78] sm:$0xff]
      %v714 = vlaneseq
      %v715 = vshrl.u32 %v714, 7
      %v716 = vsub.s32 0, %v715
      %v717 = vrot.slane %v697, %v716
      %v718 = vmul.f32 %v698, %v717
      %v719 = vmul.f32 %v699, %v717
      %v720 = vmul.f32 %v700, %v717
      %v721 = vmul.f32 %v701, %v717
      %v722 = vmul.f32 %v702, %v717
      %v723 = vmul.f32 %v703, %v717
      %v724 = vmul.f32 %v704, %v717
      %v725 = vmul.f32 %v705, %v717
      %v726 = vmul.f32 %v706, %v717
      %v727 = vmul.f32 %v707, %v717
      %v728 = vmul.f32 %v708, %v717
      %v729 = vmul.f32 %v709, %v717
      %v730 = vmul.f32 %v710, %v717
      %v731 = vmul.f32 %v711, %v717
      %v732 = vmul.f32 %v712, %v717
      %v733 = vmul.f32 %v713, %v717
      %v734 = vadd.f32 %v617, %v718
      %v735 = vadd.f32 %v618, %v719
      %v736 = vadd.f32 %v619, %v720
      %v737 = vadd.f32 %v620, %v721
      %v738 = vadd.f32 %v621, %v722
      %v739 = vadd.f32 %v622, %v723
      %v740 = vadd.f32 %v623, %v724
      %v741 = vadd.f32 %v624, %v725
      %v742 = vadd.f32 %v625, %v726
      %v743 = vadd.f32 %v626, %v727
      %v744 = vadd.f32 %v627, %v728
      %v745 = vadd.f32 %v628, %v729
      %v746 = vadd.f32 %v629, %v730
      %v747 = vadd.f32 %v630, %v731
      %v748 = vadd.f32 %v631, %v732
      %v749 = vadd.f32 %v632, %v733
      %v750 = vld [vmem:[#allocation6 + $0xa] sm:$0x1]
      %v751 = vld [vmem:[%s202] sm:$0xff]
      %v752 = vld [vmem:[%s202 + $0x8] sm:$0xff]
      %v753 = vld [vmem:[%s202 + $0x10] sm:$0xff]
      %v754 = vld [vmem:[%s202 + $0x18] sm:$0xff]
      %v755 = vld [vmem:[%s202 + $0x20] sm:$0xff]
      %v756 = vld [vmem:[%s202 + $0x28] sm:$0xff]
      %v757 = vld [vmem:[%s202 + $0x30] sm:$0xff]
      %v758 = vld [vmem:[%s202 + $0x38] sm:$0xff]
      %v759 = vld [vmem:[%s202 + $0x40] sm:$0xff]
      %v760 = vld [vmem:[%s202 + $0x48] sm:$0xff]
      %v761 = vld [vmem:[%s202 + $0x50] sm:$0xff]
      %v762 = vld [vmem:[%s202 + $0x58] sm:$0xff]
      %v763 = vld [vmem:[%s202 + $0x60] sm:$0xff]
      %v764 = vld [vmem:[%s202 + $0x68] sm:$0xff]
      %v765 = vld [vmem:[%s202 + $0x70] sm:$0xff]
      %v766 = vld [vmem:[%s202 + $0x78] sm:$0xff]
      %v767 = vlaneseq
      %v768 = vshrl.u32 %v767, 7
      %v769 = vsub.s32 0, %v768
      %v770 = vrot.slane %v750, %v769
      %v771 = vmul.f32 %v751, %v770
      %v772 = vmul.f32 %v752, %v770
      %v773 = vmul.f32 %v753, %v770
      %v774 = vmul.f32 %v754, %v770
      %v775 = vmul.f32 %v755, %v770
      %v776 = vmul.f32 %v756, %v770
      %v777 = vmul.f32 %v757, %v770
      %v778 = vmul.f32 %v758, %v770
      %v779 = vmul.f32 %v759, %v770
      %v780 = vmul.f32 %v760, %v770
      %v781 = vmul.f32 %v761, %v770
      %v782 = vmul.f32 %v762, %v770
      %v783 = vmul.f32 %v763, %v770
      %v784 = vmul.f32 %v764, %v770
      %v785 = vmul.f32 %v765, %v770
      %v786 = vmul.f32 %v766, %v770
      %v787 = vadd.f32 %v734, %v771
      %v788 = vadd.f32 %v735, %v772
      %v789 = vadd.f32 %v736, %v773
      %v790 = vadd.f32 %v737, %v774
      %v791 = vadd.f32 %v738, %v775
      %v792 = vadd.f32 %v739, %v776
      %v793 = vadd.f32 %v740, %v777
      %v794 = vadd.f32 %v741, %v778
      %v795 = vadd.f32 %v742, %v779
      %v796 = vadd.f32 %v743, %v780
      %v797 = vadd.f32 %v744, %v781
      %v798 = vadd.f32 %v745, %v782
      %v799 = vadd.f32 %v746, %v783
      %v800 = vadd.f32 %v747, %v784
      %v801 = vadd.f32 %v748, %v785
      %v802 = vadd.f32 %v749, %v786
      %v803 = vld [vmem:[#allocation6 + $0x13] sm:$0x1]
      %v804 = vld [vmem:[%s256] sm:$0xff]
      %v805 = vld [vmem:[%s256 + $0x8] sm:$0xff]
      %v806 = vld [vmem:[%s256 + $0x10] sm:$0xff]
      %v807 = vld [vmem:[%s256 + $0x18] sm:$0xff]
      %v808 = vld [vmem:[%s256 + $0x20] sm:$0xff]
      %v809 = vld [vmem:[%s256 + $0x28] sm:$0xff]
      %v810 = vld [vmem:[%s256 + $0x30] sm:$0xff]
      %v811 = vld [vmem:[%s256 + $0x38] sm:$0xff]
      %v812 = vld [vmem:[%s256 + $0x40] sm:$0xff]
      %v813 = vld [vmem:[%s256 + $0x48] sm:$0xff]
      %v814 = vld [vmem:[%s256 + $0x50] sm:$0xff]
      %v815 = vld [vmem:[%s256 + $0x58] sm:$0xff]
      %v816 = vld [vmem:[%s256 + $0x60] sm:$0xff]
      %v817 = vld [vmem:[%s256 + $0x68] sm:$0xff]
      %v818 = vld [vmem:[%s256 + $0x70] sm:$0xff]
      %v819 = vld [vmem:[%s256 + $0x78] sm:$0xff]
      %v820 = vlaneseq
      %v821 = vshrl.u32 %v820, 7
      %v822 = vsub.s32 0, %v821
      %v823 = vrot.slane %v803, %v822
      %v824 = vmul.f32 %v804, %v823
      %v825 = vmul.f32 %v805, %v823
      %v826 = vmul.f32 %v806, %v823
      %v827 = vmul.f32 %v807, %v823
      %v828 = vmul.f32 %v808, %v823
      %v829 = vmul.f32 %v809, %v823
      %v830 = vmul.f32 %v810, %v823
      %v831 = vmul.f32 %v811, %v823
      %v832 = vmul.f32 %v812, %v823
      %v833 = vmul.f32 %v813, %v823
      %v834 = vmul.f32 %v814, %v823
      %v835 = vmul.f32 %v815, %v823
      %v836 = vmul.f32 %v816, %v823
      %v837 = vmul.f32 %v817, %v823
      %v838 = vmul.f32 %v818, %v823
      %v839 = vmul.f32 %v819, %v823
      %v840 = vadd.f32 %v787, %v824
      %v841 = vadd.f32 %v788, %v825
      %v842 = vadd.f32 %v789, %v826
      %v843 = vadd.f32 %v790, %v827
      %v844 = vadd.f32 %v791, %v828
      %v845 = vadd.f32 %v792, %v829
      %v846 = vadd.f32 %v793, %v830
      %v847 = vadd.f32 %v794, %v831
      %v848 = vadd.f32 %v795, %v832
      %v849 = vadd.f32 %v796, %v833
      %v850 = vadd.f32 %v797, %v834
      %v851 = vadd.f32 %v798, %v835
      %v852 = vadd.f32 %v799, %v836
      %v853 = vadd.f32 %v800, %v837
      %v854 = vadd.f32 %v801, %v838
      %v855 = vadd.f32 %v802, %v839
      %v856 = vld [vmem:[#allocation6 + $0x1c] sm:$0x1]
      %v857 = vld [vmem:[%s310] sm:$0xff]
      %v858 = vld [vmem:[%s310 + $0x8] sm:$0xff]
      %v859 = vld [vmem:[%s310 + $0x10] sm:$0xff]
      %v860 = vld [vmem:[%s310 + $0x18] sm:$0xff]
      %v861 = vld [vmem:[%s310 + $0x20] sm:$0xff]
      %v862 = vld [vmem:[%s310 + $0x28] sm:$0xff]
      %v863 = vld [vmem:[%s310 + $0x30] sm:$0xff]
      %v864 = vld [vmem:[%s310 + $0x38] sm:$0xff]
      %v865 = vld [vmem:[%s310 + $0x40] sm:$0xff]
      %v866 = vld [vmem:[%s310 + $0x48] sm:$0xff]
      %v867 = vld [vmem:[%s310 + $0x50] sm:$0xff]
      %v868 = vld [vmem:[%s310 + $0x58] sm:$0xff]
      %v869 = vld [vmem:[%s310 + $0x60] sm:$0xff]
      %v870 = vld [vmem:[%s310 + $0x68] sm:$0xff]
      %v871 = vld [vmem:[%s310 + $0x70] sm:$0xff]
      %v872 = vld [vmem:[%s310 + $0x78] sm:$0xff]
      %v873 = vlaneseq
      %v874 = vshrl.u32 %v873, 7
      %v875 = vsub.s32 0, %v874
      %v876 = vrot.slane %v856, %v875
      %v877 = vmul.f32 %v857, %v876
      %v878 = vmul.f32 %v858, %v876
      %v879 = vmul.f32 %v859, %v876
      %v880 = vmul.f32 %v860, %v876
      %v881 = vmul.f32 %v861, %v876
      %v882 = vmul.f32 %v862, %v876
      %v883 = vmul.f32 %v863, %v876
      %v884 = vmul.f32 %v864, %v876
      %v885 = vmul.f32 %v865, %v876
      %v886 = vmul.f32 %v866, %v876
      %v887 = vmul.f32 %v867, %v876
      %v888 = vmul.f32 %v868, %v876
      %v889 = vmul.f32 %v869, %v876
      %v890 = vmul.f32 %v870, %v876
      %v891 = vmul.f32 %v871, %v876
      %v892 = vmul.f32 %v872, %v876
      %v893 = vadd.f32 %v840, %v877
      %v894 = vadd.f32 %v841, %v878
      %v895 = vadd.f32 %v842, %v879
      %v896 = vadd.f32 %v843, %v880
      %v897 = vadd.f32 %v844, %v881
      %v898 = vadd.f32 %v845, %v882
      %v899 = vadd.f32 %v846, %v883
      %v900 = vadd.f32 %v847, %v884
      %v901 = vadd.f32 %v848, %v885
      %v902 = vadd.f32 %v849, %v886
      %v903 = vadd.f32 %v850, %v887
      %v904 = vadd.f32 %v851, %v888
      %v905 = vadd.f32 %v852, %v889
      %v906 = vadd.f32 %v853, %v890
      %v907 = vadd.f32 %v854, %v891
      %v908 = vadd.f32 %v855, %v892
      %v909 = vld [vmem:[#allocation6 + $0x25] sm:$0x1]
      %v910 = vld [vmem:[%s364] sm:$0xff]
      %v911 = vld [vmem:[%s364 + $0x8] sm:$0xff]
      %v912 = vld [vmem:[%s364 + $0x10] sm:$0xff]
      %v913 = vld [vmem:[%s364 + $0x18] sm:$0xff]
      %v914 = vld [vmem:[%s364 + $0x20] sm:$0xff]
      %v915 = vld [vmem:[%s364 + $0x28] sm:$0xff]
      %v916 = vld [vmem:[%s364 + $0x30] sm:$0xff]
      %v917 = vld [vmem:[%s364 + $0x38] sm:$0xff]
      %v918 = vld [vmem:[%s364 + $0x40] sm:$0xff]
      %v919 = vld [vmem:[%s364 + $0x48] sm:$0xff]
      %v920 = vld [vmem:[%s364 + $0x50] sm:$0xff]
      %v921 = vld [vmem:[%s364 + $0x58] sm:$0xff]
      %v922 = vld [vmem:[%s364 + $0x60] sm:$0xff]
      %v923 = vld [vmem:[%s364 + $0x68] sm:$0xff]
      %v924 = vld [vmem:[%s364 + $0x70] sm:$0xff]
      %v925 = vld [vmem:[%s364 + $0x78] sm:$0xff]
      %v926 = vlaneseq
      %v927 = vshrl.u32 %v926, 7
      %v928 = vsub.s32 0, %v927
      %v929 = vrot.slane %v909, %v928
      %v930 = vmul.f32 %v910, %v929
      %v931 = vmul.f32 %v911, %v929
      %v932 = vmul.f32 %v912, %v929
      %v933 = vmul.f32 %v913, %v929
      %v934 = vmul.f32 %v914, %v929
      %v935 = vmul.f32 %v915, %v929
      %v936 = vmul.f32 %v916, %v929
      %v937 = vmul.f32 %v917, %v929
      %v938 = vmul.f32 %v918, %v929
      %v939 = vmul.f32 %v919, %v929
      %v940 = vmul.f32 %v920, %v929
      %v941 = vmul.f32 %v921, %v929
      %v942 = vmul.f32 %v922, %v929
      %v943 = vmul.f32 %v923, %v929
      %v944 = vmul.f32 %v924, %v929
      %v945 = vmul.f32 %v925, %v929
      %v946 = vadd.f32 %v893, %v930
      %v947 = vadd.f32 %v894, %v931
      %v948 = vadd.f32 %v895, %v932
      %v949 = vadd.f32 %v896, %v933
      %v950 = vadd.f32 %v897, %v934
      %v951 = vadd.f32 %v898, %v935
      %v952 = vadd.f32 %v899, %v936
      %v953 = vadd.f32 %v900, %v937
      %v954 = vadd.f32 %v901, %v938
      %v955 = vadd.f32 %v902, %v939
      %v956 = vadd.f32 %v903, %v940
      %v957 = vadd.f32 %v904, %v941
      %v958 = vadd.f32 %v905, %v942
      %v959 = vadd.f32 %v906, %v943
      %v960 = vadd.f32 %v907, %v944
      %v961 = vadd.f32 %v908, %v945
      %v962 = vld [vmem:[#allocation6 + $0x2e] sm:$0x1]
      %v963 = vld [vmem:[%s418] sm:$0xff]
      %v964 = vld [vmem:[%s418 + $0x8] sm:$0xff]
      %v965 = vld [vmem:[%s418 + $0x10] sm:$0xff]
      %v966 = vld [vmem:[%s418 + $0x18] sm:$0xff]
      %v967 = vld [vmem:[%s418 + $0x20] sm:$0xff]
      %v968 = vld [vmem:[%s418 + $0x28] sm:$0xff]
      %v969 = vld [vmem:[%s418 + $0x30] sm:$0xff]
      %v970 = vld [vmem:[%s418 + $0x38] sm:$0xff]
      %v971 = vld [vmem:[%s418 + $0x40] sm:$0xff]
      %v972 = vld [vmem:[%s418 + $0x48] sm:$0xff]
      %v973 = vld [vmem:[%s418 + $0x50] sm:$0xff]
      %v974 = vld [vmem:[%s418 + $0x58] sm:$0xff]
      %v975 = vld [vmem:[%s418 + $0x60] sm:$0xff]
      %v976 = vld [vmem:[%s418 + $0x68] sm:$0xff]
      %v977 = vld [vmem:[%s418 + $0x70] sm:$0xff]
      %v978 = vld [vmem:[%s418 + $0x78] sm:$0xff]
      %v979 = vlaneseq
      %v980 = vshrl.u32 %v979, 7
      %v981 = vsub.s32 0, %v980
      %v982 = vrot.slane %v962, %v981
      %v983 = vmul.f32 %v963, %v982
      %v984 = vmul.f32 %v964, %v982
      %v985 = vmul.f32 %v965, %v982
      %v986 = vmul.f32 %v966, %v982
      %v987 = vmul.f32 %v967, %v982
      %v988 = vmul.f32 %v968, %v982
      %v989 = vmul.f32 %v969, %v982
      %v990 = vmul.f32 %v970, %v982
      %v991 = vmul.f32 %v971, %v982
      %v992 = vmul.f32 %v972, %v982
      %v993 = vmul.f32 %v973, %v982
      %v994 = vmul.f32 %v974, %v982
      %v995 = vmul.f32 %v975, %v982
      %v996 = vmul.f32 %v976, %v982
      %v997 = vmul.f32 %v977, %v982
      %v998 = vmul.f32 %v978, %v982
      %v999 = vadd.f32 %v946, %v983
      %v1000 = vadd.f32 %v947, %v984
      %v1001 = vadd.f32 %v948, %v985
      %v1002 = vadd.f32 %v949, %v986
      %v1003 = vadd.f32 %v950, %v987
      %v1004 = vadd.f32 %v951, %v988
      %v1005 = vadd.f32 %v952, %v989
      %v1006 = vadd.f32 %v953, %v990
      %v1007 = vadd.f32 %v954, %v991
      %v1008 = vadd.f32 %v955, %v992
      %v1009 = vadd.f32 %v956, %v993
      %v1010 = vadd.f32 %v957, %v994
      %v1011 = vadd.f32 %v958, %v995
      %v1012 = vadd.f32 %v959, %v996
      %v1013 = vadd.f32 %v960, %v997
      %v1014 = vadd.f32 %v961, %v998
      %v1015 = vld [vmem:[#allocation6 + $0x37] sm:$0x1]
      %v1016 = vld [vmem:[%s472] sm:$0xff]
      %v1017 = vld [vmem:[%s472 + $0x8] sm:$0xff]
      %v1018 = vld [vmem:[%s472 + $0x10] sm:$0xff]
      %v1019 = vld [vmem:[%s472 + $0x18] sm:$0xff]
      %v1020 = vld [vmem:[%s472 + $0x20] sm:$0xff]
      %v1021 = vld [vmem:[%s472 + $0x28] sm:$0xff]
      %v1022 = vld [vmem:[%s472 + $0x30] sm:$0xff]
      %v1023 = vld [vmem:[%s472 + $0x38] sm:$0xff]
      %v1024 = vld [vmem:[%s472 + $0x40] sm:$0xff]
      %v1025 = vld [vmem:[%s472 + $0x48] sm:$0xff]
      %v1026 = vld [vmem:[%s472 + $0x50] sm:$0xff]
      %v1027 = vld [vmem:[%s472 + $0x58] sm:$0xff]
      %v1028 = vld [vmem:[%s472 + $0x60] sm:$0xff]
      %v1029 = vld [vmem:[%s472 + $0x68] sm:$0xff]
      %v1030 = vld [vmem:[%s472 + $0x70] sm:$0xff]
      %v1031 = vld [vmem:[%s472 + $0x78] sm:$0xff]
      %v1032 = vlaneseq
      %v1033 = vshrl.u32 %v1032, 7
      %v1034 = vsub.s32 0, %v1033
      %v1035 = vrot.slane %v1015, %v1034
      %v1036 = vmul.f32 %v1016, %v1035
      %v1037 = vmul.f32 %v1017, %v1035
      %v1038 = vmul.f32 %v1018, %v1035
      %v1039 = vmul.f32 %v1019, %v1035
      %v1040 = vmul.f32 %v1020, %v1035
      %v1041 = vmul.f32 %v1021, %v1035
      %v1042 = vmul.f32 %v1022, %v1035
      %v1043 = vmul.f32 %v1023, %v1035
      %v1044 = vmul.f32 %v1024, %v1035
      %v1045 = vmul.f32 %v1025, %v1035
      %v1046 = vmul.f32 %v1026, %v1035
      %v1047 = vmul.f32 %v1027, %v1035
      %v1048 = vmul.f32 %v1028, %v1035
      %v1049 = vmul.f32 %v1029, %v1035
      %v1050 = vmul.f32 %v1030, %v1035
      %v1051 = vmul.f32 %v1031, %v1035
      %v1052 = vadd.f32 %v999, %v1036
      %v1053 = vadd.f32 %v1000, %v1037
      %v1054 = vadd.f32 %v1001, %v1038
      %v1055 = vadd.f32 %v1002, %v1039
      %v1056 = vadd.f32 %v1003, %v1040
      %v1057 = vadd.f32 %v1004, %v1041
      %v1058 = vadd.f32 %v1005, %v1042
      %v1059 = vadd.f32 %v1006, %v1043
      %v1060 = vadd.f32 %v1007, %v1044
      %v1061 = vadd.f32 %v1008, %v1045
      %v1062 = vadd.f32 %v1009, %v1046
      %v1063 = vadd.f32 %v1010, %v1047
      %v1064 = vadd.f32 %v1011, %v1048
      %v1065 = vadd.f32 %v1012, %v1049
      %v1066 = vadd.f32 %v1013, %v1050
      %v1067 = vadd.f32 %v1014, %v1051
      %v1068 = vld [vmem:[#allocation6 + $0x40] sm:$0x1]
      %v1069 = vld [vmem:[%s526] sm:$0xff]
      %v1070 = vld [vmem:[%s526 + $0x8] sm:$0xff]
      %v1071 = vld [vmem:[%s526 + $0x10] sm:$0xff]
      %v1072 = vld [vmem:[%s526 + $0x18] sm:$0xff]
      %v1073 = vld [vmem:[%s526 + $0x20] sm:$0xff]
      %v1074 = vld [vmem:[%s526 + $0x28] sm:$0xff]
      %v1075 = vld [vmem:[%s526 + $0x30] sm:$0xff]
      %v1076 = vld [vmem:[%s526 + $0x38] sm:$0xff]
      %v1077 = vld [vmem:[%s526 + $0x40] sm:$0xff]
      %v1078 = vld [vmem:[%s526 + $0x48] sm:$0xff]
      %v1079 = vld [vmem:[%s526 + $0x50] sm:$0xff]
      %v1080 = vld [vmem:[%s526 + $0x58] sm:$0xff]
      %v1081 = vld [vmem:[%s526 + $0x60] sm:$0xff]
      %v1082 = vld [vmem:[%s526 + $0x68] sm:$0xff]
      %v1083 = vld [vmem:[%s526 + $0x70] sm:$0xff]
      %v1084 = vld [vmem:[%s526 + $0x78] sm:$0xff]
      %v1085 = vlaneseq
      %v1086 = vshrl.u32 %v1085, 7
      %v1087 = vsub.s32 0, %v1086
      %v1088 = vrot.slane %v1068, %v1087
      %v1089 = vmul.f32 %v1069, %v1088
      %v1090 = vmul.f32 %v1070, %v1088
      %v1091 = vmul.f32 %v1071, %v1088
      %v1092 = vmul.f32 %v1072, %v1088
      %v1093 = vmul.f32 %v1073, %v1088
      %v1094 = vmul.f32 %v1074, %v1088
      %v1095 = vmul.f32 %v1075, %v1088
      %v1096 = vmul.f32 %v1076, %v1088
      %v1097 = vmul.f32 %v1077, %v1088
      %v1098 = vmul.f32 %v1078, %v1088
      %v1099 = vmul.f32 %v1079, %v1088
      %v1100 = vmul.f32 %v1080, %v1088
      %v1101 = vmul.f32 %v1081, %v1088
      %v1102 = vmul.f32 %v1082, %v1088
      %v1103 = vmul.f32 %v1083, %v1088
      %v1104 = vmul.f32 %v1084, %v1088
      %v1105 = vadd.f32 %v1052, %v1089
      %v1106 = vadd.f32 %v1053, %v1090
      %v1107 = vadd.f32 %v1054, %v1091
      %v1108 = vadd.f32 %v1055, %v1092
      %v1109 = vadd.f32 %v1056, %v1093
      %v1110 = vadd.f32 %v1057, %v1094
      %v1111 = vadd.f32 %v1058, %v1095
      %v1112 = vadd.f32 %v1059, %v1096
      %v1113 = vadd.f32 %v1060, %v1097
      %v1114 = vadd.f32 %v1061, %v1098
      %v1115 = vadd.f32 %v1062, %v1099
      %v1116 = vadd.f32 %v1063, %v1100
      %v1117 = vadd.f32 %v1064, %v1101
      %v1118 = vadd.f32 %v1065, %v1102
      %v1119 = vadd.f32 %v1066, %v1103
      %v1120 = vadd.f32 %v1067, %v1104
      %v1121 = vld [vmem:[#allocation6 + $0x49] sm:$0x1]
      %v1122 = vld [vmem:[%s580] sm:$0xff]
      %v1123 = vld [vmem:[%s580 + $0x8] sm:$0xff]
      %v1124 = vld [vmem:[%s580 + $0x10] sm:$0xff]
      %v1125 = vld [vmem:[%s580 + $0x18] sm:$0xff]
      %v1126 = vld [vmem:[%s580 + $0x20] sm:$0xff]
      %v1127 = vld [vmem:[%s580 + $0x28] sm:$0xff]
      %v1128 = vld [vmem:[%s580 + $0x30] sm:$0xff]
      %v1129 = vld [vmem:[%s580 + $0x38] sm:$0xff]
      %v1130 = vld [vmem:[%s580 + $0x40] sm:$0xff]
      %v1131 = vld [vmem:[%s580 + $0x48] sm:$0xff]
      %v1132 = vld [vmem:[%s580 + $0x50] sm:$0xff]
      %v1133 = vld [vmem:[%s580 + $0x58] sm:$0xff]
      %v1134 = vld [vmem:[%s580 + $0x60] sm:$0xff]
      %v1135 = vld [vmem:[%s580 + $0x68] sm:$0xff]
      %v1136 = vld [vmem:[%s580 + $0x70] sm:$0xff]
      %v1137 = vld [vmem:[%s580 + $0x78] sm:$0xff]
      %v1138 = vlaneseq
      %v1139 = vshrl.u32 %v1138, 7
      %v1140 = vsub.s32 0, %v1139
      %v1141 = vrot.slane %v1121, %v1140
      %v1142 = vmul.f32 %v1122, %v1141
      %v1143 = vmul.f32 %v1123, %v1141
      %v1144 = vmul.f32 %v1124, %v1141
      %v1145 = vmul.f32 %v1125, %v1141
      %v1146 = vmul.f32 %v1126, %v1141
      %v1147 = vmul.f32 %v1127, %v1141
      %v1148 = vmul.f32 %v1128, %v1141
      %v1149 = vmul.f32 %v1129, %v1141
      %v1150 = vmul.f32 %v1130, %v1141
      %v1151 = vmul.f32 %v1131, %v1141
      %v1152 = vmul.f32 %v1132, %v1141
      %v1153 = vmul.f32 %v1133, %v1141
      %v1154 = vmul.f32 %v1134, %v1141
      %v1155 = vmul.f32 %v1135, %v1141
      %v1156 = vmul.f32 %v1136, %v1141
      %v1157 = vmul.f32 %v1137, %v1141
      %v1158 = vadd.f32 %v1105, %v1142
      %v1159 = vadd.f32 %v1106, %v1143
      %v1160 = vadd.f32 %v1107, %v1144
      %v1161 = vadd.f32 %v1108, %v1145
      %v1162 = vadd.f32 %v1109, %v1146
      %v1163 = vadd.f32 %v1110, %v1147
      %v1164 = vadd.f32 %v1111, %v1148
      %v1165 = vadd.f32 %v1112, %v1149
      %v1166 = vadd.f32 %v1113, %v1150
      %v1167 = vadd.f32 %v1114, %v1151
      %v1168 = vadd.f32 %v1115, %v1152
      %v1169 = vadd.f32 %v1116, %v1153
      %v1170 = vadd.f32 %v1117, %v1154
      %v1171 = vadd.f32 %v1118, %v1155
      %v1172 = vadd.f32 %v1119, %v1156
      %v1173 = vadd.f32 %v1120, %v1157
      %v1174 = vld [vmem:[%s83 + $0x2] sm:$0xff]
      %v1175 = vld [vmem:[%s83 + $0xa] sm:$0xff]
      %v1176 = vld [vmem:[%s83 + $0x1a] sm:$0xff]
      %v1177 = vld [vmem:[%s83 + $0x22] sm:$0xff]
      %v1178 = vld [vmem:[%s83 + $0x32] sm:$0xff]
      %v1179 = vld [vmem:[%s83 + $0x3a] sm:$0xff]
      %v1180 = vld [vmem:[%s83 + $0x4a] sm:$0xff]
      %v1181 = vld [vmem:[%s83 + $0x52] sm:$0xff]
      %v1182 = vld [vmem:[%s83 + $0x62] sm:$0xff]
      %v1183 = vld [vmem:[%s83 + $0x6a] sm:$0xff]
      %v1184 = vld [vmem:[%s83 + $0x7a] sm:$0xff]
      %v1185 = vld [vmem:[%s83 + $0x82] sm:$0xff]
      %v1186 = vld [vmem:[%s83 + $0x92] sm:$0xff]
      %v1187 = vld [vmem:[%s83 + $0x9a] sm:$0xff]
      %v1188 = vld [vmem:[%s83 + $0xaa] sm:$0xff]
      %v1189 = vld [vmem:[%s83 + $0xb2] sm:$0xff]
      %v1190 = vld [vmem:[%s83 + $0xc2] sm:$0xff]
      %v1191 = vld [vmem:[%s83 + $0xca] sm:$0xff]
      %v1192 = vld [vmem:[%s83 + $0xda] sm:$0xff]
      %v1193 = vld [vmem:[%s83 + $0xe2] sm:$0xff]
      %v1194 = vld [vmem:[%s83 + $0xf2] sm:$0xff]
      %v1195 = vld [vmem:[%s83 + $0xfa] sm:$0xff]
      %v1196 = vld [vmem:[%s83 + $0x10a] sm:$0xff]
      %v1197 = vld [vmem:[%s83 + $0x112] sm:$0xff]
      %v1198 = vld [vmem:[%s83 + $0x122] sm:$0xff]
      %v1199 = vld [vmem:[%s83 + $0x12a] sm:$0xff]
      %v1200 = vld [vmem:[%s83 + $0x13a] sm:$0xff]
      %v1201 = vld [vmem:[%s83 + $0x142] sm:$0xff]
      %v1202 = vld [vmem:[%s83 + $0x152] sm:$0xff]
      %v1203 = vld [vmem:[%s83 + $0x15a] sm:$0xff]
      %v1204 = vld [vmem:[%s83 + $0x16a] sm:$0xff]
      %v1205 = vld [vmem:[%s83 + $0x172] sm:$0xff]
      %1206 = vst [vmem:[#allocation2] sm:$0xff] %v1174
      %1207 = vst [vmem:[#allocation2 + $0x8] sm:$0xff] %v1175
      %1208 = vst [vmem:[#allocation2 + $0x10] sm:$0xff] %v1176
      %1209 = vst [vmem:[#allocation2 + $0x18] sm:$0xff] %v1177
      %1210 = vst [vmem:[#allocation2 + $0x20] sm:$0xff] %v1178
      %1211 = vst [vmem:[#allocation2 + $0x28] sm:$0xff] %v1179
      %1212 = vst [vmem:[#allocation2 + $0x30] sm:$0xff] %v1180
      %1213 = vst [vmem:[#allocation2 + $0x38] sm:$0xff] %v1181
      %1214 = vst [vmem:[#allocation2 + $0x40] sm:$0xff] %v1182
      %1215 = vst [vmem:[#allocation2 + $0x48] sm:$0xff] %v1183
      %1216 = vst [vmem:[#allocation2 + $0x50] sm:$0xff] %v1184
      %1217 = vst [vmem:[#allocation2 + $0x58] sm:$0xff] %v1185
      %1218 = vst [vmem:[#allocation2 + $0x60] sm:$0xff] %v1186
      %1219 = vst [vmem:[#allocation2 + $0x68] sm:$0xff] %v1187
      %1220 = vst [vmem:[#allocation2 + $0x70] sm:$0xff] %v1188
      %1221 = vst [vmem:[#allocation2 + $0x78] sm:$0xff] %v1189
      %1222 = vst [vmem:[#allocation2 + $0x80] sm:$0xff] %v1190
      %1223 = vst [vmem:[#allocation2 + $0x88] sm:$0xff] %v1191
      %1224 = vst [vmem:[#allocation2 + $0x90] sm:$0xff] %v1192
      %1225 = vst [vmem:[#allocation2 + $0x98] sm:$0xff] %v1193
      %1226 = vst [vmem:[#allocation2 + $0xa0] sm:$0xff] %v1194
      %1227 = vst [vmem:[#allocation2 + $0xa8] sm:$0xff] %v1195
      %1228 = vst [vmem:[#allocation2 + $0xb0] sm:$0xff] %v1196
      %1229 = vst [vmem:[#allocation2 + $0xb8] sm:$0xff] %v1197
      %1230 = vst [vmem:[#allocation2 + $0xc0] sm:$0xff] %v1198
      %1231 = vst [vmem:[#allocation2 + $0xc8] sm:$0xff] %v1199
      %1232 = vst [vmem:[#allocation2 + $0xd0] sm:$0xff] %v1200
      %1233 = vst [vmem:[#allocation2 + $0xd8] sm:$0xff] %v1201
      %1234 = vst [vmem:[#allocation2 + $0xe0] sm:$0xff] %v1202
      %1235 = vst [vmem:[#allocation2 + $0xe8] sm:$0xff] %v1203
      %1236 = vst [vmem:[#allocation2 + $0xf0] sm:$0xff] %v1204
      %1237 = vst [vmem:[#allocation2 + $0xf8] sm:$0xff] %v1205
      %v1238 = vld [vmem:[#allocation6 + $0x2] sm:$0x1]
      %v1239 = vld [vmem:[#allocation2] sm:$0xff]
      %v1240 = vld [vmem:[#allocation2 + $0x8] sm:$0xff]
      %v1241 = vld [vmem:[#allocation2 + $0x10] sm:$0xff]
      %v1242 = vld [vmem:[#allocation2 + $0x18] sm:$0xff]
      %v1243 = vld [vmem:[#allocation2 + $0x20] sm:$0xff]
      %v1244 = vld [vmem:[#allocation2 + $0x28] sm:$0xff]
      %v1245 = vld [vmem:[#allocation2 + $0x30] sm:$0xff]
      %v1246 = vld [vmem:[#allocation2 + $0x38] sm:$0xff]
      %v1247 = vld [vmem:[#allocation2 + $0x40] sm:$0xff]
      %v1248 = vld [vmem:[#allocation2 + $0x48] sm:$0xff]
      %v1249 = vld [vmem:[#allocation2 + $0x50] sm:$0xff]
      %v1250 = vld [vmem:[#allocation2 + $0x58] sm:$0xff]
      %v1251 = vld [vmem:[#allocation2 + $0x60] sm:$0xff]
      %v1252 = vld [vmem:[#allocation2 + $0x68] sm:$0xff]
      %v1253 = vld [vmem:[#allocation2 + $0x70] sm:$0xff]
      %v1254 = vld [vmem:[#allocation2 + $0x78] sm:$0xff]
      %v1255 = vlaneseq
      %v1256 = vshrl.u32 %v1255, 7
      %v1257 = vsub.s32 0, %v1256
      %v1258 = vrot.slane %v1238, %v1257
      %v1259 = vmul.f32 %v1239, %v1258
      %v1260 = vmul.f32 %v1240, %v1258
      %v1261 = vmul.f32 %v1241, %v1258
      %v1262 = vmul.f32 %v1242, %v1258
      %v1263 = vmul.f32 %v1243, %v1258
      %v1264 = vmul.f32 %v1244, %v1258
      %v1265 = vmul.f32 %v1245, %v1258
      %v1266 = vmul.f32 %v1246, %v1258
      %v1267 = vmul.f32 %v1247, %v1258
      %v1268 = vmul.f32 %v1248, %v1258
      %v1269 = vmul.f32 %v1249, %v1258
      %v1270 = vmul.f32 %v1250, %v1258
      %v1271 = vmul.f32 %v1251, %v1258
      %v1272 = vmul.f32 %v1252, %v1258
      %v1273 = vmul.f32 %v1253, %v1258
      %v1274 = vmul.f32 %v1254, %v1258
      %v1275 = vadd.f32 %v1158, %v1259
      %v1276 = vadd.f32 %v1159, %v1260
      %v1277 = vadd.f32 %v1160, %v1261
      %v1278 = vadd.f32 %v1161, %v1262
      %v1279 = vadd.f32 %v1162, %v1263
      %v1280 = vadd.f32 %v1163, %v1264
      %v1281 = vadd.f32 %v1164, %v1265
      %v1282 = vadd.f32 %v1165, %v1266
      %v1283 = vadd.f32 %v1166, %v1267
      %v1284 = vadd.f32 %v1167, %v1268
      %v1285 = vadd.f32 %v1168, %v1269
      %v1286 = vadd.f32 %v1169, %v1270
      %v1287 = vadd.f32 %v1170, %v1271
      %v1288 = vadd.f32 %v1171, %v1272
      %v1289 = vadd.f32 %v1172, %v1273
      %v1290 = vadd.f32 %v1173, %v1274
      %v1291 = vld [vmem:[#allocation6 + $0xb] sm:$0x1]
      %v1292 = vld [vmem:[%s202] sm:$0xff]
      %v1293 = vld [vmem:[%s202 + $0x8] sm:$0xff]
      %v1294 = vld [vmem:[%s202 + $0x10] sm:$0xff]
      %v1295 = vld [vmem:[%s202 + $0x18] sm:$0xff]
      %v1296 = vld [vmem:[%s202 + $0x20] sm:$0xff]
      %v1297 = vld [vmem:[%s202 + $0x28] sm:$0xff]
      %v1298 = vld [vmem:[%s202 + $0x30] sm:$0xff]
      %v1299 = vld [vmem:[%s202 + $0x38] sm:$0xff]
      %v1300 = vld [vmem:[%s202 + $0x40] sm:$0xff]
      %v1301 = vld [vmem:[%s202 + $0x48] sm:$0xff]
      %v1302 = vld [vmem:[%s202 + $0x50] sm:$0xff]
      %v1303 = vld [vmem:[%s202 + $0x58] sm:$0xff]
      %v1304 = vld [vmem:[%s202 + $0x60] sm:$0xff]
      %v1305 = vld [vmem:[%s202 + $0x68] sm:$0xff]
      %v1306 = vld [vmem:[%s202 + $0x70] sm:$0xff]
      %v1307 = vld [vmem:[%s202 + $0x78] sm:$0xff]
      %v1308 = vlaneseq
      %v1309 = vshrl.u32 %v1308, 7
      %v1310 = vsub.s32 0, %v1309
      %v1311 = vrot.slane %v1291, %v1310
      %v1312 = vmul.f32 %v1292, %v1311
      %v1313 = vmul.f32 %v1293, %v1311
      %v1314 = vmul.f32 %v1294, %v1311
      %v1315 = vmul.f32 %v1295, %v1311
      %v1316 = vmul.f32 %v1296, %v1311
      %v1317 = vmul.f32 %v1297, %v1311
      %v1318 = vmul.f32 %v1298, %v1311
      %v1319 = vmul.f32 %v1299, %v1311
      %v1320 = vmul.f32 %v1300, %v1311
      %v1321 = vmul.f32 %v1301, %v1311
      %v1322 = vmul.f32 %v1302, %v1311
      %v1323 = vmul.f32 %v1303, %v1311
      %v1324 = vmul.f32 %v1304, %v1311
      %v1325 = vmul.f32 %v1305, %v1311
      %v1326 = vmul.f32 %v1306, %v1311
      %v1327 = vmul.f32 %v1307, %v1311
      %v1328 = vadd.f32 %v1275, %v1312
      %v1329 = vadd.f32 %v1276, %v1313
      %v1330 = vadd.f32 %v1277, %v1314
      %v1331 = vadd.f32 %v1278, %v1315
      %v1332 = vadd.f32 %v1279, %v1316
      %v1333 = vadd.f32 %v1280, %v1317
      %v1334 = vadd.f32 %v1281, %v1318
      %v1335 = vadd.f32 %v1282, %v1319
      %v1336 = vadd.f32 %v1283, %v1320
      %v1337 = vadd.f32 %v1284, %v1321
      %v1338 = vadd.f32 %v1285, %v1322
      %v1339 = vadd.f32 %v1286, %v1323
      %v1340 = vadd.f32 %v1287, %v1324
      %v1341 = vadd.f32 %v1288, %v1325
      %v1342 = vadd.f32 %v1289, %v1326
      %v1343 = vadd.f32 %v1290, %v1327
      %v1344 = vld [vmem:[#allocation6 + $0x14] sm:$0x1]
      %v1345 = vld [vmem:[%s256] sm:$0xff]
      %v1346 = vld [vmem:[%s256 + $0x8] sm:$0xff]
      %v1347 = vld [vmem:[%s256 + $0x10] sm:$0xff]
      %v1348 = vld [vmem:[%s256 + $0x18] sm:$0xff]
      %v1349 = vld [vmem:[%s256 + $0x20] sm:$0xff]
      %v1350 = vld [vmem:[%s256 + $0x28] sm:$0xff]
      %v1351 = vld [vmem:[%s256 + $0x30] sm:$0xff]
      %v1352 = vld [vmem:[%s256 + $0x38] sm:$0xff]
      %v1353 = vld [vmem:[%s256 + $0x40] sm:$0xff]
      %v1354 = vld [vmem:[%s256 + $0x48] sm:$0xff]
      %v1355 = vld [vmem:[%s256 + $0x50] sm:$0xff]
      %v1356 = vld [vmem:[%s256 + $0x58] sm:$0xff]
      %v1357 = vld [vmem:[%s256 + $0x60] sm:$0xff]
      %v1358 = vld [vmem:[%s256 + $0x68] sm:$0xff]
      %v1359 = vld [vmem:[%s256 + $0x70] sm:$0xff]
      %v1360 = vld [vmem:[%s256 + $0x78] sm:$0xff]
      %v1361 = vlaneseq
      %v1362 = vshrl.u32 %v1361, 7
      %v1363 = vsub.s32 0, %v1362
      %v1364 = vrot.slane %v1344, %v1363
      %v1365 = vmul.f32 %v1345, %v1364
      %v1366 = vmul.f32 %v1346, %v1364
      %v1367 = vmul.f32 %v1347, %v1364
      %v1368 = vmul.f32 %v1348, %v1364
      %v1369 = vmul.f32 %v1349, %v1364
      %v1370 = vmul.f32 %v1350, %v1364
      %v1371 = vmul.f32 %v1351, %v1364
      %v1372 = vmul.f32 %v1352, %v1364
      %v1373 = vmul.f32 %v1353, %v1364
      %v1374 = vmul.f32 %v1354, %v1364
      %v1375 = vmul.f32 %v1355, %v1364
      %v1376 = vmul.f32 %v1356, %v1364
      %v1377 = vmul.f32 %v1357, %v1364
      %v1378 = vmul.f32 %v1358, %v1364
      %v1379 = vmul.f32 %v1359, %v1364
      %v1380 = vmul.f32 %v1360, %v1364
      %v1381 = vadd.f32 %v1328, %v1365
      %v1382 = vadd.f32 %v1329, %v1366
      %v1383 = vadd.f32 %v1330, %v1367
      %v1384 = vadd.f32 %v1331, %v1368
      %v1385 = vadd.f32 %v1332, %v1369
      %v1386 = vadd.f32 %v1333, %v1370
      %v1387 = vadd.f32 %v1334, %v1371
      %v1388 = vadd.f32 %v1335, %v1372
      %v1389 = vadd.f32 %v1336, %v1373
      %v1390 = vadd.f32 %v1337, %v1374
      %v1391 = vadd.f32 %v1338, %v1375
      %v1392 = vadd.f32 %v1339, %v1376
      %v1393 = vadd.f32 %v1340, %v1377
      %v1394 = vadd.f32 %v1341, %v1378
      %v1395 = vadd.f32 %v1342, %v1379
      %v1396 = vadd.f32 %v1343, %v1380
      %v1397 = vld [vmem:[#allocation6 + $0x1d] sm:$0x1]
      %v1398 = vld [vmem:[%s310] sm:$0xff]
      %v1399 = vld [vmem:[%s310 + $0x8] sm:$0xff]
      %v1400 = vld [vmem:[%s310 + $0x10] sm:$0xff]
      %v1401 = vld [vmem:[%s310 + $0x18] sm:$0xff]
      %v1402 = vld [vmem:[%s310 + $0x20] sm:$0xff]
      %v1403 = vld [vmem:[%s310 + $0x28] sm:$0xff]
      %v1404 = vld [vmem:[%s310 + $0x30] sm:$0xff]
      %v1405 = vld [vmem:[%s310 + $0x38] sm:$0xff]
      %v1406 = vld [vmem:[%s310 + $0x40] sm:$0xff]
      %v1407 = vld [vmem:[%s310 + $0x48] sm:$0xff]
      %v1408 = vld [vmem:[%s310 + $0x50] sm:$0xff]
      %v1409 = vld [vmem:[%s310 + $0x58] sm:$0xff]
      %v1410 = vld [vmem:[%s310 + $0x60] sm:$0xff]
      %v1411 = vld [vmem:[%s310 + $0x68] sm:$0xff]
      %v1412 = vld [vmem:[%s310 + $0x70] sm:$0xff]
      %v1413 = vld [vmem:[%s310 + $0x78] sm:$0xff]
      %v1414 = vlaneseq
      %v1415 = vshrl.u32 %v1414, 7
      %v1416 = vsub.s32 0, %v1415
      %v1417 = vrot.slane %v1397, %v1416
      %v1418 = vmul.f32 %v1398, %v1417
      %v1419 = vmul.f32 %v1399, %v1417
      %v1420 = vmul.f32 %v1400, %v1417
      %v1421 = vmul.f32 %v1401, %v1417
      %v1422 = vmul.f32 %v1402, %v1417
      %v1423 = vmul.f32 %v1403, %v1417
      %v1424 = vmul.f32 %v1404, %v1417
      %v1425 = vmul.f32 %v1405, %v1417
      %v1426 = vmul.f32 %v1406, %v1417
      %v1427 = vmul.f32 %v1407, %v1417
      %v1428 = vmul.f32 %v1408, %v1417
      %v1429 = vmul.f32 %v1409, %v1417
      %v1430 = vmul.f32 %v1410, %v1417
      %v1431 = vmul.f32 %v1411, %v1417
      %v1432 = vmul.f32 %v1412, %v1417
      %v1433 = vmul.f32 %v1413, %v1417
      %v1434 = vadd.f32 %v1381, %v1418
      %v1435 = vadd.f32 %v1382, %v1419
      %v1436 = vadd.f32 %v1383, %v1420
      %v1437 = vadd.f32 %v1384, %v1421
      %v1438 = vadd.f32 %v1385, %v1422
      %v1439 = vadd.f32 %v1386, %v1423
      %v1440 = vadd.f32 %v1387, %v1424
      %v1441 = vadd.f32 %v1388, %v1425
      %v1442 = vadd.f32 %v1389, %v1426
      %v1443 = vadd.f32 %v1390, %v1427
      %v1444 = vadd.f32 %v1391, %v1428
      %v1445 = vadd.f32 %v1392, %v1429
      %v1446 = vadd.f32 %v1393, %v1430
      %v1447 = vadd.f32 %v1394, %v1431
      %v1448 = vadd.f32 %v1395, %v1432
      %v1449 = vadd.f32 %v1396, %v1433
      %v1450 = vld [vmem:[#allocation6 + $0x26] sm:$0x1]
      %v1451 = vld [vmem:[%s364] sm:$0xff]
      %v1452 = vld [vmem:[%s364 + $0x8] sm:$0xff]
      %v1453 = vld [vmem:[%s364 + $0x10] sm:$0xff]
      %v1454 = vld [vmem:[%s364 + $0x18] sm:$0xff]
      %v1455 = vld [vmem:[%s364 + $0x20] sm:$0xff]
      %v1456 = vld [vmem:[%s364 + $0x28] sm:$0xff]
      %v1457 = vld [vmem:[%s364 + $0x30] sm:$0xff]
      %v1458 = vld [vmem:[%s364 + $0x38] sm:$0xff]
      %v1459 = vld [vmem:[%s364 + $0x40] sm:$0xff]
      %v1460 = vld [vmem:[%s364 + $0x48] sm:$0xff]
      %v1461 = vld [vmem:[%s364 + $0x50] sm:$0xff]
      %v1462 = vld [vmem:[%s364 + $0x58] sm:$0xff]
      %v1463 = vld [vmem:[%s364 + $0x60] sm:$0xff]
      %v1464 = vld [vmem:[%s364 + $0x68] sm:$0xff]
      %v1465 = vld [vmem:[%s364 + $0x70] sm:$0xff]
      %v1466 = vld [vmem:[%s364 + $0x78] sm:$0xff]
      %v1467 = vlaneseq
      %v1468 = vshrl.u32 %v1467, 7
      %v1469 = vsub.s32 0, %v1468
      %v1470 = vrot.slane %v1450, %v1469
      %v1471 = vmul.f32 %v1451, %v1470
      %v1472 = vmul.f32 %v1452, %v1470
      %v1473 = vmul.f32 %v1453, %v1470
      %v1474 = vmul.f32 %v1454, %v1470
      %v1475 = vmul.f32 %v1455, %v1470
      %v1476 = vmul.f32 %v1456, %v1470
      %v1477 = vmul.f32 %v1457, %v1470
      %v1478 = vmul.f32 %v1458, %v1470
      %v1479 = vmul.f32 %v1459, %v1470
      %v1480 = vmul.f32 %v1460, %v1470
      %v1481 = vmul.f32 %v1461, %v1470
      %v1482 = vmul.f32 %v1462, %v1470
      %v1483 = vmul.f32 %v1463, %v1470
      %v1484 = vmul.f32 %v1464, %v1470
      %v1485 = vmul.f32 %v1465, %v1470
      %v1486 = vmul.f32 %v1466, %v1470
      %v1487 = vadd.f32 %v1434, %v1471
      %v1488 = vadd.f32 %v1435, %v1472
      %v1489 = vadd.f32 %v1436, %v1473
      %v1490 = vadd.f32 %v1437, %v1474
      %v1491 = vadd.f32 %v1438, %v1475
      %v1492 = vadd.f32 %v1439, %v1476
      %v1493 = vadd.f32 %v1440, %v1477
      %v1494 = vadd.f32 %v1441, %v1478
      %v1495 = vadd.f32 %v1442, %v1479
      %v1496 = vadd.f32 %v1443, %v1480
      %v1497 = vadd.f32 %v1444, %v1481
      %v1498 = vadd.f32 %v1445, %v1482
      %v1499 = vadd.f32 %v1446, %v1483
      %v1500 = vadd.f32 %v1447, %v1484
      %v1501 = vadd.f32 %v1448, %v1485
      %v1502 = vadd.f32 %v1449, %v1486
      %v1503 = vld [vmem:[#allocation6 + $0x2f] sm:$0x1]
      %v1504 = vld [vmem:[%s418] sm:$0xff]
      %v1505 = vld [vmem:[%s418 + $0x8] sm:$0xff]
      %v1506 = vld [vmem:[%s418 + $0x10] sm:$0xff]
      %v1507 = vld [vmem:[%s418 + $0x18] sm:$0xff]
      %v1508 = vld [vmem:[%s418 + $0x20] sm:$0xff]
      %v1509 = vld [vmem:[%s418 + $0x28] sm:$0xff]
      %v1510 = vld [vmem:[%s418 + $0x30] sm:$0xff]
      %v1511 = vld [vmem:[%s418 + $0x38] sm:$0xff]
      %v1512 = vld [vmem:[%s418 + $0x40] sm:$0xff]
      %v1513 = vld [vmem:[%s418 + $0x48] sm:$0xff]
      %v1514 = vld [vmem:[%s418 + $0x50] sm:$0xff]
      %v1515 = vld [vmem:[%s418 + $0x58] sm:$0xff]
      %v1516 = vld [vmem:[%s418 + $0x60] sm:$0xff]
      %v1517 = vld [vmem:[%s418 + $0x68] sm:$0xff]
      %v1518 = vld [vmem:[%s418 + $0x70] sm:$0xff]
      %v1519 = vld [vmem:[%s418 + $0x78] sm:$0xff]
      %v1520 = vlaneseq
      %v1521 = vshrl.u32 %v1520, 7
      %v1522 = vsub.s32 0, %v1521
      %v1523 = vrot.slane %v1503, %v1522
      %v1524 = vmul.f32 %v1504, %v1523
      %v1525 = vmul.f32 %v1505, %v1523
      %v1526 = vmul.f32 %v1506, %v1523
      %v1527 = vmul.f32 %v1507, %v1523
      %v1528 = vmul.f32 %v1508, %v1523
      %v1529 = vmul.f32 %v1509, %v1523
      %v1530 = vmul.f32 %v1510, %v1523
      %v1531 = vmul.f32 %v1511, %v1523
      %v1532 = vmul.f32 %v1512, %v1523
      %v1533 = vmul.f32 %v1513, %v1523
      %v1534 = vmul.f32 %v1514, %v1523
      %v1535 = vmul.f32 %v1515, %v1523
      %v1536 = vmul.f32 %v1516, %v1523
      %v1537 = vmul.f32 %v1517, %v1523
      %v1538 = vmul.f32 %v1518, %v1523
      %v1539 = vmul.f32 %v1519, %v1523
      %v1540 = vadd.f32 %v1487, %v1524
      %v1541 = vadd.f32 %v1488, %v1525
      %v1542 = vadd.f32 %v1489, %v1526
      %v1543 = vadd.f32 %v1490, %v1527
      %v1544 = vadd.f32 %v1491, %v1528
      %v1545 = vadd.f32 %v1492, %v1529
      %v1546 = vadd.f32 %v1493, %v1530
      %v1547 = vadd.f32 %v1494, %v1531
      %v1548 = vadd.f32 %v1495, %v1532
      %v1549 = vadd.f32 %v1496, %v1533
      %v1550 = vadd.f32 %v1497, %v1534
      %v1551 = vadd.f32 %v1498, %v1535
      %v1552 = vadd.f32 %v1499, %v1536
      %v1553 = vadd.f32 %v1500, %v1537
      %v1554 = vadd.f32 %v1501, %v1538
      %v1555 = vadd.f32 %v1502, %v1539
      %v1556 = vld [vmem:[#allocation6 + $0x38] sm:$0x1]
      %v1557 = vld [vmem:[%s472] sm:$0xff]
      %v1558 = vld [vmem:[%s472 + $0x8] sm:$0xff]
      %v1559 = vld [vmem:[%s472 + $0x10] sm:$0xff]
      %v1560 = vld [vmem:[%s472 + $0x18] sm:$0xff]
      %v1561 = vld [vmem:[%s472 + $0x20] sm:$0xff]
      %v1562 = vld [vmem:[%s472 + $0x28] sm:$0xff]
      %v1563 = vld [vmem:[%s472 + $0x30] sm:$0xff]
      %v1564 = vld [vmem:[%s472 + $0x38] sm:$0xff]
      %v1565 = vld [vmem:[%s472 + $0x40] sm:$0xff]
      %v1566 = vld [vmem:[%s472 + $0x48] sm:$0xff]
      %v1567 = vld [vmem:[%s472 + $0x50] sm:$0xff]
      %v1568 = vld [vmem:[%s472 + $0x58] sm:$0xff]
      %v1569 = vld [vmem:[%s472 + $0x60] sm:$0xff]
      %v1570 = vld [vmem:[%s472 + $0x68] sm:$0xff]
      %v1571 = vld [vmem:[%s472 + $0x70] sm:$0xff]
      %v1572 = vld [vmem:[%s472 + $0x78] sm:$0xff]
      %v1573 = vlaneseq
      %v1574 = vshrl.u32 %v1573, 7
      %v1575 = vsub.s32 0, %v1574
      %v1576 = vrot.slane %v1556, %v1575
      %v1577 = vmul.f32 %v1557, %v1576
      %v1578 = vmul.f32 %v1558, %v1576
      %v1579 = vmul.f32 %v1559, %v1576
      %v1580 = vmul.f32 %v1560, %v1576
      %v1581 = vmul.f32 %v1561, %v1576
      %v1582 = vmul.f32 %v1562, %v1576
      %v1583 = vmul.f32 %v1563, %v1576
      %v1584 = vmul.f32 %v1564, %v1576
      %v1585 = vmul.f32 %v1565, %v1576
      %v1586 = vmul.f32 %v1566, %v1576
      %v1587 = vmul.f32 %v1567, %v1576
      %v1588 = vmul.f32 %v1568, %v1576
      %v1589 = vmul.f32 %v1569, %v1576
      %v1590 = vmul.f32 %v1570, %v1576
      %v1591 = vmul.f32 %v1571, %v1576
      %v1592 = vmul.f32 %v1572, %v1576
      %v1593 = vadd.f32 %v1540, %v1577
      %v1594 = vadd.f32 %v1541, %v1578
      %v1595 = vadd.f32 %v1542, %v1579
      %v1596 = vadd.f32 %v1543, %v1580
      %v1597 = vadd.f32 %v1544, %v1581
      %v1598 = vadd.f32 %v1545, %v1582
      %v1599 = vadd.f32 %v1546, %v1583
      %v1600 = vadd.f32 %v1547, %v1584
      %v1601 = vadd.f32 %v1548, %v1585
      %v1602 = vadd.f32 %v1549, %v1586
      %v1603 = vadd.f32 %v1550, %v1587
      %v1604 = vadd.f32 %v1551, %v1588
      %v1605 = vadd.f32 %v1552, %v1589
      %v1606 = vadd.f32 %v1553, %v1590
      %v1607 = vadd.f32 %v1554, %v1591
      %v1608 = vadd.f32 %v1555, %v1592
      %v1609 = vld [vmem:[#allocation6 + $0x41] sm:$0x1]
      %v1610 = vld [vmem:[%s526] sm:$0xff]
      %v1611 = vld [vmem:[%s526 + $0x8] sm:$0xff]
      %v1612 = vld [vmem:[%s526 + $0x10] sm:$0xff]
      %v1613 = vld [vmem:[%s526 + $0x18] sm:$0xff]
      %v1614 = vld [vmem:[%s526 + $0x20] sm:$0xff]
      %v1615 = vld [vmem:[%s526 + $0x28] sm:$0xff]
      %v1616 = vld [vmem:[%s526 + $0x30] sm:$0xff]
      %v1617 = vld [vmem:[%s526 + $0x38] sm:$0xff]
      %v1618 = vld [vmem:[%s526 + $0x40] sm:$0xff]
      %v1619 = vld [vmem:[%s526 + $0x48] sm:$0xff]
      %v1620 = vld [vmem:[%s526 + $0x50] sm:$0xff]
      %v1621 = vld [vmem:[%s526 + $0x58] sm:$0xff]
      %v1622 = vld [vmem:[%s526 + $0x60] sm:$0xff]
      %v1623 = vld [vmem:[%s526 + $0x68] sm:$0xff]
      %v1624 = vld [vmem:[%s526 + $0x70] sm:$0xff]
      %v1625 = vld [vmem:[%s526 + $0x78] sm:$0xff]
      %v1626 = vlaneseq
      %v1627 = vshrl.u32 %v1626, 7
      %v1628 = vsub.s32 0, %v1627
      %v1629 = vrot.slane %v1609, %v1628
      %v1630 = vmul.f32 %v1610, %v1629
      %v1631 = vmul.f32 %v1611, %v1629
      %v1632 = vmul.f32 %v1612, %v1629
      %v1633 = vmul.f32 %v1613, %v1629
      %v1634 = vmul.f32 %v1614, %v1629
      %v1635 = vmul.f32 %v1615, %v1629
      %v1636 = vmul.f32 %v1616, %v1629
      %v1637 = vmul.f32 %v1617, %v1629
      %v1638 = vmul.f32 %v1618, %v1629
      %v1639 = vmul.f32 %v1619, %v1629
      %v1640 = vmul.f32 %v1620, %v1629
      %v1641 = vmul.f32 %v1621, %v1629
      %v1642 = vmul.f32 %v1622, %v1629
      %v1643 = vmul.f32 %v1623, %v1629
      %v1644 = vmul.f32 %v1624, %v1629
      %v1645 = vmul.f32 %v1625, %v1629
      %v1646 = vadd.f32 %v1593, %v1630
      %v1647 = vadd.f32 %v1594, %v1631
      %v1648 = vadd.f32 %v1595, %v1632
      %v1649 = vadd.f32 %v1596, %v1633
      %v1650 = vadd.f32 %v1597, %v1634
      %v1651 = vadd.f32 %v1598, %v1635
      %v1652 = vadd.f32 %v1599, %v1636
      %v1653 = vadd.f32 %v1600, %v1637
      %v1654 = vadd.f32 %v1601, %v1638
      %v1655 = vadd.f32 %v1602, %v1639
      %v1656 = vadd.f32 %v1603, %v1640
      %v1657 = vadd.f32 %v1604, %v1641
      %v1658 = vadd.f32 %v1605, %v1642
      %v1659 = vadd.f32 %v1606, %v1643
      %v1660 = vadd.f32 %v1607, %v1644
      %v1661 = vadd.f32 %v1608, %v1645
      %v1662 = vld [vmem:[#allocation6 + $0x4a] sm:$0x1]
      %v1663 = vld [vmem:[%s580] sm:$0xff]
      %v1664 = vld [vmem:[%s580 + $0x8] sm:$0xff]
      %v1665 = vld [vmem:[%s580 + $0x10] sm:$0xff]
      %v1666 = vld [vmem:[%s580 + $0x18] sm:$0xff]
      %v1667 = vld [vmem:[%s580 + $0x20] sm:$0xff]
      %v1668 = vld [vmem:[%s580 + $0x28] sm:$0xff]
      %v1669 = vld [vmem:[%s580 + $0x30] sm:$0xff]
      %v1670 = vld [vmem:[%s580 + $0x38] sm:$0xff]
      %v1671 = vld [vmem:[%s580 + $0x40] sm:$0xff]
      %v1672 = vld [vmem:[%s580 + $0x48] sm:$0xff]
      %v1673 = vld [vmem:[%s580 + $0x50] sm:$0xff]
      %v1674 = vld [vmem:[%s580 + $0x58] sm:$0xff]
      %v1675 = vld [vmem:[%s580 + $0x60] sm:$0xff]
      %v1676 = vld [vmem:[%s580 + $0x68] sm:$0xff]
      %v1677 = vld [vmem:[%s580 + $0x70] sm:$0xff]
      %v1678 = vld [vmem:[%s580 + $0x78] sm:$0xff]
      %v1679 = vlaneseq
      %v1680 = vshrl.u32 %v1679, 7
      %v1681 = vsub.s32 0, %v1680
      %v1682 = vrot.slane %v1662, %v1681
      %v1683 = vmul.f32 %v1663, %v1682
      %v1684 = vmul.f32 %v1664, %v1682
      %v1685 = vmul.f32 %v1665, %v1682
      %v1686 = vmul.f32 %v1666, %v1682
      %v1687 = vmul.f32 %v1667, %v1682
      %v1688 = vmul.f32 %v1668, %v1682
      %v1689 = vmul.f32 %v1669, %v1682
      %v1690 = vmul.f32 %v1670, %v1682
      %v1691 = vmul.f32 %v1671, %v1682
      %v1692 = vmul.f32 %v1672, %v1682
      %v1693 = vmul.f32 %v1673, %v1682
      %v1694 = vmul.f32 %v1674, %v1682
      %v1695 = vmul.f32 %v1675, %v1682
      %v1696 = vmul.f32 %v1676, %v1682
      %v1697 = vmul.f32 %v1677, %v1682
      %v1698 = vmul.f32 %v1678, %v1682
      %v1699 = vadd.f32 %v1646, %v1683
      %v1700 = vadd.f32 %v1647, %v1684
      %v1701 = vadd.f32 %v1648, %v1685
      %v1702 = vadd.f32 %v1649, %v1686
      %v1703 = vadd.f32 %v1650, %v1687
      %v1704 = vadd.f32 %v1651, %v1688
      %v1705 = vadd.f32 %v1652, %v1689
      %v1706 = vadd.f32 %v1653, %v1690
      %v1707 = vadd.f32 %v1654, %v1691
      %v1708 = vadd.f32 %v1655, %v1692
      %v1709 = vadd.f32 %v1656, %v1693
      %v1710 = vadd.f32 %v1657, %v1694
      %v1711 = vadd.f32 %v1658, %v1695
      %v1712 = vadd.f32 %v1659, %v1696
      %v1713 = vadd.f32 %v1660, %v1697
      %v1714 = vadd.f32 %v1661, %v1698
      %v1715 = vld [vmem:[%s83 + $0x3] sm:$0xff]
      %v1716 = vld [vmem:[%s83 + $0xb] sm:$0xff]
      %v1717 = vld [vmem:[%s83 + $0x1b] sm:$0xff]
      %v1718 = vld [vmem:[%s83 + $0x23] sm:$0xff]
      %v1719 = vld [vmem:[%s83 + $0x33] sm:$0xff]
      %v1720 = vld [vmem:[%s83 + $0x3b] sm:$0xff]
      %v1721 = vld [vmem:[%s83 + $0x4b] sm:$0xff]
      %v1722 = vld [vmem:[%s83 + $0x53] sm:$0xff]
      %v1723 = vld [vmem:[%s83 + $0x63] sm:$0xff]
      %v1724 = vld [vmem:[%s83 + $0x6b] sm:$0xff]
      %v1725 = vld [vmem:[%s83 + $0x7b] sm:$0xff]
      %v1726 = vld [vmem:[%s83 + $0x83] sm:$0xff]
      %v1727 = vld [vmem:[%s83 + $0x93] sm:$0xff]
      %v1728 = vld [vmem:[%s83 + $0x9b] sm:$0xff]
      %v1729 = vld [vmem:[%s83 + $0xab] sm:$0xff]
      %v1730 = vld [vmem:[%s83 + $0xb3] sm:$0xff]
      %v1731 = vld [vmem:[%s83 + $0xc3] sm:$0xff]
      %v1732 = vld [vmem:[%s83 + $0xcb] sm:$0xff]
      %v1733 = vld [vmem:[%s83 + $0xdb] sm:$0xff]
      %v1734 = vld [vmem:[%s83 + $0xe3] sm:$0xff]
      %v1735 = vld [vmem:[%s83 + $0xf3] sm:$0xff]
      %v1736 = vld [vmem:[%s83 + $0xfb] sm:$0xff]
      %v1737 = vld [vmem:[%s83 + $0x10b] sm:$0xff]
      %v1738 = vld [vmem:[%s83 + $0x113] sm:$0xff]
      %v1739 = vld [vmem:[%s83 + $0x123] sm:$0xff]
      %v1740 = vld [vmem:[%s83 + $0x12b] sm:$0xff]
      %v1741 = vld [vmem:[%s83 + $0x13b] sm:$0xff]
      %v1742 = vld [vmem:[%s83 + $0x143] sm:$0xff]
      %v1743 = vld [vmem:[%s83 + $0x153] sm:$0xff]
      %v1744 = vld [vmem:[%s83 + $0x15b] sm:$0xff]
      %v1745 = vld [vmem:[%s83 + $0x16b] sm:$0xff]
      %v1746 = vld [vmem:[%s83 + $0x173] sm:$0xff]
      %1747 = vst [vmem:[#allocation2] sm:$0xff] %v1715
      %1748 = vst [vmem:[#allocation2 + $0x8] sm:$0xff] %v1716
      %1749 = vst [vmem:[#allocation2 + $0x10] sm:$0xff] %v1717
      %1750 = vst [vmem:[#allocation2 + $0x18] sm:$0xff] %v1718
      %1751 = vst [vmem:[#allocation2 + $0x20] sm:$0xff] %v1719
      %1752 = vst [vmem:[#allocation2 + $0x28] sm:$0xff] %v1720
      %1753 = vst [vmem:[#allocation2 + $0x30] sm:$0xff] %v1721
      %1754 = vst [vmem:[#allocation2 + $0x38] sm:$0xff] %v1722
      %1755 = vst [vmem:[#allocation2 + $0x40] sm:$0xff] %v1723
      %1756 = vst [vmem:[#allocation2 + $0x48] sm:$0xff] %v1724
      %1757 = vst [vmem:[#allocation2 + $0x50] sm:$0xff] %v1725
      %1758 = vst [vmem:[#allocation2 + $0x58] sm:$0xff] %v1726
      %1759 = vst [vmem:[#allocation2 + $0x60] sm:$0xff] %v1727
      %1760 = vst [vmem:[#allocation2 + $0x68] sm:$0xff] %v1728
      %1761 = vst [vmem:[#allocation2 + $0x70] sm:$0xff] %v1729
      %1762 = vst [vmem:[#allocation2 + $0x78] sm:$0xff] %v1730
      %1763 = vst [vmem:[#allocation2 + $0x80] sm:$0xff] %v1731
      %1764 = vst [vmem:[#allocation2 + $0x88] sm:$0xff] %v1732
      %1765 = vst [vmem:[#allocation2 + $0x90] sm:$0xff] %v1733
      %1766 = vst [vmem:[#allocation2 + $0x98] sm:$0xff] %v1734
      %1767 = vst [vmem:[#allocation2 + $0xa0] sm:$0xff] %v1735
      %1768 = vst [vmem:[#allocation2 + $0xa8] sm:$0xff] %v1736
      %1769 = vst [vmem:[#allocation2 + $0xb0] sm:$0xff] %v1737
      %1770 = vst [vmem:[#allocation2 + $0xb8] sm:$0xff] %v1738
      %1771 = vst [vmem:[#allocation2 + $0xc0] sm:$0xff] %v1739
      %1772 = vst [vmem:[#allocation2 + $0xc8] sm:$0xff] %v1740
      %1773 = vst [vmem:[#allocation2 + $0xd0] sm:$0xff] %v1741
      %1774 = vst [vmem:[#allocation2 + $0xd8] sm:$0xff] %v1742
      %1775 = vst [vmem:[#allocation2 + $0xe0] sm:$0xff] %v1743
      %1776 = vst [vmem:[#allocation2 + $0xe8] sm:$0xff] %v1744
      %1777 = vst [vmem:[#allocation2 + $0xf0] sm:$0xff] %v1745
      %1778 = vst [vmem:[#allocation2 + $0xf8] sm:$0xff] %v1746
      %v1779 = vld [vmem:[#allocation6 + $0x3] sm:$0x1]
      %v1780 = vld [vmem:[#allocation2] sm:$0xff]
      %v1781 = vld [vmem:[#allocation2 + $0x8] sm:$0xff]
      %v1782 = vld [vmem:[#allocation2 + $0x10] sm:$0xff]
      %v1783 = vld [vmem:[#allocation2 + $0x18] sm:$0xff]
      %v1784 = vld [vmem:[#allocation2 + $0x20] sm:$0xff]
      %v1785 = vld [vmem:[#allocation2 + $0x28] sm:$0xff]
      %v1786 = vld [vmem:[#allocation2 + $0x30] sm:$0xff]
      %v1787 = vld [vmem:[#allocation2 + $0x38] sm:$0xff]
      %v1788 = vld [vmem:[#allocation2 + $0x40] sm:$0xff]
      %v1789 = vld [vmem:[#allocation2 + $0x48] sm:$0xff]
      %v1790 = vld [vmem:[#allocation2 + $0x50] sm:$0xff]
      %v1791 = vld [vmem:[#allocation2 + $0x58] sm:$0xff]
      %v1792 = vld [vmem:[#allocation2 + $0x60] sm:$0xff]
      %v1793 = vld [vmem:[#allocation2 + $0x68] sm:$0xff]
      %v1794 = vld [vmem:[#allocation2 + $0x70] sm:$0xff]
      %v1795 = vld [vmem:[#allocation2 + $0x78] sm:$0xff]
      %v1796 = vlaneseq
      %v1797 = vshrl.u32 %v1796, 7
      %v1798 = vsub.s32 0, %v1797
      %v1799 = vrot.slane %v1779, %v1798
      %v1800 = vmul.f32 %v1780, %v1799
      %v1801 = vmul.f32 %v1781, %v1799
      %v1802 = vmul.f32 %v1782, %v1799
      %v1803 = vmul.f32 %v1783, %v1799
      %v1804 = vmul.f32 %v1784, %v1799
      %v1805 = vmul.f32 %v1785, %v1799
      %v1806 = vmul.f32 %v1786, %v1799
      %v1807 = vmul.f32 %v1787, %v1799
      %v1808 = vmul.f32 %v1788, %v1799
      %v1809 = vmul.f32 %v1789, %v1799
      %v1810 = vmul.f32 %v1790, %v1799
      %v1811 = vmul.f32 %v1791, %v1799
      %v1812 = vmul.f32 %v1792, %v1799
      %v1813 = vmul.f32 %v1793, %v1799
      %v1814 = vmul.f32 %v1794, %v1799
      %v1815 = vmul.f32 %v1795, %v1799
      %v1816 = vadd.f32 %v1699, %v1800
      %v1817 = vadd.f32 %v1700, %v1801
      %v1818 = vadd.f32 %v1701, %v1802
      %v1819 = vadd.f32 %v1702, %v1803
      %v1820 = vadd.f32 %v1703, %v1804
      %v1821 = vadd.f32 %v1704, %v1805
      %v1822 = vadd.f32 %v1705, %v1806
      %v1823 = vadd.f32 %v1706, %v1807
      %v1824 = vadd.f32 %v1707, %v1808
      %v1825 = vadd.f32 %v1708, %v1809
      %v1826 = vadd.f32 %v1709, %v1810
      %v1827 = vadd.f32 %v1710, %v1811
      %v1828 = vadd.f32 %v1711, %v1812
      %v1829 = vadd.f32 %v1712, %v1813
      %v1830 = vadd.f32 %v1713, %v1814
      %v1831 = vadd.f32 %v1714, %v1815
      %v1832 = vld [vmem:[#allocation6 + $0xc] sm:$0x1]
      %v1833 = vld [vmem:[%s202] sm:$0xff]
      %v1834 = vld [vmem:[%s202 + $0x8] sm:$0xff]
      %v1835 = vld [vmem:[%s202 + $0x10] sm:$0xff]
      %v1836 = vld [vmem:[%s202 + $0x18] sm:$0xff]
      %v1837 = vld [vmem:[%s202 + $0x20] sm:$0xff]
      %v1838 = vld [vmem:[%s202 + $0x28] sm:$0xff]
      %v1839 = vld [vmem:[%s202 + $0x30] sm:$0xff]
      %v1840 = vld [vmem:[%s202 + $0x38] sm:$0xff]
      %v1841 = vld [vmem:[%s202 + $0x40] sm:$0xff]
      %v1842 = vld [vmem:[%s202 + $0x48] sm:$0xff]
      %v1843 = vld [vmem:[%s202 + $0x50] sm:$0xff]
      %v1844 = vld [vmem:[%s202 + $0x58] sm:$0xff]
      %v1845 = vld [vmem:[%s202 + $0x60] sm:$0xff]
      %v1846 = vld [vmem:[%s202 + $0x68] sm:$0xff]
      %v1847 = vld [vmem:[%s202 + $0x70] sm:$0xff]
      %v1848 = vld [vmem:[%s202 + $0x78] sm:$0xff]
      %v1849 = vlaneseq
      %v1850 = vshrl.u32 %v1849, 7
      %v1851 = vsub.s32 0, %v1850
      %v1852 = vrot.slane %v1832, %v1851
      %v1853 = vmul.f32 %v1833, %v1852
      %v1854 = vmul.f32 %v1834, %v1852
      %v1855 = vmul.f32 %v1835, %v1852
      %v1856 = vmul.f32 %v1836, %v1852
      %v1857 = vmul.f32 %v1837, %v1852
      %v1858 = vmul.f32 %v1838, %v1852
      %v1859 = vmul.f32 %v1839, %v1852
      %v1860 = vmul.f32 %v1840, %v1852
      %v1861 = vmul.f32 %v1841, %v1852
      %v1862 = vmul.f32 %v1842, %v1852
      %v1863 = vmul.f32 %v1843, %v1852
      %v1864 = vmul.f32 %v1844, %v1852
      %v1865 = vmul.f32 %v1845, %v1852
      %v1866 = vmul.f32 %v1846, %v1852
      %v1867 = vmul.f32 %v1847, %v1852
      %v1868 = vmul.f32 %v1848, %v1852
      %v1869 = vadd.f32 %v1816, %v1853
      %v1870 = vadd.f32 %v1817, %v1854
      %v1871 = vadd.f32 %v1818, %v1855
      %v1872 = vadd.f32 %v1819, %v1856
      %v1873 = vadd.f32 %v1820, %v1857
      %v1874 = vadd.f32 %v1821, %v1858
      %v1875 = vadd.f32 %v1822, %v1859
      %v1876 = vadd.f32 %v1823, %v1860
      %v1877 = vadd.f32 %v1824, %v1861
      %v1878 = vadd.f32 %v1825, %v1862
      %v1879 = vadd.f32 %v1826, %v1863
      %v1880 = vadd.f32 %v1827, %v1864
      %v1881 = vadd.f32 %v1828, %v1865
      %v1882 = vadd.f32 %v1829, %v1866
      %v1883 = vadd.f32 %v1830, %v1867
      %v1884 = vadd.f32 %v1831, %v1868
      %v1885 = vld [vmem:[#allocation6 + $0x15] sm:$0x1]
      %v1886 = vld [vmem:[%s256] sm:$0xff]
      %v1887 = vld [vmem:[%s256 + $0x8] sm:$0xff]
      %v1888 = vld [vmem:[%s256 + $0x10] sm:$0xff]
      %v1889 = vld [vmem:[%s256 + $0x18] sm:$0xff]
      %v1890 = vld [vmem:[%s256 + $0x20] sm:$0xff]
      %v1891 = vld [vmem:[%s256 + $0x28] sm:$0xff]
      %v1892 = vld [vmem:[%s256 + $0x30] sm:$0xff]
      %v1893 = vld [vmem:[%s256 + $0x38] sm:$0xff]
      %v1894 = vld [vmem:[%s256 + $0x40] sm:$0xff]
      %v1895 = vld [vmem:[%s256 + $0x48] sm:$0xff]
      %v1896 = vld [vmem:[%s256 + $0x50] sm:$0xff]
      %v1897 = vld [vmem:[%s256 + $0x58] sm:$0xff]
      %v1898 = vld [vmem:[%s256 + $0x60] sm:$0xff]
      %v1899 = vld [vmem:[%s256 + $0x68] sm:$0xff]
      %v1900 = vld [vmem:[%s256 + $0x70] sm:$0xff]
      %v1901 = vld [vmem:[%s256 + $0x78] sm:$0xff]
      %v1902 = vlaneseq
      %v1903 = vshrl.u32 %v1902, 7
      %v1904 = vsub.s32 0, %v1903
      %v1905 = vrot.slane %v1885, %v1904
      %v1906 = vmul.f32 %v1886, %v1905
      %v1907 = vmul.f32 %v1887, %v1905
      %v1908 = vmul.f32 %v1888, %v1905
      %v1909 = vmul.f32 %v1889, %v1905
      %v1910 = vmul.f32 %v1890, %v1905
      %v1911 = vmul.f32 %v1891, %v1905
      %v1912 = vmul.f32 %v1892, %v1905
      %v1913 = vmul.f32 %v1893, %v1905
      %v1914 = vmul.f32 %v1894, %v1905
      %v1915 = vmul.f32 %v1895, %v1905
      %v1916 = vmul.f32 %v1896, %v1905
      %v1917 = vmul.f32 %v1897, %v1905
      %v1918 = vmul.f32 %v1898, %v1905
      %v1919 = vmul.f32 %v1899, %v1905
      %v1920 = vmul.f32 %v1900, %v1905
      %v1921 = vmul.f32 %v1901, %v1905
      %v1922 = vadd.f32 %v1869, %v1906
      %v1923 = vadd.f32 %v1870, %v1907
      %v1924 = vadd.f32 %v1871, %v1908
      %v1925 = vadd.f32 %v1872, %v1909
      %v1926 = vadd.f32 %v1873, %v1910
      %v1927 = vadd.f32 %v1874, %v1911
      %v1928 = vadd.f32 %v1875, %v1912
      %v1929 = vadd.f32 %v1876, %v1913
      %v1930 = vadd.f32 %v1877, %v1914
      %v1931 = vadd.f32 %v1878, %v1915
      %v1932 = vadd.f32 %v1879, %v1916
      %v1933 = vadd.f32 %v1880, %v1917
      %v1934 = vadd.f32 %v1881, %v1918
      %v1935 = vadd.f32 %v1882, %v1919
      %v1936 = vadd.f32 %v1883, %v1920
      %v1937 = vadd.f32 %v1884, %v1921
      %v1938 = vld [vmem:[#allocation6 + $0x1e] sm:$0x1]
      %v1939 = vld [vmem:[%s310] sm:$0xff]
      %v1940 = vld [vmem:[%s310 + $0x8] sm:$0xff]
      %v1941 = vld [vmem:[%s310 + $0x10] sm:$0xff]
      %v1942 = vld [vmem:[%s310 + $0x18] sm:$0xff]
      %v1943 = vld [vmem:[%s310 + $0x20] sm:$0xff]
      %v1944 = vld [vmem:[%s310 + $0x28] sm:$0xff]
      %v1945 = vld [vmem:[%s310 + $0x30] sm:$0xff]
      %v1946 = vld [vmem:[%s310 + $0x38] sm:$0xff]
      %v1947 = vld [vmem:[%s310 + $0x40] sm:$0xff]
      %v1948 = vld [vmem:[%s310 + $0x48] sm:$0xff]
      %v1949 = vld [vmem:[%s310 + $0x50] sm:$0xff]
      %v1950 = vld [vmem:[%s310 + $0x58] sm:$0xff]
      %v1951 = vld [vmem:[%s310 + $0x60] sm:$0xff]
      %v1952 = vld [vmem:[%s310 + $0x68] sm:$0xff]
      %v1953 = vld [vmem:[%s310 + $0x70] sm:$0xff]
      %v1954 = vld [vmem:[%s310 + $0x78] sm:$0xff]
      %v1955 = vlaneseq
      %v1956 = vshrl.u32 %v1955, 7
      %v1957 = vsub.s32 0, %v1956
      %v1958 = vrot.slane %v1938, %v1957
      %v1959 = vmul.f32 %v1939, %v1958
      %v1960 = vmul.f32 %v1940, %v1958
      %v1961 = vmul.f32 %v1941, %v1958
      %v1962 = vmul.f32 %v1942, %v1958
      %v1963 = vmul.f32 %v1943, %v1958
      %v1964 = vmul.f32 %v1944, %v1958
      %v1965 = vmul.f32 %v1945, %v1958
      %v1966 = vmul.f32 %v1946, %v1958
      %v1967 = vmul.f32 %v1947, %v1958
      %v1968 = vmul.f32 %v1948, %v1958
      %v1969 = vmul.f32 %v1949, %v1958
      %v1970 = vmul.f32 %v1950, %v1958
      %v1971 = vmul.f32 %v1951, %v1958
      %v1972 = vmul.f32 %v1952, %v1958
      %v1973 = vmul.f32 %v1953, %v1958
      %v1974 = vmul.f32 %v1954, %v1958
      %v1975 = vadd.f32 %v1922, %v1959
      %v1976 = vadd.f32 %v1923, %v1960
      %v1977 = vadd.f32 %v1924, %v1961
      %v1978 = vadd.f32 %v1925, %v1962
      %v1979 = vadd.f32 %v1926, %v1963
      %v1980 = vadd.f32 %v1927, %v1964
      %v1981 = vadd.f32 %v1928, %v1965
      %v1982 = vadd.f32 %v1929, %v1966
      %v1983 = vadd.f32 %v1930, %v1967
      %v1984 = vadd.f32 %v1931, %v1968
      %v1985 = vadd.f32 %v1932, %v1969
      %v1986 = vadd.f32 %v1933, %v1970
      %v1987 = vadd.f32 %v1934, %v1971
      %v1988 = vadd.f32 %v1935, %v1972
      %v1989 = vadd.f32 %v1936, %v1973
      %v1990 = vadd.f32 %v1937, %v1974
      %v1991 = vld [vmem:[#allocation6 + $0x27] sm:$0x1]
      %v1992 = vld [vmem:[%s364] sm:$0xff]
      %v1993 = vld [vmem:[%s364 + $0x8] sm:$0xff]
      %v1994 = vld [vmem:[%s364 + $0x10] sm:$0xff]
      %v1995 = vld [vmem:[%s364 + $0x18] sm:$0xff]
      %v1996 = vld [vmem:[%s364 + $0x20] sm:$0xff]
      %v1997 = vld [vmem:[%s364 + $0x28] sm:$0xff]
      %v1998 = vld [vmem:[%s364 + $0x30] sm:$0xff]
      %v1999 = vld [vmem:[%s364 + $0x38] sm:$0xff]
      %v2000 = vld [vmem:[%s364 + $0x40] sm:$0xff]
      %v2001 = vld [vmem:[%s364 + $0x48] sm:$0xff]
      %v2002 = vld [vmem:[%s364 + $0x50] sm:$0xff]
      %v2003 = vld [vmem:[%s364 + $0x58] sm:$0xff]
      %v2004 = vld [vmem:[%s364 + $0x60] sm:$0xff]
      %v2005 = vld [vmem:[%s364 + $0x68] sm:$0xff]
      %v2006 = vld [vmem:[%s364 + $0x70] sm:$0xff]
      %v2007 = vld [vmem:[%s364 + $0x78] sm:$0xff]
      %v2008 = vlaneseq
      %v2009 = vshrl.u32 %v2008, 7
      %v2010 = vsub.s32 0, %v2009
      %v2011 = vrot.slane %v1991, %v2010
      %v2012 = vmul.f32 %v1992, %v2011
      %v2013 = vmul.f32 %v1993, %v2011
      %v2014 = vmul.f32 %v1994, %v2011
      %v2015 = vmul.f32 %v1995, %v2011
      %v2016 = vmul.f32 %v1996, %v2011
      %v2017 = vmul.f32 %v1997, %v2011
      %v2018 = vmul.f32 %v1998, %v2011
      %v2019 = vmul.f32 %v1999, %v2011
      %v2020 = vmul.f32 %v2000, %v2011
      %v2021 = vmul.f32 %v2001, %v2011
      %v2022 = vmul.f32 %v2002, %v2011
      %v2023 = vmul.f32 %v2003, %v2011
      %v2024 = vmul.f32 %v2004, %v2011
      %v2025 = vmul.f32 %v2005, %v2011
      %v2026 = vmul.f32 %v2006, %v2011
      %v2027 = vmul.f32 %v2007, %v2011
      %v2028 = vadd.f32 %v1975, %v2012
      %v2029 = vadd.f32 %v1976, %v2013
      %v2030 = vadd.f32 %v1977, %v2014
      %v2031 = vadd.f32 %v1978, %v2015
      %v2032 = vadd.f32 %v1979, %v2016
      %v2033 = vadd.f32 %v1980, %v2017
      %v2034 = vadd.f32 %v1981, %v2018
      %v2035 = vadd.f32 %v1982, %v2019
      %v2036 = vadd.f32 %v1983, %v2020
      %v2037 = vadd.f32 %v1984, %v2021
      %v2038 = vadd.f32 %v1985, %v2022
      %v2039 = vadd.f32 %v1986, %v2023
      %v2040 = vadd.f32 %v1987, %v2024
      %v2041 = vadd.f32 %v1988, %v2025
      %v2042 = vadd.f32 %v1989, %v2026
      %v2043 = vadd.f32 %v1990, %v2027
      %v2044 = vld [vmem:[#allocation6 + $0x30] sm:$0x1]
      %v2045 = vld [vmem:[%s418] sm:$0xff]
      %v2046 = vld [vmem:[%s418 + $0x8] sm:$0xff]
      %v2047 = vld [vmem:[%s418 + $0x10] sm:$0xff]
      %v2048 = vld [vmem:[%s418 + $0x18] sm:$0xff]
      %v2049 = vld [vmem:[%s418 + $0x20] sm:$0xff]
      %v2050 = vld [vmem:[%s418 + $0x28] sm:$0xff]
      %v2051 = vld [vmem:[%s418 + $0x30] sm:$0xff]
      %v2052 = vld [vmem:[%s418 + $0x38] sm:$0xff]
      %v2053 = vld [vmem:[%s418 + $0x40] sm:$0xff]
      %v2054 = vld [vmem:[%s418 + $0x48] sm:$0xff]
      %v2055 = vld [vmem:[%s418 + $0x50] sm:$0xff]
      %v2056 = vld [vmem:[%s418 + $0x58] sm:$0xff]
      %v2057 = vld [vmem:[%s418 + $0x60] sm:$0xff]
      %v2058 = vld [vmem:[%s418 + $0x68] sm:$0xff]
      %v2059 = vld [vmem:[%s418 + $0x70] sm:$0xff]
      %v2060 = vld [vmem:[%s418 + $0x78] sm:$0xff]
      %v2061 = vlaneseq
      %v2062 = vshrl.u32 %v2061, 7
      %v2063 = vsub.s32 0, %v2062
      %v2064 = vrot.slane %v2044, %v2063
      %v2065 = vmul.f32 %v2045, %v2064
      %v2066 = vmul.f32 %v2046, %v2064
      %v2067 = vmul.f32 %v2047, %v2064
      %v2068 = vmul.f32 %v2048, %v2064
      %v2069 = vmul.f32 %v2049, %v2064
      %v2070 = vmul.f32 %v2050, %v2064
      %v2071 = vmul.f32 %v2051, %v2064
      %v2072 = vmul.f32 %v2052, %v2064
      %v2073 = vmul.f32 %v2053, %v2064
      %v2074 = vmul.f32 %v2054, %v2064
      %v2075 = vmul.f32 %v2055, %v2064
      %v2076 = vmul.f32 %v2056, %v2064
      %v2077 = vmul.f32 %v2057, %v2064
      %v2078 = vmul.f32 %v2058, %v2064
      %v2079 = vmul.f32 %v2059, %v2064
      %v2080 = vmul.f32 %v2060, %v2064
      %v2081 = vadd.f32 %v2028, %v2065
      %v2082 = vadd.f32 %v2029, %v2066
      %v2083 = vadd.f32 %v2030, %v2067
      %v2084 = vadd.f32 %v2031, %v2068
      %v2085 = vadd.f32 %v2032, %v2069
      %v2086 = vadd.f32 %v2033, %v2070
      %v2087 = vadd.f32 %v2034, %v2071
      %v2088 = vadd.f32 %v2035, %v2072
      %v2089 = vadd.f32 %v2036, %v2073
      %v2090 = vadd.f32 %v2037, %v2074
      %v2091 = vadd.f32 %v2038, %v2075
      %v2092 = vadd.f32 %v2039, %v2076
      %v2093 = vadd.f32 %v2040, %v2077
      %v2094 = vadd.f32 %v2041, %v2078
      %v2095 = vadd.f32 %v2042, %v2079
      %v2096 = vadd.f32 %v2043, %v2080
      %v2097 = vld [vmem:[#allocation6 + $0x39] sm:$0x1]
      %v2098 = vld [vmem:[%s472] sm:$0xff]
      %v2099 = vld [vmem:[%s472 + $0x8] sm:$0xff]
      %v2100 = vld [vmem:[%s472 + $0x10] sm:$0xff]
      %v2101 = vld [vmem:[%s472 + $0x18] sm:$0xff]
      %v2102 = vld [vmem:[%s472 + $0x20] sm:$0xff]
      %v2103 = vld [vmem:[%s472 + $0x28] sm:$0xff]
      %v2104 = vld [vmem:[%s472 + $0x30] sm:$0xff]
      %v2105 = vld [vmem:[%s472 + $0x38] sm:$0xff]
      %v2106 = vld [vmem:[%s472 + $0x40] sm:$0xff]
      %v2107 = vld [vmem:[%s472 + $0x48] sm:$0xff]
      %v2108 = vld [vmem:[%s472 + $0x50] sm:$0xff]
      %v2109 = vld [vmem:[%s472 + $0x58] sm:$0xff]
      %v2110 = vld [vmem:[%s472 + $0x60] sm:$0xff]
      %v2111 = vld [vmem:[%s472 + $0x68] sm:$0xff]
      %v2112 = vld [vmem:[%s472 + $0x70] sm:$0xff]
      %v2113 = vld [vmem:[%s472 + $0x78] sm:$0xff]
      %v2114 = vlaneseq
      %v2115 = vshrl.u32 %v2114, 7
      %v2116 = vsub.s32 0, %v2115
      %v2117 = vrot.slane %v2097, %v2116
      %v2118 = vmul.f32 %v2098, %v2117
      %v2119 = vmul.f32 %v2099, %v2117
      %v2120 = vmul.f32 %v2100, %v2117
      %v2121 = vmul.f32 %v2101, %v2117
      %v2122 = vmul.f32 %v2102, %v2117
      %v2123 = vmul.f32 %v2103, %v2117
      %v2124 = vmul.f32 %v2104, %v2117
      %v2125 = vmul.f32 %v2105, %v2117
      %v2126 = vmul.f32 %v2106, %v2117
      %v2127 = vmul.f32 %v2107, %v2117
      %v2128 = vmul.f32 %v2108, %v2117
      %v2129 = vmul.f32 %v2109, %v2117
      %v2130 = vmul.f32 %v2110, %v2117
      %v2131 = vmul.f32 %v2111, %v2117
      %v2132 = vmul.f32 %v2112, %v2117
      %v2133 = vmul.f32 %v2113, %v2117
      %v2134 = vadd.f32 %v2081, %v2118
      %v2135 = vadd.f32 %v2082, %v2119
      %v2136 = vadd.f32 %v2083, %v2120
      %v2137 = vadd.f32 %v2084, %v2121
      %v2138 = vadd.f32 %v2085, %v2122
      %v2139 = vadd.f32 %v2086, %v2123
      %v2140 = vadd.f32 %v2087, %v2124
      %v2141 = vadd.f32 %v2088, %v2125
      %v2142 = vadd.f32 %v2089, %v2126
      %v2143 = vadd.f32 %v2090, %v2127
      %v2144 = vadd.f32 %v2091, %v2128
      %v2145 = vadd.f32 %v2092, %v2129
      %v2146 = vadd.f32 %v2093, %v2130
      %v2147 = vadd.f32 %v2094, %v2131
      %v2148 = vadd.f32 %v2095, %v2132
      %v2149 = vadd.f32 %v2096, %v2133
      %v2150 = vld [vmem:[#allocation6 + $0x42] sm:$0x1]
      %v2151 = vld [vmem:[%s526] sm:$0xff]
      %v2152 = vld [vmem:[%s526 + $0x8] sm:$0xff]
      %v2153 = vld [vmem:[%s526 + $0x10] sm:$0xff]
      %v2154 = vld [vmem:[%s526 + $0x18] sm:$0xff]
      %v2155 = vld [vmem:[%s526 + $0x20] sm:$0xff]
      %v2156 = vld [vmem:[%s526 + $0x28] sm:$0xff]
      %v2157 = vld [vmem:[%s526 + $0x30] sm:$0xff]
      %v2158 = vld [vmem:[%s526 + $0x38] sm:$0xff]
      %v2159 = vld [vmem:[%s526 + $0x40] sm:$0xff]
      %v2160 = vld [vmem:[%s526 + $0x48] sm:$0xff]
      %v2161 = vld [vmem:[%s526 + $0x50] sm:$0xff]
      %v2162 = vld [vmem:[%s526 + $0x58] sm:$0xff]
      %v2163 = vld [vmem:[%s526 + $0x60] sm:$0xff]
      %v2164 = vld [vmem:[%s526 + $0x68] sm:$0xff]
      %v2165 = vld [vmem:[%s526 + $0x70] sm:$0xff]
      %v2166 = vld [vmem:[%s526 + $0x78] sm:$0xff]
      %v2167 = vlaneseq
      %v2168 = vshrl.u32 %v2167, 7
      %v2169 = vsub.s32 0, %v2168
      %v2170 = vrot.slane %v2150, %v2169
      %v2171 = vmul.f32 %v2151, %v2170
      %v2172 = vmul.f32 %v2152, %v2170
      %v2173 = vmul.f32 %v2153, %v2170
      %v2174 = vmul.f32 %v2154, %v2170
      %v2175 = vmul.f32 %v2155, %v2170
      %v2176 = vmul.f32 %v2156, %v2170
      %v2177 = vmul.f32 %v2157, %v2170
      %v2178 = vmul.f32 %v2158, %v2170
      %v2179 = vmul.f32 %v2159, %v2170
      %v2180 = vmul.f32 %v2160, %v2170
      %v2181 = vmul.f32 %v2161, %v2170
      %v2182 = vmul.f32 %v2162, %v2170
      %v2183 = vmul.f32 %v2163, %v2170
      %v2184 = vmul.f32 %v2164, %v2170
      %v2185 = vmul.f32 %v2165, %v2170
      %v2186 = vmul.f32 %v2166, %v2170
      %v2187 = vadd.f32 %v2134, %v2171
      %v2188 = vadd.f32 %v2135, %v2172
      %v2189 = vadd.f32 %v2136, %v2173
      %v2190 = vadd.f32 %v2137, %v2174
      %v2191 = vadd.f32 %v2138, %v2175
      %v2192 = vadd.f32 %v2139, %v2176
      %v2193 = vadd.f32 %v2140, %v2177
      %v2194 = vadd.f32 %v2141, %v2178
      %v2195 = vadd.f32 %v2142, %v2179
      %v2196 = vadd.f32 %v2143, %v2180
      %v2197 = vadd.f32 %v2144, %v2181
      %v2198 = vadd.f32 %v2145, %v2182
      %v2199 = vadd.f32 %v2146, %v2183
      %v2200 = vadd.f32 %v2147, %v2184
      %v2201 = vadd.f32 %v2148, %v2185
      %v2202 = vadd.f32 %v2149, %v2186
      %v2203 = vld [vmem:[#allocation6 + $0x4b] sm:$0x1]
      %v2204 = vld [vmem:[%s580] sm:$0xff]
      %v2205 = vld [vmem:[%s580 + $0x8] sm:$0xff]
      %v2206 = vld [vmem:[%s580 + $0x10] sm:$0xff]
      %v2207 = vld [vmem:[%s580 + $0x18] sm:$0xff]
      %v2208 = vld [vmem:[%s580 + $0x20] sm:$0xff]
      %v2209 = vld [vmem:[%s580 + $0x28] sm:$0xff]
      %v2210 = vld [vmem:[%s580 + $0x30] sm:$0xff]
      %v2211 = vld [vmem:[%s580 + $0x38] sm:$0xff]
      %v2212 = vld [vmem:[%s580 + $0x40] sm:$0xff]
      %v2213 = vld [vmem:[%s580 + $0x48] sm:$0xff]
      %v2214 = vld [vmem:[%s580 + $0x50] sm:$0xff]
      %v2215 = vld [vmem:[%s580 + $0x58] sm:$0xff]
      %v2216 = vld [vmem:[%s580 + $0x60] sm:$0xff]
      %v2217 = vld [vmem:[%s580 + $0x68] sm:$0xff]
      %v2218 = vld [vmem:[%s580 + $0x70] sm:$0xff]
      %v2219 = vld [vmem:[%s580 + $0x78] sm:$0xff]
      %v2220 = vlaneseq
      %v2221 = vshrl.u32 %v2220, 7
      %v2222 = vsub.s32 0, %v2221
      %v2223 = vrot.slane %v2203, %v2222
      %v2224 = vmul.f32 %v2204, %v2223
      %v2225 = vmul.f32 %v2205, %v2223
      %v2226 = vmul.f32 %v2206, %v2223
      %v2227 = vmul.f32 %v2207, %v2223
      %v2228 = vmul.f32 %v2208, %v2223
      %v2229 = vmul.f32 %v2209, %v2223
      %v2230 = vmul.f32 %v2210, %v2223
      %v2231 = vmul.f32 %v2211, %v2223
      %v2232 = vmul.f32 %v2212, %v2223
      %v2233 = vmul.f32 %v2213, %v2223
      %v2234 = vmul.f32 %v2214, %v2223
      %v2235 = vmul.f32 %v2215, %v2223
      %v2236 = vmul.f32 %v2216, %v2223
      %v2237 = vmul.f32 %v2217, %v2223
      %v2238 = vmul.f32 %v2218, %v2223
      %v2239 = vmul.f32 %v2219, %v2223
      %v2240 = vadd.f32 %v2187, %v2224
      %v2241 = vadd.f32 %v2188, %v2225
      %v2242 = vadd.f32 %v2189, %v2226
      %v2243 = vadd.f32 %v2190, %v2227
      %v2244 = vadd.f32 %v2191, %v2228
      %v2245 = vadd.f32 %v2192, %v2229
      %v2246 = vadd.f32 %v2193, %v2230
      %v2247 = vadd.f32 %v2194, %v2231
      %v2248 = vadd.f32 %v2195, %v2232
      %v2249 = vadd.f32 %v2196, %v2233
      %v2250 = vadd.f32 %v2197, %v2234
      %v2251 = vadd.f32 %v2198, %v2235
      %v2252 = vadd.f32 %v2199, %v2236
      %v2253 = vadd.f32 %v2200, %v2237
      %v2254 = vadd.f32 %v2201, %v2238
      %v2255 = vadd.f32 %v2202, %v2239
      %v2256 = vld [vmem:[%s83 + $0x4] sm:$0xff]
      %v2257 = vld [vmem:[%s83 + $0xc] sm:$0xff]
      %v2258 = vld [vmem:[%s83 + $0x1c] sm:$0xff]
      %v2259 = vld [vmem:[%s83 + $0x24] sm:$0xff]
      %v2260 = vld [vmem:[%s83 + $0x34] sm:$0xff]
      %v2261 = vld [vmem:[%s83 + $0x3c] sm:$0xff]
      %v2262 = vld [vmem:[%s83 + $0x4c] sm:$0xff]
      %v2263 = vld [vmem:[%s83 + $0x54] sm:$0xff]
      %v2264 = vld [vmem:[%s83 + $0x64] sm:$0xff]
      %v2265 = vld [vmem:[%s83 + $0x6c] sm:$0xff]
      %v2266 = vld [vmem:[%s83 + $0x7c] sm:$0xff]
      %v2267 = vld [vmem:[%s83 + $0x84] sm:$0xff]
      %v2268 = vld [vmem:[%s83 + $0x94] sm:$0xff]
      %v2269 = vld [vmem:[%s83 + $0x9c] sm:$0xff]
      %v2270 = vld [vmem:[%s83 + $0xac] sm:$0xff]
      %v2271 = vld [vmem:[%s83 + $0xb4] sm:$0xff]
      %v2272 = vld [vmem:[%s83 + $0xc4] sm:$0xff]
      %v2273 = vld [vmem:[%s83 + $0xcc] sm:$0xff]
      %v2274 = vld [vmem:[%s83 + $0xdc] sm:$0xff]
      %v2275 = vld [vmem:[%s83 + $0xe4] sm:$0xff]
      %v2276 = vld [vmem:[%s83 + $0xf4] sm:$0xff]
      %v2277 = vld [vmem:[%s83 + $0xfc] sm:$0xff]
      %v2278 = vld [vmem:[%s83 + $0x10c] sm:$0xff]
      %v2279 = vld [vmem:[%s83 + $0x114] sm:$0xff]
      %v2280 = vld [vmem:[%s83 + $0x124] sm:$0xff]
      %v2281 = vld [vmem:[%s83 + $0x12c] sm:$0xff]
      %v2282 = vld [vmem:[%s83 + $0x13c] sm:$0xff]
      %v2283 = vld [vmem:[%s83 + $0x144] sm:$0xff]
      %v2284 = vld [vmem:[%s83 + $0x154] sm:$0xff]
      %v2285 = vld [vmem:[%s83 + $0x15c] sm:$0xff]
      %v2286 = vld [vmem:[%s83 + $0x16c] sm:$0xff]
      %v2287 = vld [vmem:[%s83 + $0x174] sm:$0xff]
      %2288 = vst [vmem:[#allocation2] sm:$0xff] %v2256
      %2289 = vst [vmem:[#allocation2 + $0x8] sm:$0xff] %v2257
      %2290 = vst [vmem:[#allocation2 + $0x10] sm:$0xff] %v2258
      %2291 = vst [vmem:[#allocation2 + $0x18] sm:$0xff] %v2259
      %2292 = vst [vmem:[#allocation2 + $0x20] sm:$0xff] %v2260
      %2293 = vst [vmem:[#allocation2 + $0x28] sm:$0xff] %v2261
      %2294 = vst [vmem:[#allocation2 + $0x30] sm:$0xff] %v2262
      %2295 = vst [vmem:[#allocation2 + $0x38] sm:$0xff] %v2263
      %2296 = vst [vmem:[#allocation2 + $0x40] sm:$0xff] %v2264
      %2297 = vst [vmem:[#allocation2 + $0x48] sm:$0xff] %v2265
      %2298 = vst [vmem:[#allocation2 + $0x50] sm:$0xff] %v2266
      %2299 = vst [vmem:[#allocation2 + $0x58] sm:$0xff] %v2267
      %2300 = vst [vmem:[#allocation2 + $0x60] sm:$0xff] %v2268
      %2301 = vst [vmem:[#allocation2 + $0x68] sm:$0xff] %v2269
      %2302 = vst [vmem:[#allocation2 + $0x70] sm:$0xff] %v2270
      %2303 = vst [vmem:[#allocation2 + $0x78] sm:$0xff] %v2271
      %2304 = vst [vmem:[#allocation2 + $0x80] sm:$0xff] %v2272
      %2305 = vst [vmem:[#allocation2 + $0x88] sm:$0xff] %v2273
      %2306 = vst [vmem:[#allocation2 + $0x90] sm:$0xff] %v2274
      %2307 = vst [vmem:[#allocation2 + $0x98] sm:$0xff] %v2275
      %2308 = vst [vmem:[#allocation2 + $0xa0] sm:$0xff] %v2276
      %2309 = vst [vmem:[#allocation2 + $0xa8] sm:$0xff] %v2277
      %2310 = vst [vmem:[#allocation2 + $0xb0] sm:$0xff] %v2278
      %2311 = vst [vmem:[#allocation2 + $0xb8] sm:$0xff] %v2279
      %2312 = vst [vmem:[#allocation2 + $0xc0] sm:$0xff] %v2280
      %2313 = vst [vmem:[#allocation2 + $0xc8] sm:$0xff] %v2281
      %2314 = vst [vmem:[#allocation2 + $0xd0] sm:$0xff] %v2282
      %2315 = vst [vmem:[#allocation2 + $0xd8] sm:$0xff] %v2283
      %2316 = vst [vmem:[#allocation2 + $0xe0] sm:$0xff] %v2284
      %2317 = vst [vmem:[#allocation2 + $0xe8] sm:$0xff] %v2285
      %2318 = vst [vmem:[#allocation2 + $0xf0] sm:$0xff] %v2286
      %2319 = vst [vmem:[#allocation2 + $0xf8] sm:$0xff] %v2287
      %v2320 = vld [vmem:[#allocation6 + $0x4] sm:$0x1]
      %v2321 = vld [vmem:[#allocation2] sm:$0xff]
      %v2322 = vld [vmem:[#allocation2 + $0x8] sm:$0xff]
      %v2323 = vld [vmem:[#allocation2 + $0x10] sm:$0xff]
      %v2324 = vld [vmem:[#allocation2 + $0x18] sm:$0xff]
      %v2325 = vld [vmem:[#allocation2 + $0x20] sm:$0xff]
      %v2326 = vld [vmem:[#allocation2 + $0x28] sm:$0xff]
      %v2327 = vld [vmem:[#allocation2 + $0x30] sm:$0xff]
      %v2328 = vld [vmem:[#allocation2 + $0x38] sm:$0xff]
      %v2329 = vld [vmem:[#allocation2 + $0x40] sm:$0xff]
      %v2330 = vld [vmem:[#allocation2 + $0x48] sm:$0xff]
      %v2331 = vld [vmem:[#allocation2 + $0x50] sm:$0xff]
      %v2332 = vld [vmem:[#allocation2 + $0x58] sm:$0xff]
      %v2333 = vld [vmem:[#allocation2 + $0x60] sm:$0xff]
      %v2334 = vld [vmem:[#allocation2 + $0x68] sm:$0xff]
      %v2335 = vld [vmem:[#allocation2 + $0x70] sm:$0xff]
      %v2336 = vld [vmem:[#allocation2 + $0x78] sm:$0xff]
      %v2337 = vlaneseq
      %v2338 = vshrl.u32 %v2337, 7
      %v2339 = vsub.s32 0, %v2338
      %v2340 = vrot.slane %v2320, %v2339
      %v2341 = vmul.f32 %v2321, %v2340
      %v2342 = vmul.f32 %v2322, %v2340
      %v2343 = vmul.f32 %v2323, %v2340
      %v2344 = vmul.f32 %v2324, %v2340
      %v2345 = vmul.f32 %v2325, %v2340
      %v2346 = vmul.f32 %v2326, %v2340
      %v2347 = vmul.f32 %v2327, %v2340
      %v2348 = vmul.f32 %v2328, %v2340
      %v2349 = vmul.f32 %v2329, %v2340
      %v2350 = vmul.f32 %v2330, %v2340
      %v2351 = vmul.f32 %v2331, %v2340
      %v2352 = vmul.f32 %v2332, %v2340
      %v2353 = vmul.f32 %v2333, %v2340
      %v2354 = vmul.f32 %v2334, %v2340
      %v2355 = vmul.f32 %v2335, %v2340
      %v2356 = vmul.f32 %v2336, %v2340
      %v2357 = vadd.f32 %v2240, %v2341
      %v2358 = vadd.f32 %v2241, %v2342
      %v2359 = vadd.f32 %v2242, %v2343
      %v2360 = vadd.f32 %v2243, %v2344
      %v2361 = vadd.f32 %v2244, %v2345
      %v2362 = vadd.f32 %v2245, %v2346
      %v2363 = vadd.f32 %v2246, %v2347
      %v2364 = vadd.f32 %v2247, %v2348
      %v2365 = vadd.f32 %v2248, %v2349
      %v2366 = vadd.f32 %v2249, %v2350
      %v2367 = vadd.f32 %v2250, %v2351
      %v2368 = vadd.f32 %v2251, %v2352
      %v2369 = vadd.f32 %v2252, %v2353
      %v2370 = vadd.f32 %v2253, %v2354
      %v2371 = vadd.f32 %v2254, %v2355
      %v2372 = vadd.f32 %v2255, %v2356
      %v2373 = vld [vmem:[#allocation6 + $0xd] sm:$0x1]
      %v2374 = vld [vmem:[%s202] sm:$0xff]
      %v2375 = vld [vmem:[%s202 + $0x8] sm:$0xff]
      %v2376 = vld [vmem:[%s202 + $0x10] sm:$0xff]
      %v2377 = vld [vmem:[%s202 + $0x18] sm:$0xff]
      %v2378 = vld [vmem:[%s202 + $0x20] sm:$0xff]
      %v2379 = vld [vmem:[%s202 + $0x28] sm:$0xff]
      %v2380 = vld [vmem:[%s202 + $0x30] sm:$0xff]
      %v2381 = vld [vmem:[%s202 + $0x38] sm:$0xff]
      %v2382 = vld [vmem:[%s202 + $0x40] sm:$0xff]
      %v2383 = vld [vmem:[%s202 + $0x48] sm:$0xff]
      %v2384 = vld [vmem:[%s202 + $0x50] sm:$0xff]
      %v2385 = vld [vmem:[%s202 + $0x58] sm:$0xff]
      %v2386 = vld [vmem:[%s202 + $0x60] sm:$0xff]
      %v2387 = vld [vmem:[%s202 + $0x68] sm:$0xff]
      %v2388 = vld [vmem:[%s202 + $0x70] sm:$0xff]
      %v2389 = vld [vmem:[%s202 + $0x78] sm:$0xff]
      %v2390 = vlaneseq
      %v2391 = vshrl.u32 %v2390, 7
      %v2392 = vsub.s32 0, %v2391
      %v2393 = vrot.slane %v2373, %v2392
      %v2394 = vmul.f32 %v2374, %v2393
      %v2395 = vmul.f32 %v2375, %v2393
      %v2396 = vmul.f32 %v2376, %v2393
      %v2397 = vmul.f32 %v2377, %v2393
      %v2398 = vmul.f32 %v2378, %v2393
      %v2399 = vmul.f32 %v2379, %v2393
      %v2400 = vmul.f32 %v2380, %v2393
      %v2401 = vmul.f32 %v2381, %v2393
      %v2402 = vmul.f32 %v2382, %v2393
      %v2403 = vmul.f32 %v2383, %v2393
      %v2404 = vmul.f32 %v2384, %v2393
      %v2405 = vmul.f32 %v2385, %v2393
      %v2406 = vmul.f32 %v2386, %v2393
      %v2407 = vmul.f32 %v2387, %v2393
      %v2408 = vmul.f32 %v2388, %v2393
      %v2409 = vmul.f32 %v2389, %v2393
      %v2410 = vadd.f32 %v2357, %v2394
      %v2411 = vadd.f32 %v2358, %v2395
      %v2412 = vadd.f32 %v2359, %v2396
      %v2413 = vadd.f32 %v2360, %v2397
      %v2414 = vadd.f32 %v2361, %v2398
      %v2415 = vadd.f32 %v2362, %v2399
      %v2416 = vadd.f32 %v2363, %v2400
      %v2417 = vadd.f32 %v2364, %v2401
      %v2418 = vadd.f32 %v2365, %v2402
      %v2419 = vadd.f32 %v2366, %v2403
      %v2420 = vadd.f32 %v2367, %v2404
      %v2421 = vadd.f32 %v2368, %v2405
      %v2422 = vadd.f32 %v2369, %v2406
      %v2423 = vadd.f32 %v2370, %v2407
      %v2424 = vadd.f32 %v2371, %v2408
      %v2425 = vadd.f32 %v2372, %v2409
      %v2426 = vld [vmem:[#allocation6 + $0x16] sm:$0x1]
      %v2427 = vld [vmem:[%s256] sm:$0xff]
      %v2428 = vld [vmem:[%s256 + $0x8] sm:$0xff]
      %v2429 = vld [vmem:[%s256 + $0x10] sm:$0xff]
      %v2430 = vld [vmem:[%s256 + $0x18] sm:$0xff]
      %v2431 = vld [vmem:[%s256 + $0x20] sm:$0xff]
      %v2432 = vld [vmem:[%s256 + $0x28] sm:$0xff]
      %v2433 = vld [vmem:[%s256 + $0x30] sm:$0xff]
      %v2434 = vld [vmem:[%s256 + $0x38] sm:$0xff]
      %v2435 = vld [vmem:[%s256 + $0x40] sm:$0xff]
      %v2436 = vld [vmem:[%s256 + $0x48] sm:$0xff]
      %v2437 = vld [vmem:[%s256 + $0x50] sm:$0xff]
      %v2438 = vld [vmem:[%s256 + $0x58] sm:$0xff]
      %v2439 = vld [vmem:[%s256 + $0x60] sm:$0xff]
      %v2440 = vld [vmem:[%s256 + $0x68] sm:$0xff]
      %v2441 = vld [vmem:[%s256 + $0x70] sm:$0xff]
      %v2442 = vld [vmem:[%s256 + $0x78] sm:$0xff]
      %v2443 = vlaneseq
      %v2444 = vshrl.u32 %v2443, 7
      %v2445 = vsub.s32 0, %v2444
      %v2446 = vrot.slane %v2426, %v2445
      %v2447 = vmul.f32 %v2427, %v2446
      %v2448 = vmul.f32 %v2428, %v2446
      %v2449 = vmul.f32 %v2429, %v2446
      %v2450 = vmul.f32 %v2430, %v2446
      %v2451 = vmul.f32 %v2431, %v2446
      %v2452 = vmul.f32 %v2432, %v2446
      %v2453 = vmul.f32 %v2433, %v2446
      %v2454 = vmul.f32 %v2434, %v2446
      %v2455 = vmul.f32 %v2435, %v2446
      %v2456 = vmul.f32 %v2436, %v2446
      %v2457 = vmul.f32 %v2437, %v2446
      %v2458 = vmul.f32 %v2438, %v2446
      %v2459 = vmul.f32 %v2439, %v2446
      %v2460 = vmul.f32 %v2440, %v2446
      %v2461 = vmul.f32 %v2441, %v2446
      %v2462 = vmul.f32 %v2442, %v2446
      %v2463 = vadd.f32 %v2410, %v2447
      %v2464 = vadd.f32 %v2411, %v2448
      %v2465 = vadd.f32 %v2412, %v2449
      %v2466 = vadd.f32 %v2413, %v2450
      %v2467 = vadd.f32 %v2414, %v2451
      %v2468 = vadd.f32 %v2415, %v2452
      %v2469 = vadd.f32 %v2416, %v2453
      %v2470 = vadd.f32 %v2417, %v2454
      %v2471 = vadd.f32 %v2418, %v2455
      %v2472 = vadd.f32 %v2419, %v2456
      %v2473 = vadd.f32 %v2420, %v2457
      %v2474 = vadd.f32 %v2421, %v2458
      %v2475 = vadd.f32 %v2422, %v2459
      %v2476 = vadd.f32 %v2423, %v2460
      %v2477 = vadd.f32 %v2424, %v2461
      %v2478 = vadd.f32 %v2425, %v2462
      %v2479 = vld [vmem:[#allocation6 + $0x1f] sm:$0x1]
      %v2480 = vld [vmem:[%s310] sm:$0xff]
      %v2481 = vld [vmem:[%s310 + $0x8] sm:$0xff]
      %v2482 = vld [vmem:[%s310 + $0x10] sm:$0xff]
      %v2483 = vld [vmem:[%s310 + $0x18] sm:$0xff]
      %v2484 = vld [vmem:[%s310 + $0x20] sm:$0xff]
      %v2485 = vld [vmem:[%s310 + $0x28] sm:$0xff]
      %v2486 = vld [vmem:[%s310 + $0x30] sm:$0xff]
      %v2487 = vld [vmem:[%s310 + $0x38] sm:$0xff]
      %v2488 = vld [vmem:[%s310 + $0x40] sm:$0xff]
      %v2489 = vld [vmem:[%s310 + $0x48] sm:$0xff]
      %v2490 = vld [vmem:[%s310 + $0x50] sm:$0xff]
      %v2491 = vld [vmem:[%s310 + $0x58] sm:$0xff]
      %v2492 = vld [vmem:[%s310 + $0x60] sm:$0xff]
      %v2493 = vld [vmem:[%s310 + $0x68] sm:$0xff]
      %v2494 = vld [vmem:[%s310 + $0x70] sm:$0xff]
      %v2495 = vld [vmem:[%s310 + $0x78] sm:$0xff]
      %v2496 = vlaneseq
      %v2497 = vshrl.u32 %v2496, 7
      %v2498 = vsub.s32 0, %v2497
      %v2499 = vrot.slane %v2479, %v2498
      %v2500 = vmul.f32 %v2480, %v2499
      %v2501 = vmul.f32 %v2481, %v2499
      %v2502 = vmul.f32 %v2482, %v2499
      %v2503 = vmul.f32 %v2483, %v2499
      %v2504 = vmul.f32 %v2484, %v2499
      %v2505 = vmul.f32 %v2485, %v2499
      %v2506 = vmul.f32 %v2486, %v2499
      %v2507 = vmul.f32 %v2487, %v2499
      %v2508 = vmul.f32 %v2488, %v2499
      %v2509 = vmul.f32 %v2489, %v2499
      %v2510 = vmul.f32 %v2490, %v2499
      %v2511 = vmul.f32 %v2491, %v2499
      %v2512 = vmul.f32 %v2492, %v2499
      %v2513 = vmul.f32 %v2493, %v2499
      %v2514 = vmul.f32 %v2494, %v2499
      %v2515 = vmul.f32 %v2495, %v2499
      %v2516 = vadd.f32 %v2463, %v2500
      %v2517 = vadd.f32 %v2464, %v2501
      %v2518 = vadd.f32 %v2465, %v2502
      %v2519 = vadd.f32 %v2466, %v2503
      %v2520 = vadd.f32 %v2467, %v2504
      %v2521 = vadd.f32 %v2468, %v2505
      %v2522 = vadd.f32 %v2469, %v2506
      %v2523 = vadd.f32 %v2470, %v2507
      %v2524 = vadd.f32 %v2471, %v2508
      %v2525 = vadd.f32 %v2472, %v2509
      %v2526 = vadd.f32 %v2473, %v2510
      %v2527 = vadd.f32 %v2474, %v2511
      %v2528 = vadd.f32 %v2475, %v2512
      %v2529 = vadd.f32 %v2476, %v2513
      %v2530 = vadd.f32 %v2477, %v2514
      %v2531 = vadd.f32 %v2478, %v2515
      %v2532 = vld [vmem:[#allocation6 + $0x28] sm:$0x1]
      %v2533 = vld [vmem:[%s364] sm:$0xff]
      %v2534 = vld [vmem:[%s364 + $0x8] sm:$0xff]
      %v2535 = vld [vmem:[%s364 + $0x10] sm:$0xff]
      %v2536 = vld [vmem:[%s364 + $0x18] sm:$0xff]
      %v2537 = vld [vmem:[%s364 + $0x20] sm:$0xff]
      %v2538 = vld [vmem:[%s364 + $0x28] sm:$0xff]
      %v2539 = vld [vmem:[%s364 + $0x30] sm:$0xff]
      %v2540 = vld [vmem:[%s364 + $0x38] sm:$0xff]
      %v2541 = vld [vmem:[%s364 + $0x40] sm:$0xff]
      %v2542 = vld [vmem:[%s364 + $0x48] sm:$0xff]
      %v2543 = vld [vmem:[%s364 + $0x50] sm:$0xff]
      %v2544 = vld [vmem:[%s364 + $0x58] sm:$0xff]
      %v2545 = vld [vmem:[%s364 + $0x60] sm:$0xff]
      %v2546 = vld [vmem:[%s364 + $0x68] sm:$0xff]
      %v2547 = vld [vmem:[%s364 + $0x70] sm:$0xff]
      %v2548 = vld [vmem:[%s364 + $0x78] sm:$0xff]
      %v2549 = vlaneseq
      %v2550 = vshrl.u32 %v2549, 7
      %v2551 = vsub.s32 0, %v2550
      %v2552 = vrot.slane %v2532, %v2551
      %v2553 = vmul.f32 %v2533, %v2552
      %v2554 = vmul.f32 %v2534, %v2552
      %v2555 = vmul.f32 %v2535, %v2552
      %v2556 = vmul.f32 %v2536, %v2552
      %v2557 = vmul.f32 %v2537, %v2552
      %v2558 = vmul.f32 %v2538, %v2552
      %v2559 = vmul.f32 %v2539, %v2552
      %v2560 = vmul.f32 %v2540, %v2552
      %v2561 = vmul.f32 %v2541, %v2552
      %v2562 = vmul.f32 %v2542, %v2552
      %v2563 = vmul.f32 %v2543, %v2552
      %v2564 = vmul.f32 %v2544, %v2552
      %v2565 = vmul.f32 %v2545, %v2552
      %v2566 = vmul.f32 %v2546, %v2552
      %v2567 = vmul.f32 %v2547, %v2552
      %v2568 = vmul.f32 %v2548, %v2552
      %v2569 = vadd.f32 %v2516, %v2553
      %v2570 = vadd.f32 %v2517, %v2554
      %v2571 = vadd.f32 %v2518, %v2555
      %v2572 = vadd.f32 %v2519, %v2556
      %v2573 = vadd.f32 %v2520, %v2557
      %v2574 = vadd.f32 %v2521, %v2558
      %v2575 = vadd.f32 %v2522, %v2559
      %v2576 = vadd.f32 %v2523, %v2560
      %v2577 = vadd.f32 %v2524, %v2561
      %v2578 = vadd.f32 %v2525, %v2562
      %v2579 = vadd.f32 %v2526, %v2563
      %v2580 = vadd.f32 %v2527, %v2564
      %v2581 = vadd.f32 %v2528, %v2565
      %v2582 = vadd.f32 %v2529, %v2566
      %v2583 = vadd.f32 %v2530, %v2567
      %v2584 = vadd.f32 %v2531, %v2568
      %v2585 = vld [vmem:[#allocation6 + $0x31] sm:$0x1]
      %v2586 = vld [vmem:[%s418] sm:$0xff]
      %v2587 = vld [vmem:[%s418 + $0x8] sm:$0xff]
      %v2588 = vld [vmem:[%s418 + $0x10] sm:$0xff]
      %v2589 = vld [vmem:[%s418 + $0x18] sm:$0xff]
      %v2590 = vld [vmem:[%s418 + $0x20] sm:$0xff]
      %v2591 = vld [vmem:[%s418 + $0x28] sm:$0xff]
      %v2592 = vld [vmem:[%s418 + $0x30] sm:$0xff]
      %v2593 = vld [vmem:[%s418 + $0x38] sm:$0xff]
      %v2594 = vld [vmem:[%s418 + $0x40] sm:$0xff]
      %v2595 = vld [vmem:[%s418 + $0x48] sm:$0xff]
      %v2596 = vld [vmem:[%s418 + $0x50] sm:$0xff]
      %v2597 = vld [vmem:[%s418 + $0x58] sm:$0xff]
      %v2598 = vld [vmem:[%s418 + $0x60] sm:$0xff]
      %v2599 = vld [vmem:[%s418 + $0x68] sm:$0xff]
      %v2600 = vld [vmem:[%s418 + $0x70] sm:$0xff]
      %v2601 = vld [vmem:[%s418 + $0x78] sm:$0xff]
      %v2602 = vlaneseq
      %v2603 = vshrl.u32 %v2602, 7
      %v2604 = vsub.s32 0, %v2603
      %v2605 = vrot.slane %v2585, %v2604
      %v2606 = vmul.f32 %v2586, %v2605
      %v2607 = vmul.f32 %v2587, %v2605
      %v2608 = vmul.f32 %v2588, %v2605
      %v2609 = vmul.f32 %v2589, %v2605
      %v2610 = vmul.f32 %v2590, %v2605
      %v2611 = vmul.f32 %v2591, %v2605
      %v2612 = vmul.f32 %v2592, %v2605
      %v2613 = vmul.f32 %v2593, %v2605
      %v2614 = vmul.f32 %v2594, %v2605
      %v2615 = vmul.f32 %v2595, %v2605
      %v2616 = vmul.f32 %v2596, %v2605
      %v2617 = vmul.f32 %v2597, %v2605
      %v2618 = vmul.f32 %v2598, %v2605
      %v2619 = vmul.f32 %v2599, %v2605
      %v2620 = vmul.f32 %v2600, %v2605
      %v2621 = vmul.f32 %v2601, %v2605
      %v2622 = vadd.f32 %v2569, %v2606
      %v2623 = vadd.f32 %v2570, %v2607
      %v2624 = vadd.f32 %v2571, %v2608
      %v2625 = vadd.f32 %v2572, %v2609
      %v2626 = vadd.f32 %v2573, %v2610
      %v2627 = vadd.f32 %v2574, %v2611
      %v2628 = vadd.f32 %v2575, %v2612
      %v2629 = vadd.f32 %v2576, %v2613
      %v2630 = vadd.f32 %v2577, %v2614
      %v2631 = vadd.f32 %v2578, %v2615
      %v2632 = vadd.f32 %v2579, %v2616
      %v2633 = vadd.f32 %v2580, %v2617
      %v2634 = vadd.f32 %v2581, %v2618
      %v2635 = vadd.f32 %v2582, %v2619
      %v2636 = vadd.f32 %v2583, %v2620
      %v2637 = vadd.f32 %v2584, %v2621
      %v2638 = vld [vmem:[#allocation6 + $0x3a] sm:$0x1]
      %v2639 = vld [vmem:[%s472] sm:$0xff]
      %v2640 = vld [vmem:[%s472 + $0x8] sm:$0xff]
      %v2641 = vld [vmem:[%s472 + $0x10] sm:$0xff]
      %v2642 = vld [vmem:[%s472 + $0x18] sm:$0xff]
      %v2643 = vld [vmem:[%s472 + $0x20] sm:$0xff]
      %v2644 = vld [vmem:[%s472 + $0x28] sm:$0xff]
      %v2645 = vld [vmem:[%s472 + $0x30] sm:$0xff]
      %v2646 = vld [vmem:[%s472 + $0x38] sm:$0xff]
      %v2647 = vld [vmem:[%s472 + $0x40] sm:$0xff]
      %v2648 = vld [vmem:[%s472 + $0x48] sm:$0xff]
      %v2649 = vld [vmem:[%s472 + $0x50] sm:$0xff]
      %v2650 = vld [vmem:[%s472 + $0x58] sm:$0xff]
      %v2651 = vld [vmem:[%s472 + $0x60] sm:$0xff]
      %v2652 = vld [vmem:[%s472 + $0x68] sm:$0xff]
      %v2653 = vld [vmem:[%s472 + $0x70] sm:$0xff]
      %v2654 = vld [vmem:[%s472 + $0x78] sm:$0xff]
      %v2655 = vlaneseq
      %v2656 = vshrl.u32 %v2655, 7
      %v2657 = vsub.s32 0, %v2656
      %v2658 = vrot.slane %v2638, %v2657
      %v2659 = vmul.f32 %v2639, %v2658
      %v2660 = vmul.f32 %v2640, %v2658
      %v2661 = vmul.f32 %v2641, %v2658
      %v2662 = vmul.f32 %v2642, %v2658
      %v2663 = vmul.f32 %v2643, %v2658
      %v2664 = vmul.f32 %v2644, %v2658
      %v2665 = vmul.f32 %v2645, %v2658
      %v2666 = vmul.f32 %v2646, %v2658
      %v2667 = vmul.f32 %v2647, %v2658
      %v2668 = vmul.f32 %v2648, %v2658
      %v2669 = vmul.f32 %v2649, %v2658
      %v2670 = vmul.f32 %v2650, %v2658
      %v2671 = vmul.f32 %v2651, %v2658
      %v2672 = vmul.f32 %v2652, %v2658
      %v2673 = vmul.f32 %v2653, %v2658
      %v2674 = vmul.f32 %v2654, %v2658
      %v2675 = vadd.f32 %v2622, %v2659
      %v2676 = vadd.f32 %v2623, %v2660
      %v2677 = vadd.f32 %v2624, %v2661
      %v2678 = vadd.f32 %v2625, %v2662
      %v2679 = vadd.f32 %v2626, %v2663
      %v2680 = vadd.f32 %v2627, %v2664
      %v2681 = vadd.f32 %v2628, %v2665
      %v2682 = vadd.f32 %v2629, %v2666
      %v2683 = vadd.f32 %v2630, %v2667
      %v2684 = vadd.f32 %v2631, %v2668
      %v2685 = vadd.f32 %v2632, %v2669
      %v2686 = vadd.f32 %v2633, %v2670
      %v2687 = vadd.f32 %v2634, %v2671
      %v2688 = vadd.f32 %v2635, %v2672
      %v2689 = vadd.f32 %v2636, %v2673
      %v2690 = vadd.f32 %v2637, %v2674
      %v2691 = vld [vmem:[#allocation6 + $0x43] sm:$0x1]
      %v2692 = vld [vmem:[%s526] sm:$0xff]
      %v2693 = vld [vmem:[%s526 + $0x8] sm:$0xff]
      %v2694 = vld [vmem:[%s526 + $0x10] sm:$0xff]
      %v2695 = vld [vmem:[%s526 + $0x18] sm:$0xff]
      %v2696 = vld [vmem:[%s526 + $0x20] sm:$0xff]
      %v2697 = vld [vmem:[%s526 + $0x28] sm:$0xff]
      %v2698 = vld [vmem:[%s526 + $0x30] sm:$0xff]
      %v2699 = vld [vmem:[%s526 + $0x38] sm:$0xff]
      %v2700 = vld [vmem:[%s526 + $0x40] sm:$0xff]
      %v2701 = vld [vmem:[%s526 + $0x48] sm:$0xff]
      %v2702 = vld [vmem:[%s526 + $0x50] sm:$0xff]
      %v2703 = vld [vmem:[%s526 + $0x58] sm:$0xff]
      %v2704 = vld [vmem:[%s526 + $0x60] sm:$0xff]
      %v2705 = vld [vmem:[%s526 + $0x68] sm:$0xff]
      %v2706 = vld [vmem:[%s526 + $0x70] sm:$0xff]
      %v2707 = vld [vmem:[%s526 + $0x78] sm:$0xff]
      %v2708 = vlaneseq
      %v2709 = vshrl.u32 %v2708, 7
      %v2710 = vsub.s32 0, %v2709
      %v2711 = vrot.slane %v2691, %v2710
      %v2712 = vmul.f32 %v2692, %v2711
      %v2713 = vmul.f32 %v2693, %v2711
      %v2714 = vmul.f32 %v2694, %v2711
      %v2715 = vmul.f32 %v2695, %v2711
      %v2716 = vmul.f32 %v2696, %v2711
      %v2717 = vmul.f32 %v2697, %v2711
      %v2718 = vmul.f32 %v2698, %v2711
      %v2719 = vmul.f32 %v2699, %v2711
      %v2720 = vmul.f32 %v2700, %v2711
      %v2721 = vmul.f32 %v2701, %v2711
      %v2722 = vmul.f32 %v2702, %v2711
      %v2723 = vmul.f32 %v2703, %v2711
      %v2724 = vmul.f32 %v2704, %v2711
      %v2725 = vmul.f32 %v2705, %v2711
      %v2726 = vmul.f32 %v2706, %v2711
      %v2727 = vmul.f32 %v2707, %v2711
      %v2728 = vadd.f32 %v2675, %v2712
      %v2729 = vadd.f32 %v2676, %v2713
      %v2730 = vadd.f32 %v2677, %v2714
      %v2731 = vadd.f32 %v2678, %v2715
      %v2732 = vadd.f32 %v2679, %v2716
      %v2733 = vadd.f32 %v2680, %v2717
      %v2734 = vadd.f32 %v2681, %v2718
      %v2735 = vadd.f32 %v2682, %v2719
      %v2736 = vadd.f32 %v2683, %v2720
      %v2737 = vadd.f32 %v2684, %v2721
      %v2738 = vadd.f32 %v2685, %v2722
      %v2739 = vadd.f32 %v2686, %v2723
      %v2740 = vadd.f32 %v2687, %v2724
      %v2741 = vadd.f32 %v2688, %v2725
      %v2742 = vadd.f32 %v2689, %v2726
      %v2743 = vadd.f32 %v2690, %v2727
      %v2744 = vld [vmem:[#allocation6 + $0x4c] sm:$0x1]
      %v2745 = vld [vmem:[%s580] sm:$0xff]
      %v2746 = vld [vmem:[%s580 + $0x8] sm:$0xff]
      %v2747 = vld [vmem:[%s580 + $0x10] sm:$0xff]
      %v2748 = vld [vmem:[%s580 + $0x18] sm:$0xff]
      %v2749 = vld [vmem:[%s580 + $0x20] sm:$0xff]
      %v2750 = vld [vmem:[%s580 + $0x28] sm:$0xff]
      %v2751 = vld [vmem:[%s580 + $0x30] sm:$0xff]
      %v2752 = vld [vmem:[%s580 + $0x38] sm:$0xff]
      %v2753 = vld [vmem:[%s580 + $0x40] sm:$0xff]
      %v2754 = vld [vmem:[%s580 + $0x48] sm:$0xff]
      %v2755 = vld [vmem:[%s580 + $0x50] sm:$0xff]
      %v2756 = vld [vmem:[%s580 + $0x58] sm:$0xff]
      %v2757 = vld [vmem:[%s580 + $0x60] sm:$0xff]
      %v2758 = vld [vmem:[%s580 + $0x68] sm:$0xff]
      %v2759 = vld [vmem:[%s580 + $0x70] sm:$0xff]
      %v2760 = vld [vmem:[%s580 + $0x78] sm:$0xff]
      %v2761 = vlaneseq
      %v2762 = vshrl.u32 %v2761, 7
      %v2763 = vsub.s32 0, %v2762
      %v2764 = vrot.slane %v2744, %v2763
      %v2765 = vmul.f32 %v2745, %v2764
      %v2766 = vmul.f32 %v2746, %v2764
      %v2767 = vmul.f32 %v2747, %v2764
      %v2768 = vmul.f32 %v2748, %v2764
      %v2769 = vmul.f32 %v2749, %v2764
      %v2770 = vmul.f32 %v2750, %v2764
      %v2771 = vmul.f32 %v2751, %v2764
      %v2772 = vmul.f32 %v2752, %v2764
      %v2773 = vmul.f32 %v2753, %v2764
      %v2774 = vmul.f32 %v2754, %v2764
      %v2775 = vmul.f32 %v2755, %v2764
      %v2776 = vmul.f32 %v2756, %v2764
      %v2777 = vmul.f32 %v2757, %v2764
      %v2778 = vmul.f32 %v2758, %v2764
      %v2779 = vmul.f32 %v2759, %v2764
      %v2780 = vmul.f32 %v2760, %v2764
      %v2781 = vadd.f32 %v2728, %v2765
      %v2782 = vadd.f32 %v2729, %v2766
      %v2783 = vadd.f32 %v2730, %v2767
      %v2784 = vadd.f32 %v2731, %v2768
      %v2785 = vadd.f32 %v2732, %v2769
      %v2786 = vadd.f32 %v2733, %v2770
      %v2787 = vadd.f32 %v2734, %v2771
      %v2788 = vadd.f32 %v2735, %v2772
      %v2789 = vadd.f32 %v2736, %v2773
      %v2790 = vadd.f32 %v2737, %v2774
      %v2791 = vadd.f32 %v2738, %v2775
      %v2792 = vadd.f32 %v2739, %v2776
      %v2793 = vadd.f32 %v2740, %v2777
      %v2794 = vadd.f32 %v2741, %v2778
      %v2795 = vadd.f32 %v2742, %v2779
      %v2796 = vadd.f32 %v2743, %v2780
      %v2797 = vld [vmem:[%s83 + $0x5] sm:$0xff]
      %v2798 = vld [vmem:[%s83 + $0xd] sm:$0xff]
      %v2799 = vld [vmem:[%s83 + $0x1d] sm:$0xff]
      %v2800 = vld [vmem:[%s83 + $0x25] sm:$0xff]
      %v2801 = vld [vmem:[%s83 + $0x35] sm:$0xff]
      %v2802 = vld [vmem:[%s83 + $0x3d] sm:$0xff]
      %v2803 = vld [vmem:[%s83 + $0x4d] sm:$0xff]
      %v2804 = vld [vmem:[%s83 + $0x55] sm:$0xff]
      %v2805 = vld [vmem:[%s83 + $0x65] sm:$0xff]
      %v2806 = vld [vmem:[%s83 + $0x6d] sm:$0xff]
      %v2807 = vld [vmem:[%s83 + $0x7d] sm:$0xff]
      %v2808 = vld [vmem:[%s83 + $0x85] sm:$0xff]
      %v2809 = vld [vmem:[%s83 + $0x95] sm:$0xff]
      %v2810 = vld [vmem:[%s83 + $0x9d] sm:$0xff]
      %v2811 = vld [vmem:[%s83 + $0xad] sm:$0xff]
      %v2812 = vld [vmem:[%s83 + $0xb5] sm:$0xff]
      %v2813 = vld [vmem:[%s83 + $0xc5] sm:$0xff]
      %v2814 = vld [vmem:[%s83 + $0xcd] sm:$0xff]
      %v2815 = vld [vmem:[%s83 + $0xdd] sm:$0xff]
      %v2816 = vld [vmem:[%s83 + $0xe5] sm:$0xff]
      %v2817 = vld [vmem:[%s83 + $0xf5] sm:$0xff]
      %v2818 = vld [vmem:[%s83 + $0xfd] sm:$0xff]
      %v2819 = vld [vmem:[%s83 + $0x10d] sm:$0xff]
      %v2820 = vld [vmem:[%s83 + $0x115] sm:$0xff]
      %v2821 = vld [vmem:[%s83 + $0x125] sm:$0xff]
      %v2822 = vld [vmem:[%s83 + $0x12d] sm:$0xff]
      %v2823 = vld [vmem:[%s83 + $0x13d] sm:$0xff]
      %v2824 = vld [vmem:[%s83 + $0x145] sm:$0xff]
      %v2825 = vld [vmem:[%s83 + $0x155] sm:$0xff]
      %v2826 = vld [vmem:[%s83 + $0x15d] sm:$0xff]
      %v2827 = vld [vmem:[%s83 + $0x16d] sm:$0xff]
      %v2828 = vld [vmem:[%s83 + $0x175] sm:$0xff]
      %2829 = vst [vmem:[#allocation2] sm:$0xff] %v2797
      %2830 = vst [vmem:[#allocation2 + $0x8] sm:$0xff] %v2798
      %2831 = vst [vmem:[#allocation2 + $0x10] sm:$0xff] %v2799
      %2832 = vst [vmem:[#allocation2 + $0x18] sm:$0xff] %v2800
      %2833 = vst [vmem:[#allocation2 + $0x20] sm:$0xff] %v2801
      %2834 = vst [vmem:[#allocation2 + $0x28] sm:$0xff] %v2802
      %2835 = vst [vmem:[#allocation2 + $0x30] sm:$0xff] %v2803
      %2836 = vst [vmem:[#allocation2 + $0x38] sm:$0xff] %v2804
      %2837 = vst [vmem:[#allocation2 + $0x40] sm:$0xff] %v2805
      %2838 = vst [vmem:[#allocation2 + $0x48] sm:$0xff] %v2806
      %2839 = vst [vmem:[#allocation2 + $0x50] sm:$0xff] %v2807
      %2840 = vst [vmem:[#allocation2 + $0x58] sm:$0xff] %v2808
      %2841 = vst [vmem:[#allocation2 + $0x60] sm:$0xff] %v2809
      %2842 = vst [vmem:[#allocation2 + $0x68] sm:$0xff] %v2810
      %2843 = vst [vmem:[#allocation2 + $0x70] sm:$0xff] %v2811
      %2844 = vst [vmem:[#allocation2 + $0x78] sm:$0xff] %v2812
      %2845 = vst [vmem:[#allocation2 + $0x80] sm:$0xff] %v2813
      %2846 = vst [vmem:[#allocation2 + $0x88] sm:$0xff] %v2814
      %2847 = vst [vmem:[#allocation2 + $0x90] sm:$0xff] %v2815
      %2848 = vst [vmem:[#allocation2 + $0x98] sm:$0xff] %v2816
      %2849 = vst [vmem:[#allocation2 + $0xa0] sm:$0xff] %v2817
      %2850 = vst [vmem:[#allocation2 + $0xa8] sm:$0xff] %v2818
      %2851 = vst [vmem:[#allocation2 + $0xb0] sm:$0xff] %v2819
      %2852 = vst [vmem:[#allocation2 + $0xb8] sm:$0xff] %v2820
      %2853 = vst [vmem:[#allocation2 + $0xc0] sm:$0xff] %v2821
      %2854 = vst [vmem:[#allocation2 + $0xc8] sm:$0xff] %v2822
      %2855 = vst [vmem:[#allocation2 + $0xd0] sm:$0xff] %v2823
      %2856 = vst [vmem:[#allocation2 + $0xd8] sm:$0xff] %v2824
      %2857 = vst [vmem:[#allocation2 + $0xe0] sm:$0xff] %v2825
      %2858 = vst [vmem:[#allocation2 + $0xe8] sm:$0xff] %v2826
      %2859 = vst [vmem:[#allocation2 + $0xf0] sm:$0xff] %v2827
      %2860 = vst [vmem:[#allocation2 + $0xf8] sm:$0xff] %v2828
      %v2861 = vld [vmem:[#allocation6 + $0x5] sm:$0x1]
      %v2862 = vld [vmem:[#allocation2] sm:$0xff]
      %v2863 = vld [vmem:[#allocation2 + $0x8] sm:$0xff]
      %v2864 = vld [vmem:[#allocation2 + $0x10] sm:$0xff]
      %v2865 = vld [vmem:[#allocation2 + $0x18] sm:$0xff]
      %v2866 = vld [vmem:[#allocation2 + $0x20] sm:$0xff]
      %v2867 = vld [vmem:[#allocation2 + $0x28] sm:$0xff]
      %v2868 = vld [vmem:[#allocation2 + $0x30] sm:$0xff]
      %v2869 = vld [vmem:[#allocation2 + $0x38] sm:$0xff]
      %v2870 = vld [vmem:[#allocation2 + $0x40] sm:$0xff]
      %v2871 = vld [vmem:[#allocation2 + $0x48] sm:$0xff]
      %v2872 = vld [vmem:[#allocation2 + $0x50] sm:$0xff]
      %v2873 = vld [vmem:[#allocation2 + $0x58] sm:$0xff]
      %v2874 = vld [vmem:[#allocation2 + $0x60] sm:$0xff]
      %v2875 = vld [vmem:[#allocation2 + $0x68] sm:$0xff]
      %v2876 = vld [vmem:[#allocation2 + $0x70] sm:$0xff]
      %v2877 = vld [vmem:[#allocation2 + $0x78] sm:$0xff]
      %v2878 = vlaneseq
      %v2879 = vshrl.u32 %v2878, 7
      %v2880 = vsub.s32 0, %v2879
      %v2881 = vrot.slane %v2861, %v2880
      %v2882 = vmul.f32 %v2862, %v2881
      %v2883 = vmul.f32 %v2863, %v2881
      %v2884 = vmul.f32 %v2864, %v2881
      %v2885 = vmul.f32 %v2865, %v2881
      %v2886 = vmul.f32 %v2866, %v2881
      %v2887 = vmul.f32 %v2867, %v2881
      %v2888 = vmul.f32 %v2868, %v2881
      %v2889 = vmul.f32 %v2869, %v2881
      %v2890 = vmul.f32 %v2870, %v2881
      %v2891 = vmul.f32 %v2871, %v2881
      %v2892 = vmul.f32 %v2872, %v2881
      %v2893 = vmul.f32 %v2873, %v2881
      %v2894 = vmul.f32 %v2874, %v2881
      %v2895 = vmul.f32 %v2875, %v2881
      %v2896 = vmul.f32 %v2876, %v2881
      %v2897 = vmul.f32 %v2877, %v2881
      %v2898 = vadd.f32 %v2781, %v2882
      %v2899 = vadd.f32 %v2782, %v2883
      %v2900 = vadd.f32 %v2783, %v2884
      %v2901 = vadd.f32 %v2784, %v2885
      %v2902 = vadd.f32 %v2785, %v2886
      %v2903 = vadd.f32 %v2786, %v2887
      %v2904 = vadd.f32 %v2787, %v2888
      %v2905 = vadd.f32 %v2788, %v2889
      %v2906 = vadd.f32 %v2789, %v2890
      %v2907 = vadd.f32 %v2790, %v2891
      %v2908 = vadd.f32 %v2791, %v2892
      %v2909 = vadd.f32 %v2792, %v2893
      %v2910 = vadd.f32 %v2793, %v2894
      %v2911 = vadd.f32 %v2794, %v2895
      %v2912 = vadd.f32 %v2795, %v2896
      %v2913 = vadd.f32 %v2796, %v2897
      %v2914 = vld [vmem:[#allocation6 + $0xe] sm:$0x1]
      %v2915 = vld [vmem:[%s202] sm:$0xff]
      %v2916 = vld [vmem:[%s202 + $0x8] sm:$0xff]
      %v2917 = vld [vmem:[%s202 + $0x10] sm:$0xff]
      %v2918 = vld [vmem:[%s202 + $0x18] sm:$0xff]
      %v2919 = vld [vmem:[%s202 + $0x20] sm:$0xff]
      %v2920 = vld [vmem:[%s202 + $0x28] sm:$0xff]
      %v2921 = vld [vmem:[%s202 + $0x30] sm:$0xff]
      %v2922 = vld [vmem:[%s202 + $0x38] sm:$0xff]
      %v2923 = vld [vmem:[%s202 + $0x40] sm:$0xff]
      %v2924 = vld [vmem:[%s202 + $0x48] sm:$0xff]
      %v2925 = vld [vmem:[%s202 + $0x50] sm:$0xff]
      %v2926 = vld [vmem:[%s202 + $0x58] sm:$0xff]
      %v2927 = vld [vmem:[%s202 + $0x60] sm:$0xff]
      %v2928 = vld [vmem:[%s202 + $0x68] sm:$0xff]
      %v2929 = vld [vmem:[%s202 + $0x70] sm:$0xff]
      %v2930 = vld [vmem:[%s202 + $0x78] sm:$0xff]
      %v2931 = vlaneseq
      %v2932 = vshrl.u32 %v2931, 7
      %v2933 = vsub.s32 0, %v2932
      %v2934 = vrot.slane %v2914, %v2933
      %v2935 = vmul.f32 %v2915, %v2934
      %v2936 = vmul.f32 %v2916, %v2934
      %v2937 = vmul.f32 %v2917, %v2934
      %v2938 = vmul.f32 %v2918, %v2934
      %v2939 = vmul.f32 %v2919, %v2934
      %v2940 = vmul.f32 %v2920, %v2934
      %v2941 = vmul.f32 %v2921, %v2934
      %v2942 = vmul.f32 %v2922, %v2934
      %v2943 = vmul.f32 %v2923, %v2934
      %v2944 = vmul.f32 %v2924, %v2934
      %v2945 = vmul.f32 %v2925, %v2934
      %v2946 = vmul.f32 %v2926, %v2934
      %v2947 = vmul.f32 %v2927, %v2934
      %v2948 = vmul.f32 %v2928, %v2934
      %v2949 = vmul.f32 %v2929, %v2934
      %v2950 = vmul.f32 %v2930, %v2934
      %v2951 = vadd.f32 %v2898, %v2935
      %v2952 = vadd.f32 %v2899, %v2936
      %v2953 = vadd.f32 %v2900, %v2937
      %v2954 = vadd.f32 %v2901, %v2938
      %v2955 = vadd.f32 %v2902, %v2939
      %v2956 = vadd.f32 %v2903, %v2940
      %v2957 = vadd.f32 %v2904, %v2941
      %v2958 = vadd.f32 %v2905, %v2942
      %v2959 = vadd.f32 %v2906, %v2943
      %v2960 = vadd.f32 %v2907, %v2944
      %v2961 = vadd.f32 %v2908, %v2945
      %v2962 = vadd.f32 %v2909, %v2946
      %v2963 = vadd.f32 %v2910, %v2947
      %v2964 = vadd.f32 %v2911, %v2948
      %v2965 = vadd.f32 %v2912, %v2949
      %v2966 = vadd.f32 %v2913, %v2950
      %v2967 = vld [vmem:[#allocation6 + $0x17] sm:$0x1]
      %v2968 = vld [vmem:[%s256] sm:$0xff]
      %v2969 = vld [vmem:[%s256 + $0x8] sm:$0xff]
      %v2970 = vld [vmem:[%s256 + $0x10] sm:$0xff]
      %v2971 = vld [vmem:[%s256 + $0x18] sm:$0xff]
      %v2972 = vld [vmem:[%s256 + $0x20] sm:$0xff]
      %v2973 = vld [vmem:[%s256 + $0x28] sm:$0xff]
      %v2974 = vld [vmem:[%s256 + $0x30] sm:$0xff]
      %v2975 = vld [vmem:[%s256 + $0x38] sm:$0xff]
      %v2976 = vld [vmem:[%s256 + $0x40] sm:$0xff]
      %v2977 = vld [vmem:[%s256 + $0x48] sm:$0xff]
      %v2978 = vld [vmem:[%s256 + $0x50] sm:$0xff]
      %v2979 = vld [vmem:[%s256 + $0x58] sm:$0xff]
      %v2980 = vld [vmem:[%s256 + $0x60] sm:$0xff]
      %v2981 = vld [vmem:[%s256 + $0x68] sm:$0xff]
      %v2982 = vld [vmem:[%s256 + $0x70] sm:$0xff]
      %v2983 = vld [vmem:[%s256 + $0x78] sm:$0xff]
      %v2984 = vlaneseq
      %v2985 = vshrl.u32 %v2984, 7
      %v2986 = vsub.s32 0, %v2985
      %v2987 = vrot.slane %v2967, %v2986
      %v2988 = vmul.f32 %v2968, %v2987
      %v2989 = vmul.f32 %v2969, %v2987
      %v2990 = vmul.f32 %v2970, %v2987
      %v2991 = vmul.f32 %v2971, %v2987
      %v2992 = vmul.f32 %v2972, %v2987
      %v2993 = vmul.f32 %v2973, %v2987
      %v2994 = vmul.f32 %v2974, %v2987
      %v2995 = vmul.f32 %v2975, %v2987
      %v2996 = vmul.f32 %v2976, %v2987
      %v2997 = vmul.f32 %v2977, %v2987
      %v2998 = vmul.f32 %v2978, %v2987
      %v2999 = vmul.f32 %v2979, %v2987
      %v3000 = vmul.f32 %v2980, %v2987
      %v3001 = vmul.f32 %v2981, %v2987
      %v3002 = vmul.f32 %v2982, %v2987
      %v3003 = vmul.f32 %v2983, %v2987
      %v3004 = vadd.f32 %v2951, %v2988
      %v3005 = vadd.f32 %v2952, %v2989
      %v3006 = vadd.f32 %v2953, %v2990
      %v3007 = vadd.f32 %v2954, %v2991
      %v3008 = vadd.f32 %v2955, %v2992
      %v3009 = vadd.f32 %v2956, %v2993
      %v3010 = vadd.f32 %v2957, %v2994
      %v3011 = vadd.f32 %v2958, %v2995
      %v3012 = vadd.f32 %v2959, %v2996
      %v3013 = vadd.f32 %v2960, %v2997
      %v3014 = vadd.f32 %v2961, %v2998
      %v3015 = vadd.f32 %v2962, %v2999
      %v3016 = vadd.f32 %v2963, %v3000
      %v3017 = vadd.f32 %v2964, %v3001
      %v3018 = vadd.f32 %v2965, %v3002
      %v3019 = vadd.f32 %v2966, %v3003
      %v3020 = vld [vmem:[#allocation6 + $0x20] sm:$0x1]
      %v3021 = vld [vmem:[%s310] sm:$0xff]
      %v3022 = vld [vmem:[%s310 + $0x8] sm:$0xff]
      %v3023 = vld [vmem:[%s310 + $0x10] sm:$0xff]
      %v3024 = vld [vmem:[%s310 + $0x18] sm:$0xff]
      %v3025 = vld [vmem:[%s310 + $0x20] sm:$0xff]
      %v3026 = vld [vmem:[%s310 + $0x28] sm:$0xff]
      %v3027 = vld [vmem:[%s310 + $0x30] sm:$0xff]
      %v3028 = vld [vmem:[%s310 + $0x38] sm:$0xff]
      %v3029 = vld [vmem:[%s310 + $0x40] sm:$0xff]
      %v3030 = vld [vmem:[%s310 + $0x48] sm:$0xff]
      %v3031 = vld [vmem:[%s310 + $0x50] sm:$0xff]
      %v3032 = vld [vmem:[%s310 + $0x58] sm:$0xff]
      %v3033 = vld [vmem:[%s310 + $0x60] sm:$0xff]
      %v3034 = vld [vmem:[%s310 + $0x68] sm:$0xff]
      %v3035 = vld [vmem:[%s310 + $0x70] sm:$0xff]
      %v3036 = vld [vmem:[%s310 + $0x78] sm:$0xff]
      %v3037 = vlaneseq
      %v3038 = vshrl.u32 %v3037, 7
      %v3039 = vsub.s32 0, %v3038
      %v3040 = vrot.slane %v3020, %v3039
      %v3041 = vmul.f32 %v3021, %v3040
      %v3042 = vmul.f32 %v3022, %v3040
      %v3043 = vmul.f32 %v3023, %v3040
      %v3044 = vmul.f32 %v3024, %v3040
      %v3045 = vmul.f32 %v3025, %v3040
      %v3046 = vmul.f32 %v3026, %v3040
      %v3047 = vmul.f32 %v3027, %v3040
      %v3048 = vmul.f32 %v3028, %v3040
      %v3049 = vmul.f32 %v3029, %v3040
      %v3050 = vmul.f32 %v3030, %v3040
      %v3051 = vmul.f32 %v3031, %v3040
      %v3052 = vmul.f32 %v3032, %v3040
      %v3053 = vmul.f32 %v3033, %v3040
      %v3054 = vmul.f32 %v3034, %v3040
      %v3055 = vmul.f32 %v3035, %v3040
      %v3056 = vmul.f32 %v3036, %v3040
      %v3057 = vadd.f32 %v3004, %v3041
      %v3058 = vadd.f32 %v3005, %v3042
      %v3059 = vadd.f32 %v3006, %v3043
      %v3060 = vadd.f32 %v3007, %v3044
      %v3061 = vadd.f32 %v3008, %v3045
      %v3062 = vadd.f32 %v3009, %v3046
      %v3063 = vadd.f32 %v3010, %v3047
      %v3064 = vadd.f32 %v3011, %v3048
      %v3065 = vadd.f32 %v3012, %v3049
      %v3066 = vadd.f32 %v3013, %v3050
      %v3067 = vadd.f32 %v3014, %v3051
      %v3068 = vadd.f32 %v3015, %v3052
      %v3069 = vadd.f32 %v3016, %v3053
      %v3070 = vadd.f32 %v3017, %v3054
      %v3071 = vadd.f32 %v3018, %v3055
      %v3072 = vadd.f32 %v3019, %v3056
      %v3073 = vld [vmem:[#allocation6 + $0x29] sm:$0x1]
      %v3074 = vld [vmem:[%s364] sm:$0xff]
      %v3075 = vld [vmem:[%s364 + $0x8] sm:$0xff]
      %v3076 = vld [vmem:[%s364 + $0x10] sm:$0xff]
      %v3077 = vld [vmem:[%s364 + $0x18] sm:$0xff]
      %v3078 = vld [vmem:[%s364 + $0x20] sm:$0xff]
      %v3079 = vld [vmem:[%s364 + $0x28] sm:$0xff]
      %v3080 = vld [vmem:[%s364 + $0x30] sm:$0xff]
      %v3081 = vld [vmem:[%s364 + $0x38] sm:$0xff]
      %v3082 = vld [vmem:[%s364 + $0x40] sm:$0xff]
      %v3083 = vld [vmem:[%s364 + $0x48] sm:$0xff]
      %v3084 = vld [vmem:[%s364 + $0x50] sm:$0xff]
      %v3085 = vld [vmem:[%s364 + $0x58] sm:$0xff]
      %v3086 = vld [vmem:[%s364 + $0x60] sm:$0xff]
      %v3087 = vld [vmem:[%s364 + $0x68] sm:$0xff]
      %v3088 = vld [vmem:[%s364 + $0x70] sm:$0xff]
      %v3089 = vld [vmem:[%s364 + $0x78] sm:$0xff]
      %v3090 = vlaneseq
      %v3091 = vshrl.u32 %v3090, 7
      %v3092 = vsub.s32 0, %v3091
      %v3093 = vrot.slane %v3073, %v3092
      %v3094 = vmul.f32 %v3074, %v3093
      %v3095 = vmul.f32 %v3075, %v3093
      %v3096 = vmul.f32 %v3076, %v3093
      %v3097 = vmul.f32 %v3077, %v3093
      %v3098 = vmul.f32 %v3078, %v3093
      %v3099 = vmul.f32 %v3079, %v3093
      %v3100 = vmul.f32 %v3080, %v3093
      %v3101 = vmul.f32 %v3081, %v3093
      %v3102 = vmul.f32 %v3082, %v3093
      %v3103 = vmul.f32 %v3083, %v3093
      %v3104 = vmul.f32 %v3084, %v3093
      %v3105 = vmul.f32 %v3085, %v3093
      %v3106 = vmul.f32 %v3086, %v3093
      %v3107 = vmul.f32 %v3087, %v3093
      %v3108 = vmul.f32 %v3088, %v3093
      %v3109 = vmul.f32 %v3089, %v3093
      %v3110 = vadd.f32 %v3057, %v3094
      %v3111 = vadd.f32 %v3058, %v3095
      %v3112 = vadd.f32 %v3059, %v3096
      %v3113 = vadd.f32 %v3060, %v3097
      %v3114 = vadd.f32 %v3061, %v3098
      %v3115 = vadd.f32 %v3062, %v3099
      %v3116 = vadd.f32 %v3063, %v3100
      %v3117 = vadd.f32 %v3064, %v3101
      %v3118 = vadd.f32 %v3065, %v3102
      %v3119 = vadd.f32 %v3066, %v3103
      %v3120 = vadd.f32 %v3067, %v3104
      %v3121 = vadd.f32 %v3068, %v3105
      %v3122 = vadd.f32 %v3069, %v3106
      %v3123 = vadd.f32 %v3070, %v3107
      %v3124 = vadd.f32 %v3071, %v3108
      %v3125 = vadd.f32 %v3072, %v3109
      %v3126 = vld [vmem:[#allocation6 + $0x32] sm:$0x1]
      %v3127 = vld [vmem:[%s418] sm:$0xff]
      %v3128 = vld [vmem:[%s418 + $0x8] sm:$0xff]
      %v3129 = vld [vmem:[%s418 + $0x10] sm:$0xff]
      %v3130 = vld [vmem:[%s418 + $0x18] sm:$0xff]
      %v3131 = vld [vmem:[%s418 + $0x20] sm:$0xff]
      %v3132 = vld [vmem:[%s418 + $0x28] sm:$0xff]
      %v3133 = vld [vmem:[%s418 + $0x30] sm:$0xff]
      %v3134 = vld [vmem:[%s418 + $0x38] sm:$0xff]
      %v3135 = vld [vmem:[%s418 + $0x40] sm:$0xff]
      %v3136 = vld [vmem:[%s418 + $0x48] sm:$0xff]
      %v3137 = vld [vmem:[%s418 + $0x50] sm:$0xff]
      %v3138 = vld [vmem:[%s418 + $0x58] sm:$0xff]
      %v3139 = vld [vmem:[%s418 + $0x60] sm:$0xff]
      %v3140 = vld [vmem:[%s418 + $0x68] sm:$0xff]
      %v3141 = vld [vmem:[%s418 + $0x70] sm:$0xff]
      %v3142 = vld [vmem:[%s418 + $0x78] sm:$0xff]
      %v3143 = vlaneseq
      %v3144 = vshrl.u32 %v3143, 7
      %v3145 = vsub.s32 0, %v3144
      %v3146 = vrot.slane %v3126, %v3145
      %v3147 = vmul.f32 %v3127, %v3146
      %v3148 = vmul.f32 %v3128, %v3146
      %v3149 = vmul.f32 %v3129, %v3146
      %v3150 = vmul.f32 %v3130, %v3146
      %v3151 = vmul.f32 %v3131, %v3146
      %v3152 = vmul.f32 %v3132, %v3146
      %v3153 = vmul.f32 %v3133, %v3146
      %v3154 = vmul.f32 %v3134, %v3146
      %v3155 = vmul.f32 %v3135, %v3146
      %v3156 = vmul.f32 %v3136, %v3146
      %v3157 = vmul.f32 %v3137, %v3146
      %v3158 = vmul.f32 %v3138, %v3146
      %v3159 = vmul.f32 %v3139, %v3146
      %v3160 = vmul.f32 %v3140, %v3146
      %v3161 = vmul.f32 %v3141, %v3146
      %v3162 = vmul.f32 %v3142, %v3146
      %v3163 = vadd.f32 %v3110, %v3147
      %v3164 = vadd.f32 %v3111, %v3148
      %v3165 = vadd.f32 %v3112, %v3149
      %v3166 = vadd.f32 %v3113, %v3150
      %v3167 = vadd.f32 %v3114, %v3151
      %v3168 = vadd.f32 %v3115, %v3152
      %v3169 = vadd.f32 %v3116, %v3153
      %v3170 = vadd.f32 %v3117, %v3154
      %v3171 = vadd.f32 %v3118, %v3155
      %v3172 = vadd.f32 %v3119, %v3156
      %v3173 = vadd.f32 %v3120, %v3157
      %v3174 = vadd.f32 %v3121, %v3158
      %v3175 = vadd.f32 %v3122, %v3159
      %v3176 = vadd.f32 %v3123, %v3160
      %v3177 = vadd.f32 %v3124, %v3161
      %v3178 = vadd.f32 %v3125, %v3162
      %v3179 = vld [vmem:[#allocation6 + $0x3b] sm:$0x1]
      %v3180 = vld [vmem:[%s472] sm:$0xff]
      %v3181 = vld [vmem:[%s472 + $0x8] sm:$0xff]
      %v3182 = vld [vmem:[%s472 + $0x10] sm:$0xff]
      %v3183 = vld [vmem:[%s472 + $0x18] sm:$0xff]
      %v3184 = vld [vmem:[%s472 + $0x20] sm:$0xff]
      %v3185 = vld [vmem:[%s472 + $0x28] sm:$0xff]
      %v3186 = vld [vmem:[%s472 + $0x30] sm:$0xff]
      %v3187 = vld [vmem:[%s472 + $0x38] sm:$0xff]
      %v3188 = vld [vmem:[%s472 + $0x40] sm:$0xff]
      %v3189 = vld [vmem:[%s472 + $0x48] sm:$0xff]
      %v3190 = vld [vmem:[%s472 + $0x50] sm:$0xff]
      %v3191 = vld [vmem:[%s472 + $0x58] sm:$0xff]
      %v3192 = vld [vmem:[%s472 + $0x60] sm:$0xff]
      %v3193 = vld [vmem:[%s472 + $0x68] sm:$0xff]
      %v3194 = vld [vmem:[%s472 + $0x70] sm:$0xff]
      %v3195 = vld [vmem:[%s472 + $0x78] sm:$0xff]
      %v3196 = vlaneseq
      %v3197 = vshrl.u32 %v3196, 7
      %v3198 = vsub.s32 0, %v3197
      %v3199 = vrot.slane %v3179, %v3198
      %v3200 = vmul.f32 %v3180, %v3199
      %v3201 = vmul.f32 %v3181, %v3199
      %v3202 = vmul.f32 %v3182, %v3199
      %v3203 = vmul.f32 %v3183, %v3199
      %v3204 = vmul.f32 %v3184, %v3199
      %v3205 = vmul.f32 %v3185, %v3199
      %v3206 = vmul.f32 %v3186, %v3199
      %v3207 = vmul.f32 %v3187, %v3199
      %v3208 = vmul.f32 %v3188, %v3199
      %v3209 = vmul.f32 %v3189, %v3199
      %v3210 = vmul.f32 %v3190, %v3199
      %v3211 = vmul.f32 %v3191, %v3199
      %v3212 = vmul.f32 %v3192, %v3199
      %v3213 = vmul.f32 %v3193, %v3199
      %v3214 = vmul.f32 %v3194, %v3199
      %v3215 = vmul.f32 %v3195, %v3199
      %v3216 = vadd.f32 %v3163, %v3200
      %v3217 = vadd.f32 %v3164, %v3201
      %v3218 = vadd.f32 %v3165, %v3202
      %v3219 = vadd.f32 %v3166, %v3203
      %v3220 = vadd.f32 %v3167, %v3204
      %v3221 = vadd.f32 %v3168, %v3205
      %v3222 = vadd.f32 %v3169, %v3206
      %v3223 = vadd.f32 %v3170, %v3207
      %v3224 = vadd.f32 %v3171, %v3208
      %v3225 = vadd.f32 %v3172, %v3209
      %v3226 = vadd.f32 %v3173, %v3210
      %v3227 = vadd.f32 %v3174, %v3211
      %v3228 = vadd.f32 %v3175, %v3212
      %v3229 = vadd.f32 %v3176, %v3213
      %v3230 = vadd.f32 %v3177, %v3214
      %v3231 = vadd.f32 %v3178, %v3215
      %v3232 = vld [vmem:[#allocation6 + $0x44] sm:$0x1]
      %v3233 = vld [vmem:[%s526] sm:$0xff]
      %v3234 = vld [vmem:[%s526 + $0x8] sm:$0xff]
      %v3235 = vld [vmem:[%s526 + $0x10] sm:$0xff]
      %v3236 = vld [vmem:[%s526 + $0x18] sm:$0xff]
      %v3237 = vld [vmem:[%s526 + $0x20] sm:$0xff]
      %v3238 = vld [vmem:[%s526 + $0x28] sm:$0xff]
      %v3239 = vld [vmem:[%s526 + $0x30] sm:$0xff]
      %v3240 = vld [vmem:[%s526 + $0x38] sm:$0xff]
      %v3241 = vld [vmem:[%s526 + $0x40] sm:$0xff]
      %v3242 = vld [vmem:[%s526 + $0x48] sm:$0xff]
      %v3243 = vld [vmem:[%s526 + $0x50] sm:$0xff]
      %v3244 = vld [vmem:[%s526 + $0x58] sm:$0xff]
      %v3245 = vld [vmem:[%s526 + $0x60] sm:$0xff]
      %v3246 = vld [vmem:[%s526 + $0x68] sm:$0xff]
      %v3247 = vld [vmem:[%s526 + $0x70] sm:$0xff]
      %v3248 = vld [vmem:[%s526 + $0x78] sm:$0xff]
      %v3249 = vlaneseq
      %v3250 = vshrl.u32 %v3249, 7
      %v3251 = vsub.s32 0, %v3250
      %v3252 = vrot.slane %v3232, %v3251
      %v3253 = vmul.f32 %v3233, %v3252
      %v3254 = vmul.f32 %v3234, %v3252
      %v3255 = vmul.f32 %v3235, %v3252
      %v3256 = vmul.f32 %v3236, %v3252
      %v3257 = vmul.f32 %v3237, %v3252
      %v3258 = vmul.f32 %v3238, %v3252
      %v3259 = vmul.f32 %v3239, %v3252
      %v3260 = vmul.f32 %v3240, %v3252
      %v3261 = vmul.f32 %v3241, %v3252
      %v3262 = vmul.f32 %v3242, %v3252
      %v3263 = vmul.f32 %v3243, %v3252
      %v3264 = vmul.f32 %v3244, %v3252
      %v3265 = vmul.f32 %v3245, %v3252
      %v3266 = vmul.f32 %v3246, %v3252
      %v3267 = vmul.f32 %v3247, %v3252
      %v3268 = vmul.f32 %v3248, %v3252
      %v3269 = vadd.f32 %v3216, %v3253
      %v3270 = vadd.f32 %v3217, %v3254
      %v3271 = vadd.f32 %v3218, %v3255
      %v3272 = vadd.f32 %v3219, %v3256
      %v3273 = vadd.f32 %v3220, %v3257
      %v3274 = vadd.f32 %v3221, %v3258
      %v3275 = vadd.f32 %v3222, %v3259
      %v3276 = vadd.f32 %v3223, %v3260
      %v3277 = vadd.f32 %v3224, %v3261
      %v3278 = vadd.f32 %v3225, %v3262
      %v3279 = vadd.f32 %v3226, %v3263
      %v3280 = vadd.f32 %v3227, %v3264
      %v3281 = vadd.f32 %v3228, %v3265
      %v3282 = vadd.f32 %v3229, %v3266
      %v3283 = vadd.f32 %v3230, %v3267
      %v3284 = vadd.f32 %v3231, %v3268
      %v3285 = vld [vmem:[#allocation6 + $0x4d] sm:$0x1]
      %v3286 = vld [vmem:[%s580] sm:$0xff]
      %v3287 = vld [vmem:[%s580 + $0x8] sm:$0xff]
      %v3288 = vld [vmem:[%s580 + $0x10] sm:$0xff]
      %v3289 = vld [vmem:[%s580 + $0x18] sm:$0xff]
      %v3290 = vld [vmem:[%s580 + $0x20] sm:$0xff]
      %v3291 = vld [vmem:[%s580 + $0x28] sm:$0xff]
      %v3292 = vld [vmem:[%s580 + $0x30] sm:$0xff]
      %v3293 = vld [vmem:[%s580 + $0x38] sm:$0xff]
      %v3294 = vld [vmem:[%s580 + $0x40] sm:$0xff]
      %v3295 = vld [vmem:[%s580 + $0x48] sm:$0xff]
      %v3296 = vld [vmem:[%s580 + $0x50] sm:$0xff]
      %v3297 = vld [vmem:[%s580 + $0x58] sm:$0xff]
      %v3298 = vld [vmem:[%s580 + $0x60] sm:$0xff]
      %v3299 = vld [vmem:[%s580 + $0x68] sm:$0xff]
      %v3300 = vld [vmem:[%s580 + $0x70] sm:$0xff]
      %v3301 = vld [vmem:[%s580 + $0x78] sm:$0xff]
      %v3302 = vlaneseq
      %v3303 = vshrl.u32 %v3302, 7
      %v3304 = vsub.s32 0, %v3303
      %v3305 = vrot.slane %v3285, %v3304
      %v3306 = vmul.f32 %v3286, %v3305
      %v3307 = vmul.f32 %v3287, %v3305
      %v3308 = vmul.f32 %v3288, %v3305
      %v3309 = vmul.f32 %v3289, %v3305
      %v3310 = vmul.f32 %v3290, %v3305
      %v3311 = vmul.f32 %v3291, %v3305
      %v3312 = vmul.f32 %v3292, %v3305
      %v3313 = vmul.f32 %v3293, %v3305
      %v3314 = vmul.f32 %v3294, %v3305
      %v3315 = vmul.f32 %v3295, %v3305
      %v3316 = vmul.f32 %v3296, %v3305
      %v3317 = vmul.f32 %v3297, %v3305
      %v3318 = vmul.f32 %v3298, %v3305
      %v3319 = vmul.f32 %v3299, %v3305
      %v3320 = vmul.f32 %v3300, %v3305
      %v3321 = vmul.f32 %v3301, %v3305
      %v3322 = vadd.f32 %v3269, %v3306
      %v3323 = vadd.f32 %v3270, %v3307
      %v3324 = vadd.f32 %v3271, %v3308
      %v3325 = vadd.f32 %v3272, %v3309
      %v3326 = vadd.f32 %v3273, %v3310
      %v3327 = vadd.f32 %v3274, %v3311
      %v3328 = vadd.f32 %v3275, %v3312
      %v3329 = vadd.f32 %v3276, %v3313
      %v3330 = vadd.f32 %v3277, %v3314
      %v3331 = vadd.f32 %v3278, %v3315
      %v3332 = vadd.f32 %v3279, %v3316
      %v3333 = vadd.f32 %v3280, %v3317
      %v3334 = vadd.f32 %v3281, %v3318
      %v3335 = vadd.f32 %v3282, %v3319
      %v3336 = vadd.f32 %v3283, %v3320
      %v3337 = vadd.f32 %v3284, %v3321
      %v3338 = vld [vmem:[%s83 + $0x6] sm:$0xff]
      %v3339 = vld [vmem:[%s83 + $0xe] sm:$0xff]
      %v3340 = vld [vmem:[%s83 + $0x1e] sm:$0xff]
      %v3341 = vld [vmem:[%s83 + $0x26] sm:$0xff]
      %v3342 = vld [vmem:[%s83 + $0x36] sm:$0xff]
      %v3343 = vld [vmem:[%s83 + $0x3e] sm:$0xff]
      %v3344 = vld [vmem:[%s83 + $0x4e] sm:$0xff]
      %v3345 = vld [vmem:[%s83 + $0x56] sm:$0xff]
      %v3346 = vld [vmem:[%s83 + $0x66] sm:$0xff]
      %v3347 = vld [vmem:[%s83 + $0x6e] sm:$0xff]
      %v3348 = vld [vmem:[%s83 + $0x7e] sm:$0xff]
      %v3349 = vld [vmem:[%s83 + $0x86] sm:$0xff]
      %v3350 = vld [vmem:[%s83 + $0x96] sm:$0xff]
      %v3351 = vld [vmem:[%s83 + $0x9e] sm:$0xff]
      %v3352 = vld [vmem:[%s83 + $0xae] sm:$0xff]
      %v3353 = vld [vmem:[%s83 + $0xb6] sm:$0xff]
      %v3354 = vld [vmem:[%s83 + $0xc6] sm:$0xff]
      %v3355 = vld [vmem:[%s83 + $0xce] sm:$0xff]
      %v3356 = vld [vmem:[%s83 + $0xde] sm:$0xff]
      %v3357 = vld [vmem:[%s83 + $0xe6] sm:$0xff]
      %v3358 = vld [vmem:[%s83 + $0xf6] sm:$0xff]
      %v3359 = vld [vmem:[%s83 + $0xfe] sm:$0xff]
      %v3360 = vld [vmem:[%s83 + $0x10e] sm:$0xff]
      %v3361 = vld [vmem:[%s83 + $0x116] sm:$0xff]
      %v3362 = vld [vmem:[%s83 + $0x126] sm:$0xff]
      %v3363 = vld [vmem:[%s83 + $0x12e] sm:$0xff]
      %v3364 = vld [vmem:[%s83 + $0x13e] sm:$0xff]
      %v3365 = vld [vmem:[%s83 + $0x146] sm:$0xff]
      %v3366 = vld [vmem:[%s83 + $0x156] sm:$0xff]
      %v3367 = vld [vmem:[%s83 + $0x15e] sm:$0xff]
      %v3368 = vld [vmem:[%s83 + $0x16e] sm:$0xff]
      %v3369 = vld [vmem:[%s83 + $0x176] sm:$0xff]
      %3370 = vst [vmem:[#allocation2] sm:$0xff] %v3338
      %3371 = vst [vmem:[#allocation2 + $0x8] sm:$0xff] %v3339
      %3372 = vst [vmem:[#allocation2 + $0x10] sm:$0xff] %v3340
      %3373 = vst [vmem:[#allocation2 + $0x18] sm:$0xff] %v3341
      %3374 = vst [vmem:[#allocation2 + $0x20] sm:$0xff] %v3342
      %3375 = vst [vmem:[#allocation2 + $0x28] sm:$0xff] %v3343
      %3376 = vst [vmem:[#allocation2 + $0x30] sm:$0xff] %v3344
      %3377 = vst [vmem:[#allocation2 + $0x38] sm:$0xff] %v3345
      %3378 = vst [vmem:[#allocation2 + $0x40] sm:$0xff] %v3346
      %3379 = vst [vmem:[#allocation2 + $0x48] sm:$0xff] %v3347
      %3380 = vst [vmem:[#allocation2 + $0x50] sm:$0xff] %v3348
      %3381 = vst [vmem:[#allocation2 + $0x58] sm:$0xff] %v3349
      %3382 = vst [vmem:[#allocation2 + $0x60] sm:$0xff] %v3350
      %3383 = vst [vmem:[#allocation2 + $0x68] sm:$0xff] %v3351
      %3384 = vst [vmem:[#allocation2 + $0x70] sm:$0xff] %v3352
      %3385 = vst [vmem:[#allocation2 + $0x78] sm:$0xff] %v3353
      %3386 = vst [vmem:[#allocation2 + $0x80] sm:$0xff] %v3354
      %3387 = vst [vmem:[#allocation2 + $0x88] sm:$0xff] %v3355
      %3388 = vst [vmem:[#allocation2 + $0x90] sm:$0xff] %v3356
      %3389 = vst [vmem:[#allocation2 + $0x98] sm:$0xff] %v3357
      %3390 = vst [vmem:[#allocation2 + $0xa0] sm:$0xff] %v3358
      %3391 = vst [vmem:[#allocation2 + $0xa8] sm:$0xff] %v3359
      %3392 = vst [vmem:[#allocation2 + $0xb0] sm:$0xff] %v3360
      %3393 = vst [vmem:[#allocation2 + $0xb8] sm:$0xff] %v3361
      %3394 = vst [vmem:[#allocation2 + $0xc0] sm:$0xff] %v3362
      %3395 = vst [vmem:[#allocation2 + $0xc8] sm:$0xff] %v3363
      %3396 = vst [vmem:[#allocation2 + $0xd0] sm:$0xff] %v3364
      %3397 = vst [vmem:[#allocation2 + $0xd8] sm:$0xff] %v3365
      %3398 = vst [vmem:[#allocation2 + $0xe0] sm:$0xff] %v3366
      %3399 = vst [vmem:[#allocation2 + $0xe8] sm:$0xff] %v3367
      %3400 = vst [vmem:[#allocation2 + $0xf0] sm:$0xff] %v3368
      %3401 = vst [vmem:[#allocation2 + $0xf8] sm:$0xff] %v3369
      %v3402 = vld [vmem:[#allocation6 + $0x6] sm:$0x1]
      %v3403 = vld [vmem:[#allocation2] sm:$0xff]
      %v3404 = vld [vmem:[#allocation2 + $0x8] sm:$0xff]
      %v3405 = vld [vmem:[#allocation2 + $0x10] sm:$0xff]
      %v3406 = vld [vmem:[#allocation2 + $0x18] sm:$0xff]
      %v3407 = vld [vmem:[#allocation2 + $0x20] sm:$0xff]
      %v3408 = vld [vmem:[#allocation2 + $0x28] sm:$0xff]
      %v3409 = vld [vmem:[#allocation2 + $0x30] sm:$0xff]
      %v3410 = vld [vmem:[#allocation2 + $0x38] sm:$0xff]
      %v3411 = vld [vmem:[#allocation2 + $0x40] sm:$0xff]
      %v3412 = vld [vmem:[#allocation2 + $0x48] sm:$0xff]
      %v3413 = vld [vmem:[#allocation2 + $0x50] sm:$0xff]
      %v3414 = vld [vmem:[#allocation2 + $0x58] sm:$0xff]
      %v3415 = vld [vmem:[#allocation2 + $0x60] sm:$0xff]
      %v3416 = vld [vmem:[#allocation2 + $0x68] sm:$0xff]
      %v3417 = vld [vmem:[#allocation2 + $0x70] sm:$0xff]
      %v3418 = vld [vmem:[#allocation2 + $0x78] sm:$0xff]
      %v3419 = vlaneseq
      %v3420 = vshrl.u32 %v3419, 7
      %v3421 = vsub.s32 0, %v3420
      %v3422 = vrot.slane %v3402, %v3421
      %v3423 = vmul.f32 %v3403, %v3422
      %v3424 = vmul.f32 %v3404, %v3422
      %v3425 = vmul.f32 %v3405, %v3422
      %v3426 = vmul.f32 %v3406, %v3422
      %v3427 = vmul.f32 %v3407, %v3422
      %v3428 = vmul.f32 %v3408, %v3422
      %v3429 = vmul.f32 %v3409, %v3422
      %v3430 = vmul.f32 %v3410, %v3422
      %v3431 = vmul.f32 %v3411, %v3422
      %v3432 = vmul.f32 %v3412, %v3422
      %v3433 = vmul.f32 %v3413, %v3422
      %v3434 = vmul.f32 %v3414, %v3422
      %v3435 = vmul.f32 %v3415, %v3422
      %v3436 = vmul.f32 %v3416, %v3422
      %v3437 = vmul.f32 %v3417, %v3422
      %v3438 = vmul.f32 %v3418, %v3422
      %v3439 = vadd.f32 %v3322, %v3423
      %v3440 = vadd.f32 %v3323, %v3424
      %v3441 = vadd.f32 %v3324, %v3425
      %v3442 = vadd.f32 %v3325, %v3426
      %v3443 = vadd.f32 %v3326, %v3427
      %v3444 = vadd.f32 %v3327, %v3428
      %v3445 = vadd.f32 %v3328, %v3429
      %v3446 = vadd.f32 %v3329, %v3430
      %v3447 = vadd.f32 %v3330, %v3431
      %v3448 = vadd.f32 %v3331, %v3432
      %v3449 = vadd.f32 %v3332, %v3433
      %v3450 = vadd.f32 %v3333, %v3434
      %v3451 = vadd.f32 %v3334, %v3435
      %v3452 = vadd.f32 %v3335, %v3436
      %v3453 = vadd.f32 %v3336, %v3437
      %v3454 = vadd.f32 %v3337, %v3438
      %v3455 = vld [vmem:[#allocation6 + $0xf] sm:$0x1]
      %v3456 = vld [vmem:[%s202] sm:$0xff]
      %v3457 = vld [vmem:[%s202 + $0x8] sm:$0xff]
      %v3458 = vld [vmem:[%s202 + $0x10] sm:$0xff]
      %v3459 = vld [vmem:[%s202 + $0x18] sm:$0xff]
      %v3460 = vld [vmem:[%s202 + $0x20] sm:$0xff]
      %v3461 = vld [vmem:[%s202 + $0x28] sm:$0xff]
      %v3462 = vld [vmem:[%s202 + $0x30] sm:$0xff]
      %v3463 = vld [vmem:[%s202 + $0x38] sm:$0xff]
      %v3464 = vld [vmem:[%s202 + $0x40] sm:$0xff]
      %v3465 = vld [vmem:[%s202 + $0x48] sm:$0xff]
      %v3466 = vld [vmem:[%s202 + $0x50] sm:$0xff]
      %v3467 = vld [vmem:[%s202 + $0x58] sm:$0xff]
      %v3468 = vld [vmem:[%s202 + $0x60] sm:$0xff]
      %v3469 = vld [vmem:[%s202 + $0x68] sm:$0xff]
      %v3470 = vld [vmem:[%s202 + $0x70] sm:$0xff]
      %v3471 = vld [vmem:[%s202 + $0x78] sm:$0xff]
      %v3472 = vlaneseq
      %v3473 = vshrl.u32 %v3472, 7
      %v3474 = vsub.s32 0, %v3473
      %v3475 = vrot.slane %v3455, %v3474
      %v3476 = vmul.f32 %v3456, %v3475
      %v3477 = vmul.f32 %v3457, %v3475
      %v3478 = vmul.f32 %v3458, %v3475
      %v3479 = vmul.f32 %v3459, %v3475
      %v3480 = vmul.f32 %v3460, %v3475
      %v3481 = vmul.f32 %v3461, %v3475
      %v3482 = vmul.f32 %v3462, %v3475
      %v3483 = vmul.f32 %v3463, %v3475
      %v3484 = vmul.f32 %v3464, %v3475
      %v3485 = vmul.f32 %v3465, %v3475
      %v3486 = vmul.f32 %v3466, %v3475
      %v3487 = vmul.f32 %v3467, %v3475
      %v3488 = vmul.f32 %v3468, %v3475
      %v3489 = vmul.f32 %v3469, %v3475
      %v3490 = vmul.f32 %v3470, %v3475
      %v3491 = vmul.f32 %v3471, %v3475
      %v3492 = vadd.f32 %v3439, %v3476
      %v3493 = vadd.f32 %v3440, %v3477
      %v3494 = vadd.f32 %v3441, %v3478
      %v3495 = vadd.f32 %v3442, %v3479
      %v3496 = vadd.f32 %v3443, %v3480
      %v3497 = vadd.f32 %v3444, %v3481
      %v3498 = vadd.f32 %v3445, %v3482
      %v3499 = vadd.f32 %v3446, %v3483
      %v3500 = vadd.f32 %v3447, %v3484
      %v3501 = vadd.f32 %v3448, %v3485
      %v3502 = vadd.f32 %v3449, %v3486
      %v3503 = vadd.f32 %v3450, %v3487
      %v3504 = vadd.f32 %v3451, %v3488
      %v3505 = vadd.f32 %v3452, %v3489
      %v3506 = vadd.f32 %v3453, %v3490
      %v3507 = vadd.f32 %v3454, %v3491
      %v3508 = vld [vmem:[#allocation6 + $0x18] sm:$0x1]
      %v3509 = vld [vmem:[%s256] sm:$0xff]
      %v3510 = vld [vmem:[%s256 + $0x8] sm:$0xff]
      %v3511 = vld [vmem:[%s256 + $0x10] sm:$0xff]
      %v3512 = vld [vmem:[%s256 + $0x18] sm:$0xff]
      %v3513 = vld [vmem:[%s256 + $0x20] sm:$0xff]
      %v3514 = vld [vmem:[%s256 + $0x28] sm:$0xff]
      %v3515 = vld [vmem:[%s256 + $0x30] sm:$0xff]
      %v3516 = vld [vmem:[%s256 + $0x38] sm:$0xff]
      %v3517 = vld [vmem:[%s256 + $0x40] sm:$0xff]
      %v3518 = vld [vmem:[%s256 + $0x48] sm:$0xff]
      %v3519 = vld [vmem:[%s256 + $0x50] sm:$0xff]
      %v3520 = vld [vmem:[%s256 + $0x58] sm:$0xff]
      %v3521 = vld [vmem:[%s256 + $0x60] sm:$0xff]
      %v3522 = vld [vmem:[%s256 + $0x68] sm:$0xff]
      %v3523 = vld [vmem:[%s256 + $0x70] sm:$0xff]
      %v3524 = vld [vmem:[%s256 + $0x78] sm:$0xff]
      %v3525 = vlaneseq
      %v3526 = vshrl.u32 %v3525, 7
      %v3527 = vsub.s32 0, %v3526
      %v3528 = vrot.slane %v3508, %v3527
      %v3529 = vmul.f32 %v3509, %v3528
      %v3530 = vmul.f32 %v3510, %v3528
      %v3531 = vmul.f32 %v3511, %v3528
      %v3532 = vmul.f32 %v3512, %v3528
      %v3533 = vmul.f32 %v3513, %v3528
      %v3534 = vmul.f32 %v3514, %v3528
      %v3535 = vmul.f32 %v3515, %v3528
      %v3536 = vmul.f32 %v3516, %v3528
      %v3537 = vmul.f32 %v3517, %v3528
      %v3538 = vmul.f32 %v3518, %v3528
      %v3539 = vmul.f32 %v3519, %v3528
      %v3540 = vmul.f32 %v3520, %v3528
      %v3541 = vmul.f32 %v3521, %v3528
      %v3542 = vmul.f32 %v3522, %v3528
      %v3543 = vmul.f32 %v3523, %v3528
      %v3544 = vmul.f32 %v3524, %v3528
      %v3545 = vadd.f32 %v3492, %v3529
      %v3546 = vadd.f32 %v3493, %v3530
      %v3547 = vadd.f32 %v3494, %v3531
      %v3548 = vadd.f32 %v3495, %v3532
      %v3549 = vadd.f32 %v3496, %v3533
      %v3550 = vadd.f32 %v3497, %v3534
      %v3551 = vadd.f32 %v3498, %v3535
      %v3552 = vadd.f32 %v3499, %v3536
      %v3553 = vadd.f32 %v3500, %v3537
      %v3554 = vadd.f32 %v3501, %v3538
      %v3555 = vadd.f32 %v3502, %v3539
      %v3556 = vadd.f32 %v3503, %v3540
      %v3557 = vadd.f32 %v3504, %v3541
      %v3558 = vadd.f32 %v3505, %v3542
      %v3559 = vadd.f32 %v3506, %v3543
      %v3560 = vadd.f32 %v3507, %v3544
      %v3561 = vld [vmem:[#allocation6 + $0x21] sm:$0x1]
      %v3562 = vld [vmem:[%s310] sm:$0xff]
      %v3563 = vld [vmem:[%s310 + $0x8] sm:$0xff]
      %v3564 = vld [vmem:[%s310 + $0x10] sm:$0xff]
      %v3565 = vld [vmem:[%s310 + $0x18] sm:$0xff]
      %v3566 = vld [vmem:[%s310 + $0x20] sm:$0xff]
      %v3567 = vld [vmem:[%s310 + $0x28] sm:$0xff]
      %v3568 = vld [vmem:[%s310 + $0x30] sm:$0xff]
      %v3569 = vld [vmem:[%s310 + $0x38] sm:$0xff]
      %v3570 = vld [vmem:[%s310 + $0x40] sm:$0xff]
      %v3571 = vld [vmem:[%s310 + $0x48] sm:$0xff]
      %v3572 = vld [vmem:[%s310 + $0x50] sm:$0xff]
      %v3573 = vld [vmem:[%s310 + $0x58] sm:$0xff]
      %v3574 = vld [vmem:[%s310 + $0x60] sm:$0xff]
      %v3575 = vld [vmem:[%s310 + $0x68] sm:$0xff]
      %v3576 = vld [vmem:[%s310 + $0x70] sm:$0xff]
      %v3577 = vld [vmem:[%s310 + $0x78] sm:$0xff]
      %v3578 = vlaneseq
      %v3579 = vshrl.u32 %v3578, 7
      %v3580 = vsub.s32 0, %v3579
      %v3581 = vrot.slane %v3561, %v3580
      %v3582 = vmul.f32 %v3562, %v3581
      %v3583 = vmul.f32 %v3563, %v3581
      %v3584 = vmul.f32 %v3564, %v3581
      %v3585 = vmul.f32 %v3565, %v3581
      %v3586 = vmul.f32 %v3566, %v3581
      %v3587 = vmul.f32 %v3567, %v3581
      %v3588 = vmul.f32 %v3568, %v3581
      %v3589 = vmul.f32 %v3569, %v3581
      %v3590 = vmul.f32 %v3570, %v3581
      %v3591 = vmul.f32 %v3571, %v3581
      %v3592 = vmul.f32 %v3572, %v3581
      %v3593 = vmul.f32 %v3573, %v3581
      %v3594 = vmul.f32 %v3574, %v3581
      %v3595 = vmul.f32 %v3575, %v3581
      %v3596 = vmul.f32 %v3576, %v3581
      %v3597 = vmul.f32 %v3577, %v3581
      %v3598 = vadd.f32 %v3545, %v3582
      %v3599 = vadd.f32 %v3546, %v3583
      %v3600 = vadd.f32 %v3547, %v3584
      %v3601 = vadd.f32 %v3548, %v3585
      %v3602 = vadd.f32 %v3549, %v3586
      %v3603 = vadd.f32 %v3550, %v3587
      %v3604 = vadd.f32 %v3551, %v3588
      %v3605 = vadd.f32 %v3552, %v3589
      %v3606 = vadd.f32 %v3553, %v3590
      %v3607 = vadd.f32 %v3554, %v3591
      %v3608 = vadd.f32 %v3555, %v3592
      %v3609 = vadd.f32 %v3556, %v3593
      %v3610 = vadd.f32 %v3557, %v3594
      %v3611 = vadd.f32 %v3558, %v3595
      %v3612 = vadd.f32 %v3559, %v3596
      %v3613 = vadd.f32 %v3560, %v3597
      %v3614 = vld [vmem:[#allocation6 + $0x2a] sm:$0x1]
      %v3615 = vld [vmem:[%s364] sm:$0xff]
      %v3616 = vld [vmem:[%s364 + $0x8] sm:$0xff]
      %v3617 = vld [vmem:[%s364 + $0x10] sm:$0xff]
      %v3618 = vld [vmem:[%s364 + $0x18] sm:$0xff]
      %v3619 = vld [vmem:[%s364 + $0x20] sm:$0xff]
      %v3620 = vld [vmem:[%s364 + $0x28] sm:$0xff]
      %v3621 = vld [vmem:[%s364 + $0x30] sm:$0xff]
      %v3622 = vld [vmem:[%s364 + $0x38] sm:$0xff]
      %v3623 = vld [vmem:[%s364 + $0x40] sm:$0xff]
      %v3624 = vld [vmem:[%s364 + $0x48] sm:$0xff]
      %v3625 = vld [vmem:[%s364 + $0x50] sm:$0xff]
      %v3626 = vld [vmem:[%s364 + $0x58] sm:$0xff]
      %v3627 = vld [vmem:[%s364 + $0x60] sm:$0xff]
      %v3628 = vld [vmem:[%s364 + $0x68] sm:$0xff]
      %v3629 = vld [vmem:[%s364 + $0x70] sm:$0xff]
      %v3630 = vld [vmem:[%s364 + $0x78] sm:$0xff]
      %v3631 = vlaneseq
      %v3632 = vshrl.u32 %v3631, 7
      %v3633 = vsub.s32 0, %v3632
      %v3634 = vrot.slane %v3614, %v3633
      %v3635 = vmul.f32 %v3615, %v3634
      %v3636 = vmul.f32 %v3616, %v3634
      %v3637 = vmul.f32 %v3617, %v3634
      %v3638 = vmul.f32 %v3618, %v3634
      %v3639 = vmul.f32 %v3619, %v3634
      %v3640 = vmul.f32 %v3620, %v3634
      %v3641 = vmul.f32 %v3621, %v3634
      %v3642 = vmul.f32 %v3622, %v3634
      %v3643 = vmul.f32 %v3623, %v3634
      %v3644 = vmul.f32 %v3624, %v3634
      %v3645 = vmul.f32 %v3625, %v3634
      %v3646 = vmul.f32 %v3626, %v3634
      %v3647 = vmul.f32 %v3627, %v3634
      %v3648 = vmul.f32 %v3628, %v3634
      %v3649 = vmul.f32 %v3629, %v3634
      %v3650 = vmul.f32 %v3630, %v3634
      %v3651 = vadd.f32 %v3598, %v3635
      %v3652 = vadd.f32 %v3599, %v3636
      %v3653 = vadd.f32 %v3600, %v3637
      %v3654 = vadd.f32 %v3601, %v3638
      %v3655 = vadd.f32 %v3602, %v3639
      %v3656 = vadd.f32 %v3603, %v3640
      %v3657 = vadd.f32 %v3604, %v3641
      %v3658 = vadd.f32 %v3605, %v3642
      %v3659 = vadd.f32 %v3606, %v3643
      %v3660 = vadd.f32 %v3607, %v3644
      %v3661 = vadd.f32 %v3608, %v3645
      %v3662 = vadd.f32 %v3609, %v3646
      %v3663 = vadd.f32 %v3610, %v3647
      %v3664 = vadd.f32 %v3611, %v3648
      %v3665 = vadd.f32 %v3612, %v3649
      %v3666 = vadd.f32 %v3613, %v3650
      %v3667 = vld [vmem:[#allocation6 + $0x33] sm:$0x1]
      %v3668 = vld [vmem:[%s418] sm:$0xff]
      %v3669 = vld [vmem:[%s418 + $0x8] sm:$0xff]
      %v3670 = vld [vmem:[%s418 + $0x10] sm:$0xff]
      %v3671 = vld [vmem:[%s418 + $0x18] sm:$0xff]
      %v3672 = vld [vmem:[%s418 + $0x20] sm:$0xff]
      %v3673 = vld [vmem:[%s418 + $0x28] sm:$0xff]
      %v3674 = vld [vmem:[%s418 + $0x30] sm:$0xff]
      %v3675 = vld [vmem:[%s418 + $0x38] sm:$0xff]
      %v3676 = vld [vmem:[%s418 + $0x40] sm:$0xff]
      %v3677 = vld [vmem:[%s418 + $0x48] sm:$0xff]
      %v3678 = vld [vmem:[%s418 + $0x50] sm:$0xff]
      %v3679 = vld [vmem:[%s418 + $0x58] sm:$0xff]
      %v3680 = vld [vmem:[%s418 + $0x60] sm:$0xff]
      %v3681 = vld [vmem:[%s418 + $0x68] sm:$0xff]
      %v3682 = vld [vmem:[%s418 + $0x70] sm:$0xff]
      %v3683 = vld [vmem:[%s418 + $0x78] sm:$0xff]
      %v3684 = vlaneseq
      %v3685 = vshrl.u32 %v3684, 7
      %v3686 = vsub.s32 0, %v3685
      %v3687 = vrot.slane %v3667, %v3686
      %v3688 = vmul.f32 %v3668, %v3687
      %v3689 = vmul.f32 %v3669, %v3687
      %v3690 = vmul.f32 %v3670, %v3687
      %v3691 = vmul.f32 %v3671, %v3687
      %v3692 = vmul.f32 %v3672, %v3687
      %v3693 = vmul.f32 %v3673, %v3687
      %v3694 = vmul.f32 %v3674, %v3687
      %v3695 = vmul.f32 %v3675, %v3687
      %v3696 = vmul.f32 %v3676, %v3687
      %v3697 = vmul.f32 %v3677, %v3687
      %v3698 = vmul.f32 %v3678, %v3687
      %v3699 = vmul.f32 %v3679, %v3687
      %v3700 = vmul.f32 %v3680, %v3687
      %v3701 = vmul.f32 %v3681, %v3687
      %v3702 = vmul.f32 %v3682, %v3687
      %v3703 = vmul.f32 %v3683, %v3687
      %v3704 = vadd.f32 %v3651, %v3688
      %v3705 = vadd.f32 %v3652, %v3689
      %v3706 = vadd.f32 %v3653, %v3690
      %v3707 = vadd.f32 %v3654, %v3691
      %v3708 = vadd.f32 %v3655, %v3692
      %v3709 = vadd.f32 %v3656, %v3693
      %v3710 = vadd.f32 %v3657, %v3694
      %v3711 = vadd.f32 %v3658, %v3695
      %v3712 = vadd.f32 %v3659, %v3696
      %v3713 = vadd.f32 %v3660, %v3697
      %v3714 = vadd.f32 %v3661, %v3698
      %v3715 = vadd.f32 %v3662, %v3699
      %v3716 = vadd.f32 %v3663, %v3700
      %v3717 = vadd.f32 %v3664, %v3701
      %v3718 = vadd.f32 %v3665, %v3702
      %v3719 = vadd.f32 %v3666, %v3703
      %v3720 = vld [vmem:[#allocation6 + $0x3c] sm:$0x1]
      %v3721 = vld [vmem:[%s472] sm:$0xff]
      %v3722 = vld [vmem:[%s472 + $0x8] sm:$0xff]
      %v3723 = vld [vmem:[%s472 + $0x10] sm:$0xff]
      %v3724 = vld [vmem:[%s472 + $0x18] sm:$0xff]
      %v3725 = vld [vmem:[%s472 + $0x20] sm:$0xff]
      %v3726 = vld [vmem:[%s472 + $0x28] sm:$0xff]
      %v3727 = vld [vmem:[%s472 + $0x30] sm:$0xff]
      %v3728 = vld [vmem:[%s472 + $0x38] sm:$0xff]
      %v3729 = vld [vmem:[%s472 + $0x40] sm:$0xff]
      %v3730 = vld [vmem:[%s472 + $0x48] sm:$0xff]
      %v3731 = vld [vmem:[%s472 + $0x50] sm:$0xff]
      %v3732 = vld [vmem:[%s472 + $0x58] sm:$0xff]
      %v3733 = vld [vmem:[%s472 + $0x60] sm:$0xff]
      %v3734 = vld [vmem:[%s472 + $0x68] sm:$0xff]
      %v3735 = vld [vmem:[%s472 + $0x70] sm:$0xff]
      %v3736 = vld [vmem:[%s472 + $0x78] sm:$0xff]
      %v3737 = vlaneseq
      %v3738 = vshrl.u32 %v3737, 7
      %v3739 = vsub.s32 0, %v3738
      %v3740 = vrot.slane %v3720, %v3739
      %v3741 = vmul.f32 %v3721, %v3740
      %v3742 = vmul.f32 %v3722, %v3740
      %v3743 = vmul.f32 %v3723, %v3740
      %v3744 = vmul.f32 %v3724, %v3740
      %v3745 = vmul.f32 %v3725, %v3740
      %v3746 = vmul.f32 %v3726, %v3740
      %v3747 = vmul.f32 %v3727, %v3740
      %v3748 = vmul.f32 %v3728, %v3740
      %v3749 = vmul.f32 %v3729, %v3740
      %v3750 = vmul.f32 %v3730, %v3740
      %v3751 = vmul.f32 %v3731, %v3740
      %v3752 = vmul.f32 %v3732, %v3740
      %v3753 = vmul.f32 %v3733, %v3740
      %v3754 = vmul.f32 %v3734, %v3740
      %v3755 = vmul.f32 %v3735, %v3740
      %v3756 = vmul.f32 %v3736, %v3740
      %v3757 = vadd.f32 %v3704, %v3741
      %v3758 = vadd.f32 %v3705, %v3742
      %v3759 = vadd.f32 %v3706, %v3743
      %v3760 = vadd.f32 %v3707, %v3744
      %v3761 = vadd.f32 %v3708, %v3745
      %v3762 = vadd.f32 %v3709, %v3746
      %v3763 = vadd.f32 %v3710, %v3747
      %v3764 = vadd.f32 %v3711, %v3748
      %v3765 = vadd.f32 %v3712, %v3749
      %v3766 = vadd.f32 %v3713, %v3750
      %v3767 = vadd.f32 %v3714, %v3751
      %v3768 = vadd.f32 %v3715, %v3752
      %v3769 = vadd.f32 %v3716, %v3753
      %v3770 = vadd.f32 %v3717, %v3754
      %v3771 = vadd.f32 %v3718, %v3755
      %v3772 = vadd.f32 %v3719, %v3756
      %v3773 = vld [vmem:[#allocation6 + $0x45] sm:$0x1]
      %v3774 = vld [vmem:[%s526] sm:$0xff]
      %v3775 = vld [vmem:[%s526 + $0x8] sm:$0xff]
      %v3776 = vld [vmem:[%s526 + $0x10] sm:$0xff]
      %v3777 = vld [vmem:[%s526 + $0x18] sm:$0xff]
      %v3778 = vld [vmem:[%s526 + $0x20] sm:$0xff]
      %v3779 = vld [vmem:[%s526 + $0x28] sm:$0xff]
      %v3780 = vld [vmem:[%s526 + $0x30] sm:$0xff]
      %v3781 = vld [vmem:[%s526 + $0x38] sm:$0xff]
      %v3782 = vld [vmem:[%s526 + $0x40] sm:$0xff]
      %v3783 = vld [vmem:[%s526 + $0x48] sm:$0xff]
      %v3784 = vld [vmem:[%s526 + $0x50] sm:$0xff]
      %v3785 = vld [vmem:[%s526 + $0x58] sm:$0xff]
      %v3786 = vld [vmem:[%s526 + $0x60] sm:$0xff]
      %v3787 = vld [vmem:[%s526 + $0x68] sm:$0xff]
      %v3788 = vld [vmem:[%s526 + $0x70] sm:$0xff]
      %v3789 = vld [vmem:[%s526 + $0x78] sm:$0xff]
      %v3790 = vlaneseq
      %v3791 = vshrl.u32 %v3790, 7
      %v3792 = vsub.s32 0, %v3791
      %v3793 = vrot.slane %v3773, %v3792
      %v3794 = vmul.f32 %v3774, %v3793
      %v3795 = vmul.f32 %v3775, %v3793
      %v3796 = vmul.f32 %v3776, %v3793
      %v3797 = vmul.f32 %v3777, %v3793
      %v3798 = vmul.f32 %v3778, %v3793
      %v3799 = vmul.f32 %v3779, %v3793
      %v3800 = vmul.f32 %v3780, %v3793
      %v3801 = vmul.f32 %v3781, %v3793
      %v3802 = vmul.f32 %v3782, %v3793
      %v3803 = vmul.f32 %v3783, %v3793
      %v3804 = vmul.f32 %v3784, %v3793
      %v3805 = vmul.f32 %v3785, %v3793
      %v3806 = vmul.f32 %v3786, %v3793
      %v3807 = vmul.f32 %v3787, %v3793
      %v3808 = vmul.f32 %v3788, %v3793
      %v3809 = vmul.f32 %v3789, %v3793
      %v3810 = vadd.f32 %v3757, %v3794
      %v3811 = vadd.f32 %v3758, %v3795
      %v3812 = vadd.f32 %v3759, %v3796
      %v3813 = vadd.f32 %v3760, %v3797
      %v3814 = vadd.f32 %v3761, %v3798
      %v3815 = vadd.f32 %v3762, %v3799
      %v3816 = vadd.f32 %v3763, %v3800
      %v3817 = vadd.f32 %v3764, %v3801
      %v3818 = vadd.f32 %v3765, %v3802
      %v3819 = vadd.f32 %v3766, %v3803
      %v3820 = vadd.f32 %v3767, %v3804
      %v3821 = vadd.f32 %v3768, %v3805
      %v3822 = vadd.f32 %v3769, %v3806
      %v3823 = vadd.f32 %v3770, %v3807
      %v3824 = vadd.f32 %v3771, %v3808
      %v3825 = vadd.f32 %v3772, %v3809
      %v3826 = vld [vmem:[#allocation6 + $0x4e] sm:$0x1]
      %v3827 = vld [vmem:[%s580] sm:$0xff]
      %v3828 = vld [vmem:[%s580 + $0x8] sm:$0xff]
      %v3829 = vld [vmem:[%s580 + $0x10] sm:$0xff]
      %v3830 = vld [vmem:[%s580 + $0x18] sm:$0xff]
      %v3831 = vld [vmem:[%s580 + $0x20] sm:$0xff]
      %v3832 = vld [vmem:[%s580 + $0x28] sm:$0xff]
      %v3833 = vld [vmem:[%s580 + $0x30] sm:$0xff]
      %v3834 = vld [vmem:[%s580 + $0x38] sm:$0xff]
      %v3835 = vld [vmem:[%s580 + $0x40] sm:$0xff]
      %v3836 = vld [vmem:[%s580 + $0x48] sm:$0xff]
      %v3837 = vld [vmem:[%s580 + $0x50] sm:$0xff]
      %v3838 = vld [vmem:[%s580 + $0x58] sm:$0xff]
      %v3839 = vld [vmem:[%s580 + $0x60] sm:$0xff]
      %v3840 = vld [vmem:[%s580 + $0x68] sm:$0xff]
      %v3841 = vld [vmem:[%s580 + $0x70] sm:$0xff]
      %v3842 = vld [vmem:[%s580 + $0x78] sm:$0xff]
      %v3843 = vlaneseq
      %v3844 = vshrl.u32 %v3843, 7
      %v3845 = vsub.s32 0, %v3844
      %v3846 = vrot.slane %v3826, %v3845
      %v3847 = vmul.f32 %v3827, %v3846
      %v3848 = vmul.f32 %v3828, %v3846
      %v3849 = vmul.f32 %v3829, %v3846
      %v3850 = vmul.f32 %v3830, %v3846
      %v3851 = vmul.f32 %v3831, %v3846
      %v3852 = vmul.f32 %v3832, %v3846
      %v3853 = vmul.f32 %v3833, %v3846
      %v3854 = vmul.f32 %v3834, %v3846
      %v3855 = vmul.f32 %v3835, %v3846
      %v3856 = vmul.f32 %v3836, %v3846
      %v3857 = vmul.f32 %v3837, %v3846
      %v3858 = vmul.f32 %v3838, %v3846
      %v3859 = vmul.f32 %v3839, %v3846
      %v3860 = vmul.f32 %v3840, %v3846
      %v3861 = vmul.f32 %v3841, %v3846
      %v3862 = vmul.f32 %v3842, %v3846
      %v3863 = vadd.f32 %v3810, %v3847
      %v3864 = vadd.f32 %v3811, %v3848
      %v3865 = vadd.f32 %v3812, %v3849
      %v3866 = vadd.f32 %v3813, %v3850
      %v3867 = vadd.f32 %v3814, %v3851
      %v3868 = vadd.f32 %v3815, %v3852
      %v3869 = vadd.f32 %v3816, %v3853
      %v3870 = vadd.f32 %v3817, %v3854
      %v3871 = vadd.f32 %v3818, %v3855
      %v3872 = vadd.f32 %v3819, %v3856
      %v3873 = vadd.f32 %v3820, %v3857
      %v3874 = vadd.f32 %v3821, %v3858
      %v3875 = vadd.f32 %v3822, %v3859
      %v3876 = vadd.f32 %v3823, %v3860
      %v3877 = vadd.f32 %v3824, %v3861
      %v3878 = vadd.f32 %v3825, %v3862
      %v3879 = vld [vmem:[%s83 + $0x7] sm:$0xff]
      %v3880 = vld [vmem:[%s83 + $0xf] sm:$0xff]
      %v3881 = vld [vmem:[%s83 + $0x1f] sm:$0xff]
      %v3882 = vld [vmem:[%s83 + $0x27] sm:$0xff]
      %v3883 = vld [vmem:[%s83 + $0x37] sm:$0xff]
      %v3884 = vld [vmem:[%s83 + $0x3f] sm:$0xff]
      %v3885 = vld [vmem:[%s83 + $0x4f] sm:$0xff]
      %v3886 = vld [vmem:[%s83 + $0x57] sm:$0xff]
      %v3887 = vld [vmem:[%s83 + $0x67] sm:$0xff]
      %v3888 = vld [vmem:[%s83 + $0x6f] sm:$0xff]
      %v3889 = vld [vmem:[%s83 + $0x7f] sm:$0xff]
      %v3890 = vld [vmem:[%s83 + $0x87] sm:$0xff]
      %v3891 = vld [vmem:[%s83 + $0x97] sm:$0xff]
      %v3892 = vld [vmem:[%s83 + $0x9f] sm:$0xff]
      %v3893 = vld [vmem:[%s83 + $0xaf] sm:$0xff]
      %v3894 = vld [vmem:[%s83 + $0xb7] sm:$0xff]
      %v3895 = vld [vmem:[%s83 + $0xc7] sm:$0xff]
      %v3896 = vld [vmem:[%s83 + $0xcf] sm:$0xff]
      %v3897 = vld [vmem:[%s83 + $0xdf] sm:$0xff]
      %v3898 = vld [vmem:[%s83 + $0xe7] sm:$0xff]
      %v3899 = vld [vmem:[%s83 + $0xf7] sm:$0xff]
      %v3900 = vld [vmem:[%s83 + $0xff] sm:$0xff]
      %v3901 = vld [vmem:[%s83 + $0x10f] sm:$0xff]
      %v3902 = vld [vmem:[%s83 + $0x117] sm:$0xff]
      %v3903 = vld [vmem:[%s83 + $0x127] sm:$0xff]
      %v3904 = vld [vmem:[%s83 + $0x12f] sm:$0xff]
      %v3905 = vld [vmem:[%s83 + $0x13f] sm:$0xff]
      %v3906 = vld [vmem:[%s83 + $0x147] sm:$0xff]
      %v3907 = vld [vmem:[%s83 + $0x157] sm:$0xff]
      %v3908 = vld [vmem:[%s83 + $0x15f] sm:$0xff]
      %v3909 = vld [vmem:[%s83 + $0x16f] sm:$0xff]
      %v3910 = vld [vmem:[%s83 + $0x177] sm:$0xff]
      %3911 = vst [vmem:[#allocation2] sm:$0xff] %v3879
      %3912 = vst [vmem:[#allocation2 + $0x8] sm:$0xff] %v3880
      %3913 = vst [vmem:[#allocation2 + $0x10] sm:$0xff] %v3881
      %3914 = vst [vmem:[#allocation2 + $0x18] sm:$0xff] %v3882
      %3915 = vst [vmem:[#allocation2 + $0x20] sm:$0xff] %v3883
      %3916 = vst [vmem:[#allocation2 + $0x28] sm:$0xff] %v3884
      %3917 = vst [vmem:[#allocation2 + $0x30] sm:$0xff] %v3885
      %3918 = vst [vmem:[#allocation2 + $0x38] sm:$0xff] %v3886
      %3919 = vst [vmem:[#allocation2 + $0x40] sm:$0xff] %v3887
      %3920 = vst [vmem:[#allocation2 + $0x48] sm:$0xff] %v3888
      %3921 = vst [vmem:[#allocation2 + $0x50] sm:$0xff] %v3889
      %3922 = vst [vmem:[#allocation2 + $0x58] sm:$0xff] %v3890
      %3923 = vst [vmem:[#allocation2 + $0x60] sm:$0xff] %v3891
      %3924 = vst [vmem:[#allocation2 + $0x68] sm:$0xff] %v3892
      %3925 = vst [vmem:[#allocation2 + $0x70] sm:$0xff] %v3893
      %3926 = vst [vmem:[#allocation2 + $0x78] sm:$0xff] %v3894
      %3927 = vst [vmem:[#allocation2 + $0x80] sm:$0xff] %v3895
      %3928 = vst [vmem:[#allocation2 + $0x88] sm:$0xff] %v3896
      %3929 = vst [vmem:[#allocation2 + $0x90] sm:$0xff] %v3897
      %3930 = vst [vmem:[#allocation2 + $0x98] sm:$0xff] %v3898
      %3931 = vst [vmem:[#allocation2 + $0xa0] sm:$0xff] %v3899
      %3932 = vst [vmem:[#allocation2 + $0xa8] sm:$0xff] %v3900
      %3933 = vst [vmem:[#allocation2 + $0xb0] sm:$0xff] %v3901
      %3934 = vst [vmem:[#allocation2 + $0xb8] sm:$0xff] %v3902
      %3935 = vst [vmem:[#allocation2 + $0xc0] sm:$0xff] %v3903
      %3936 = vst [vmem:[#allocation2 + $0xc8] sm:$0xff] %v3904
      %3937 = vst [vmem:[#allocation2 + $0xd0] sm:$0xff] %v3905
      %3938 = vst [vmem:[#allocation2 + $0xd8] sm:$0xff] %v3906
      %3939 = vst [vmem:[#allocation2 + $0xe0] sm:$0xff] %v3907
      %3940 = vst [vmem:[#allocation2 + $0xe8] sm:$0xff] %v3908
      %3941 = vst [vmem:[#allocation2 + $0xf0] sm:$0xff] %v3909
      %3942 = vst [vmem:[#allocation2 + $0xf8] sm:$0xff] %v3910
      %v3943 = vld [vmem:[#allocation6 + $0x7] sm:$0x1]
      %v3944 = vld [vmem:[#allocation2] sm:$0xff]
      %v3945 = vld [vmem:[#allocation2 + $0x8] sm:$0xff]
      %v3946 = vld [vmem:[#allocation2 + $0x10] sm:$0xff]
      %v3947 = vld [vmem:[#allocation2 + $0x18] sm:$0xff]
      %v3948 = vld [vmem:[#allocation2 + $0x20] sm:$0xff]
      %v3949 = vld [vmem:[#allocation2 + $0x28] sm:$0xff]
      %v3950 = vld [vmem:[#allocation2 + $0x30] sm:$0xff]
      %v3951 = vld [vmem:[#allocation2 + $0x38] sm:$0xff]
      %v3952 = vld [vmem:[#allocation2 + $0x40] sm:$0xff]
      %v3953 = vld [vmem:[#allocation2 + $0x48] sm:$0xff]
      %v3954 = vld [vmem:[#allocation2 + $0x50] sm:$0xff]
      %v3955 = vld [vmem:[#allocation2 + $0x58] sm:$0xff]
      %v3956 = vld [vmem:[#allocation2 + $0x60] sm:$0xff]
      %v3957 = vld [vmem:[#allocation2 + $0x68] sm:$0xff]
      %v3958 = vld [vmem:[#allocation2 + $0x70] sm:$0xff]
      %v3959 = vld [vmem:[#allocation2 + $0x78] sm:$0xff]
      %v3960 = vlaneseq
      %v3961 = vshrl.u32 %v3960, 7
      %v3962 = vsub.s32 0, %v3961
      %v3963 = vrot.slane %v3943, %v3962
      %v3964 = vmul.f32 %v3944, %v3963
      %v3965 = vmul.f32 %v3945, %v3963
      %v3966 = vmul.f32 %v3946, %v3963
      %v3967 = vmul.f32 %v3947, %v3963
      %v3968 = vmul.f32 %v3948, %v3963
      %v3969 = vmul.f32 %v3949, %v3963
      %v3970 = vmul.f32 %v3950, %v3963
      %v3971 = vmul.f32 %v3951, %v3963
      %v3972 = vmul.f32 %v3952, %v3963
      %v3973 = vmul.f32 %v3953, %v3963
      %v3974 = vmul.f32 %v3954, %v3963
      %v3975 = vmul.f32 %v3955, %v3963
      %v3976 = vmul.f32 %v3956, %v3963
      %v3977 = vmul.f32 %v3957, %v3963
      %v3978 = vmul.f32 %v3958, %v3963
      %v3979 = vmul.f32 %v3959, %v3963
      %v3980 = vadd.f32 %v3863, %v3964
      %v3981 = vadd.f32 %v3864, %v3965
      %v3982 = vadd.f32 %v3865, %v3966
      %v3983 = vadd.f32 %v3866, %v3967
      %v3984 = vadd.f32 %v3867, %v3968
      %v3985 = vadd.f32 %v3868, %v3969
      %v3986 = vadd.f32 %v3869, %v3970
      %v3987 = vadd.f32 %v3870, %v3971
      %v3988 = vadd.f32 %v3871, %v3972
      %v3989 = vadd.f32 %v3872, %v3973
      %v3990 = vadd.f32 %v3873, %v3974
      %v3991 = vadd.f32 %v3874, %v3975
      %v3992 = vadd.f32 %v3875, %v3976
      %v3993 = vadd.f32 %v3876, %v3977
      %v3994 = vadd.f32 %v3877, %v3978
      %v3995 = vadd.f32 %v3878, %v3979
      %v3996 = vld [vmem:[#allocation6 + $0x10] sm:$0x1]
      %v3997 = vld [vmem:[%s202] sm:$0xff]
      %v3998 = vld [vmem:[%s202 + $0x8] sm:$0xff]
      %v3999 = vld [vmem:[%s202 + $0x10] sm:$0xff]
      %v4000 = vld [vmem:[%s202 + $0x18] sm:$0xff]
      %v4001 = vld [vmem:[%s202 + $0x20] sm:$0xff]
      %v4002 = vld [vmem:[%s202 + $0x28] sm:$0xff]
      %v4003 = vld [vmem:[%s202 + $0x30] sm:$0xff]
      %v4004 = vld [vmem:[%s202 + $0x38] sm:$0xff]
      %v4005 = vld [vmem:[%s202 + $0x40] sm:$0xff]
      %v4006 = vld [vmem:[%s202 + $0x48] sm:$0xff]
      %v4007 = vld [vmem:[%s202 + $0x50] sm:$0xff]
      %v4008 = vld [vmem:[%s202 + $0x58] sm:$0xff]
      %v4009 = vld [vmem:[%s202 + $0x60] sm:$0xff]
      %v4010 = vld [vmem:[%s202 + $0x68] sm:$0xff]
      %v4011 = vld [vmem:[%s202 + $0x70] sm:$0xff]
      %v4012 = vld [vmem:[%s202 + $0x78] sm:$0xff]
      %v4013 = vlaneseq
      %v4014 = vshrl.u32 %v4013, 7
      %v4015 = vsub.s32 0, %v4014
      %v4016 = vrot.slane %v3996, %v4015
      %v4017 = vmul.f32 %v3997, %v4016
      %v4018 = vmul.f32 %v3998, %v4016
      %v4019 = vmul.f32 %v3999, %v4016
      %v4020 = vmul.f32 %v4000, %v4016
      %v4021 = vmul.f32 %v4001, %v4016
      %v4022 = vmul.f32 %v4002, %v4016
      %v4023 = vmul.f32 %v4003, %v4016
      %v4024 = vmul.f32 %v4004, %v4016
      %v4025 = vmul.f32 %v4005, %v4016
      %v4026 = vmul.f32 %v4006, %v4016
      %v4027 = vmul.f32 %v4007, %v4016
      %v4028 = vmul.f32 %v4008, %v4016
      %v4029 = vmul.f32 %v4009, %v4016
      %v4030 = vmul.f32 %v4010, %v4016
      %v4031 = vmul.f32 %v4011, %v4016
      %v4032 = vmul.f32 %v4012, %v4016
      %v4033 = vadd.f32 %v3980, %v4017
      %v4034 = vadd.f32 %v3981, %v4018
      %v4035 = vadd.f32 %v3982, %v4019
      %v4036 = vadd.f32 %v3983, %v4020
      %v4037 = vadd.f32 %v3984, %v4021
      %v4038 = vadd.f32 %v3985, %v4022
      %v4039 = vadd.f32 %v3986, %v4023
      %v4040 = vadd.f32 %v3987, %v4024
      %v4041 = vadd.f32 %v3988, %v4025
      %v4042 = vadd.f32 %v3989, %v4026
      %v4043 = vadd.f32 %v3990, %v4027
      %v4044 = vadd.f32 %v3991, %v4028
      %v4045 = vadd.f32 %v3992, %v4029
      %v4046 = vadd.f32 %v3993, %v4030
      %v4047 = vadd.f32 %v3994, %v4031
      %v4048 = vadd.f32 %v3995, %v4032
      %v4049 = vld [vmem:[#allocation6 + $0x19] sm:$0x1]
      %v4050 = vld [vmem:[%s256] sm:$0xff]
      %v4051 = vld [vmem:[%s256 + $0x8] sm:$0xff]
      %v4052 = vld [vmem:[%s256 + $0x10] sm:$0xff]
      %v4053 = vld [vmem:[%s256 + $0x18] sm:$0xff]
      %v4054 = vld [vmem:[%s256 + $0x20] sm:$0xff]
      %v4055 = vld [vmem:[%s256 + $0x28] sm:$0xff]
      %v4056 = vld [vmem:[%s256 + $0x30] sm:$0xff]
      %v4057 = vld [vmem:[%s256 + $0x38] sm:$0xff]
      %v4058 = vld [vmem:[%s256 + $0x40] sm:$0xff]
      %v4059 = vld [vmem:[%s256 + $0x48] sm:$0xff]
      %v4060 = vld [vmem:[%s256 + $0x50] sm:$0xff]
      %v4061 = vld [vmem:[%s256 + $0x58] sm:$0xff]
      %v4062 = vld [vmem:[%s256 + $0x60] sm:$0xff]
      %v4063 = vld [vmem:[%s256 + $0x68] sm:$0xff]
      %v4064 = vld [vmem:[%s256 + $0x70] sm:$0xff]
      %v4065 = vld [vmem:[%s256 + $0x78] sm:$0xff]
      %v4066 = vlaneseq
      %v4067 = vshrl.u32 %v4066, 7
      %v4068 = vsub.s32 0, %v4067
      %v4069 = vrot.slane %v4049, %v4068
      %v4070 = vmul.f32 %v4050, %v4069
      %v4071 = vmul.f32 %v4051, %v4069
      %v4072 = vmul.f32 %v4052, %v4069
      %v4073 = vmul.f32 %v4053, %v4069
      %v4074 = vmul.f32 %v4054, %v4069
      %v4075 = vmul.f32 %v4055, %v4069
      %v4076 = vmul.f32 %v4056, %v4069
      %v4077 = vmul.f32 %v4057, %v4069
      %v4078 = vmul.f32 %v4058, %v4069
      %v4079 = vmul.f32 %v4059, %v4069
      %v4080 = vmul.f32 %v4060, %v4069
      %v4081 = vmul.f32 %v4061, %v4069
      %v4082 = vmul.f32 %v4062, %v4069
      %v4083 = vmul.f32 %v4063, %v4069
      %v4084 = vmul.f32 %v4064, %v4069
      %v4085 = vmul.f32 %v4065, %v4069
      %v4086 = vadd.f32 %v4033, %v4070
      %v4087 = vadd.f32 %v4034, %v4071
      %v4088 = vadd.f32 %v4035, %v4072
      %v4089 = vadd.f32 %v4036, %v4073
      %v4090 = vadd.f32 %v4037, %v4074
      %v4091 = vadd.f32 %v4038, %v4075
      %v4092 = vadd.f32 %v4039, %v4076
      %v4093 = vadd.f32 %v4040, %v4077
      %v4094 = vadd.f32 %v4041, %v4078
      %v4095 = vadd.f32 %v4042, %v4079
      %v4096 = vadd.f32 %v4043, %v4080
      %v4097 = vadd.f32 %v4044, %v4081
      %v4098 = vadd.f32 %v4045, %v4082
      %v4099 = vadd.f32 %v4046, %v4083
      %v4100 = vadd.f32 %v4047, %v4084
      %v4101 = vadd.f32 %v4048, %v4085
      %v4102 = vld [vmem:[#allocation6 + $0x22] sm:$0x1]
      %v4103 = vld [vmem:[%s310] sm:$0xff]
      %v4104 = vld [vmem:[%s310 + $0x8] sm:$0xff]
      %v4105 = vld [vmem:[%s310 + $0x10] sm:$0xff]
      %v4106 = vld [vmem:[%s310 + $0x18] sm:$0xff]
      %v4107 = vld [vmem:[%s310 + $0x20] sm:$0xff]
      %v4108 = vld [vmem:[%s310 + $0x28] sm:$0xff]
      %v4109 = vld [vmem:[%s310 + $0x30] sm:$0xff]
      %v4110 = vld [vmem:[%s310 + $0x38] sm:$0xff]
      %v4111 = vld [vmem:[%s310 + $0x40] sm:$0xff]
      %v4112 = vld [vmem:[%s310 + $0x48] sm:$0xff]
      %v4113 = vld [vmem:[%s310 + $0x50] sm:$0xff]
      %v4114 = vld [vmem:[%s310 + $0x58] sm:$0xff]
      %v4115 = vld [vmem:[%s310 + $0x60] sm:$0xff]
      %v4116 = vld [vmem:[%s310 + $0x68] sm:$0xff]
      %v4117 = vld [vmem:[%s310 + $0x70] sm:$0xff]
      %v4118 = vld [vmem:[%s310 + $0x78] sm:$0xff]
      %v4119 = vlaneseq
      %v4120 = vshrl.u32 %v4119, 7
      %v4121 = vsub.s32 0, %v4120
      %v4122 = vrot.slane %v4102, %v4121
      %v4123 = vmul.f32 %v4103, %v4122
      %v4124 = vmul.f32 %v4104, %v4122
      %v4125 = vmul.f32 %v4105, %v4122
      %v4126 = vmul.f32 %v4106, %v4122
      %v4127 = vmul.f32 %v4107, %v4122
      %v4128 = vmul.f32 %v4108, %v4122
      %v4129 = vmul.f32 %v4109, %v4122
      %v4130 = vmul.f32 %v4110, %v4122
      %v4131 = vmul.f32 %v4111, %v4122
      %v4132 = vmul.f32 %v4112, %v4122
      %v4133 = vmul.f32 %v4113, %v4122
      %v4134 = vmul.f32 %v4114, %v4122
      %v4135 = vmul.f32 %v4115, %v4122
      %v4136 = vmul.f32 %v4116, %v4122
      %v4137 = vmul.f32 %v4117, %v4122
      %v4138 = vmul.f32 %v4118, %v4122
      %v4139 = vadd.f32 %v4086, %v4123
      %v4140 = vadd.f32 %v4087, %v4124
      %v4141 = vadd.f32 %v4088, %v4125
      %v4142 = vadd.f32 %v4089, %v4126
      %v4143 = vadd.f32 %v4090, %v4127
      %v4144 = vadd.f32 %v4091, %v4128
      %v4145 = vadd.f32 %v4092, %v4129
      %v4146 = vadd.f32 %v4093, %v4130
      %v4147 = vadd.f32 %v4094, %v4131
      %v4148 = vadd.f32 %v4095, %v4132
      %v4149 = vadd.f32 %v4096, %v4133
      %v4150 = vadd.f32 %v4097, %v4134
      %v4151 = vadd.f32 %v4098, %v4135
      %v4152 = vadd.f32 %v4099, %v4136
      %v4153 = vadd.f32 %v4100, %v4137
      %v4154 = vadd.f32 %v4101, %v4138
      %v4155 = vld [vmem:[#allocation6 + $0x2b] sm:$0x1]
      %v4156 = vld [vmem:[%s364] sm:$0xff]
      %v4157 = vld [vmem:[%s364 + $0x8] sm:$0xff]
      %v4158 = vld [vmem:[%s364 + $0x10] sm:$0xff]
      %v4159 = vld [vmem:[%s364 + $0x18] sm:$0xff]
      %v4160 = vld [vmem:[%s364 + $0x20] sm:$0xff]
      %v4161 = vld [vmem:[%s364 + $0x28] sm:$0xff]
      %v4162 = vld [vmem:[%s364 + $0x30] sm:$0xff]
      %v4163 = vld [vmem:[%s364 + $0x38] sm:$0xff]
      %v4164 = vld [vmem:[%s364 + $0x40] sm:$0xff]
      %v4165 = vld [vmem:[%s364 + $0x48] sm:$0xff]
      %v4166 = vld [vmem:[%s364 + $0x50] sm:$0xff]
      %v4167 = vld [vmem:[%s364 + $0x58] sm:$0xff]
      %v4168 = vld [vmem:[%s364 + $0x60] sm:$0xff]
      %v4169 = vld [vmem:[%s364 + $0x68] sm:$0xff]
      %v4170 = vld [vmem:[%s364 + $0x70] sm:$0xff]
      %v4171 = vld [vmem:[%s364 + $0x78] sm:$0xff]
      %v4172 = vlaneseq
      %v4173 = vshrl.u32 %v4172, 7
      %v4174 = vsub.s32 0, %v4173
      %v4175 = vrot.slane %v4155, %v4174
      %v4176 = vmul.f32 %v4156, %v4175
      %v4177 = vmul.f32 %v4157, %v4175
      %v4178 = vmul.f32 %v4158, %v4175
      %v4179 = vmul.f32 %v4159, %v4175
      %v4180 = vmul.f32 %v4160, %v4175
      %v4181 = vmul.f32 %v4161, %v4175
      %v4182 = vmul.f32 %v4162, %v4175
      %v4183 = vmul.f32 %v4163, %v4175
      %v4184 = vmul.f32 %v4164, %v4175
      %v4185 = vmul.f32 %v4165, %v4175
      %v4186 = vmul.f32 %v4166, %v4175
      %v4187 = vmul.f32 %v4167, %v4175
      %v4188 = vmul.f32 %v4168, %v4175
      %v4189 = vmul.f32 %v4169, %v4175
      %v4190 = vmul.f32 %v4170, %v4175
      %v4191 = vmul.f32 %v4171, %v4175
      %v4192 = vadd.f32 %v4139, %v4176
      %v4193 = vadd.f32 %v4140, %v4177
      %v4194 = vadd.f32 %v4141, %v4178
      %v4195 = vadd.f32 %v4142, %v4179
      %v4196 = vadd.f32 %v4143, %v4180
      %v4197 = vadd.f32 %v4144, %v4181
      %v4198 = vadd.f32 %v4145, %v4182
      %v4199 = vadd.f32 %v4146, %v4183
      %v4200 = vadd.f32 %v4147, %v4184
      %v4201 = vadd.f32 %v4148, %v4185
      %v4202 = vadd.f32 %v4149, %v4186
      %v4203 = vadd.f32 %v4150, %v4187
      %v4204 = vadd.f32 %v4151, %v4188
      %v4205 = vadd.f32 %v4152, %v4189
      %v4206 = vadd.f32 %v4153, %v4190
      %v4207 = vadd.f32 %v4154, %v4191
      %v4208 = vld [vmem:[#allocation6 + $0x34] sm:$0x1]
      %v4209 = vld [vmem:[%s418] sm:$0xff]
      %v4210 = vld [vmem:[%s418 + $0x8] sm:$0xff]
      %v4211 = vld [vmem:[%s418 + $0x10] sm:$0xff]
      %v4212 = vld [vmem:[%s418 + $0x18] sm:$0xff]
      %v4213 = vld [vmem:[%s418 + $0x20] sm:$0xff]
      %v4214 = vld [vmem:[%s418 + $0x28] sm:$0xff]
      %v4215 = vld [vmem:[%s418 + $0x30] sm:$0xff]
      %v4216 = vld [vmem:[%s418 + $0x38] sm:$0xff]
      %v4217 = vld [vmem:[%s418 + $0x40] sm:$0xff]
      %v4218 = vld [vmem:[%s418 + $0x48] sm:$0xff]
      %v4219 = vld [vmem:[%s418 + $0x50] sm:$0xff]
      %v4220 = vld [vmem:[%s418 + $0x58] sm:$0xff]
      %v4221 = vld [vmem:[%s418 + $0x60] sm:$0xff]
      %v4222 = vld [vmem:[%s418 + $0x68] sm:$0xff]
      %v4223 = vld [vmem:[%s418 + $0x70] sm:$0xff]
      %v4224 = vld [vmem:[%s418 + $0x78] sm:$0xff]
      %v4225 = vlaneseq
      %v4226 = vshrl.u32 %v4225, 7
      %v4227 = vsub.s32 0, %v4226
      %v4228 = vrot.slane %v4208, %v4227
      %v4229 = vmul.f32 %v4209, %v4228
      %v4230 = vmul.f32 %v4210, %v4228
      %v4231 = vmul.f32 %v4211, %v4228
      %v4232 = vmul.f32 %v4212, %v4228
      %v4233 = vmul.f32 %v4213, %v4228
      %v4234 = vmul.f32 %v4214, %v4228
      %v4235 = vmul.f32 %v4215, %v4228
      %v4236 = vmul.f32 %v4216, %v4228
      %v4237 = vmul.f32 %v4217, %v4228
      %v4238 = vmul.f32 %v4218, %v4228
      %v4239 = vmul.f32 %v4219, %v4228
      %v4240 = vmul.f32 %v4220, %v4228
      %v4241 = vmul.f32 %v4221, %v4228
      %v4242 = vmul.f32 %v4222, %v4228
      %v4243 = vmul.f32 %v4223, %v4228
      %v4244 = vmul.f32 %v4224, %v4228
      %v4245 = vadd.f32 %v4192, %v4229
      %v4246 = vadd.f32 %v4193, %v4230
      %v4247 = vadd.f32 %v4194, %v4231
      %v4248 = vadd.f32 %v4195, %v4232
      %v4249 = vadd.f32 %v4196, %v4233
      %v4250 = vadd.f32 %v4197, %v4234
      %v4251 = vadd.f32 %v4198, %v4235
      %v4252 = vadd.f32 %v4199, %v4236
      %v4253 = vadd.f32 %v4200, %v4237
      %v4254 = vadd.f32 %v4201, %v4238
      %v4255 = vadd.f32 %v4202, %v4239
      %v4256 = vadd.f32 %v4203, %v4240
      %v4257 = vadd.f32 %v4204, %v4241
      %v4258 = vadd.f32 %v4205, %v4242
      %v4259 = vadd.f32 %v4206, %v4243
      %v4260 = vadd.f32 %v4207, %v4244
      %v4261 = vld [vmem:[#allocation6 + $0x3d] sm:$0x1]
      %v4262 = vld [vmem:[%s472] sm:$0xff]
      %v4263 = vld [vmem:[%s472 + $0x8] sm:$0xff]
      %v4264 = vld [vmem:[%s472 + $0x10] sm:$0xff]
      %v4265 = vld [vmem:[%s472 + $0x18] sm:$0xff]
      %v4266 = vld [vmem:[%s472 + $0x20] sm:$0xff]
      %v4267 = vld [vmem:[%s472 + $0x28] sm:$0xff]
      %v4268 = vld [vmem:[%s472 + $0x30] sm:$0xff]
      %v4269 = vld [vmem:[%s472 + $0x38] sm:$0xff]
      %v4270 = vld [vmem:[%s472 + $0x40] sm:$0xff]
      %v4271 = vld [vmem:[%s472 + $0x48] sm:$0xff]
      %v4272 = vld [vmem:[%s472 + $0x50] sm:$0xff]
      %v4273 = vld [vmem:[%s472 + $0x58] sm:$0xff]
      %v4274 = vld [vmem:[%s472 + $0x60] sm:$0xff]
      %v4275 = vld [vmem:[%s472 + $0x68] sm:$0xff]
      %v4276 = vld [vmem:[%s472 + $0x70] sm:$0xff]
      %v4277 = vld [vmem:[%s472 + $0x78] sm:$0xff]
      %v4278 = vlaneseq
      %v4279 = vshrl.u32 %v4278, 7
      %v4280 = vsub.s32 0, %v4279
      %v4281 = vrot.slane %v4261, %v4280
      %v4282 = vmul.f32 %v4262, %v4281
      %v4283 = vmul.f32 %v4263, %v4281
      %v4284 = vmul.f32 %v4264, %v4281
      %v4285 = vmul.f32 %v4265, %v4281
      %v4286 = vmul.f32 %v4266, %v4281
      %v4287 = vmul.f32 %v4267, %v4281
      %v4288 = vmul.f32 %v4268, %v4281
      %v4289 = vmul.f32 %v4269, %v4281
      %v4290 = vmul.f32 %v4270, %v4281
      %v4291 = vmul.f32 %v4271, %v4281
      %v4292 = vmul.f32 %v4272, %v4281
      %v4293 = vmul.f32 %v4273, %v4281
      %v4294 = vmul.f32 %v4274, %v4281
      %v4295 = vmul.f32 %v4275, %v4281
      %v4296 = vmul.f32 %v4276, %v4281
      %v4297 = vmul.f32 %v4277, %v4281
      %v4298 = vadd.f32 %v4245, %v4282
      %v4299 = vadd.f32 %v4246, %v4283
      %v4300 = vadd.f32 %v4247, %v4284
      %v4301 = vadd.f32 %v4248, %v4285
      %v4302 = vadd.f32 %v4249, %v4286
      %v4303 = vadd.f32 %v4250, %v4287
      %v4304 = vadd.f32 %v4251, %v4288
      %v4305 = vadd.f32 %v4252, %v4289
      %v4306 = vadd.f32 %v4253, %v4290
      %v4307 = vadd.f32 %v4254, %v4291
      %v4308 = vadd.f32 %v4255, %v4292
      %v4309 = vadd.f32 %v4256, %v4293
      %v4310 = vadd.f32 %v4257, %v4294
      %v4311 = vadd.f32 %v4258, %v4295
      %v4312 = vadd.f32 %v4259, %v4296
      %v4313 = vadd.f32 %v4260, %v4297
      %v4314 = vld [vmem:[#allocation6 + $0x46] sm:$0x1]
      %v4315 = vld [vmem:[%s526] sm:$0xff]
      %v4316 = vld [vmem:[%s526 + $0x8] sm:$0xff]
      %v4317 = vld [vmem:[%s526 + $0x10] sm:$0xff]
      %v4318 = vld [vmem:[%s526 + $0x18] sm:$0xff]
      %v4319 = vld [vmem:[%s526 + $0x20] sm:$0xff]
      %v4320 = vld [vmem:[%s526 + $0x28] sm:$0xff]
      %v4321 = vld [vmem:[%s526 + $0x30] sm:$0xff]
      %v4322 = vld [vmem:[%s526 + $0x38] sm:$0xff]
      %v4323 = vld [vmem:[%s526 + $0x40] sm:$0xff]
      %v4324 = vld [vmem:[%s526 + $0x48] sm:$0xff]
      %v4325 = vld [vmem:[%s526 + $0x50] sm:$0xff]
      %v4326 = vld [vmem:[%s526 + $0x58] sm:$0xff]
      %v4327 = vld [vmem:[%s526 + $0x60] sm:$0xff]
      %v4328 = vld [vmem:[%s526 + $0x68] sm:$0xff]
      %v4329 = vld [vmem:[%s526 + $0x70] sm:$0xff]
      %v4330 = vld [vmem:[%s526 + $0x78] sm:$0xff]
      %v4331 = vlaneseq
      %v4332 = vshrl.u32 %v4331, 7
      %v4333 = vsub.s32 0, %v4332
      %v4334 = vrot.slane %v4314, %v4333
      %v4335 = vmul.f32 %v4315, %v4334
      %v4336 = vmul.f32 %v4316, %v4334
      %v4337 = vmul.f32 %v4317, %v4334
      %v4338 = vmul.f32 %v4318, %v4334
      %v4339 = vmul.f32 %v4319, %v4334
      %v4340 = vmul.f32 %v4320, %v4334
      %v4341 = vmul.f32 %v4321, %v4334
      %v4342 = vmul.f32 %v4322, %v4334
      %v4343 = vmul.f32 %v4323, %v4334
      %v4344 = vmul.f32 %v4324, %v4334
      %v4345 = vmul.f32 %v4325, %v4334
      %v4346 = vmul.f32 %v4326, %v4334
      %v4347 = vmul.f32 %v4327, %v4334
      %v4348 = vmul.f32 %v4328, %v4334
      %v4349 = vmul.f32 %v4329, %v4334
      %v4350 = vmul.f32 %v4330, %v4334
      %v4351 = vadd.f32 %v4298, %v4335
      %v4352 = vadd.f32 %v4299, %v4336
      %v4353 = vadd.f32 %v4300, %v4337
      %v4354 = vadd.f32 %v4301, %v4338
      %v4355 = vadd.f32 %v4302, %v4339
      %v4356 = vadd.f32 %v4303, %v4340
      %v4357 = vadd.f32 %v4304, %v4341
      %v4358 = vadd.f32 %v4305, %v4342
      %v4359 = vadd.f32 %v4306, %v4343
      %v4360 = vadd.f32 %v4307, %v4344
      %v4361 = vadd.f32 %v4308, %v4345
      %v4362 = vadd.f32 %v4309, %v4346
      %v4363 = vadd.f32 %v4310, %v4347
      %v4364 = vadd.f32 %v4311, %v4348
      %v4365 = vadd.f32 %v4312, %v4349
      %v4366 = vadd.f32 %v4313, %v4350
      %v4367 = vld [vmem:[#allocation6 + $0x4f] sm:$0x1]
      %v4368 = vld [vmem:[%s580] sm:$0xff]
      %v4369 = vld [vmem:[%s580 + $0x8] sm:$0xff]
      %v4370 = vld [vmem:[%s580 + $0x10] sm:$0xff]
      %v4371 = vld [vmem:[%s580 + $0x18] sm:$0xff]
      %v4372 = vld [vmem:[%s580 + $0x20] sm:$0xff]
      %v4373 = vld [vmem:[%s580 + $0x28] sm:$0xff]
      %v4374 = vld [vmem:[%s580 + $0x30] sm:$0xff]
      %v4375 = vld [vmem:[%s580 + $0x38] sm:$0xff]
      %v4376 = vld [vmem:[%s580 + $0x40] sm:$0xff]
      %v4377 = vld [vmem:[%s580 + $0x48] sm:$0xff]
      %v4378 = vld [vmem:[%s580 + $0x50] sm:$0xff]
      %v4379 = vld [vmem:[%s580 + $0x58] sm:$0xff]
      %v4380 = vld [vmem:[%s580 + $0x60] sm:$0xff]
      %v4381 = vld [vmem:[%s580 + $0x68] sm:$0xff]
      %v4382 = vld [vmem:[%s580 + $0x70] sm:$0xff]
      %v4383 = vld [vmem:[%s580 + $0x78] sm:$0xff]
      %v4384 = vlaneseq
      %v4385 = vshrl.u32 %v4384, 7
      %v4386 = vsub.s32 0, %v4385
      %v4387 = vrot.slane %v4367, %v4386
      %v4388 = vmul.f32 %v4368, %v4387
      %v4389 = vmul.f32 %v4369, %v4387
      %v4390 = vmul.f32 %v4370, %v4387
      %v4391 = vmul.f32 %v4371, %v4387
      %v4392 = vmul.f32 %v4372, %v4387
      %v4393 = vmul.f32 %v4373, %v4387
      %v4394 = vmul.f32 %v4374, %v4387
      %v4395 = vmul.f32 %v4375, %v4387
      %v4396 = vmul.f32 %v4376, %v4387
      %v4397 = vmul.f32 %v4377, %v4387
      %v4398 = vmul.f32 %v4378, %v4387
      %v4399 = vmul.f32 %v4379, %v4387
      %v4400 = vmul.f32 %v4380, %v4387
      %v4401 = vmul.f32 %v4381, %v4387
      %v4402 = vmul.f32 %v4382, %v4387
      %v4403 = vmul.f32 %v4383, %v4387
      %v4404 = vadd.f32 %v4351, %v4388
      %v4405 = vadd.f32 %v4352, %v4389
      %v4406 = vadd.f32 %v4353, %v4390
      %v4407 = vadd.f32 %v4354, %v4391
      %v4408 = vadd.f32 %v4355, %v4392
      %v4409 = vadd.f32 %v4356, %v4393
      %v4410 = vadd.f32 %v4357, %v4394
      %v4411 = vadd.f32 %v4358, %v4395
      %v4412 = vadd.f32 %v4359, %v4396
      %v4413 = vadd.f32 %v4360, %v4397
      %v4414 = vadd.f32 %v4361, %v4398
      %v4415 = vadd.f32 %v4362, %v4399
      %v4416 = vadd.f32 %v4363, %v4400
      %v4417 = vadd.f32 %v4364, %v4401
      %v4418 = vadd.f32 %v4365, %v4402
      %v4419 = vadd.f32 %v4366, %v4403
      %v4420 = vld [vmem:[%s83 + $0x8] sm:$0xff]
      %v4421 = vld [vmem:[%s83 + $0x10] sm:$0xff]
      %v4422 = vld [vmem:[%s83 + $0x20] sm:$0xff]
      %v4423 = vld [vmem:[%s83 + $0x28] sm:$0xff]
      %v4424 = vld [vmem:[%s83 + $0x38] sm:$0xff]
      %v4425 = vld [vmem:[%s83 + $0x40] sm:$0xff]
      %v4426 = vld [vmem:[%s83 + $0x50] sm:$0xff]
      %v4427 = vld [vmem:[%s83 + $0x58] sm:$0xff]
      %v4428 = vld [vmem:[%s83 + $0x68] sm:$0xff]
      %v4429 = vld [vmem:[%s83 + $0x70] sm:$0xff]
      %v4430 = vld [vmem:[%s83 + $0x80] sm:$0xff]
      %v4431 = vld [vmem:[%s83 + $0x88] sm:$0xff]
      %v4432 = vld [vmem:[%s83 + $0x98] sm:$0xff]
      %v4433 = vld [vmem:[%s83 + $0xa0] sm:$0xff]
      %v4434 = vld [vmem:[%s83 + $0xb0] sm:$0xff]
      %v4435 = vld [vmem:[%s83 + $0xb8] sm:$0xff]
      %v4436 = vld [vmem:[%s83 + $0xc8] sm:$0xff]
      %v4437 = vld [vmem:[%s83 + $0xd0] sm:$0xff]
      %v4438 = vld [vmem:[%s83 + $0xe0] sm:$0xff]
      %v4439 = vld [vmem:[%s83 + $0xe8] sm:$0xff]
      %v4440 = vld [vmem:[%s83 + $0xf8] sm:$0xff]
      %v4441 = vld [vmem:[%s83 + $0x100] sm:$0xff]
      %v4442 = vld [vmem:[%s83 + $0x110] sm:$0xff]
      %v4443 = vld [vmem:[%s83 + $0x118] sm:$0xff]
      %v4444 = vld [vmem:[%s83 + $0x128] sm:$0xff]
      %v4445 = vld [vmem:[%s83 + $0x130] sm:$0xff]
      %v4446 = vld [vmem:[%s83 + $0x140] sm:$0xff]
      %v4447 = vld [vmem:[%s83 + $0x148] sm:$0xff]
      %v4448 = vld [vmem:[%s83 + $0x158] sm:$0xff]
      %v4449 = vld [vmem:[%s83 + $0x160] sm:$0xff]
      %v4450 = vld [vmem:[%s83 + $0x170] sm:$0xff]
      %v4451 = vld [vmem:[%s83 + $0x178] sm:$0xff]
      %4452 = vst [vmem:[#allocation2] sm:$0xff] %v4420
      %4453 = vst [vmem:[#allocation2 + $0x8] sm:$0xff] %v4421
      %4454 = vst [vmem:[#allocation2 + $0x10] sm:$0xff] %v4422
      %4455 = vst [vmem:[#allocation2 + $0x18] sm:$0xff] %v4423
      %4456 = vst [vmem:[#allocation2 + $0x20] sm:$0xff] %v4424
      %4457 = vst [vmem:[#allocation2 + $0x28] sm:$0xff] %v4425
      %4458 = vst [vmem:[#allocation2 + $0x30] sm:$0xff] %v4426
      %4459 = vst [vmem:[#allocation2 + $0x38] sm:$0xff] %v4427
      %4460 = vst [vmem:[#allocation2 + $0x40] sm:$0xff] %v4428
      %4461 = vst [vmem:[#allocation2 + $0x48] sm:$0xff] %v4429
      %4462 = vst [vmem:[#allocation2 + $0x50] sm:$0xff] %v4430
      %4463 = vst [vmem:[#allocation2 + $0x58] sm:$0xff] %v4431
      %4464 = vst [vmem:[#allocation2 + $0x60] sm:$0xff] %v4432
      %4465 = vst [vmem:[#allocation2 + $0x68] sm:$0xff] %v4433
      %4466 = vst [vmem:[#allocation2 + $0x70] sm:$0xff] %v4434
      %4467 = vst [vmem:[#allocation2 + $0x78] sm:$0xff] %v4435
      %4468 = vst [vmem:[#allocation2 + $0x80] sm:$0xff] %v4436
      %4469 = vst [vmem:[#allocation2 + $0x88] sm:$0xff] %v4437
      %4470 = vst [vmem:[#allocation2 + $0x90] sm:$0xff] %v4438
      %4471 = vst [vmem:[#allocation2 + $0x98] sm:$0xff] %v4439
      %4472 = vst [vmem:[#allocation2 + $0xa0] sm:$0xff] %v4440
      %4473 = vst [vmem:[#allocation2 + $0xa8] sm:$0xff] %v4441
      %4474 = vst [vmem:[#allocation2 + $0xb0] sm:$0xff] %v4442
      %4475 = vst [vmem:[#allocation2 + $0xb8] sm:$0xff] %v4443
      %4476 = vst [vmem:[#allocation2 + $0xc0] sm:$0xff] %v4444
      %4477 = vst [vmem:[#allocation2 + $0xc8] sm:$0xff] %v4445
      %4478 = vst [vmem:[#allocation2 + $0xd0] sm:$0xff] %v4446
      %4479 = vst [vmem:[#allocation2 + $0xd8] sm:$0xff] %v4447
      %4480 = vst [vmem:[#allocation2 + $0xe0] sm:$0xff] %v4448
      %4481 = vst [vmem:[#allocation2 + $0xe8] sm:$0xff] %v4449
      %4482 = vst [vmem:[#allocation2 + $0xf0] sm:$0xff] %v4450
      %4483 = vst [vmem:[#allocation2 + $0xf8] sm:$0xff] %v4451
      %v4484 = vld [vmem:[#allocation6 + $0x8] sm:$0x1]
      %v4485 = vld [vmem:[#allocation2] sm:$0xff]
      %v4486 = vld [vmem:[#allocation2 + $0x8] sm:$0xff]
      %v4487 = vld [vmem:[#allocation2 + $0x10] sm:$0xff]
      %v4488 = vld [vmem:[#allocation2 + $0x18] sm:$0xff]
      %v4489 = vld [vmem:[#allocation2 + $0x20] sm:$0xff]
      %v4490 = vld [vmem:[#allocation2 + $0x28] sm:$0xff]
      %v4491 = vld [vmem:[#allocation2 + $0x30] sm:$0xff]
      %v4492 = vld [vmem:[#allocation2 + $0x38] sm:$0xff]
      %v4493 = vld [vmem:[#allocation2 + $0x40] sm:$0xff]
      %v4494 = vld [vmem:[#allocation2 + $0x48] sm:$0xff]
      %v4495 = vld [vmem:[#allocation2 + $0x50] sm:$0xff]
      %v4496 = vld [vmem:[#allocation2 + $0x58] sm:$0xff]
      %v4497 = vld [vmem:[#allocation2 + $0x60] sm:$0xff]
      %v4498 = vld [vmem:[#allocation2 + $0x68] sm:$0xff]
      %v4499 = vld [vmem:[#allocation2 + $0x70] sm:$0xff]
      %v4500 = vld [vmem:[#allocation2 + $0x78] sm:$0xff]
      %v4501 = vlaneseq
      %v4502 = vshrl.u32 %v4501, 7
      %v4503 = vsub.s32 0, %v4502
      %v4504 = vrot.slane %v4484, %v4503
      %v4505 = vmul.f32 %v4485, %v4504
      %v4506 = vmul.f32 %v4486, %v4504
      %v4507 = vmul.f32 %v4487, %v4504
      %v4508 = vmul.f32 %v4488, %v4504
      %v4509 = vmul.f32 %v4489, %v4504
      %v4510 = vmul.f32 %v4490, %v4504
      %v4511 = vmul.f32 %v4491, %v4504
      %v4512 = vmul.f32 %v4492, %v4504
      %v4513 = vmul.f32 %v4493, %v4504
      %v4514 = vmul.f32 %v4494, %v4504
      %v4515 = vmul.f32 %v4495, %v4504
      %v4516 = vmul.f32 %v4496, %v4504
      %v4517 = vmul.f32 %v4497, %v4504
      %v4518 = vmul.f32 %v4498, %v4504
      %v4519 = vmul.f32 %v4499, %v4504
      %v4520 = vmul.f32 %v4500, %v4504
      %v4521 = vadd.f32 %v4404, %v4505
      %v4522 = vadd.f32 %v4405, %v4506
      %v4523 = vadd.f32 %v4406, %v4507
      %v4524 = vadd.f32 %v4407, %v4508
      %v4525 = vadd.f32 %v4408, %v4509
      %v4526 = vadd.f32 %v4409, %v4510
      %v4527 = vadd.f32 %v4410, %v4511
      %v4528 = vadd.f32 %v4411, %v4512
      %v4529 = vadd.f32 %v4412, %v4513
      %v4530 = vadd.f32 %v4413, %v4514
      %v4531 = vadd.f32 %v4414, %v4515
      %v4532 = vadd.f32 %v4415, %v4516
      %v4533 = vadd.f32 %v4416, %v4517
      %v4534 = vadd.f32 %v4417, %v4518
      %v4535 = vadd.f32 %v4418, %v4519
      %v4536 = vadd.f32 %v4419, %v4520
      %v4537 = vld [vmem:[#allocation6 + $0x11] sm:$0x1]
      %v4538 = vld [vmem:[%s202] sm:$0xff]
      %v4539 = vld [vmem:[%s202 + $0x8] sm:$0xff]
      %v4540 = vld [vmem:[%s202 + $0x10] sm:$0xff]
      %v4541 = vld [vmem:[%s202 + $0x18] sm:$0xff]
      %v4542 = vld [vmem:[%s202 + $0x20] sm:$0xff]
      %v4543 = vld [vmem:[%s202 + $0x28] sm:$0xff]
      %v4544 = vld [vmem:[%s202 + $0x30] sm:$0xff]
      %v4545 = vld [vmem:[%s202 + $0x38] sm:$0xff]
      %v4546 = vld [vmem:[%s202 + $0x40] sm:$0xff]
      %v4547 = vld [vmem:[%s202 + $0x48] sm:$0xff]
      %v4548 = vld [vmem:[%s202 + $0x50] sm:$0xff]
      %v4549 = vld [vmem:[%s202 + $0x58] sm:$0xff]
      %v4550 = vld [vmem:[%s202 + $0x60] sm:$0xff]
      %v4551 = vld [vmem:[%s202 + $0x68] sm:$0xff]
      %v4552 = vld [vmem:[%s202 + $0x70] sm:$0xff]
      %v4553 = vld [vmem:[%s202 + $0x78] sm:$0xff]
      %v4554 = vlaneseq
      %v4555 = vshrl.u32 %v4554, 7
      %v4556 = vsub.s32 0, %v4555
      %v4557 = vrot.slane %v4537, %v4556
      %v4558 = vmul.f32 %v4538, %v4557
      %v4559 = vmul.f32 %v4539, %v4557
      %v4560 = vmul.f32 %v4540, %v4557
      %v4561 = vmul.f32 %v4541, %v4557
      %v4562 = vmul.f32 %v4542, %v4557
      %v4563 = vmul.f32 %v4543, %v4557
      %v4564 = vmul.f32 %v4544, %v4557
      %v4565 = vmul.f32 %v4545, %v4557
      %v4566 = vmul.f32 %v4546, %v4557
      %v4567 = vmul.f32 %v4547, %v4557
      %v4568 = vmul.f32 %v4548, %v4557
      %v4569 = vmul.f32 %v4549, %v4557
      %v4570 = vmul.f32 %v4550, %v4557
      %v4571 = vmul.f32 %v4551, %v4557
      %v4572 = vmul.f32 %v4552, %v4557
      %v4573 = vmul.f32 %v4553, %v4557
      %v4574 = vadd.f32 %v4521, %v4558
      %v4575 = vadd.f32 %v4522, %v4559
      %v4576 = vadd.f32 %v4523, %v4560
      %v4577 = vadd.f32 %v4524, %v4561
      %v4578 = vadd.f32 %v4525, %v4562
      %v4579 = vadd.f32 %v4526, %v4563
      %v4580 = vadd.f32 %v4527, %v4564
      %v4581 = vadd.f32 %v4528, %v4565
      %v4582 = vadd.f32 %v4529, %v4566
      %v4583 = vadd.f32 %v4530, %v4567
      %v4584 = vadd.f32 %v4531, %v4568
      %v4585 = vadd.f32 %v4532, %v4569
      %v4586 = vadd.f32 %v4533, %v4570
      %v4587 = vadd.f32 %v4534, %v4571
      %v4588 = vadd.f32 %v4535, %v4572
      %v4589 = vadd.f32 %v4536, %v4573
      %v4590 = vld [vmem:[#allocation6 + $0x1a] sm:$0x1]
      %v4591 = vld [vmem:[%s256] sm:$0xff]
      %v4592 = vld [vmem:[%s256 + $0x8] sm:$0xff]
      %v4593 = vld [vmem:[%s256 + $0x10] sm:$0xff]
      %v4594 = vld [vmem:[%s256 + $0x18] sm:$0xff]
      %v4595 = vld [vmem:[%s256 + $0x20] sm:$0xff]
      %v4596 = vld [vmem:[%s256 + $0x28] sm:$0xff]
      %v4597 = vld [vmem:[%s256 + $0x30] sm:$0xff]
      %v4598 = vld [vmem:[%s256 + $0x38] sm:$0xff]
      %v4599 = vld [vmem:[%s256 + $0x40] sm:$0xff]
      %v4600 = vld [vmem:[%s256 + $0x48] sm:$0xff]
      %v4601 = vld [vmem:[%s256 + $0x50] sm:$0xff]
      %v4602 = vld [vmem:[%s256 + $0x58] sm:$0xff]
      %v4603 = vld [vmem:[%s256 + $0x60] sm:$0xff]
      %v4604 = vld [vmem:[%s256 + $0x68] sm:$0xff]
      %v4605 = vld [vmem:[%s256 + $0x70] sm:$0xff]
      %v4606 = vld [vmem:[%s256 + $0x78] sm:$0xff]
      %v4607 = vlaneseq
      %v4608 = vshrl.u32 %v4607, 7
      %v4609 = vsub.s32 0, %v4608
      %v4610 = vrot.slane %v4590, %v4609
      %v4611 = vmul.f32 %v4591, %v4610
      %v4612 = vmul.f32 %v4592, %v4610
      %v4613 = vmul.f32 %v4593, %v4610
      %v4614 = vmul.f32 %v4594, %v4610
      %v4615 = vmul.f32 %v4595, %v4610
      %v4616 = vmul.f32 %v4596, %v4610
      %v4617 = vmul.f32 %v4597, %v4610
      %v4618 = vmul.f32 %v4598, %v4610
      %v4619 = vmul.f32 %v4599, %v4610
      %v4620 = vmul.f32 %v4600, %v4610
      %v4621 = vmul.f32 %v4601, %v4610
      %v4622 = vmul.f32 %v4602, %v4610
      %v4623 = vmul.f32 %v4603, %v4610
      %v4624 = vmul.f32 %v4604, %v4610
      %v4625 = vmul.f32 %v4605, %v4610
      %v4626 = vmul.f32 %v4606, %v4610
      %v4627 = vadd.f32 %v4574, %v4611
      %v4628 = vadd.f32 %v4575, %v4612
      %v4629 = vadd.f32 %v4576, %v4613
      %v4630 = vadd.f32 %v4577, %v4614
      %v4631 = vadd.f32 %v4578, %v4615
      %v4632 = vadd.f32 %v4579, %v4616
      %v4633 = vadd.f32 %v4580, %v4617
      %v4634 = vadd.f32 %v4581, %v4618
      %v4635 = vadd.f32 %v4582, %v4619
      %v4636 = vadd.f32 %v4583, %v4620
      %v4637 = vadd.f32 %v4584, %v4621
      %v4638 = vadd.f32 %v4585, %v4622
      %v4639 = vadd.f32 %v4586, %v4623
      %v4640 = vadd.f32 %v4587, %v4624
      %v4641 = vadd.f32 %v4588, %v4625
      %v4642 = vadd.f32 %v4589, %v4626
      %v4643 = vld [vmem:[#allocation6 + $0x23] sm:$0x1]
      %v4644 = vld [vmem:[%s310] sm:$0xff]
      %v4645 = vld [vmem:[%s310 + $0x8] sm:$0xff]
      %v4646 = vld [vmem:[%s310 + $0x10] sm:$0xff]
      %v4647 = vld [vmem:[%s310 + $0x18] sm:$0xff]
      %v4648 = vld [vmem:[%s310 + $0x20] sm:$0xff]
      %v4649 = vld [vmem:[%s310 + $0x28] sm:$0xff]
      %v4650 = vld [vmem:[%s310 + $0x30] sm:$0xff]
      %v4651 = vld [vmem:[%s310 + $0x38] sm:$0xff]
      %v4652 = vld [vmem:[%s310 + $0x40] sm:$0xff]
      %v4653 = vld [vmem:[%s310 + $0x48] sm:$0xff]
      %v4654 = vld [vmem:[%s310 + $0x50] sm:$0xff]
      %v4655 = vld [vmem:[%s310 + $0x58] sm:$0xff]
      %v4656 = vld [vmem:[%s310 + $0x60] sm:$0xff]
      %v4657 = vld [vmem:[%s310 + $0x68] sm:$0xff]
      %v4658 = vld [vmem:[%s310 + $0x70] sm:$0xff]
      %v4659 = vld [vmem:[%s310 + $0x78] sm:$0xff]
      %v4660 = vlaneseq
      %v4661 = vshrl.u32 %v4660, 7
      %v4662 = vsub.s32 0, %v4661
      %v4663 = vrot.slane %v4643, %v4662
      %v4664 = vmul.f32 %v4644, %v4663
      %v4665 = vmul.f32 %v4645, %v4663
      %v4666 = vmul.f32 %v4646, %v4663
      %v4667 = vmul.f32 %v4647, %v4663
      %v4668 = vmul.f32 %v4648, %v4663
      %v4669 = vmul.f32 %v4649, %v4663
      %v4670 = vmul.f32 %v4650, %v4663
      %v4671 = vmul.f32 %v4651, %v4663
      %v4672 = vmul.f32 %v4652, %v4663
      %v4673 = vmul.f32 %v4653, %v4663
      %v4674 = vmul.f32 %v4654, %v4663
      %v4675 = vmul.f32 %v4655, %v4663
      %v4676 = vmul.f32 %v4656, %v4663
      %v4677 = vmul.f32 %v4657, %v4663
      %v4678 = vmul.f32 %v4658, %v4663
      %v4679 = vmul.f32 %v4659, %v4663
      %v4680 = vadd.f32 %v4627, %v4664
      %v4681 = vadd.f32 %v4628, %v4665
      %v4682 = vadd.f32 %v4629, %v4666
      %v4683 = vadd.f32 %v4630, %v4667
      %v4684 = vadd.f32 %v4631, %v4668
      %v4685 = vadd.f32 %v4632, %v4669
      %v4686 = vadd.f32 %v4633, %v4670
      %v4687 = vadd.f32 %v4634, %v4671
      %v4688 = vadd.f32 %v4635, %v4672
      %v4689 = vadd.f32 %v4636, %v4673
      %v4690 = vadd.f32 %v4637, %v4674
      %v4691 = vadd.f32 %v4638, %v4675
      %v4692 = vadd.f32 %v4639, %v4676
      %v4693 = vadd.f32 %v4640, %v4677
      %v4694 = vadd.f32 %v4641, %v4678
      %v4695 = vadd.f32 %v4642, %v4679
      %v4696 = vld [vmem:[#allocation6 + $0x2c] sm:$0x1]
      %v4697 = vld [vmem:[%s364] sm:$0xff]
      %v4698 = vld [vmem:[%s364 + $0x8] sm:$0xff]
      %v4699 = vld [vmem:[%s364 + $0x10] sm:$0xff]
      %v4700 = vld [vmem:[%s364 + $0x18] sm:$0xff]
      %v4701 = vld [vmem:[%s364 + $0x20] sm:$0xff]
      %v4702 = vld [vmem:[%s364 + $0x28] sm:$0xff]
      %v4703 = vld [vmem:[%s364 + $0x30] sm:$0xff]
      %v4704 = vld [vmem:[%s364 + $0x38] sm:$0xff]
      %v4705 = vld [vmem:[%s364 + $0x40] sm:$0xff]
      %v4706 = vld [vmem:[%s364 + $0x48] sm:$0xff]
      %v4707 = vld [vmem:[%s364 + $0x50] sm:$0xff]
      %v4708 = vld [vmem:[%s364 + $0x58] sm:$0xff]
      %v4709 = vld [vmem:[%s364 + $0x60] sm:$0xff]
      %v4710 = vld [vmem:[%s364 + $0x68] sm:$0xff]
      %v4711 = vld [vmem:[%s364 + $0x70] sm:$0xff]
      %v4712 = vld [vmem:[%s364 + $0x78] sm:$0xff]
      %v4713 = vlaneseq
      %v4714 = vshrl.u32 %v4713, 7
      %v4715 = vsub.s32 0, %v4714
      %v4716 = vrot.slane %v4696, %v4715
      %v4717 = vmul.f32 %v4697, %v4716
      %v4718 = vmul.f32 %v4698, %v4716
      %v4719 = vmul.f32 %v4699, %v4716
      %v4720 = vmul.f32 %v4700, %v4716
      %v4721 = vmul.f32 %v4701, %v4716
      %v4722 = vmul.f32 %v4702, %v4716
      %v4723 = vmul.f32 %v4703, %v4716
      %v4724 = vmul.f32 %v4704, %v4716
      %v4725 = vmul.f32 %v4705, %v4716
      %v4726 = vmul.f32 %v4706, %v4716
      %v4727 = vmul.f32 %v4707, %v4716
      %v4728 = vmul.f32 %v4708, %v4716
      %v4729 = vmul.f32 %v4709, %v4716
      %v4730 = vmul.f32 %v4710, %v4716
      %v4731 = vmul.f32 %v4711, %v4716
      %v4732 = vmul.f32 %v4712, %v4716
      %v4733 = vadd.f32 %v4680, %v4717
      %v4734 = vadd.f32 %v4681, %v4718
      %v4735 = vadd.f32 %v4682, %v4719
      %v4736 = vadd.f32 %v4683, %v4720
      %v4737 = vadd.f32 %v4684, %v4721
      %v4738 = vadd.f32 %v4685, %v4722
      %v4739 = vadd.f32 %v4686, %v4723
      %v4740 = vadd.f32 %v4687, %v4724
      %v4741 = vadd.f32 %v4688, %v4725
      %v4742 = vadd.f32 %v4689, %v4726
      %v4743 = vadd.f32 %v4690, %v4727
      %v4744 = vadd.f32 %v4691, %v4728
      %v4745 = vadd.f32 %v4692, %v4729
      %v4746 = vadd.f32 %v4693, %v4730
      %v4747 = vadd.f32 %v4694, %v4731
      %v4748 = vadd.f32 %v4695, %v4732
      %v4749 = vld [vmem:[#allocation6 + $0x35] sm:$0x1]
      %v4750 = vld [vmem:[%s418] sm:$0xff]
      %v4751 = vld [vmem:[%s418 + $0x8] sm:$0xff]
      %v4752 = vld [vmem:[%s418 + $0x10] sm:$0xff]
      %v4753 = vld [vmem:[%s418 + $0x18] sm:$0xff]
      %v4754 = vld [vmem:[%s418 + $0x20] sm:$0xff]
      %v4755 = vld [vmem:[%s418 + $0x28] sm:$0xff]
      %v4756 = vld [vmem:[%s418 + $0x30] sm:$0xff]
      %v4757 = vld [vmem:[%s418 + $0x38] sm:$0xff]
      %v4758 = vld [vmem:[%s418 + $0x40] sm:$0xff]
      %v4759 = vld [vmem:[%s418 + $0x48] sm:$0xff]
      %v4760 = vld [vmem:[%s418 + $0x50] sm:$0xff]
      %v4761 = vld [vmem:[%s418 + $0x58] sm:$0xff]
      %v4762 = vld [vmem:[%s418 + $0x60] sm:$0xff]
      %v4763 = vld [vmem:[%s418 + $0x68] sm:$0xff]
      %v4764 = vld [vmem:[%s418 + $0x70] sm:$0xff]
      %v4765 = vld [vmem:[%s418 + $0x78] sm:$0xff]
      %v4766 = vlaneseq
      %v4767 = vshrl.u32 %v4766, 7
      %v4768 = vsub.s32 0, %v4767
      %v4769 = vrot.slane %v4749, %v4768
      %v4770 = vmul.f32 %v4750, %v4769
      %v4771 = vmul.f32 %v4751, %v4769
      %v4772 = vmul.f32 %v4752, %v4769
      %v4773 = vmul.f32 %v4753, %v4769
      %v4774 = vmul.f32 %v4754, %v4769
      %v4775 = vmul.f32 %v4755, %v4769
      %v4776 = vmul.f32 %v4756, %v4769
      %v4777 = vmul.f32 %v4757, %v4769
      %v4778 = vmul.f32 %v4758, %v4769
      %v4779 = vmul.f32 %v4759, %v4769
      %v4780 = vmul.f32 %v4760, %v4769
      %v4781 = vmul.f32 %v4761, %v4769
      %v4782 = vmul.f32 %v4762, %v4769
      %v4783 = vmul.f32 %v4763, %v4769
      %v4784 = vmul.f32 %v4764, %v4769
      %v4785 = vmul.f32 %v4765, %v4769
      %v4786 = vadd.f32 %v4733, %v4770
      %v4787 = vadd.f32 %v4734, %v4771
      %v4788 = vadd.f32 %v4735, %v4772
      %v4789 = vadd.f32 %v4736, %v4773
      %v4790 = vadd.f32 %v4737, %v4774
      %v4791 = vadd.f32 %v4738, %v4775
      %v4792 = vadd.f32 %v4739, %v4776
      %v4793 = vadd.f32 %v4740, %v4777
      %v4794 = vadd.f32 %v4741, %v4778
      %v4795 = vadd.f32 %v4742, %v4779
      %v4796 = vadd.f32 %v4743, %v4780
      %v4797 = vadd.f32 %v4744, %v4781
      %v4798 = vadd.f32 %v4745, %v4782
      %v4799 = vadd.f32 %v4746, %v4783
      %v4800 = vadd.f32 %v4747, %v4784
      %v4801 = vadd.f32 %v4748, %v4785
      %v4802 = vld [vmem:[#allocation6 + $0x3e] sm:$0x1]
      %v4803 = vld [vmem:[%s472] sm:$0xff]
      %v4804 = vld [vmem:[%s472 + $0x8] sm:$0xff]
      %v4805 = vld [vmem:[%s472 + $0x10] sm:$0xff]
      %v4806 = vld [vmem:[%s472 + $0x18] sm:$0xff]
      %v4807 = vld [vmem:[%s472 + $0x20] sm:$0xff]
      %v4808 = vld [vmem:[%s472 + $0x28] sm:$0xff]
      %v4809 = vld [vmem:[%s472 + $0x30] sm:$0xff]
      %v4810 = vld [vmem:[%s472 + $0x38] sm:$0xff]
      %v4811 = vld [vmem:[%s472 + $0x40] sm:$0xff]
      %v4812 = vld [vmem:[%s472 + $0x48] sm:$0xff]
      %v4813 = vld [vmem:[%s472 + $0x50] sm:$0xff]
      %v4814 = vld [vmem:[%s472 + $0x58] sm:$0xff]
      %v4815 = vld [vmem:[%s472 + $0x60] sm:$0xff]
      %v4816 = vld [vmem:[%s472 + $0x68] sm:$0xff]
      %v4817 = vld [vmem:[%s472 + $0x70] sm:$0xff]
      %v4818 = vld [vmem:[%s472 + $0x78] sm:$0xff]
      %v4819 = vlaneseq
      %v4820 = vshrl.u32 %v4819, 7
      %v4821 = vsub.s32 0, %v4820
      %v4822 = vrot.slane %v4802, %v4821
      %v4823 = vmul.f32 %v4803, %v4822
      %v4824 = vmul.f32 %v4804, %v4822
      %v4825 = vmul.f32 %v4805, %v4822
      %v4826 = vmul.f32 %v4806, %v4822
      %v4827 = vmul.f32 %v4807, %v4822
      %v4828 = vmul.f32 %v4808, %v4822
      %v4829 = vmul.f32 %v4809, %v4822
      %v4830 = vmul.f32 %v4810, %v4822
      %v4831 = vmul.f32 %v4811, %v4822
      %v4832 = vmul.f32 %v4812, %v4822
      %v4833 = vmul.f32 %v4813, %v4822
      %v4834 = vmul.f32 %v4814, %v4822
      %v4835 = vmul.f32 %v4815, %v4822
      %v4836 = vmul.f32 %v4816, %v4822
      %v4837 = vmul.f32 %v4817, %v4822
      %v4838 = vmul.f32 %v4818, %v4822
      %v4839 = vadd.f32 %v4786, %v4823
      %v4840 = vadd.f32 %v4787, %v4824
      %v4841 = vadd.f32 %v4788, %v4825
      %v4842 = vadd.f32 %v4789, %v4826
      %v4843 = vadd.f32 %v4790, %v4827
      %v4844 = vadd.f32 %v4791, %v4828
      %v4845 = vadd.f32 %v4792, %v4829
      %v4846 = vadd.f32 %v4793, %v4830
      %v4847 = vadd.f32 %v4794, %v4831
      %v4848 = vadd.f32 %v4795, %v4832
      %v4849 = vadd.f32 %v4796, %v4833
      %v4850 = vadd.f32 %v4797, %v4834
      %v4851 = vadd.f32 %v4798, %v4835
      %v4852 = vadd.f32 %v4799, %v4836
      %v4853 = vadd.f32 %v4800, %v4837
      %v4854 = vadd.f32 %v4801, %v4838
      %v4855 = vld [vmem:[#allocation6 + $0x47] sm:$0x1]
      %v4856 = vld [vmem:[%s526] sm:$0xff]
      %v4857 = vld [vmem:[%s526 + $0x8] sm:$0xff]
      %v4858 = vld [vmem:[%s526 + $0x10] sm:$0xff]
      %v4859 = vld [vmem:[%s526 + $0x18] sm:$0xff]
      %v4860 = vld [vmem:[%s526 + $0x20] sm:$0xff]
      %v4861 = vld [vmem:[%s526 + $0x28] sm:$0xff]
      %v4862 = vld [vmem:[%s526 + $0x30] sm:$0xff]
      %v4863 = vld [vmem:[%s526 + $0x38] sm:$0xff]
      %v4864 = vld [vmem:[%s526 + $0x40] sm:$0xff]
      %v4865 = vld [vmem:[%s526 + $0x48] sm:$0xff]
      %v4866 = vld [vmem:[%s526 + $0x50] sm:$0xff]
      %v4867 = vld [vmem:[%s526 + $0x58] sm:$0xff]
      %v4868 = vld [vmem:[%s526 + $0x60] sm:$0xff]
      %v4869 = vld [vmem:[%s526 + $0x68] sm:$0xff]
      %v4870 = vld [vmem:[%s526 + $0x70] sm:$0xff]
      %v4871 = vld [vmem:[%s526 + $0x78] sm:$0xff]
      %v4872 = vlaneseq
      %v4873 = vshrl.u32 %v4872, 7
      %v4874 = vsub.s32 0, %v4873
      %v4875 = vrot.slane %v4855, %v4874
      %v4876 = vmul.f32 %v4856, %v4875
      %v4877 = vmul.f32 %v4857, %v4875
      %v4878 = vmul.f32 %v4858, %v4875
      %v4879 = vmul.f32 %v4859, %v4875
      %v4880 = vmul.f32 %v4860, %v4875
      %v4881 = vmul.f32 %v4861, %v4875
      %v4882 = vmul.f32 %v4862, %v4875
      %v4883 = vmul.f32 %v4863, %v4875
      %v4884 = vmul.f32 %v4864, %v4875
      %v4885 = vmul.f32 %v4865, %v4875
      %v4886 = vmul.f32 %v4866, %v4875
      %v4887 = vmul.f32 %v4867, %v4875
      %v4888 = vmul.f32 %v4868, %v4875
      %v4889 = vmul.f32 %v4869, %v4875
      %v4890 = vmul.f32 %v4870, %v4875
      %v4891 = vmul.f32 %v4871, %v4875
      %v4892 = vadd.f32 %v4839, %v4876
      %v4893 = vadd.f32 %v4840, %v4877
      %v4894 = vadd.f32 %v4841, %v4878
      %v4895 = vadd.f32 %v4842, %v4879
      %v4896 = vadd.f32 %v4843, %v4880
      %v4897 = vadd.f32 %v4844, %v4881
      %v4898 = vadd.f32 %v4845, %v4882
      %v4899 = vadd.f32 %v4846, %v4883
      %v4900 = vadd.f32 %v4847, %v4884
      %v4901 = vadd.f32 %v4848, %v4885
      %v4902 = vadd.f32 %v4849, %v4886
      %v4903 = vadd.f32 %v4850, %v4887
      %v4904 = vadd.f32 %v4851, %v4888
      %v4905 = vadd.f32 %v4852, %v4889
      %v4906 = vadd.f32 %v4853, %v4890
      %v4907 = vadd.f32 %v4854, %v4891
      %v4908 = vld [vmem:[#allocation6 + $0x50] sm:$0x1]
      %v4909 = vld [vmem:[%s580] sm:$0xff]
      %v4910 = vld [vmem:[%s580 + $0x8] sm:$0xff]
      %v4911 = vld [vmem:[%s580 + $0x10] sm:$0xff]
      %v4912 = vld [vmem:[%s580 + $0x18] sm:$0xff]
      %v4913 = vld [vmem:[%s580 + $0x20] sm:$0xff]
      %v4914 = vld [vmem:[%s580 + $0x28] sm:$0xff]
      %v4915 = vld [vmem:[%s580 + $0x30] sm:$0xff]
      %v4916 = vld [vmem:[%s580 + $0x38] sm:$0xff]
      %v4917 = vld [vmem:[%s580 + $0x40] sm:$0xff]
      %v4918 = vld [vmem:[%s580 + $0x48] sm:$0xff]
      %v4919 = vld [vmem:[%s580 + $0x50] sm:$0xff]
      %v4920 = vld [vmem:[%s580 + $0x58] sm:$0xff]
      %v4921 = vld [vmem:[%s580 + $0x60] sm:$0xff]
      %v4922 = vld [vmem:[%s580 + $0x68] sm:$0xff]
      %v4923 = vld [vmem:[%s580 + $0x70] sm:$0xff]
      %v4924 = vld [vmem:[%s580 + $0x78] sm:$0xff]
      %v4925 = vlaneseq
      %v4926 = vshrl.u32 %v4925, 7
      %v4927 = vsub.s32 0, %v4926
      %v4928 = vrot.slane %v4908, %v4927
      %v4929 = vmul.f32 %v4909, %v4928
      %v4930 = vmul.f32 %v4910, %v4928
      %v4931 = vmul.f32 %v4911, %v4928
      %v4932 = vmul.f32 %v4912, %v4928
      %v4933 = vmul.f32 %v4913, %v4928
      %v4934 = vmul.f32 %v4914, %v4928
      %v4935 = vmul.f32 %v4915, %v4928
      %v4936 = vmul.f32 %v4916, %v4928
      %v4937 = vmul.f32 %v4917, %v4928
      %v4938 = vmul.f32 %v4918, %v4928
      %v4939 = vmul.f32 %v4919, %v4928
      %v4940 = vmul.f32 %v4920, %v4928
      %v4941 = vmul.f32 %v4921, %v4928
      %v4942 = vmul.f32 %v4922, %v4928
      %v4943 = vmul.f32 %v4923, %v4928
      %v4944 = vmul.f32 %v4924, %v4928
      %v4945 = vadd.f32 %v4892, %v4929
      %v4946 = vadd.f32 %v4893, %v4930
      %v4947 = vadd.f32 %v4894, %v4931
      %v4948 = vadd.f32 %v4895, %v4932
      %v4949 = vadd.f32 %v4896, %v4933
      %v4950 = vadd.f32 %v4897, %v4934
      %v4951 = vadd.f32 %v4898, %v4935
      %v4952 = vadd.f32 %v4899, %v4936
      %v4953 = vadd.f32 %v4900, %v4937
      %v4954 = vadd.f32 %v4901, %v4938
      %v4955 = vadd.f32 %v4902, %v4939
      %v4956 = vadd.f32 %v4903, %v4940
      %v4957 = vadd.f32 %v4904, %v4941
      %v4958 = vadd.f32 %v4905, %v4942
      %v4959 = vadd.f32 %v4906, %v4943
      %v4960 = vadd.f32 %v4907, %v4944
      %v4961 = vld [vmem:[%s2] sm:$0xff]
      %v4962 = vld [vmem:[%s2 + $0x8] sm:$0xff]
      %v4963 = vld [vmem:[%s2 + $0x10] sm:$0xff]
      %v4964 = vld [vmem:[%s2 + $0x18] sm:$0xff]
      %v4965 = vld [vmem:[%s2 + $0x20] sm:$0xff]
      %v4966 = vld [vmem:[%s2 + $0x28] sm:$0xff]
      %v4967 = vld [vmem:[%s2 + $0x30] sm:$0xff]
      %v4968 = vld [vmem:[%s2 + $0x38] sm:$0xff]
      %v4969 = vld [vmem:[%s2 + $0x40] sm:$0xff]
      %v4970 = vld [vmem:[%s2 + $0x48] sm:$0xff]
      %v4971 = vld [vmem:[%s2 + $0x50] sm:$0xff]
      %v4972 = vld [vmem:[%s2 + $0x58] sm:$0xff]
      %v4973 = vld [vmem:[%s2 + $0x60] sm:$0xff]
      %v4974 = vld [vmem:[%s2 + $0x68] sm:$0xff]
      %v4975 = vld [vmem:[%s2 + $0x70] sm:$0xff]
      %v4976 = vld [vmem:[%s2 + $0x78] sm:$0xff]
      %v4977 = vld [vmem:[%s3] sm:$0x1]
      %v4979 = vlaneseq
      %v4980 = vshrl.u32 %v4979, 7
      %v4981 = vsub.s32 0, %v4980
      %v4982 = vrot.slane %v4977, %v4981
      %4984 = vmatprep.subr.mxu0 0.0
      %4985 = vmatpush1.msra.mxu0 %v4961
      %4986 = vmatprep.subr.mxu0 0.0
      %4987 = vmatpush1.msra.mxu0 %v4962
      %4988 = vmatprep.subr.mxu0 0.0
      %4989 = vmatpush1.msra.mxu0 %v4963
      %4990 = vmatprep.subr.mxu0 0.0
      %4991 = vmatpush1.msra.mxu0 %v4964
      %4992 = vmatprep.subr.mxu0 0.0
      %4993 = vmatpush1.msra.mxu0 %v4965
      %4994 = vmatprep.subr.mxu0 0.0
      %4995 = vmatpush1.msra.mxu0 %v4966
      %4996 = vmatprep.subr.mxu0 0.0
      %4997 = vmatpush1.msra.mxu0 %v4967
      %4998 = vmatprep.subr.mxu0 0.0
      %4999 = vmatpush1.msra.mxu0 %v4968
      %5000 = vmatprep.subr.mxu0 0.0
      %5001 = vmatpush1.msra.mxu0 %v4969
      %5002 = vmatprep.subr.mxu0 0.0
      %5003 = vmatpush1.msra.mxu0 %v4970
      %5004 = vmatprep.subr.mxu0 0.0
      %5005 = vmatpush1.msra.mxu0 %v4971
      %5006 = vmatprep.subr.mxu0 0.0
      %5007 = vmatpush1.msra.mxu0 %v4972
      %5008 = vmatprep.subr.mxu0 0.0
      %5009 = vmatpush1.msra.mxu0 %v4973
      %5010 = vmatprep.subr.mxu0 0.0
      %5011 = vmatpush1.msra.mxu0 %v4974
      %5012 = vmatprep.subr.mxu0 0.0
      %5013 = vmatpush1.msra.mxu0 %v4975
      %5014 = vmatprep.subr.mxu0 0.0
      %5015 = vmatpush1.msra.mxu0 %v4976
      %5016 = vmatprep.subr.mxu0 0.0
      %5017 = vmatpush1.msra.mxu0 0.0
      %5018 = vmatprep.subr.mxu0 0.0
      %5019 = vmatpush1.msra.mxu0 0.0
      %5020 = vmatprep.subr.mxu0 0.0
      %5021 = vmatpush1.msra.mxu0 0.0
      %5022 = vmatprep.subr.mxu0 0.0
      %5023 = vmatpush1.msra.mxu0 0.0
      %5024 = vmatprep.subr.mxu0 0.0
      %5025 = vmatpush1.msra.mxu0 0.0
      %5026 = vmatprep.subr.mxu0 0.0
      %5027 = vmatpush1.msra.mxu0 0.0
      %5028 = vmatprep.subr.mxu0 0.0
      %5029 = vmatpush1.msra.mxu0 0.0
      %5030 = vmatprep.subr.mxu0 0.0
      %5031 = vmatpush1.msra.mxu0 0.0
      %5032 = vmatprep.subr.mxu0 0.0
      %5033 = vmatpush1.msra.mxu0 0.0
      %5034 = vmatprep.subr.mxu0 0.0
      %5035 = vmatpush1.msra.mxu0 0.0
      %5036 = vmatprep.subr.mxu0 0.0
      %5037 = vmatpush1.msra.mxu0 0.0
      %5038 = vmatprep.subr.mxu0 0.0
      %5039 = vmatpush1.msra.mxu0 0.0
      %5040 = vmatprep.subr.mxu0 0.0
      %5041 = vmatpush1.msra.mxu0 0.0
      %5042 = vmatprep.subr.mxu0 0.0
      %5043 = vmatpush1.msra.mxu0 0.0
      %5044 = vmatprep.subr.mxu0 0.0
      %5045 = vmatpush1.msra.mxu0 0.0
      %5046 = vmatprep.subr.mxu0 0.0
      %5047 = vmatpush1.msra.mxu0 0.0
      %5048 = vmatprep.mubr.f32.mxu0 0.0
      %5049 = vmatmul.mubr.f32.gmra.mrb[0].mxu0 %v4945
      %v5050 = vpop.f32.mrb[0].mxu0
      %v5051 = vadd.f32 %v4982, %v5050
      %v5052 = vpop.f32.mrb[0].mxu0
      %5053 = vmatprep.mubr.f32.mxu0 0.0
      %5054 = vmatmul.mubr.f32.gmra.mrb[0].mxu0 %v4946
      %v5055 = vpop.f32.mrb[0].mxu0
      %v5056 = vadd.f32 %v4982, %v5055
      %v5057 = vpop.f32.mrb[0].mxu0
      %5058 = vmatprep.mubr.f32.mxu0 0.0
      %5059 = vmatmul.mubr.f32.gmra.mrb[0].mxu0 %v4947
      %v5060 = vpop.f32.mrb[0].mxu0
      %v5061 = vadd.f32 %v4982, %v5060
      %v5062 = vpop.f32.mrb[0].mxu0
      %5063 = vmatprep.mubr.f32.mxu0 0.0
      %5064 = vmatmul.mubr.f32.gmra.mrb[0].mxu0 %v4948
      %v5065 = vpop.f32.mrb[0].mxu0
      %v5066 = vadd.f32 %v4982, %v5065
      %v5067 = vpop.f32.mrb[0].mxu0
      %5068 = vmatprep.mubr.f32.mxu0 0.0
      %5069 = vmatmul.mubr.f32.gmra.mrb[0].mxu0 %v4949
      %v5070 = vpop.f32.mrb[0].mxu0
      %v5071 = vadd.f32 %v4982, %v5070
      %v5072 = vpop.f32.mrb[0].mxu0
      %5073 = vmatprep.mubr.f32.mxu0 0.0
      %5074 = vmatmul.mubr.f32.gmra.mrb[0].mxu0 %v4950
      %v5075 = vpop.f32.mrb[0].mxu0
      %v5076 = vadd.f32 %v4982, %v5075
      %v5077 = vpop.f32.mrb[0].mxu0
      %5078 = vmatprep.mubr.f32.mxu0 0.0
      %5079 = vmatmul.mubr.f32.gmra.mrb[0].mxu0 %v4951
      %v5080 = vpop.f32.mrb[0].mxu0
      %v5081 = vadd.f32 %v4982, %v5080
      %v5082 = vpop.f32.mrb[0].mxu0
      %5083 = vmatprep.mubr.f32.mxu0 0.0
      %5084 = vmatmul.mubr.f32.gmra.mrb[0].mxu0 %v4952
      %v5085 = vpop.f32.mrb[0].mxu0
      %v5086 = vadd.f32 %v4982, %v5085
      %v5087 = vpop.f32.mrb[0].mxu0
      %5088 = vmatprep.mubr.f32.mxu0 0.0
      %5089 = vmatmul.mubr.f32.gmra.mrb[0].mxu0 %v4953
      %v5090 = vpop.f32.mrb[0].mxu0
      %v5091 = vadd.f32 %v4982, %v5090
      %v5092 = vpop.f32.mrb[0].mxu0
      %5093 = vmatprep.mubr.f32.mxu0 0.0
      %5094 = vmatmul.mubr.f32.gmra.mrb[0].mxu0 %v4954
      %v5095 = vpop.f32.mrb[0].mxu0
      %v5096 = vadd.f32 %v4982, %v5095
      %v5097 = vpop.f32.mrb[0].mxu0
      %5098 = vmatprep.mubr.f32.mxu0 0.0
      %5099 = vmatmul.mubr.f32.gmra.mrb[0].mxu0 %v4955
      %v5100 = vpop.f32.mrb[0].mxu0
      %v5101 = vadd.f32 %v4982, %v5100
      %v5102 = vpop.f32.mrb[0].mxu0
      %5103 = vmatprep.mubr.f32.mxu0 0.0
      %5104 = vmatmul.mubr.f32.gmra.mrb[0].mxu0 %v4956
      %v5105 = vpop.f32.mrb[0].mxu0
      %v5106 = vadd.f32 %v4982, %v5105
      %v5107 = vpop.f32.mrb[0].mxu0
      %5108 = vmatprep.mubr.f32.mxu0 0.0
      %5109 = vmatmul.mubr.f32.gmra.mrb[0].mxu0 %v4957
      %v5110 = vpop.f32.mrb[0].mxu0
      %v5111 = vadd.f32 %v4982, %v5110
      %v5112 = vpop.f32.mrb[0].mxu0
      %5113 = vmatprep.mubr.f32.mxu0 0.0
      %5114 = vmatmul.mubr.f32.gmra.mrb[0].mxu0 %v4958
      %v5115 = vpop.f32.mrb[0].mxu0
      %v5116 = vadd.f32 %v4982, %v5115
      %v5117 = vpop.f32.mrb[0].mxu0
      %5118 = vmatprep.mubr.f32.mxu0 0.0
      %5119 = vmatmul.mubr.f32.gmra.mrb[0].mxu0 %v4959
      %v5120 = vpop.f32.mrb[0].mxu0
      %v5121 = vadd.f32 %v4982, %v5120
      %v5122 = vpop.f32.mrb[0].mxu0
      %5123 = vmatprep.mubr.f32.mxu0 0.0
      %5124 = vmatmul.mubr.f32.gmra.mrb[0].mxu0 %v4960
      %v5125 = vpop.f32.mrb[0].mxu0
      %v5126 = vadd.f32 %v4982, %v5125
      %v5127 = vpop.f32.mrb[0].mxu0
      %5128 = vdwg.mxu0
      %s5129 = smul.u32 %s75, 128
      %s5130 = scalar_lea.vmem [#allocation9], %s5129
      %5131 = vst [vmem:[%s5130] sm:$0xff] %v5051
      %5132 = vst [vmem:[%s5130 + $0x8] sm:$0xff] %v5056
      %5133 = vst [vmem:[%s5130 + $0x10] sm:$0xff] %v5061
      %5134 = vst [vmem:[%s5130 + $0x18] sm:$0xff] %v5066
      %5135 = vst [vmem:[%s5130 + $0x20] sm:$0xff] %v5071
      %5136 = vst [vmem:[%s5130 + $0x28] sm:$0xff] %v5076
      %5137 = vst [vmem:[%s5130 + $0x30] sm:$0xff] %v5081
      %5138 = vst [vmem:[%s5130 + $0x38] sm:$0xff] %v5086
      %5139 = vst [vmem:[%s5130 + $0x40] sm:$0xff] %v5091
      %5140 = vst [vmem:[%s5130 + $0x48] sm:$0xff] %v5096
      %5141 = vst [vmem:[%s5130 + $0x50] sm:$0xff] %v5101
      %5142 = vst [vmem:[%s5130 + $0x58] sm:$0xff] %v5106
      %5143 = vst [vmem:[%s5130 + $0x60] sm:$0xff] %v5111
      %5144 = vst [vmem:[%s5130 + $0x68] sm:$0xff] %v5116
      %5145 = vst [vmem:[%s5130 + $0x70] sm:$0xff] %v5121
      %5146 = vst [vmem:[%s5130 + $0x78] sm:$0xff] %v5126
      %v5147 = vadd.f32 %v5051, %v5056
      %v5148 = vadd.f32 %v5147, %v5061
      %v5149 = vadd.f32 %v5148, %v5066
      %v5150 = vadd.f32 %v5149, %v5071
      %v5151 = vadd.f32 %v5150, %v5076
      %v5152 = vadd.f32 %v5151, %v5081
      %v5153 = vadd.f32 %v5152, %v5086
      %v5154 = vadd.f32 %v5153, %v5091
      %v5155 = vadd.f32 %v5154, %v5096
      %v5156 = vadd.f32 %v5155, %v5101
      %v5157 = vadd.f32 %v5156, %v5106
      %v5158 = vadd.f32 %v5157, %v5111
      %v5159 = vadd.f32 %v5158, %v5116
      %v5160 = vadd.f32 %v5159, %v5121
      %v5161 = vadd.f32 %v5160, %v5126
      %v5162 = vrot.slane %v5161, 4
      %v5163 = vadd.f32 %v5161, %v5162
      %v5164 = vrot.slane %v5163, 2
      %v5165 = vadd.f32 %v5163, %v5164
      %v5166 = vrot.slane %v5165, 1
      %v5167 = vadd.f32 %v5165, %v5166
      %v5168 = vadd.f32 %v80, %v5167
    $region54: #{tpu_custom_call.1} parent=1 // loop_footer
      %s79 = sadd.s32 1, %s75
    $region55: #{tpu_custom_call.1} parent=1 // loop_footer_branch
      %74 = sbr.rel target = $region51
    $region56: #{tpu_custom_call.1} parent=1 // loop_exit
      _
    %v5169 = vmul.f32 %v80, 0.00390625
    %v5170 = vld [vmem:[%s4] sm:$0xff]
    %v5171 = vld [vmem:[%s4 + $0x8] sm:$0xff]
    %v5172 = vld [vmem:[%s4 + $0x10] sm:$0xff]
    %v5173 = vld [vmem:[%s4 + $0x18] sm:$0xff]
    %v5174 = vld [vmem:[%s4 + $0x20] sm:$0xff]
    %v5175 = vld [vmem:[%s4 + $0x28] sm:$0xff]
    %v5176 = vld [vmem:[%s4 + $0x30] sm:$0xff]
    %v5177 = vld [vmem:[%s4 + $0x38] sm:$0xff]
    %v5178 = vld [vmem:[%s4 + $0x40] sm:$0xff]
    %v5179 = vld [vmem:[%s4 + $0x48] sm:$0xff]
    %v5180 = vld [vmem:[%s4 + $0x50] sm:$0xff]
    %v5181 = vld [vmem:[%s4 + $0x58] sm:$0xff]
    %v5182 = vld [vmem:[%s4 + $0x60] sm:$0xff]
    %v5183 = vld [vmem:[%s4 + $0x68] sm:$0xff]
    %v5184 = vld [vmem:[%s4 + $0x70] sm:$0xff]
    %v5185 = vld [vmem:[%s4 + $0x78] sm:$0xff]
    %v5186 = vld [vmem:[%s5] sm:$0x1]
    %5187 = vmatprep.subr.mxu0 0.0
    %5188 = vmatpush1.msra.mxu0 %v5170
    %5189 = vmatprep.subr.mxu0 0.0
    %5190 = vmatpush1.msra.mxu0 %v5171
    %5191 = vmatprep.subr.mxu0 0.0
    %5192 = vmatpush1.msra.mxu0 %v5172
    %5193 = vmatprep.subr.mxu0 0.0
    %5194 = vmatpush1.msra.mxu0 %v5173
    %5195 = vmatprep.subr.mxu0 0.0
    %5196 = vmatpush1.msra.mxu0 %v5174
    %5197 = vmatprep.subr.mxu0 0.0
    %5198 = vmatpush1.msra.mxu0 %v5175
    %5199 = vmatprep.subr.mxu0 0.0
    %5200 = vmatpush1.msra.mxu0 %v5176
    %5201 = vmatprep.subr.mxu0 0.0
    %5202 = vmatpush1.msra.mxu0 %v5177
    %5203 = vmatprep.subr.mxu0 0.0
    %5204 = vmatpush1.msra.mxu0 %v5178
    %5205 = vmatprep.subr.mxu0 0.0
    %5206 = vmatpush1.msra.mxu0 %v5179
    %5207 = vmatprep.subr.mxu0 0.0
    %5208 = vmatpush1.msra.mxu0 %v5180
    %5209 = vmatprep.subr.mxu0 0.0
    %5210 = vmatpush1.msra.mxu0 %v5181
    %5211 = vmatprep.subr.mxu0 0.0
    %5212 = vmatpush1.msra.mxu0 %v5182
    %5213 = vmatprep.subr.mxu0 0.0
    %5214 = vmatpush1.msra.mxu0 %v5183
    %5215 = vmatprep.subr.mxu0 0.0
    %5216 = vmatpush1.msra.mxu0 %v5184
    %5217 = vmatprep.subr.mxu0 0.0
    %5218 = vmatpush1.msra.mxu0 %v5185
    %5219 = vmatprep.subr.mxu0 0.0
    %5220 = vmatpush1.msra.mxu0 0.0
    %5221 = vmatprep.subr.mxu0 0.0
    %5222 = vmatpush1.msra.mxu0 0.0
    %5223 = vmatprep.subr.mxu0 0.0
    %5224 = vmatpush1.msra.mxu0 0.0
    %5225 = vmatprep.subr.mxu0 0.0
    %5226 = vmatpush1.msra.mxu0 0.0
    %5227 = vmatprep.subr.mxu0 0.0
    %5228 = vmatpush1.msra.mxu0 0.0
    %5229 = vmatprep.subr.mxu0 0.0
    %5230 = vmatpush1.msra.mxu0 0.0
    %5231 = vmatprep.subr.mxu0 0.0
    %5232 = vmatpush1.msra.mxu0 0.0
    %5233 = vmatprep.subr.mxu0 0.0
    %5234 = vmatpush1.msra.mxu0 0.0
    %5235 = vmatprep.subr.mxu0 0.0
    %5236 = vmatpush1.msra.mxu0 0.0
    %5237 = vmatprep.subr.mxu0 0.0
    %5238 = vmatpush1.msra.mxu0 0.0
    %5239 = vmatprep.subr.mxu0 0.0
    %5240 = vmatpush1.msra.mxu0 0.0
    %5241 = vmatprep.subr.mxu0 0.0
    %5242 = vmatpush1.msra.mxu0 0.0
    %5243 = vmatprep.subr.mxu0 0.0
    %5244 = vmatpush1.msra.mxu0 0.0
    %5245 = vmatprep.subr.mxu0 0.0
    %5246 = vmatpush1.msra.mxu0 0.0
    %5247 = vmatprep.subr.mxu0 0.0
    %5248 = vmatpush1.msra.mxu0 0.0
    %5249 = vmatprep.subr.mxu0 0.0
    %5250 = vmatpush1.msra.mxu0 0.0
    %5251 = vmatprep.mubr.f32.mxu0 0.0
    %5252 = vmatmul.mubr.f32.gmra.mrb[0].mxu0 %v5169
    %v5253 = vpop.f32.mrb[0].mxu0
    %v5254 = vadd.f32 %v5186, %v5253
    %v5255 = vpop.f32.mrb[0].mxu0
    %5256 = vdwg.mxu0
    %v5257 = vmax.f32 %v5254, 0.0
    %v5258 = vld [vmem:[%s6] sm:$0xff]
    %v5259 = vld [vmem:[%s6 + $0x8] sm:$0xff]
    %v5260 = vld [vmem:[%s6 + $0x10] sm:$0xff]
    %v5261 = vld [vmem:[%s6 + $0x18] sm:$0xff]
    %v5262 = vld [vmem:[%s7] sm:$0x1]
    %vm5263 = vcmask 261120
    %v5265 = vsel %vm5263, %v5257, 0
    %5267 = vmatprep.subr.mxu0 0.0
    %5268 = vmatpush1.msra.mxu0 %v5258
    %5269 = vmatprep.subr.mxu0 0.0
    %5270 = vmatpush1.msra.mxu0 %v5259
    %5271 = vmatprep.subr.mxu0 0.0
    %5272 = vmatpush1.msra.mxu0 %v5260
    %5273 = vmatprep.subr.mxu0 0.0
    %5274 = vmatpush1.msra.mxu0 %v5261
    %5275 = vmatprep.subr.mxu0 0.0
    %5276 = vmatpush1.msra.mxu0 0.0
    %5277 = vmatprep.subr.mxu0 0.0
    %5278 = vmatpush1.msra.mxu0 0.0
    %5279 = vmatprep.subr.mxu0 0.0
    %5280 = vmatpush1.msra.mxu0 0.0
    %5281 = vmatprep.subr.mxu0 0.0
    %5282 = vmatpush1.msra.mxu0 0.0
    %5283 = vmatprep.subr.mxu0 0.0
    %5284 = vmatpush1.msra.mxu0 0.0
    %5285 = vmatprep.subr.mxu0 0.0
    %5286 = vmatpush1.msra.mxu0 0.0
    %5287 = vmatprep.subr.mxu0 0.0
    %5288 = vmatpush1.msra.mxu0 0.0
    %5289 = vmatprep.subr.mxu0 0.0
    %5290 = vmatpush1.msra.mxu0 0.0
    %5291 = vmatprep.subr.mxu0 0.0
    %5292 = vmatpush1.msra.mxu0 0.0
    %5293 = vmatprep.subr.mxu0 0.0
    %5294 = vmatpush1.msra.mxu0 0.0
    %5295 = vmatprep.subr.mxu0 0.0
    %5296 = vmatpush1.msra.mxu0 0.0
    %5297 = vmatprep.subr.mxu0 0.0
    %5298 = vmatpush1.msra.mxu0 0.0
    %5299 = vmatprep.subr.mxu0 0.0
    %5300 = vmatpush1.msra.mxu0 0.0
    %5301 = vmatprep.subr.mxu0 0.0
    %5302 = vmatpush1.msra.mxu0 0.0
    %5303 = vmatprep.subr.mxu0 0.0
    %5304 = vmatpush1.msra.mxu0 0.0
    %5305 = vmatprep.subr.mxu0 0.0
    %5306 = vmatpush1.msra.mxu0 0.0
    %5307 = vmatprep.subr.mxu0 0.0
    %5308 = vmatpush1.msra.mxu0 0.0
    %5309 = vmatprep.subr.mxu0 0.0
    %5310 = vmatpush1.msra.mxu0 0.0
    %5311 = vmatprep.subr.mxu0 0.0
    %5312 = vmatpush1.msra.mxu0 0.0
    %5313 = vmatprep.subr.mxu0 0.0
    %5314 = vmatpush1.msra.mxu0 0.0
    %5315 = vmatprep.subr.mxu0 0.0
    %5316 = vmatpush1.msra.mxu0 0.0
    %5317 = vmatprep.subr.mxu0 0.0
    %5318 = vmatpush1.msra.mxu0 0.0
    %5319 = vmatprep.subr.mxu0 0.0
    %5320 = vmatpush1.msra.mxu0 0.0
    %5321 = vmatprep.subr.mxu0 0.0
    %5322 = vmatpush1.msra.mxu0 0.0
    %5323 = vmatprep.subr.mxu0 0.0
    %5324 = vmatpush1.msra.mxu0 0.0
    %5325 = vmatprep.subr.mxu0 0.0
    %5326 = vmatpush1.msra.mxu0 0.0
    %5327 = vmatprep.subr.mxu0 0.0
    %5328 = vmatpush1.msra.mxu0 0.0
    %5329 = vmatprep.subr.mxu0 0.0
    %5330 = vmatpush1.msra.mxu0 0.0
    %5331 = vmatprep.mubr.f32.mxu0 0.0
    %5332 = vmatmul.mubr.f32.gmra.mrb[0].mxu0 %v5265
    %v5333 = vpop.f32.mrb[0].mxu0
    %v5334 = vadd.f32 %v5262, %v5333
    %v5335 = vpop.f32.mrb[0].mxu0
    %5336 = vdwg.mxu0
    %v5337 = vxor.u32 %v5334, 2147483648
    %v5338 = vmul.f32 %v5337, 1.442695
    %v5339 = vpow.pop %v5338
    %v5340 = vadd.f32 %v5339, 1.0
    %v5341 = vrcp.pop %v5340
    %v5342 = vmul.f32 1.0, %v5341
    %v5343 = vmul.f32 %v5342, 1.442695
    %v5344 = vpow.pop %v5343
    %v5345 = vld [vmem:[#allocation8] sm:$0xff]
    %v5346 = vld [vmem:[#allocation8 + $0x8] sm:$0xff]
    %v5347 = vld [vmem:[#allocation8 + $0x10] sm:$0xff]
    %v5348 = vld [vmem:[#allocation8 + $0x18] sm:$0xff]
    %v5349 = vld [vmem:[#allocation8 + $0x20] sm:$0xff]
    %v5350 = vld [vmem:[#allocation8 + $0x28] sm:$0xff]
    %v5351 = vld [vmem:[#allocation8 + $0x30] sm:$0xff]
    %v5352 = vld [vmem:[#allocation8 + $0x38] sm:$0xff]
    %v5353 = vld [vmem:[#allocation8 + $0x40] sm:$0xff]
    %v5354 = vld [vmem:[#allocation8 + $0x48] sm:$0xff]
    %v5355 = vld [vmem:[#allocation8 + $0x50] sm:$0xff]
    %v5356 = vld [vmem:[#allocation8 + $0x58] sm:$0xff]
    %v5357 = vld [vmem:[#allocation8 + $0x60] sm:$0xff]
    %v5358 = vld [vmem:[#allocation8 + $0x68] sm:$0xff]
    %v5359 = vld [vmem:[#allocation8 + $0x70] sm:$0xff]
    %v5360 = vld [vmem:[#allocation8 + $0x78] sm:$0xff]
    %5361 = vmatprep.subr.mxu0 0.0
    %5362 = vmatpush1.msra.mxu0 %v5345
    %5363 = vmatprep.subr.mxu0 0.0
    %5364 = vmatpush1.msra.mxu0 %v5346
    %5365 = vmatprep.subr.mxu0 0.0
    %5366 = vmatpush1.msra.mxu0 %v5347
    %5367 = vmatprep.subr.mxu0 0.0
    %5368 = vmatpush1.msra.mxu0 %v5348
    %5369 = vmatprep.subr.mxu0 0.0
    %5370 = vmatpush1.msra.mxu0 %v5349
    %5371 = vmatprep.subr.mxu0 0.0
    %5372 = vmatpush1.msra.mxu0 %v5350
    %5373 = vmatprep.subr.mxu0 0.0
    %5374 = vmatpush1.msra.mxu0 %v5351
    %5375 = vmatprep.subr.mxu0 0.0
    %5376 = vmatpush1.msra.mxu0 %v5352
    %5377 = vmatprep.subr.mxu0 0.0
    %5378 = vmatpush1.msra.mxu0 %v5353
    %5379 = vmatprep.subr.mxu0 0.0
    %5380 = vmatpush1.msra.mxu0 %v5354
    %5381 = vmatprep.subr.mxu0 0.0
    %5382 = vmatpush1.msra.mxu0 %v5355
    %5383 = vmatprep.subr.mxu0 0.0
    %5384 = vmatpush1.msra.mxu0 %v5356
    %5385 = vmatprep.subr.mxu0 0.0
    %5386 = vmatpush1.msra.mxu0 %v5357
    %5387 = vmatprep.subr.mxu0 0.0
    %5388 = vmatpush1.msra.mxu0 %v5358
    %5389 = vmatprep.subr.mxu0 0.0
    %5390 = vmatpush1.msra.mxu0 %v5359
    %5391 = vmatprep.subr.mxu0 0.0
    %5392 = vmatpush1.msra.mxu0 %v5360
    %5393 = vmatprep.subr.mxu0 0.0
    %5394 = vmatpush1.msra.mxu0 0.0
    %5395 = vmatprep.subr.mxu0 0.0
    %5396 = vmatpush1.msra.mxu0 0.0
    %5397 = vmatprep.subr.mxu0 0.0
    %5398 = vmatpush1.msra.mxu0 0.0
    %5399 = vmatprep.subr.mxu0 0.0
    %5400 = vmatpush1.msra.mxu0 0.0
    %5401 = vmatprep.subr.mxu0 0.0
    %5402 = vmatpush1.msra.mxu0 0.0
    %5403 = vmatprep.subr.mxu0 0.0
    %5404 = vmatpush1.msra.mxu0 0.0
    %5405 = vmatprep.subr.mxu0 0.0
    %5406 = vmatpush1.msra.mxu0 0.0
    %5407 = vmatprep.subr.mxu0 0.0
    %5408 = vmatpush1.msra.mxu0 0.0
    %5409 = vmatprep.subr.mxu0 0.0
    %5410 = vmatpush1.msra.mxu0 0.0
    %5411 = vmatprep.subr.mxu0 0.0
    %5412 = vmatpush1.msra.mxu0 0.0
    %5413 = vmatprep.subr.mxu0 0.0
    %5414 = vmatpush1.msra.mxu0 0.0
    %5415 = vmatprep.subr.mxu0 0.0
    %5416 = vmatpush1.msra.mxu0 0.0
    %5417 = vmatprep.subr.mxu0 0.0
    %5418 = vmatpush1.msra.mxu0 0.0
    %5419 = vmatprep.subr.mxu0 0.0
    %5420 = vmatpush1.msra.mxu0 0.0
    %5421 = vmatprep.subr.mxu0 0.0
    %5422 = vmatpush1.msra.mxu0 0.0
    %5423 = vmatprep.subr.mxu0 0.0
    %5424 = vmatpush1.msra.mxu0 0.0
    %5425 = vmatprep.mubr.f32.mxu0 0.0
    %5426 = vmatmul.mubr.f32.gmra.mrb[0].mxu0 %v5344
    %v5427 = vpop.f32.mrb[0].mxu0
    %v5428 = vadd.f32 0.0, %v5427
    %v5429 = vpop.f32.mrb[0].mxu0
    %5430 = vdwg.mxu0
    %v5431 = vrcp.pop %v5428
    %v5432 = vmul.f32 %v5344, %v5431
    %v5433 = vld [vmem:[#allocation9] sm:$0xff]
    %v5434 = vld [vmem:[#allocation9 + $0x8] sm:$0xff]
    %v5435 = vld [vmem:[#allocation9 + $0x10] sm:$0xff]
    %v5436 = vld [vmem:[#allocation9 + $0x18] sm:$0xff]
    %v5437 = vld [vmem:[#allocation9 + $0x20] sm:$0xff]
    %v5438 = vld [vmem:[#allocation9 + $0x28] sm:$0xff]
    %v5439 = vld [vmem:[#allocation9 + $0x30] sm:$0xff]
    %v5440 = vld [vmem:[#allocation9 + $0x38] sm:$0xff]
    %v5441 = vld [vmem:[#allocation9 + $0x40] sm:$0xff]
    %v5442 = vld [vmem:[#allocation9 + $0x48] sm:$0xff]
    %v5443 = vld [vmem:[#allocation9 + $0x50] sm:$0xff]
    %v5444 = vld [vmem:[#allocation9 + $0x58] sm:$0xff]
    %v5445 = vld [vmem:[#allocation9 + $0x60] sm:$0xff]
    %v5446 = vld [vmem:[#allocation9 + $0x68] sm:$0xff]
    %v5447 = vld [vmem:[#allocation9 + $0x70] sm:$0xff]
    %v5448 = vld [vmem:[#allocation9 + $0x78] sm:$0xff]
    %v5449 = vld [vmem:[#allocation9 + $0x80] sm:$0xff]
    %v5450 = vld [vmem:[#allocation9 + $0x88] sm:$0xff]
    %v5451 = vld [vmem:[#allocation9 + $0x90] sm:$0xff]
    %v5452 = vld [vmem:[#allocation9 + $0x98] sm:$0xff]
    %v5453 = vld [vmem:[#allocation9 + $0xa0] sm:$0xff]
    %v5454 = vld [vmem:[#allocation9 + $0xa8] sm:$0xff]
    %v5455 = vld [vmem:[#allocation9 + $0xb0] sm:$0xff]
    %v5456 = vld [vmem:[#allocation9 + $0xb8] sm:$0xff]
    %v5457 = vld [vmem:[#allocation9 + $0xc0] sm:$0xff]
    %v5458 = vld [vmem:[#allocation9 + $0xc8] sm:$0xff]
    %v5459 = vld [vmem:[#allocation9 + $0xd0] sm:$0xff]
    %v5460 = vld [vmem:[#allocation9 + $0xd8] sm:$0xff]
    %v5461 = vld [vmem:[#allocation9 + $0xe0] sm:$0xff]
    %v5462 = vld [vmem:[#allocation9 + $0xe8] sm:$0xff]
    %v5463 = vld [vmem:[#allocation9 + $0xf0] sm:$0xff]
    %v5464 = vld [vmem:[#allocation9 + $0xf8] sm:$0xff]
    %v5465 = vlaneseq
    %v5466 = vshrl.u32 %v5465, 7
    %v5467 = vsub.s32 0, %v5466
    %v5468 = vrot.slane %v5432, %v5467
    %v5469 = vmul.f32 %v5433, %v5468
    %v5470 = vmul.f32 %v5434, %v5468
    %v5471 = vmul.f32 %v5435, %v5468
    %v5472 = vmul.f32 %v5436, %v5468
    %v5473 = vmul.f32 %v5437, %v5468
    %v5474 = vmul.f32 %v5438, %v5468
    %v5475 = vmul.f32 %v5439, %v5468
    %v5476 = vmul.f32 %v5440, %v5468
    %v5477 = vmul.f32 %v5441, %v5468
    %v5478 = vmul.f32 %v5442, %v5468
    %v5479 = vmul.f32 %v5443, %v5468
    %v5480 = vmul.f32 %v5444, %v5468
    %v5481 = vmul.f32 %v5445, %v5468
    %v5482 = vmul.f32 %v5446, %v5468
    %v5483 = vmul.f32 %v5447, %v5468
    %v5484 = vmul.f32 %v5448, %v5468
    %v5485 = vmul.f32 %v5449, %v5468
    %v5486 = vmul.f32 %v5450, %v5468
    %v5487 = vmul.f32 %v5451, %v5468
    %v5488 = vmul.f32 %v5452, %v5468
    %v5489 = vmul.f32 %v5453, %v5468
    %v5490 = vmul.f32 %v5454, %v5468
    %v5491 = vmul.f32 %v5455, %v5468
    %v5492 = vmul.f32 %v5456, %v5468
    %v5493 = vmul.f32 %v5457, %v5468
    %v5494 = vmul.f32 %v5458, %v5468
    %v5495 = vmul.f32 %v5459, %v5468
    %v5496 = vmul.f32 %v5460, %v5468
    %v5497 = vmul.f32 %v5461, %v5468
    %v5498 = vmul.f32 %v5462, %v5468
    %v5499 = vmul.f32 %v5463, %v5468
    %v5500 = vmul.f32 %v5464, %v5468
    %5501 = vst [vmem:[#allocation9] sm:$0xff] %v5469
    %5502 = vst [vmem:[#allocation9 + $0x8] sm:$0xff] %v5470
    %5503 = vst [vmem:[#allocation9 + $0x10] sm:$0xff] %v5471
    %5504 = vst [vmem:[#allocation9 + $0x18] sm:$0xff] %v5472
    %5505 = vst [vmem:[#allocation9 + $0x20] sm:$0xff] %v5473
    %5506 = vst [vmem:[#allocation9 + $0x28] sm:$0xff] %v5474
    %5507 = vst [vmem:[#allocation9 + $0x30] sm:$0xff] %v5475
    %5508 = vst [vmem:[#allocation9 + $0x38] sm:$0xff] %v5476
    %5509 = vst [vmem:[#allocation9 + $0x40] sm:$0xff] %v5477
    %5510 = vst [vmem:[#allocation9 + $0x48] sm:$0xff] %v5478
    %5511 = vst [vmem:[#allocation9 + $0x50] sm:$0xff] %v5479
    %5512 = vst [vmem:[#allocation9 + $0x58] sm:$0xff] %v5480
    %5513 = vst [vmem:[#allocation9 + $0x60] sm:$0xff] %v5481
    %5514 = vst [vmem:[#allocation9 + $0x68] sm:$0xff] %v5482
    %5515 = vst [vmem:[#allocation9 + $0x70] sm:$0xff] %v5483
    %5516 = vst [vmem:[#allocation9 + $0x78] sm:$0xff] %v5484
    %5517 = vst [vmem:[#allocation9 + $0x80] sm:$0xff] %v5485
    %5518 = vst [vmem:[#allocation9 + $0x88] sm:$0xff] %v5486
    %5519 = vst [vmem:[#allocation9 + $0x90] sm:$0xff] %v5487
    %5520 = vst [vmem:[#allocation9 + $0x98] sm:$0xff] %v5488
    %5521 = vst [vmem:[#allocation9 + $0xa0] sm:$0xff] %v5489
    %5522 = vst [vmem:[#allocation9 + $0xa8] sm:$0xff] %v5490
    %5523 = vst [vmem:[#allocation9 + $0xb0] sm:$0xff] %v5491
    %5524 = vst [vmem:[#allocation9 + $0xb8] sm:$0xff] %v5492
    %5525 = vst [vmem:[#allocation9 + $0xc0] sm:$0xff] %v5493
    %5526 = vst [vmem:[#allocation9 + $0xc8] sm:$0xff] %v5494
    %5527 = vst [vmem:[#allocation9 + $0xd0] sm:$0xff] %v5495
    %5528 = vst [vmem:[#allocation9 + $0xd8] sm:$0xff] %v5496
    %5529 = vst [vmem:[#allocation9 + $0xe0] sm:$0xff] %v5497
    %5530 = vst [vmem:[#allocation9 + $0xe8] sm:$0xff] %v5498
    %5531 = vst [vmem:[#allocation9 + $0xf0] sm:$0xff] %v5499
    %5532 = vst [vmem:[#allocation9 + $0xf8] sm:$0xff] %v5500
    // Predicated region
    $region57: #{tpu_custom_call.1} parent=1 // pred_check
      _
    $region58: #{tpu_custom_call.1} parent=1 // pred_check_branch
      %5534 = sbr.rel (0) target = $region60
    $region59: #{tpu_custom_call.1} parent=1 // pred_region
      %s5536 = ssub.s32 4096, 4096
      %5537 = vsyncadd [#allocation5], %s5536
      %s5538 = sshll.u32 [#allocation9], 4
      %s5539 = int_to_ptr.vmem [resolvable:$true] %s5538
      %5544 = dma.vmem_to_hbm [thread:$0]  %s5539, 4096, %s9, [#allocation5], 128, 128, 8
    $region60: #{tpu_custom_call.1} parent=1 // pred_fallthru
      _
    // Predicated region
    $region61: #{tpu_custom_call.1} parent=1 // pred_check
      _
    $region62: #{tpu_custom_call.1} parent=1 // pred_check_branch
      %5546 = sbr.rel (0) target = $region64
    $region63: #{tpu_custom_call.1} parent=1 // pred_region
      %5547 = dma.done [#allocation5], 4096
    $region64: #{tpu_custom_call.1} parent=1 // pred_fallthru
      _
    %5548 = vsyncpa [#allocation4], 1
    %5549 = vsyncpa [#allocation7], 1
    %5550 = vsyncpa [#allocation5], 1

</llo_original>
